<compile_context>
chip_gen: v6e
topology: v6e:2x2x1
jax: 0.10.0
libtpu: 0.0.40
codegen_flags: <defaults>
</compile_context>

<pallas_src>
import numpy as np
import jax
import jax.numpy as jnp
from jax import lax
from jax.experimental import pallas as pl
from jax.experimental.pallas import tpu as pltpu


# --------------------------- row-ordering helper ------------------------------

def _phase_row_perm():
    # Order the 14x14 pooled-conv1 positions as (a, b, u, v) where (a, b) is the
    # parity ("phase") of the *padded* coordinate (i+1, j+1).  With this
    # ordering the kernel can scatter the conv1 output into the phase scratch
    # and build conv2's im2col with only unit-stride, static slices.
    order = []
    for a in (0, 1):
        i_list = [i for i in range(14) if (i + 1) % 2 == a]
        for b in (0, 1):
            j_list = [j for j in range(14) if (j + 1) % 2 == b]
            for i in i_list:
                for j in j_list:
                    order.append(i * 14 + j)
    return np.asarray(order, dtype=np.int32)


_PHASE_PERM = _phase_row_perm()


# --------------------------- Pallas kernels -----------------------------------

def conv_fused_kernel(x1_ref, w1_ref, b1_ref, w2_ref, b2_ref, o_ref,
                      q_ref, x2_ref):
    # One image per grid step.
    #   x1_ref: (1, 196, 36) bf16  packed conv1 im2col (4 taps x 9 offsets in lanes)
    #   w1_ref: (36, 128)    bf16  block-diagonal conv1 weight
    #   b1_ref: (1, 32) f32        conv1 bias
    #   w2_ref: (288, 64)    bf16  conv2 im2col weight
    #   b2_ref: (1, 64) f32        conv2 bias
    #   o_ref : (1, 49, 64)  bf16  pooled conv2 output (NHWC-flatten row order)
    #   q_ref : VMEM (4, 8, 8, 32) f32   phase-decomposed, zero-padded conv1 output
    #   x2_ref: VMEM (196, 288)    f32   conv2 im2col (rows grouped by pooling tap)

    # --- conv1: one lane-dense matmul, tap-max pool, bias, relu ---------------
    t = jnp.dot(x1_ref[0], w1_ref[...], preferred_element_type=jnp.float32)
    m = jnp.maximum(jnp.maximum(t[:, 0:32], t[:, 32:64]),
                    jnp.maximum(t[:, 64:96], t[:, 96:128]))
    p1 = jnp.maximum(m + b1_ref[...], 0.0)                       # (196, 32) f32

    # --- scatter p1 (phase-ordered rows) into the zero-padded phase scratch ---
    q_ref[...] = jnp.zeros_like(q_ref)
    for a in range(2):
        for b in range(2):
            blk = (2 * a + b) * 49
            u0, v0 = 1 - a, 1 - b
            for u in range(7):
                q_ref[2 * a + b, u0 + u, v0:v0 + 7, :] = \
                    p1[blk + u * 7: blk + u * 7 + 7, :]

    # --- build conv2 im2col in VMEM (never touches HBM) -----------------------
    for tp in range(4):                       # pooling tap (ph, pw)
        ph, pw = tp // 2, tp % 2
        for s in range(9):                    # kernel offset (dy, dx)
            dy, dx = s // 3, s % 3
            R, S = ph + dy, pw + dx
            a, r0 = R % 2, R // 2
            b, c0 = S % 2, S // 2
            for u in range(7):                # output row ho
                x2_ref[tp * 49 + u * 7: tp * 49 + u * 7 + 7,
                       s * 32:(s + 1) * 32] = \
                    q_ref[2 * a + b, r0 + u, c0:c0 + 7, :]

    # --- conv2: one matmul, tap-max pool, bias, relu ---------------------------
    y2 = jnp.dot(x2_ref[...].astype(jnp.bfloat16), w2_ref[...],
                 preferred_element_type=jnp.float32)              # (196, 64)
    pooled = jnp.maximum(jnp.maximum(y2[0:49], y2[49:98]),
                         jnp.maximum(y2[98:147], y2[147:196]))    # (49, 64)
    o_ref[0] = jnp.maximum(pooled + b2_ref[...], 0.0).astype(o_ref.dtype)


def fc_kernel(x_ref, w1_ref, b1_ref, w2_ref, o_ref):
    # Grid axis j tiles the fc1 hidden dim (padded to 1024), "parallel".
    #   x : (B, 3136) bf16   w1 tile: (3136, TN) bf16   b1 tile: (1, TN) f32
    #   w2 tile: (TN, 10) f32   o: (1, B, 10) f32 partial logits for this tile.
    h = jnp.dot(x_ref[...], w1_ref[...], preferred_element_type=jnp.float32)
    h = jnp.maximum(h + b1_ref[...], 0.0)
    o_ref[0] = jnp.dot(h, w2_ref[...], preferred_element_type=jnp.float32)


# --------------------------- Pallas wrappers -----------------------------------

def _conv1_packed_cols(x2d):
    """Packed conv1 im2col: (B, 196, 36) bf16, rows in phase order.

    Lane index = tap*9 + (dy*3+dx); rows ordered by _PHASE_PERM.  Assumes even
    H and W (28x28 here)."""
    B = x2d.shape[0]
    xp = jnp.pad(x2d, ((0, 0), (1, 1), (1, 1)))                  # (B, 30, 30)
    cols = []
    for ph in range(2):
        for pw in range(2):
            for dy in range(3):
                for dx in range(3):
                    cols.append(xp[:, ph + dy:ph + dy + 28:2,
                                   pw + dx:pw + dx + 28:2])      # (B, 14, 14)
    c = jnp.stack(cols, axis=-1).reshape(B, 196, 36)
    c = jnp.take(c, jnp.asarray(_PHASE_PERM), axis=1)
    return c.astype(jnp.bfloat16)


def _conv_fused(x1col, w1p, b1c, w2col, b2c):
    """Fused conv1+relu+pool+conv2+relu+pool; one image per grid step."""
    B = x1col.shape[0]
    return pl.pallas_call(
        conv_fused_kernel,
        out_shape=jax.ShapeDtypeStruct((B, 49, 64), jnp.bfloat16),
        grid=(B,),
        in_specs=[
            pl.BlockSpec((1, 196, 36), lambda i: (i, 0, 0)),
            pl.BlockSpec((36, 128), lambda i: (0, 0)),
            pl.BlockSpec((1, 32), lambda i: (0, 0)),
            pl.BlockSpec((288, 64), lambda i: (0, 0)),
            pl.BlockSpec((1, 64), lambda i: (0, 0)),
        ],
        out_specs=pl.BlockSpec((1, 49, 64), lambda i: (i, 0, 0)),
        scratch_shapes=[
            pltpu.VMEM((4, 8, 8, 32), jnp.float32),   # phase-padded conv1 output
            pltpu.VMEM((196, 288), jnp.float32),      # conv2 im2col
        ],
        compiler_params=pltpu.CompilerParams(dimension_semantics=("parallel",)),
    )(x1col, w1p, b1c, w2col, b2c)


def _fc_partial_logits(feat, w1, b1, w2, tn=256):
    """fc1 (bf16 x bf16, tiled over hidden dim) + relu + fc2 partial logits."""
    B, D = feat.shape
    H1 = w1.shape[1]
    Dout = w2.shape[1]
    assert H1 % tn == 0
    n_tiles = H1 // tn
    return pl.pallas_call(
        fc_kernel,
        out_shape=jax.ShapeDtypeStruct((n_tiles, B, Dout), jnp.float32),
        grid=(n_tiles,),
        in_specs=[
            pl.BlockSpec((B, D), lambda j: (0, 0)),
            pl.BlockSpec((D, tn), lambda j: (0, j)),      # bf16 weight stream
            pl.BlockSpec((1, tn), lambda j: (0, j)),
            pl.BlockSpec((tn, Dout), lambda j: (j, 0)),
        ],
        out_specs=pl.BlockSpec((1, B, Dout), lambda j: (j, 0, 0)),
        compiler_params=pltpu.CompilerParams(dimension_semantics=("parallel",)),
    )(feat, w1, b1, w2)


# --------------------------- Model forward -------------------------------------

def cnn_forward(x_nchw, p):
    B = x_nchw.shape[0]
    x2d = x_nchw[:, 0, :, :]                                      # (B, 28, 28)
    x1col = _conv1_packed_cols(x2d)                               # (B, 196, 36)
    feat = _conv_fused(x1col, p["w1p"], p["b1c"], p["w2col"], p["b2c"])
    # TODO(synk): nn.Dropout2d(0.25) is identity at inference (eval mode);
    # training-mode stochastic channel masking is not implemented.
    feat = feat.reshape(B, 7 * 7 * 64)       # NHWC flatten; fc1 rows pre-permuted
    partial = _fc_partial_logits(feat, p["w_fc1_k"], p["b_fc1_k"], p["w_fc2_k"])
    logits = partial.sum(axis=0) + p["b_fc2"][None, :]
    return jax.nn.softmax(logits, axis=-1)


# --------------------------- Params & reference --------------------------------

def init_params(key):
    ks = jax.random.split(key, 8)
    w_conv1 = jax.random.normal(ks[0], (32, 1, 3, 3), jnp.float32) / 3.0
    b_conv1 = jax.random.normal(ks[1], (32,), jnp.float32) * 0.05
    w_conv2 = jax.random.normal(ks[2], (64, 32, 3, 3), jnp.float32) / jnp.sqrt(288.0)
    b_conv2 = jax.random.normal(ks[3], (64,), jnp.float32) * 0.05
    # fc1 weight is kept in bf16 (the model's storage dtype); MXU accum is f32.
    w_fc1 = (jax.random.normal(ks[4], (3136, 1000), jnp.float32)
             / jnp.sqrt(3136.0)).astype(jnp.bfloat16)
    b_fc1 = jax.random.normal(ks[5], (1000,), jnp.float32) * 0.05
    w_fc2 = jax.random.normal(ks[6], (1000, 10), jnp.float32) / jnp.sqrt(1000.0)
    b_fc2 = jax.random.normal(ks[7], (10,), jnp.float32) * 0.05

    # conv1: im2col weight (9, 32), packed block-diagonally into (36, 128) so
    # one matmul produces all 4 pooling taps lane-dense.
    w1col = jnp.transpose(w_conv1, (2, 3, 1, 0)).reshape(9, 32)
    w1p = jnp.zeros((36, 128), jnp.float32)
    for t in range(4):
        w1p = w1p.at[t * 9:(t + 1) * 9, t * 32:(t + 1) * 32].set(w1col)
    w1p = w1p.astype(jnp.bfloat16)
    b1c = b_conv1.reshape(1, 32)

    # conv2: im2col weight, row = (ky*3+kx)*32 + ci.
    w2col = jnp.transpose(w_conv2, (2, 3, 1, 0)).reshape(288, 64).astype(jnp.bfloat16)
    b2c = b_conv2.reshape(1, 64)

    # fc1 kernel layout: permute rows from NCHW-flatten (c*49+h*7+w) to
    # NHWC-flatten ((h*7+w)*64+c), then zero-pad the hidden dim 1000 -> 1024
    # (exact: relu(0)=0 and the padded fc2 rows are zero).
    H1P = 1024
    w_fc1_nhwc = jnp.transpose(w_fc1.reshape(64, 7, 7, 1000), (1, 2, 0, 3)
                               ).reshape(3136, 1000)
    w_fc1_k = jnp.pad(w_fc1_nhwc, ((0, 0), (0, H1P - 1000)))        # bf16
    b_fc1_k = jnp.pad(b_fc1, (0, H1P - 1000)).reshape(1, H1P)
    w_fc2_k = jnp.pad(w_fc2, ((0, H1P - 1000), (0, 0)))

    return dict(w_conv1=w_conv1, b_conv1=b_conv1, w_conv2=w_conv2, b_conv2=b_conv2,
                w_fc1=w_fc1, b_fc1=b_fc1, w_fc2=w_fc2, b_fc2=b_fc2,
                w1p=w1p, b1c=b1c, w2col=w2col, b2c=b2c,
                w_fc1_k=w_fc1_k, b_fc1_k=b_fc1_k, w_fc2_k=w_fc2_k)


def reference_forward(x_nchw, p):
    """Pure-JAX/XLA reference mirroring the PyTorch forward (eval mode)."""
    dn = ("NCHW", "OIHW", "NCHW")
    y = lax.conv_general_dilated(x_nchw, p["w_conv1"], (1, 1), "SAME",
                                 dimension_numbers=dn)
    y = jnp.maximum(y + p["b_conv1"][None, :, None, None], 0.0)
    y = lax.reduce_window(y, -jnp.inf, lax.max, (1, 1, 2, 2), (1, 1, 2, 2), "VALID")
    y = lax.conv_general_dilated(y, p["w_conv2"], (1, 1), "SAME",
                                 dimension_numbers=dn)
    y = jnp.maximum(y + p["b_conv2"][None, :, None, None], 0.0)
    y = lax.reduce_window(y, -jnp.inf, lax.max, (1, 1, 2, 2), (1, 1, 2, 2), "VALID")
    y = y.reshape(y.shape[0], -1)                                  # NCHW flatten
    y = jnp.maximum(y @ p["w_fc1"].astype(jnp.float32) + p["b_fc1"], 0.0)
    z = y @ p["w_fc2"] + p["b_fc2"]
    return jax.nn.softmax(z, axis=1)


# --------------------------- Main -----------------------------------------------

if __name__ == "__main__":
    key = jax.random.PRNGKey(0)
    kx, kp = jax.random.split(key)
    params = init_params(kp)
    # fc1 expects 3136 = 64 * 7 * 7 features -> input must be (B, 1, 28, 28)
    x = jax.random.normal(kx, (2, 1, 28, 28), jnp.float32)

    fwd = jax.jit(cnn_forward)
    out = jax.block_until_ready(fwd(x, params))
    ref = jax.block_until_ready(reference_forward(x, params))

    assert out.shape == (2, 10), out.shape
    assert bool(jnp.all(jnp.isfinite(out)))
    assert bool(jnp.allclose(jnp.sum(out, axis=1), 1.0, atol=1e-5))
    # bf16 conv weights/activations + bf16 fc1 activations in the kernel path
    # (reference is f32 except the bf16-stored fc1 weight) -> loosen slightly.
    err = float(jnp.max(jnp.abs(out - ref)))
    assert err < 5e-3, err
    print("KERNEL_OK")
</pallas_src>

<mosaic_0001>
module attributes {stable_mosaic.version = 11 : i64} {
  func.func @fc_kernel(%arg0: i32, %arg1: memref<2x3136xbf16, #tpu.memory_space<vmem>>, %arg2: memref<3136x256xbf16, #tpu.memory_space<vmem>>, %arg3: memref<1x256xf32, #tpu.memory_space<vmem>>, %arg4: memref<256x10xf32, #tpu.memory_space<vmem>>, %arg5: memref<1x2x10xf32, #tpu.memory_space<vmem>>) attributes {dimension_semantics = [#tpu.dimension_semantics<parallel>], iteration_bounds = array<i64: 4>, scalar_prefetch = 0 : i64, scratch_operands = 0 : i64, tpu.core_type = #tpu.core_type<tc>, window_params = [{pipeline_mode = #tpu.pipeline_mode<synchronous>, transform_indices = @transform_0, window_bounds = array<i64: 2, 3136>}, {transform_indices = @transform_1, window_bounds = array<i64: 3136, 256>}, {transform_indices = @transform_2, window_bounds = array<i64: 1, 256>}, {transform_indices = @transform_3, window_bounds = array<i64: 256, 10>}, {transform_indices = @transform_4, window_bounds = array<i64: 1, 2, 10>}]} {
    %c0 = arith.constant 0 : index
    %c0_0 = arith.constant 0 : index
    %0 = vector.load %arg1[%c0, %c0_0] : memref<2x3136xbf16, #tpu.memory_space<vmem>>, vector<2x3136xbf16>
    %c0_1 = arith.constant 0 : index
    %c0_2 = arith.constant 0 : index
    %1 = vector.load %arg2[%c0_1, %c0_2] : memref<3136x256xbf16, #tpu.memory_space<vmem>>, vector<3136x256xbf16>
    %cst = arith.constant dense<0.000000e+00> : vector<2x256xf32>
    %2 = tpu.matmul %0, %1, %cst {dimension_numbers = #tpu.dot_dimension_numbers<[1], [0], [0], [1], [0, 0, 1, 1], [], []>} : vector<2x3136xbf16>, vector<3136x256xbf16>, vector<2x256xf32> -> vector<2x256xf32>
    %c0_3 = arith.constant 0 : index
    %c0_4 = arith.constant 0 : index
    %3 = vector.load %arg3[%c0_3, %c0_4] : memref<1x256xf32, #tpu.memory_space<vmem>>, vector<1x256xf32>
    %4 = vector.broadcast %3 : vector<1x256xf32> to vector<2x256xf32>
    %5 = arith.addf %2, %4 : vector<2x256xf32>
    %cst_5 = arith.constant 0.000000e+00 : f32
    %6 = vector.broadcast %cst_5 : f32 to vector<2x256xf32>
    %7 = arith.maximumf %5, %6 : vector<2x256xf32>
    %c0_6 = arith.constant 0 : index
    %c0_7 = arith.constant 0 : index
    %8 = vector.load %arg4[%c0_6, %c0_7] : memref<256x10xf32, #tpu.memory_space<vmem>>, vector<256x10xf32>
    %cst_8 = arith.constant dense<0.000000e+00> : vector<2x10xf32>
    %9 = tpu.matmul %7, %8, %cst_8 {dimension_numbers = #tpu.dot_dimension_numbers<[1], [0], [0], [1], [0, 0, 1, 1], [], []>} : vector<2x256xf32>, vector<256x10xf32>, vector<2x10xf32> -> vector<2x10xf32>
    %c0_9 = arith.constant 0 : index
    %c0_10 = arith.constant 0 : index
    %c0_11 = arith.constant 0 : index
    %10 = vector.load %arg5[%c0_9, %c0_10, %c0_11] : memref<1x2x10xf32, #tpu.memory_space<vmem>>, vector<1x2x10xf32>
    %11 = vector.shape_cast %10 : vector<1x2x10xf32> to vector<2x10xf32>
    %12 = vector.shape_cast %9 : vector<2x10xf32> to vector<1x2x10xf32>
    tpu.vector_store %arg5[%c0_9, %c0_10, %c0_11], %12 {strides = array<i32>} : memref<1x2x10xf32, #tpu.memory_space<vmem>>, vector<1x2x10xf32>,
    return
  }
  func.func @transform_0(%arg0: i32) -> (i32, i32) {
    %c0_i32 = arith.constant 0 : i32
    %c0_i32_0 = arith.constant 0 : i32
    %c0_i32_1 = arith.constant 0 : i32
    return %c0_i32, %c0_i32_0 : i32, i32
  }
  func.func @transform_1(%arg0: i32) -> (i32, i32) {
    %c0_i32 = arith.constant 0 : i32
    %c0_i32_0 = arith.constant 0 : i32
    return %c0_i32, %arg0 : i32, i32
  }
  func.func @transform_2(%arg0: i32) -> (i32, i32) {
    %c0_i32 = arith.constant 0 : i32
    %c0_i32_0 = arith.constant 0 : i32
    return %c0_i32, %arg0 : i32, i32
  }
  func.func @transform_3(%arg0: i32) -> (i32, i32) {
    %c0_i32 = arith.constant 0 : i32
    %c0_i32_0 = arith.constant 0 : i32
    return %arg0, %c0_i32 : i32, i32
  }
  func.func @transform_4(%arg0: i32) -> (i32, i32, i32) {
    %c0_i32 = arith.constant 0 : i32
    %c0_i32_0 = arith.constant 0 : i32
    %c0_i32_1 = arith.constant 0 : i32
    return %arg0, %c0_i32, %c0_i32_0 : i32, i32, i32
  }
}

module attributes {stable_mosaic.version = 11 : i64} {
  func.func @conv_fused_kernel(%arg0: i32, %arg1: memref<1x196x36xbf16, #tpu.memory_space<vmem>>, %arg2: memref<36x128xbf16, #tpu.memory_space<vmem>>, %arg3: memref<1x32xf32, #tpu.memory_space<vmem>>, %arg4: memref<288x64xbf16, #tpu.memory_space<vmem>>, %arg5: memref<1x64xf32, #tpu.memory_space<vmem>>, %arg6: memref<1x49x64xbf16, #tpu.memory_space<vmem>>, %arg7: memref<4x8x8x32xf32, #tpu.memory_space<vmem>>, %arg8: memref<196x288xf32, #tpu.memory_space<vmem>>) attributes {dimension_semantics = [#tpu.dimension_semantics<parallel>], iteration_bounds = array<i64: 2>, scalar_prefetch = 0 : i64, scratch_operands = 2 : i64, tpu.core_type = #tpu.core_type<tc>, window_params = [{transform_indices = @transform_0, window_bounds = array<i64: 1, 196, 36>}, {pipeline_mode = #tpu.pipeline_mode<synchronous>, transform_indices = @transform_1, window_bounds = array<i64: 36, 128>}, {pipeline_mode = #tpu.pipeline_mode<synchronous>, transform_indices = @transform_2, window_bounds = array<i64: 1, 32>}, {pipeline_mode = #tpu.pipeline_mode<synchronous>, transform_indices = @transform_3, window_bounds = array<i64: 288, 64>}, {pipeline_mode = #tpu.pipeline_mode<synchronous>, transform_indices = @transform_4, window_bounds = array<i64: 1, 64>}, {transform_indices = @transform_5, window_bounds = array<i64: 1, 49, 64>}]} {
    %c0 = arith.constant 0 : index
    %c0_0 = arith.constant 0 : index
    %c0_1 = arith.constant 0 : index
    %0 = vector.load %arg1[%c0, %c0_0, %c0_1] : memref<1x196x36xbf16, #tpu.memory_space<vmem>>, vector<1x196x36xbf16>
    %1 = vector.shape_cast %0 : vector<1x196x36xbf16> to vector<196x36xbf16>
    %c0_2 = arith.constant 0 : index
    %c0_3 = arith.constant 0 : index
    %2 = vector.load %arg2[%c0_2, %c0_3] : memref<36x128xbf16, #tpu.memory_space<vmem>>, vector<36x128xbf16>
    %cst = arith.constant dense<0.000000e+00> : vector<196x128xf32>
    %3 = tpu.matmul %1, %2, %cst {dimension_numbers = #tpu.dot_dimension_numbers<[1], [0], [0], [1], [0, 0, 1, 1], [], []>} : vector<196x36xbf16>, vector<36x128xbf16>, vector<196x128xf32> -> vector<196x128xf32>
    %4 = vector.extract_strided_slice %3 {offsets = [0, 0], sizes = [196, 32], strides = [1, 1]} : vector<196x128xf32> to vector<196x32xf32>
    %5 = vector.extract_strided_slice %3 {offsets = [0, 32], sizes = [196, 32], strides = [1, 1]} : vector<196x128xf32> to vector<196x32xf32>
    %6 = arith.maximumf %4, %5 : vector<196x32xf32>
    %7 = vector.extract_strided_slice %3 {offsets = [0, 64], sizes = [196, 32], strides = [1, 1]} : vector<196x128xf32> to vector<196x32xf32>
    %8 = vector.extract_strided_slice %3 {offsets = [0, 96], sizes = [196, 32], strides = [1, 1]} : vector<196x128xf32> to vector<196x32xf32>
    %9 = arith.maximumf %7, %8 : vector<196x32xf32>
    %10 = arith.maximumf %6, %9 : vector<196x32xf32>
    %c0_4 = arith.constant 0 : index
    %c0_5 = arith.constant 0 : index
    %11 = vector.load %arg3[%c0_4, %c0_5] : memref<1x32xf32, #tpu.memory_space<vmem>>, vector<1x32xf32>
    %12 = vector.broadcast %11 : vector<1x32xf32> to vector<196x32xf32>
    %13 = arith.addf %10, %12 : vector<196x32xf32>
    %cst_6 = arith.constant 0.000000e+00 : f32
    %14 = vector.broadcast %cst_6 : f32 to vector<196x32xf32>
    %15 = arith.maximumf %13, %14 : vector<196x32xf32>
    %cst_7 = arith.constant 0.000000e+00 : f32
    %16 = vector.broadcast %cst_7 : f32 to vector<4x8x8x32xf32>
    %c0_8 = arith.constant 0 : index
    %c0_9 = arith.constant 0 : index
    %c0_10 = arith.constant 0 : index
    %c0_11 = arith.constant 0 : index
    %17 = vector.load %arg7[%c0_8, %c0_9, %c0_10, %c0_11] : memref<4x8x8x32xf32, #tpu.memory_space<vmem>>, vector<4x8x8x32xf32>
    tpu.vector_store %arg7[%c0_8, %c0_9, %c0_10, %c0_11], %16 {strides = array<i32>} : memref<4x8x8x32xf32, #tpu.memory_space<vmem>>, vector<4x8x8x32xf32>,
    %18 = vector.extract_strided_slice %15 {offsets = [0, 0], sizes = [7, 32], strides = [1, 1]} : vector<196x32xf32> to vector<7x32xf32>
    %c0_12 = arith.constant 0 : index
    %c1 = arith.constant 1 : index
    %c1_13 = arith.constant 1 : index
    %c0_14 = arith.constant 0 : index
    %19 = vector.load %arg7[%c0_12, %c1, %c1_13, %c0_14] : memref<4x8x8x32xf32, #tpu.memory_space<vmem>>, vector<1x1x7x32xf32>
    %20 = vector.shape_cast %19 : vector<1x1x7x32xf32> to vector<7x32xf32>
    %21 = vector.shape_cast %18 : vector<7x32xf32> to vector<1x1x7x32xf32>
    tpu.vector_store %arg7[%c0_12, %c1, %c1_13, %c0_14], %21 {strides = array<i32>} : memref<4x8x8x32xf32, #tpu.memory_space<vmem>>, vector<1x1x7x32xf32>,
    %22 = vector.extract_strided_slice %15 {offsets = [7, 0], sizes = [7, 32], strides = [1, 1]} : vector<196x32xf32> to vector<7x32xf32>
    %c0_15 = arith.constant 0 : index
    %c2 = arith.constant 2 : index
    %c1_16 = arith.constant 1 : index
    %c0_17 = arith.constant 0 : index
    %23 = vector.load %arg7[%c0_15, %c2, %c1_16, %c0_17] : memref<4x8x8x32xf32, #tpu.memory_space<vmem>>, vector<1x1x7x32xf32>
    %24 = vector.shape_cast %23 : vector<1x1x7x32xf32> to vector<7x32xf32>
    %25 = vector.shape_cast %22 : vector<7x32xf32> to vector<1x1x7x32xf32>
    tpu.vector_store %arg7[%c0_15, %c2, %c1_16, %c0_17], %25 {strides = array<i32>} : memref<4x8x8x32xf32, #tpu.memory_space<vmem>>, vector<1x1x7x32xf32>,
    %26 = vector.extract_strided_slice %15 {offsets = [14, 0], sizes = [7, 32], strides = [1, 1]} : vector<196x32xf32> to vector<7x32xf32>
    %c0_18 = arith.constant 0 : index
    %c3 = arith.constant 3 : index
    %c1_19 = arith.constant 1 : index
    %c0_20 = arith.constant 0 : index
    %27 = vector.load %arg7[%c0_18, %c3, %c1_19, %c0_20] : memref<4x8x8x32xf32, #tpu.memory_space<vmem>>, vector<1x1x7x32xf32>
    %28 = vector.shape_cast %27 : vector<1x1x7x32xf32> to vector<7x32xf32>
    %29 = vector.shape_cast %26 : vector<7x32xf32> to vector<1x1x7x32xf32>
    tpu.vector_store %arg7[%c0_18, %c3, %c1_19, %c0_20], %29 {strides = array<i32>} : memref<4x8x8x32xf32, #tpu.memory_space<vmem>>, vector<1x1x7x32xf32>,
    %30 = vector.extract_strided_slice %15 {offsets = [21, 0], sizes = [7, 32], strides = [1, 1]} : vector<196x32xf32> to vector<7x32xf32>
    %c0_21 = arith.constant 0 : index
    %c4 = arith.constant 4 : index
    %c1_22 = arith.constant 1 : index
    %c0_23 = arith.constant 0 : index
    %31 = vector.load %arg7[%c0_21, %c4, %c1_22, %c0_23] : memref<4x8x8x32xf32, #tpu.memory_space<vmem>>, vector<1x1x7x32xf32>
    %32 = vector.shape_cast %31 : vector<1x1x7x32xf32> to vector<7x32xf32>
    %33 = vector.shape_cast %30 : vector<7x32xf32> to vector<1x1x7x32xf32>
    tpu.vector_store %arg7[%c0_21, %c4, %c1_22, %c0_23], %33 {strides = array<i32>} : memref<4x8x8x32xf32, #tpu.memory_space<vmem>>, vector<1x1x7x32xf32>,
    %34 = vector.extract_strided_slice %15 {offsets = [28, 0], sizes = [7, 32], strides = [1, 1]} : vector<196x32xf32> to vector<7x32xf32>
    %c0_24 = arith.constant 0 : index
    %c5 = arith.constant 5 : index
    %c1_25 = arith.constant 1 : index
    %c0_26 = arith.constant 0 : index
    %35 = vector.load %arg7[%c0_24, %c5, %c1_25, %c0_26] : memref<4x8x8x32xf32, #tpu.memory_space<vmem>>, vector<1x1x7x32xf32>
    %36 = vector.shape_cast %35 : vector<1x1x7x32xf32> to vector<7x32xf32>
    %37 = vector.shape_cast %34 : vector<7x32xf32> to vector<1x1x7x32xf32>
    tpu.vector_store %arg7[%c0_24, %c5, %c1_25, %c0_26], %37 {strides = array<i32>} : memref<4x8x8x32xf32, #tpu.memory_space<vmem>>, vector<1x1x7x32xf32>,
    %38 = vector.extract_strided_slice %15 {offsets = [35, 0], sizes = [7, 32], strides = [1, 1]} : vector<196x32xf32> to vector<7x32xf32>
    %c0_27 = arith.constant 0 : index
    %c6 = arith.constant 6 : index
    %c1_28 = arith.constant 1 : index
    %c0_29 = arith.constant 0 : index
    %39 = vector.load %arg7[%c0_27, %c6, %c1_28, %c0_29] : memref<4x8x8x32xf32, #tpu.memory_space<vmem>>, vector<1x1x7x32xf32>
    %40 = vector.shape_cast %39 : vector<1x1x7x32xf32> to vector<7x32xf32>
    %41 = vector.shape_cast %38 : vector<7x32xf32> to vector<1x1x7x32xf32>
    tpu.vector_store %arg7[%c0_27, %c6, %c1_28, %c0_29], %41 {strides = array<i32>} : memref<4x8x8x32xf32, #tpu.memory_space<vmem>>, vector<1x1x7x32xf32>,
    %42 = vector.extract_strided_slice %15 {offsets = [42, 0], sizes = [7, 32], strides = [1, 1]} : vector<196x32xf32> to vector<7x32xf32>
    %c0_30 = arith.constant 0 : index
    %c7 = arith.constant 7 : index
    %c1_31 = arith.constant 1 : index
    %c0_32 = arith.constant 0 : index
    %43 = vector.load %arg7[%c0_30, %c7, %c1_31, %c0_32] : memref<4x8x8x32xf32, #tpu.memory_space<vmem>>, vector<1x1x7x32xf32>
    %44 = vector.shape_cast %43 : vector<1x1x7x32xf32> to vector<7x32xf32>
    %45 = vector.shape_cast %42 : vector<7x32xf32> to vector<1x1x7x32xf32>
    tpu.vector_store %arg7[%c0_30, %c7, %c1_31, %c0_32], %45 {strides = array<i32>} : memref<4x8x8x32xf32, #tpu.memory_space<vmem>>, vector<1x1x7x32xf32>,
    %46 = vector.extract_strided_slice %15 {offsets = [49, 0], sizes = [7, 32], strides = [1, 1]} : vector<196x32xf32> to vector<7x32xf32>
    %c1_33 = arith.constant 1 : index
    %c1_34 = arith.constant 1 : index
    %c0_35 = arith.constant 0 : index
    %c0_36 = arith.constant 0 : index
    %47 = vector.load %arg7[%c1_33, %c1_34, %c0_35, %c0_36] : memref<4x8x8x32xf32, #tpu.memory_space<vmem>>, vector<1x1x7x32xf32>
    %48 = vector.shape_cast %47 : vector<1x1x7x32xf32> to vector<7x32xf32>
    %49 = vector.shape_cast %46 : vector<7x32xf32> to vector<1x1x7x32xf32>
    tpu.vector_store %arg7[%c1_33, %c1_34, %c0_35, %c0_36], %49 {strides = array<i32>} : memref<4x8x8x32xf32, #tpu.memory_space<vmem>>, vector<1x1x7x32xf32>,
    %50 = vector.extract_strided_slice %15 {offsets = [56, 0], sizes = [7, 32], strides = [1, 1]} : vector<196x32xf32> to vector<7x32xf32>
    %c1_37 = arith.constant 1 : index
    %c2_38 = arith.constant 2 : index
    %c0_39 = arith.constant 0 : index
    %c0_40 = arith.constant 0 : index
    %51 = vector.load %arg7[%c1_37, %c2_38, %c0_39, %c0_40] : memref<4x8x8x32xf32, #tpu.memory_space<vmem>>, vector<1x1x7x32xf32>
    %52 = vector.shape_cast %51 : vector<1x1x7x32xf32> to vector<7x32xf32>
    %53 = vector.shape_cast %50 : vector<7x32xf32> to vector<1x1x7x32xf32>
    tpu.vector_store %arg7[%c1_37, %c2_38, %c0_39, %c0_40], %53 {strides = array<i32>} : memref<4x8x8x32xf32, #tpu.memory_space<vmem>>, vector<1x1x7x32xf32>,
    %54 = vector.extract_strided_slice %15 {offsets = [63, 0], sizes = [7, 32], strides = [1, 1]} : vector<196x32xf32> to vector<7x32xf32>
    %c1_41 = arith.constant 1 : index
    %c3_42 = arith.constant 3 : index
    %c0_43 = arith.constant 0 : index
    %c0_44 = arith.constant 0 : index
    %55 = vector.load %arg7[%c1_41, %c3_42, %c0_43, %c0_44] : memref<4x8x8x32xf32, #tpu.memory_space<vmem>>, vector<1x1x7x32xf32>
    %56 = vector.shape_cast %55 : vector<1x1x7x32xf32> to vector<7x32xf32>
    %57 = vector.shape_cast %54 : vector<7x32xf32> to vector<1x1x7x32xf32>
    tpu.vector_store %arg7[%c1_41, %c3_42, %c0_43, %c0_44], %57 {strides = array<i32>} : memref<4x8x8x32xf32, #tpu.memory_space<vmem>>, vector<1x1x7x32xf32>,
    %58 = vector.extract_strided_slice %15 {offsets = [70, 0], sizes = [7, 32], strides = [1, 1]} : vector<196x32xf32> to vector<7x32xf32>
    %c1_45 = arith.constant 1 : index
    %c4_46 = arith.constant 4 : index
    %c0_47 = arith.constant 0 : index
    %c0_48 = arith.constant 0 : index
    %59 = vector.load %arg7[%c1_45, %c4_46, %c0_47, %c0_48] : memref<4x8x8x32xf32, #tpu.memory_space<vmem>>, vector<1x1x7x32xf32>
    %60 = vector.shape_cast %59 : vector<1x1x7x32xf32> to vector<7x32xf32>
    %61 = vector.shape_cast %58 : vector<7x32xf32> to vector<1x1x7x32xf32>
    tpu.vector_store %arg7[%c1_45, %c4_46, %c0_47, %c0_48], %61 {strides = array<i32>} : memref<4x8x8x32xf32, #tpu.memory_space<vmem>>, vector<1x1x7x32xf32>,
    %62 = vector.extract_strided_slice %15 {offsets = [77, 0], sizes = [7, 32], strides = [1, 1]} : vector<196x32xf32> to vector<7x32xf32>
    %c1_49 = arith.constant 1 : index
    %c5_50 = arith.constant 5 : index
    %c0_51 = arith.constant 0 : index
    %c0_52 = arith.constant 0 : index
    %63 = vector.load %arg7[%c1_49, %c5_50, %c0_51, %c0_52] : memref<4x8x8x32xf32, #tpu.memory_space<vmem>>, vector<1x1x7x32xf32>
    %64 = vector.shape_cast %63 : vector<1x1x7x32xf32> to vector<7x32xf32>
    %65 = vector.shape_cast %62 : vector<7x32xf32> to vector<1x1x7x32xf32>
    tpu.vector_store %arg7[%c1_49, %c5_50, %c0_51, %c0_52], %65 {strides = array<i32>} : memref<4x8x8x32xf32, #tpu.memory_space<vmem>>, vector<1x1x7x32xf32>,
    %66 = vector.extract_strided_slice %15 {offsets = [84, 0], sizes = [7, 32], strides = [1, 1]} : vector<196x32xf32> to vector<7x32xf32>
    %c1_53 = arith.constant 1 : index
    %c6_54 = arith.constant 6 : index
    %c0_55 = arith.constant 0 : index
    %c0_56 = arith.constant 0 : index
    %67 = vector.load %arg7[%c1_53, %c6_54, %c0_55, %c0_56] : memref<4x8x8x32xf32, #tpu.memory_space<vmem>>, vector<1x1x7x32xf32>
    %68 = vector.shape_cast %67 : vector<1x1x7x32xf32> to vector<7x32xf32>
    %69 = vector.shape_cast %66 : vector<7x32xf32> to vector<1x1x7x32xf32>
    tpu.vector_store %arg7[%c1_53, %c6_54, %c0_55, %c0_56], %69 {strides = array<i32>} : memref<4x8x8x32xf32, #tpu.memory_space<vmem>>, vector<1x1x7x32xf32>,
    %70 = vector.extract_strided_slice %15 {offsets = [91, 0], sizes = [7, 32], strides = [1, 1]} : vector<196x32xf32> to vector<7x32xf32>
    %c1_57 = arith.constant 1 : index
    %c7_58 = arith.constant 7 : index
    %c0_59 = arith.constant 0 : index
    %c0_60 = arith.constant 0 : index
    %71 = vector.load %arg7[%c1_57, %c7_58, %c0_59, %c0_60] : memref<4x8x8x32xf32, #tpu.memory_space<vmem>>, vector<1x1x7x32xf32>
    %72 = vector.shape_cast %71 : vector<1x1x7x32xf32> to vector<7x32xf32>
    %73 = vector.shape_cast %70 : vector<7x32xf32> to vector<1x1x7x32xf32>
    tpu.vector_store %arg7[%c1_57, %c7_58, %c0_59, %c0_60], %73 {strides = array<i32>} : memref<4x8x8x32xf32, #tpu.memory_space<vmem>>, vector<1x1x7x32xf32>,
    %74 = vector.extract_strided_slice %15 {offsets = [98, 0], sizes = [7, 32], strides = [1, 1]} : vector<196x32xf32> to vector<7x32xf32>
    %c2_61 = arith.constant 2 : index
    %c0_62 = arith.constant 0 : index
    %c1_63 = arith.constant 1 : index
    %c0_64 = arith.constant 0 : index
    %75 = vector.load %arg7[%c2_61, %c0_62, %c1_63, %c0_64] : memref<4x8x8x32xf32, #tpu.memory_space<vmem>>, vector<1x1x7x32xf32>
    %76 = vector.shape_cast %75 : vector<1x1x7x32xf32> to vector<7x32xf32>
    %77 = vector.shape_cast %74 : vector<7x32xf32> to vector<1x1x7x32xf32>
    tpu.vector_store %arg7[%c2_61, %c0_62, %c1_63, %c0_64], %77 {strides = array<i32>} : memref<4x8x8x32xf32, #tpu.memory_space<vmem>>, vector<1x1x7x32xf32>,
    %78 = vector.extract_strided_slice %15 {offsets = [105, 0], sizes = [7, 32], strides = [1, 1]} : vector<196x32xf32> to vector<7x32xf32>
    %c2_65 = arith.constant 2 : index
    %c1_66 = arith.constant 1 : index
    %c1_67 = arith.constant 1 : index
    %c0_68 = arith.constant 0 : index
    %79 = vector.load %arg7[%c2_65, %c1_66, %c1_67, %c0_68] : memref<4x8x8x32xf32, #tpu.memory_space<vmem>>, vector<1x1x7x32xf32>
    %80 = vector.shape_cast %79 : vector<1x1x7x32xf32> to vector<7x32xf32>
    %81 = vector.shape_cast %78 : vector<7x32xf32> to vector<1x1x7x32xf32>
    tpu.vector_store %arg7[%c2_65, %c1_66, %c1_67, %c0_68], %81 {strides = array<i32>} : memref<4x8x8x32xf32, #tpu.memory_space<vmem>>, vector<1x1x7x32xf32>,
    %82 = vector.extract_strided_slice %15 {offsets = [112, 0], sizes = [7, 32], strides = [1, 1]} : vector<196x32xf32> to vector<7x32xf32>
    %c2_69 = arith.constant 2 : index
    %c2_70 = arith.constant 2 : index
    %c1_71 = arith.constant 1 : index
    %c0_72 = arith.constant 0 : index
    %83 = vector.load %arg7[%c2_69, %c2_70, %c1_71, %c0_72] : memref<4x8x8x32xf32, #tpu.memory_space<vmem>>, vector<1x1x7x32xf32>
    %84 = vector.shape_cast %83 : vector<1x1x7x32xf32> to vector<7x32xf32>
    %85 = vector.shape_cast %82 : vector<7x32xf32> to vector<1x1x7x32xf32>
    tpu.vector_store %arg7[%c2_69, %c2_70, %c1_71, %c0_72], %85 {strides = array<i32>} : memref<4x8x8x32xf32, #tpu.memory_space<vmem>>, vector<1x1x7x32xf32>,
    %86 = vector.extract_strided_slice %15 {offsets = [119, 0], sizes = [7, 32], strides = [1, 1]} : vector<196x32xf32> to vector<7x32xf32>
    %c2_73 = arith.constant 2 : index
    %c3_74 = arith.constant 3 : index
    %c1_75 = arith.constant 1 : index
    %c0_76 = arith.constant 0 : index
    %87 = vector.load %arg7[%c2_73, %c3_74, %c1_75, %c0_76] : memref<4x8x8x32xf32, #tpu.memory_space<vmem>>, vector<1x1x7x32xf32>
    %88 = vector.shape_cast %87 : vector<1x1x7x32xf32> to vector<7x32xf32>
    %89 = vector.shape_cast %86 : vector<7x32xf32> to vector<1x1x7x32xf32>
    tpu.vector_store %arg7[%c2_73, %c3_74, %c1_75, %c0_76], %89 {strides = array<i32>} : memref<4x8x8x32xf32, #tpu.memory_space<vmem>>, vector<1x1x7x32xf32>,
    %90 = vector.extract_strided_slice %15 {offsets = [126, 0], sizes = [7, 32], strides = [1, 1]} : vector<196x32xf32> to vector<7x32xf32>
    %c2_77 = arith.constant 2 : index
    %c4_78 = arith.constant 4 : index
    %c1_79 = arith.constant 1 : index
    %c0_80 = arith.constant 0 : index
    %91 = vector.load %arg7[%c2_77, %c4_78, %c1_79, %c0_80] : memref<4x8x8x32xf32, #tpu.memory_space<vmem>>, vector<1x1x7x32xf32>
    %92 = vector.shape_cast %91 : vector<1x1x7x32xf32> to vector<7x32xf32>
    %93 = vector.shape_cast %90 : vector<7x32xf32> to vector<1x1x7x32xf32>
    tpu.vector_store %arg7[%c2_77, %c4_78, %c1_79, %c0_80], %93 {strides = array<i32>} : memref<4x8x8x32xf32, #tpu.memory_space<vmem>>, vector<1x1x7x32xf32>,
    %94 = vector.extract_strided_slice %15 {offsets = [133, 0], sizes = [7, 32], strides = [1, 1]} : vector<196x32xf32> to vector<7x32xf32>
    %c2_81 = arith.constant 2 : index
    %c5_82 = arith.constant 5 : index
    %c1_83 = arith.constant 1 : index
    %c0_84 = arith.constant 0 : index
    %95 = vector.load %arg7[%c2_81, %c5_82, %c1_83, %c0_84] : memref<4x8x8x32xf32, #tpu.memory_space<vmem>>, vector<1x1x7x32xf32>
    %96 = vector.shape_cast %95 : vector<1x1x7x32xf32> to vector<7x32xf32>
    %97 = vector.shape_cast %94 : vector<7x32xf32> to vector<1x1x7x32xf32>
    tpu.vector_store %arg7[%c2_81, %c5_82, %c1_83, %c0_84], %97 {strides = array<i32>} : memref<4x8x8x32xf32, #tpu.memory_space<vmem>>, vector<1x1x7x32xf32>,
    %98 = vector.extract_strided_slice %15 {offsets = [140, 0], sizes = [7, 32], strides = [1, 1]} : vector<196x32xf32> to vector<7x32xf32>
    %c2_85 = arith.constant 2 : index
    %c6_86 = arith.constant 6 : index
    %c1_87 = arith.constant 1 : index
    %c0_88 = arith.constant 0 : index
    %99 = vector.load %arg7[%c2_85, %c6_86, %c1_87, %c0_88] : memref<4x8x8x32xf32, #tpu.memory_space<vmem>>, vector<1x1x7x32xf32>
    %100 = vector.shape_cast %99 : vector<1x1x7x32xf32> to vector<7x32xf32>
    %101 = vector.shape_cast %98 : vector<7x32xf32> to vector<1x1x7x32xf32>
    tpu.vector_store %arg7[%c2_85, %c6_86, %c1_87, %c0_88], %101 {strides = array<i32>} : memref<4x8x8x32xf32, #tpu.memory_space<vmem>>, vector<1x1x7x32xf32>,
    %102 = vector.extract_strided_slice %15 {offsets = [147, 0], sizes = [7, 32], strides = [1, 1]} : vector<196x32xf32> to vector<7x32xf32>
    %c3_89 = arith.constant 3 : index
    %c0_90 = arith.constant 0 : index
    %c0_91 = arith.constant 0 : index
    %c0_92 = arith.constant 0 : index
    %103 = vector.load %arg7[%c3_89, %c0_90, %c0_91, %c0_92] : memref<4x8x8x32xf32, #tpu.memory_space<vmem>>, vector<1x1x7x32xf32>
    %104 = vector.shape_cast %103 : vector<1x1x7x32xf32> to vector<7x32xf32>
    %105 = vector.shape_cast %102 : vector<7x32xf32> to vector<1x1x7x32xf32>
    tpu.vector_store %arg7[%c3_89, %c0_90, %c0_91, %c0_92], %105 {strides = array<i32>} : memref<4x8x8x32xf32, #tpu.memory_space<vmem>>, vector<1x1x7x32xf32>,
    %106 = vector.extract_strided_slice %15 {offsets = [154, 0], sizes = [7, 32], strides = [1, 1]} : vector<196x32xf32> to vector<7x32xf32>
    %c3_93 = arith.constant 3 : index
    %c1_94 = arith.constant 1 : index
    %c0_95 = arith.constant 0 : index
    %c0_96 = arith.constant 0 : index
    %107 = vector.load %arg7[%c3_93, %c1_94, %c0_95, %c0_96] : memref<4x8x8x32xf32, #tpu.memory_space<vmem>>, vector<1x1x7x32xf32>
    %108 = vector.shape_cast %107 : vector<1x1x7x32xf32> to vector<7x32xf32>
    %109 = vector.shape_cast %106 : vector<7x32xf32> to vector<1x1x7x32xf32>
    tpu.vector_store %arg7[%c3_93, %c1_94, %c0_95, %c0_96], %109 {strides = array<i32>} : memref<4x8x8x32xf32, #tpu.memory_space<vmem>>, vector<1x1x7x32xf32>,
    %110 = vector.extract_strided_slice %15 {offsets = [161, 0], sizes = [7, 32], strides = [1, 1]} : vector<196x32xf32> to vector<7x32xf32>
    %c3_97 = arith.constant 3 : index
    %c2_98 = arith.constant 2 : index
    %c0_99 = arith.constant 0 : index
    %c0_100 = arith.constant 0 : index
    %111 = vector.load %arg7[%c3_97, %c2_98, %c0_99, %c0_100] : memref<4x8x8x32xf32, #tpu.memory_space<vmem>>, vector<1x1x7x32xf32>
    %112 = vector.shape_cast %111 : vector<1x1x7x32xf32> to vector<7x32xf32>
    %113 = vector.shape_cast %110 : vector<7x32xf32> to vector<1x1x7x32xf32>
    tpu.vector_store %arg7[%c3_97, %c2_98, %c0_99, %c0_100], %113 {strides = array<i32>} : memref<4x8x8x32xf32, #tpu.memory_space<vmem>>, vector<1x1x7x32xf32>,
    %114 = vector.extract_strided_slice %15 {offsets = [168, 0], sizes = [7, 32], strides = [1, 1]} : vector<196x32xf32> to vector<7x32xf32>
    %c3_101 = arith.constant 3 : index
    %c3_102 = arith.constant 3 : index
    %c0_103 = arith.constant 0 : index
    %c0_104 = arith.constant 0 : index
    %115 = vector.load %arg7[%c3_101, %c3_102, %c0_103, %c0_104] : memref<4x8x8x32xf32, #tpu.memory_space<vmem>>, vector<1x1x7x32xf32>
    %116 = vector.shape_cast %115 : vector<1x1x7x32xf32> to vector<7x32xf32>
    %117 = vector.shape_cast %114 : vector<7x32xf32> to vector<1x1x7x32xf32>
    tpu.vector_store %arg7[%c3_101, %c3_102, %c0_103, %c0_104], %117 {strides = array<i32>} : memref<4x8x8x32xf32, #tpu.memory_space<vmem>>, vector<1x1x7x32xf32>,
    %118 = vector.extract_strided_slice %15 {offsets = [175, 0], sizes = [7, 32], strides = [1, 1]} : vector<196x32xf32> to vector<7x32xf32>
    %c3_105 = arith.constant 3 : index
    %c4_106 = arith.constant 4 : index
    %c0_107 = arith.constant 0 : index
    %c0_108 = arith.constant 0 : index
    %119 = vector.load %arg7[%c3_105, %c4_106, %c0_107, %c0_108] : memref<4x8x8x32xf32, #tpu.memory_space<vmem>>, vector<1x1x7x32xf32>
    %120 = vector.shape_cast %119 : vector<1x1x7x32xf32> to vector<7x32xf32>
    %121 = vector.shape_cast %118 : vector<7x32xf32> to vector<1x1x7x32xf32>
    tpu.vector_store %arg7[%c3_105, %c4_106, %c0_107, %c0_108], %121 {strides = array<i32>} : memref<4x8x8x32xf32, #tpu.memory_space<vmem>>, vector<1x1x7x32xf32>,
    %122 = vector.extract_strided_slice %15 {offsets = [182, 0], sizes = [7, 32], strides = [1, 1]} : vector<196x32xf32> to vector<7x32xf32>
    %c3_109 = arith.constant 3 : index
    %c5_110 = arith.constant 5 : index
    %c0_111 = arith.constant 0 : index
    %c0_112 = arith.constant 0 : index
    %123 = vector.load %arg7[%c3_109, %c5_110, %c0_111, %c0_112] : memref<4x8x8x32xf32, #tpu.memory_space<vmem>>, vector<1x1x7x32xf32>
    %124 = vector.shape_cast %123 : vector<1x1x7x32xf32> to vector<7x32xf32>
    %125 = vector.shape_cast %122 : vector<7x32xf32> to vector<1x1x7x32xf32>
    tpu.vector_store %arg7[%c3_109, %c5_110, %c0_111, %c0_112], %125 {strides = array<i32>} : memref<4x8x8x32xf32, #tpu.memory_space<vmem>>, vector<1x1x7x32xf32>,
    %126 = vector.extract_strided_slice %15 {offsets = [189, 0], sizes = [7, 32], strides = [1, 1]} : vector<196x32xf32> to vector<7x32xf32>
    %c3_113 = arith.constant 3 : index
    %c6_114 = arith.constant 6 : index
    %c0_115 = arith.constant 0 : index
    %c0_116 = arith.constant 0 : index
    %127 = vector.load %arg7[%c3_113, %c6_114, %c0_115, %c0_116] : memref<4x8x8x32xf32, #tpu.memory_space<vmem>>, vector<1x1x7x32xf32>
    %128 = vector.shape_cast %127 : vector<1x1x7x32xf32> to vector<7x32xf32>
    %129 = vector.shape_cast %126 : vector<7x32xf32> to vector<1x1x7x32xf32>
    tpu.vector_store %arg7[%c3_113, %c6_114, %c0_115, %c0_116], %129 {strides = array<i32>} : memref<4x8x8x32xf32, #tpu.memory_space<vmem>>, vector<1x1x7x32xf32>,
    %c0_117 = arith.constant 0 : index
    %c0_118 = arith.constant 0 : index
    %c0_119 = arith.constant 0 : index
    %c0_120 = arith.constant 0 : index
    %130 = vector.load %arg7[%c0_117, %c0_118, %c0_119, %c0_120] : memref<4x8x8x32xf32, #tpu.memory_space<vmem>>, vector<1x1x7x32xf32>
    %131 = vector.shape_cast %130 : vector<1x1x7x32xf32> to vector<7x32xf32>
    %c0_121 = arith.constant 0 : index
    %c0_122 = arith.constant 0 : index
    %132 = vector.load %arg8[%c0_121, %c0_122] : memref<196x288xf32, #tpu.memory_space<vmem>>, vector<7x32xf32>
    tpu.vector_store %arg8[%c0_121, %c0_122], %131 {strides = array<i32>} : memref<196x288xf32, #tpu.memory_space<vmem>>, vector<7x32xf32>,
    %c0_123 = arith.constant 0 : index
    %c1_124 = arith.constant 1 : index
    %c0_125 = arith.constant 0 : index
    %c0_126 = arith.constant 0 : index
    %133 = vector.load %arg7[%c0_123, %c1_124, %c0_125, %c0_126] : memref<4x8x8x32xf32, #tpu.memory_space<vmem>>, vector<1x1x7x32xf32>
    %134 = vector.shape_cast %133 : vector<1x1x7x32xf32> to vector<7x32xf32>
    %c7_127 = arith.constant 7 : index
    %c0_128 = arith.constant 0 : index
    %135 = vector.load %arg8[%c7_127, %c0_128] : memref<196x288xf32, #tpu.memory_space<vmem>>, vector<7x32xf32>
    tpu.vector_store %arg8[%c7_127, %c0_128], %134 {strides = array<i32>} : memref<196x288xf32, #tpu.memory_space<vmem>>, vector<7x32xf32>,
    %c0_129 = arith.constant 0 : index
    %c2_130 = arith.constant 2 : index
    %c0_131 = arith.constant 0 : index
    %c0_132 = arith.constant 0 : index
    %136 = vector.load %arg7[%c0_129, %c2_130, %c0_131, %c0_132] : memref<4x8x8x32xf32, #tpu.memory_space<vmem>>, vector<1x1x7x32xf32>
    %137 = vector.shape_cast %136 : vector<1x1x7x32xf32> to vector<7x32xf32>
    %c14 = arith.constant 14 : index
    %c0_133 = arith.constant 0 : index
    %138 = vector.load %arg8[%c14, %c0_133] : memref<196x288xf32, #tpu.memory_space<vmem>>, vector<7x32xf32>
    tpu.vector_store %arg8[%c14, %c0_133], %137 {strides = array<i32>} : memref<196x288xf32, #tpu.memory_space<vmem>>, vector<7x32xf32>,
    %c0_134 = arith.constant 0 : index
    %c3_135 = arith.constant 3 : index
    %c0_136 = arith.constant 0 : index
    %c0_137 = arith.constant 0 : index
    %139 = vector.load %arg7[%c0_134, %c3_135, %c0_136, %c0_137] : memref<4x8x8x32xf32, #tpu.memory_space<vmem>>, vector<1x1x7x32xf32>
    %140 = vector.shape_cast %139 : vector<1x1x7x32xf32> to vector<7x32xf32>
    %c21 = arith.constant 21 : index
    %c0_138 = arith.constant 0 : index
    %141 = vector.load %arg8[%c21, %c0_138] : memref<196x288xf32, #tpu.memory_space<vmem>>, vector<7x32xf32>
    tpu.vector_store %arg8[%c21, %c0_138], %140 {strides = array<i32>} : memref<196x288xf32, #tpu.memory_space<vmem>>, vector<7x32xf32>,
    %c0_139 = arith.constant 0 : index
    %c4_140 = arith.constant 4 : index
    %c0_141 = arith.constant 0 : index
    %c0_142 = arith.constant 0 : index
    %142 = vector.load %arg7[%c0_139, %c4_140, %c0_141, %c0_142] : memref<4x8x8x32xf32, #tpu.memory_space<vmem>>, vector<1x1x7x32xf32>
    %143 = vector.shape_cast %142 : vector<1x1x7x32xf32> to vector<7x32xf32>
    %c28 = arith.constant 28 : index
    %c0_143 = arith.constant 0 : index
    %144 = vector.load %arg8[%c28, %c0_143] : memref<196x288xf32, #tpu.memory_space<vmem>>, vector<7x32xf32>
    tpu.vector_store %arg8[%c28, %c0_143], %143 {strides = array<i32>} : memref<196x288xf32, #tpu.memory_space<vmem>>, vector<7x32xf32>,
    %c0_144 = arith.constant 0 : index
    %c5_145 = arith.constant 5 : index
    %c0_146 = arith.constant 0 : index
    %c0_147 = arith.constant 0 : index
    %145 = vector.load %arg7[%c0_144, %c5_145, %c0_146, %c0_147] : memref<4x8x8x32xf32, #tpu.memory_space<vmem>>, vector<1x1x7x32xf32>
    %146 = vector.shape_cast %145 : vector<1x1x7x32xf32> to vector<7x32xf32>
    %c35 = arith.constant 35 : index
    %c0_148 = arith.constant 0 : index
    %147 = vector.load %arg8[%c35, %c0_148] : memref<196x288xf32, #tpu.memory_space<vmem>>, vector<7x32xf32>
    tpu.vector_store %arg8[%c35, %c0_148], %146 {strides = array<i32>} : memref<196x288xf32, #tpu.memory_space<vmem>>, vector<7x32xf32>,
    %c0_149 = arith.constant 0 : index
    %c6_150 = arith.constant 6 : index
    %c0_151 = arith.constant 0 : index
    %c0_152 = arith.constant 0 : index
    %148 = vector.load %arg7[%c0_149, %c6_150, %c0_151, %c0_152] : memref<4x8x8x32xf32, #tpu.memory_space<vmem>>, vector<1x1x7x32xf32>
    %149 = vector.shape_cast %148 : vector<1x1x7x32xf32> to vector<7x32xf32>
    %c42 = arith.constant 42 : index
    %c0_153 = arith.constant 0 : index
    %150 = vector.load %arg8[%c42, %c0_153] : memref<196x288xf32, #tpu.memory_space<vmem>>, vector<7x32xf32>
    tpu.vector_store %arg8[%c42, %c0_153], %149 {strides = array<i32>} : memref<196x288xf32, #tpu.memory_space<vmem>>, vector<7x32xf32>,
    %c1_154 = arith.constant 1 : index
    %c0_155 = arith.constant 0 : index
    %c0_156 = arith.constant 0 : index
    %c0_157 = arith.constant 0 : index
    %151 = vector.load %arg7[%c1_154, %c0_155, %c0_156, %c0_157] : memref<4x8x8x32xf32, #tpu.memory_space<vmem>>, vector<1x1x7x32xf32>
    %152 = vector.shape_cast %151 : vector<1x1x7x32xf32> to vector<7x32xf32>
    %c0_158 = arith.constant 0 : index
    %c32 = arith.constant 32 : index
    %153 = vector.load %arg8[%c0_158, %c32] : memref<196x288xf32, #tpu.memory_space<vmem>>, vector<7x32xf32>
    tpu.vector_store %arg8[%c0_158, %c32], %152 {strides = array<i32>} : memref<196x288xf32, #tpu.memory_space<vmem>>, vector<7x32xf32>,
    %c1_159 = arith.constant 1 : index
    %c1_160 = arith.constant 1 : index
    %c0_161 = arith.constant 0 : index
    %c0_162 = arith.constant 0 : index
    %154 = vector.load %arg7[%c1_159, %c1_160, %c0_161, %c0_162] : memref<4x8x8x32xf32, #tpu.memory_space<vmem>>, vector<1x1x7x32xf32>
    %155 = vector.shape_cast %154 : vector<1x1x7x32xf32> to vector<7x32xf32>
    %c7_163 = arith.constant 7 : index
    %c32_164 = arith.constant 32 : index
    %156 = vector.load %arg8[%c7_163, %c32_164] : memref<196x288xf32, #tpu.memory_space<vmem>>, vector<7x32xf32>
    tpu.vector_store %arg8[%c7_163, %c32_164], %155 {strides = array<i32>} : memref<196x288xf32, #tpu.memory_space<vmem>>, vector<7x32xf32>,
    %c1_165 = arith.constant 1 : index
    %c2_166 = arith.constant 2 : index
    %c0_167 = arith.constant 0 : index
    %c0_168 = arith.constant 0 : index
    %157 = vector.load %arg7[%c1_165, %c2_166, %c0_167, %c0_168] : memref<4x8x8x32xf32, #tpu.memory_space<vmem>>, vector<1x1x7x32xf32>
    %158 = vector.shape_cast %157 : vector<1x1x7x32xf32> to vector<7x32xf32>
    %c14_169 = arith.constant 14 : index
    %c32_170 = arith.constant 32 : index
    %159 = vector.load %arg8[%c14_169, %c32_170] : memref<196x288xf32, #tpu.memory_space<vmem>>, vector<7x32xf32>
    tpu.vector_store %arg8[%c14_169, %c32_170], %158 {strides = array<i32>} : memref<196x288xf32, #tpu.memory_space<vmem>>, vector<7x32xf32>,
    %c1_171 = arith.constant 1 : index
    %c3_172 = arith.constant 3 : index
    %c0_173 = arith.constant 0 : index
    %c0_174 = arith.constant 0 : index
    %160 = vector.load %arg7[%c1_171, %c3_172, %c0_173, %c0_174] : memref<4x8x8x32xf32, #tpu.memory_space<vmem>>, vector<1x1x7x32xf32>
    %161 = vector.shape_cast %160 : vector<1x1x7x32xf32> to vector<7x32xf32>
    %c21_175 = arith.constant 21 : index
    %c32_176 = arith.constant 32 : index
    %162 = vector.load %arg8[%c21_175, %c32_176] : memref<196x288xf32, #tpu.memory_space<vmem>>, vector<7x32xf32>
    tpu.vector_store %arg8[%c21_175, %c32_176], %161 {strides = array<i32>} : memref<196x288xf32, #tpu.memory_space<vmem>>, vector<7x32xf32>,
    %c1_177 = arith.constant 1 : index
    %c4_178 = arith.constant 4 : index
    %c0_179 = arith.constant 0 : index
    %c0_180 = arith.constant 0 : index
    %163 = vector.load %arg7[%c1_177, %c4_178, %c0_179, %c0_180] : memref<4x8x8x32xf32, #tpu.memory_space<vmem>>, vector<1x1x7x32xf32>
    %164 = vector.shape_cast %163 : vector<1x1x7x32xf32> to vector<7x32xf32>
    %c28_181 = arith.constant 28 : index
    %c32_182 = arith.constant 32 : index
    %165 = vector.load %arg8[%c28_181, %c32_182] : memref<196x288xf32, #tpu.memory_space<vmem>>, vector<7x32xf32>
    tpu.vector_store %arg8[%c28_181, %c32_182], %164 {strides = array<i32>} : memref<196x288xf32, #tpu.memory_space<vmem>>, vector<7x32xf32>,
    %c1_183 = arith.constant 1 : index
    %c5_184 = arith.constant 5 : index
    %c0_185 = arith.constant 0 : index
    %c0_186 = arith.constant 0 : index
    %166 = vector.load %arg7[%c1_183, %c5_184, %c0_185, %c0_186] : memref<4x8x8x32xf32, #tpu.memory_space<vmem>>, vector<1x1x7x32xf32>
    %167 = vector.shape_cast %166 : vector<1x1x7x32xf32> to vector<7x32xf32>
    %c35_187 = arith.constant 35 : index
    %c32_188 = arith.constant 32 : index
    %168 = vector.load %arg8[%c35_187, %c32_188] : memref<196x288xf32, #tpu.memory_space<vmem>>, vector<7x32xf32>
    tpu.vector_store %arg8[%c35_187, %c32_188], %167 {strides = array<i32>} : memref<196x288xf32, #tpu.memory_space<vmem>>, vector<7x32xf32>,
    %c1_189 = arith.constant 1 : index
    %c6_190 = arith.constant 6 : index
    %c0_191 = arith.constant 0 : index
    %c0_192 = arith.constant 0 : index
    %169 = vector.load %arg7[%c1_189, %c6_190, %c0_191, %c0_192] : memref<4x8x8x32xf32, #tpu.memory_space<vmem>>, vector<1x1x7x32xf32>
    %170 = vector.shape_cast %169 : vector<1x1x7x32xf32> to vector<7x32xf32>
    %c42_193 = arith.constant 42 : index
    %c32_194 = arith.constant 32 : index
    %171 = vector.load %arg8[%c42_193, %c32_194] : memref<196x288xf32, #tpu.memory_space<vmem>>, vector<7x32xf32>
    tpu.vector_store %arg8[%c42_193, %c32_194], %170 {strides = array<i32>} : memref<196x288xf32, #tpu.memory_space<vmem>>, vector<7x32xf32>,
    %c0_195 = arith.constant 0 : index
    %c0_196 = arith.constant 0 : index
    %c1_197 = arith.constant 1 : index
    %c0_198 = arith.constant 0 : index
    %172 = vector.load %arg7[%c0_195, %c0_196, %c1_197, %c0_198] : memref<4x8x8x32xf32, #tpu.memory_space<vmem>>, vector<1x1x7x32xf32>
    %173 = vector.shape_cast %172 : vector<1x1x7x32xf32> to vector<7x32xf32>
    %c0_199 = arith.constant 0 : index
    %c64 = arith.constant 64 : index
    %174 = vector.load %arg8[%c0_199, %c64] : memref<196x288xf32, #tpu.memory_space<vmem>>, vector<7x32xf32>
    tpu.vector_store %arg8[%c0_199, %c64], %173 {strides = array<i32>} : memref<196x288xf32, #tpu.memory_space<vmem>>, vector<7x32xf32>,
    %c0_200 = arith.constant 0 : index
    %c1_201 = arith.constant 1 : index
    %c1_202 = arith.constant 1 : index
    %c0_203 = arith.constant 0 : index
    %175 = vector.load %arg7[%c0_200, %c1_201, %c1_202, %c0_203] : memref<4x8x8x32xf32, #tpu.memory_space<vmem>>, vector<1x1x7x32xf32>
    %176 = vector.shape_cast %175 : vector<1x1x7x32xf32> to vector<7x32xf32>
    %c7_204 = arith.constant 7 : index
    %c64_205 = arith.constant 64 : index
    %177 = vector.load %arg8[%c7_204, %c64_205] : memref<196x288xf32, #tpu.memory_space<vmem>>, vector<7x32xf32>
    tpu.vector_store %arg8[%c7_204, %c64_205], %176 {strides = array<i32>} : memref<196x288xf32, #tpu.memory_space<vmem>>, vector<7x32xf32>,
    %c0_206 = arith.constant 0 : index
    %c2_207 = arith.constant 2 : index
    %c1_208 = arith.constant 1 : index
    %c0_209 = arith.constant 0 : index
    %178 = vector.load %arg7[%c0_206, %c2_207, %c1_208, %c0_209] : memref<4x8x8x32xf32, #tpu.memory_space<vmem>>, vector<1x1x7x32xf32>
    %179 = vector.shape_cast %178 : vector<1x1x7x32xf32> to vector<7x32xf32>
    %c14_210 = arith.constant 14 : index
    %c64_211 = arith.constant 64 : index
    %180 = vector.load %arg8[%c14_210, %c64_211] : memref<196x288xf32, #tpu.memory_space<vmem>>, vector<7x32xf32>
    tpu.vector_store %arg8[%c14_210, %c64_211], %179 {strides = array<i32>} : memref<196x288xf32, #tpu.memory_space<vmem>>, vector<7x32xf32>,
    %c0_212 = arith.constant 0 : index
    %c3_213 = arith.constant 3 : index
    %c1_214 = arith.constant 1 : index
    %c0_215 = arith.constant 0 : index
    %181 = vector.load %arg7[%c0_212, %c3_213, %c1_214, %c0_215] : memref<4x8x8x32xf32, #tpu.memory_space<vmem>>, vector<1x1x7x32xf32>
    %182 = vector.shape_cast %181 : vector<1x1x7x32xf32> to vector<7x32xf32>
    %c21_216 = arith.constant 21 : index
    %c64_217 = arith.constant 64 : index
    %183 = vector.load %arg8[%c21_216, %c64_217] : memref<196x288xf32, #tpu.memory_space<vmem>>, vector<7x32xf32>
    tpu.vector_store %arg8[%c21_216, %c64_217], %182 {strides = array<i32>} : memref<196x288xf32, #tpu.memory_space<vmem>>, vector<7x32xf32>,
    %c0_218 = arith.constant 0 : index
    %c4_219 = arith.constant 4 : index
    %c1_220 = arith.constant 1 : index
    %c0_221 = arith.constant 0 : index
    %184 = vector.load %arg7[%c0_218, %c4_219, %c1_220, %c0_221] : memref<4x8x8x32xf32, #tpu.memory_space<vmem>>, vector<1x1x7x32xf32>
    %185 = vector.shape_cast %184 : vector<1x1x7x32xf32> to vector<7x32xf32>
    %c28_222 = arith.constant 28 : index
    %c64_223 = arith.constant 64 : index
    %186 = vector.load %arg8[%c28_222, %c64_223] : memref<196x288xf32, #tpu.memory_space<vmem>>, vector<7x32xf32>
    tpu.vector_store %arg8[%c28_222, %c64_223], %185 {strides = array<i32>} : memref<196x288xf32, #tpu.memory_space<vmem>>, vector<7x32xf32>,
    %c0_224 = arith.constant 0 : index
    %c5_225 = arith.constant 5 : index
    %c1_226 = arith.constant 1 : index
    %c0_227 = arith.constant 0 : index
    %187 = vector.load %arg7[%c0_224, %c5_225, %c1_226, %c0_227] : memref<4x8x8x32xf32, #tpu.memory_space<vmem>>, vector<1x1x7x32xf32>
    %188 = vector.shape_cast %187 : vector<1x1x7x32xf32> to vector<7x32xf32>
    %c35_228 = arith.constant 35 : index
    %c64_229 = arith.constant 64 : index
    %189 = vector.load %arg8[%c35_228, %c64_229] : memref<196x288xf32, #tpu.memory_space<vmem>>, vector<7x32xf32>
    tpu.vector_store %arg8[%c35_228, %c64_229], %188 {strides = array<i32>} : memref<196x288xf32, #tpu.memory_space<vmem>>, vector<7x32xf32>,
    %c0_230 = arith.constant 0 : index
    %c6_231 = arith.constant 6 : index
    %c1_232 = arith.constant 1 : index
    %c0_233 = arith.constant 0 : index
    %190 = vector.load %arg7[%c0_230, %c6_231, %c1_232, %c0_233] : memref<4x8x8x32xf32, #tpu.memory_space<vmem>>, vector<1x1x7x32xf32>
    %191 = vector.shape_cast %190 : vector<1x1x7x32xf32> to vector<7x32xf32>
    %c42_234 = arith.constant 42 : index
    %c64_235 = arith.constant 64 : index
    %192 = vector.load %arg8[%c42_234, %c64_235] : memref<196x288xf32, #tpu.memory_space<vmem>>, vector<7x32xf32>
    tpu.vector_store %arg8[%c42_234, %c64_235], %191 {strides = array<i32>} : memref<196x288xf32, #tpu.memory_space<vmem>>, vector<7x32xf32>,
    %c2_236 = arith.constant 2 : index
    %c0_237 = arith.constant 0 : index
    %c0_238 = arith.constant 0 : index
    %c0_239 = arith.constant 0 : index
    %193 = vector.load %arg7[%c2_236, %c0_237, %c0_238, %c0_239] : memref<4x8x8x32xf32, #tpu.memory_space<vmem>>, vector<1x1x7x32xf32>
    %194 = vector.shape_cast %193 : vector<1x1x7x32xf32> to vector<7x32xf32>
    %c0_240 = arith.constant 0 : index
    %c96 = arith.constant 96 : index
    %195 = vector.load %arg8[%c0_240, %c96] : memref<196x288xf32, #tpu.memory_space<vmem>>, vector<7x32xf32>
    tpu.vector_store %arg8[%c0_240, %c96], %194 {strides = array<i32>} : memref<196x288xf32, #tpu.memory_space<vmem>>, vector<7x32xf32>,
    %c2_241 = arith.constant 2 : index
    %c1_242 = arith.constant 1 : index
    %c0_243 = arith.constant 0 : index
    %c0_244 = arith.constant 0 : index
    %196 = vector.load %arg7[%c2_241, %c1_242, %c0_243, %c0_244] : memref<4x8x8x32xf32, #tpu.memory_space<vmem>>, vector<1x1x7x32xf32>
    %197 = vector.shape_cast %196 : vector<1x1x7x32xf32> to vector<7x32xf32>
    %c7_245 = arith.constant 7 : index
    %c96_246 = arith.constant 96 : index
    %198 = vector.load %arg8[%c7_245, %c96_246] : memref<196x288xf32, #tpu.memory_space<vmem>>, vector<7x32xf32>
    tpu.vector_store %arg8[%c7_245, %c96_246], %197 {strides = array<i32>} : memref<196x288xf32, #tpu.memory_space<vmem>>, vector<7x32xf32>,
    %c2_247 = arith.constant 2 : index
    %c2_248 = arith.constant 2 : index
    %c0_249 = arith.constant 0 : index
    %c0_250 = arith.constant 0 : index
    %199 = vector.load %arg7[%c2_247, %c2_248, %c0_249, %c0_250] : memref<4x8x8x32xf32, #tpu.memory_space<vmem>>, vector<1x1x7x32xf32>
    %200 = vector.shape_cast %199 : vector<1x1x7x32xf32> to vector<7x32xf32>
    %c14_251 = arith.constant 14 : index
    %c96_252 = arith.constant 96 : index
    %201 = vector.load %arg8[%c14_251, %c96_252] : memref<196x288xf32, #tpu.memory_space<vmem>>, vector<7x32xf32>
    tpu.vector_store %arg8[%c14_251, %c96_252], %200 {strides = array<i32>} : memref<196x288xf32, #tpu.memory_space<vmem>>, vector<7x32xf32>,
    %c2_253 = arith.constant 2 : index
    %c3_254 = arith.constant 3 : index
    %c0_255 = arith.constant 0 : index
    %c0_256 = arith.constant 0 : index
    %202 = vector.load %arg7[%c2_253, %c3_254, %c0_255, %c0_256] : memref<4x8x8x32xf32, #tpu.memory_space<vmem>>, vector<1x1x7x32xf32>
    %203 = vector.shape_cast %202 : vector<1x1x7x32xf32> to vector<7x32xf32>
    %c21_257 = arith.constant 21 : index
    %c96_258 = arith.constant 96 : index
    %204 = vector.load %arg8[%c21_257, %c96_258] : memref<196x288xf32, #tpu.memory_space<vmem>>, vector<7x32xf32>
    tpu.vector_store %arg8[%c21_257, %c96_258], %203 {strides = array<i32>} : memref<196x288xf32, #tpu.memory_space<vmem>>, vector<7x32xf32>,
    %c2_259 = arith.constant 2 : index
    %c4_260 = arith.constant 4 : index
    %c0_261 = arith.constant 0 : index
    %c0_262 = arith.constant 0 : index
    %205 = vector.load %arg7[%c2_259, %c4_260, %c0_261, %c0_262] : memref<4x8x8x32xf32, #tpu.memory_space<vmem>>, vector<1x1x7x32xf32>
    %206 = vector.shape_cast %205 : vector<1x1x7x32xf32> to vector<7x32xf32>
    %c28_263 = arith.constant 28 : index
    %c96_264 = arith.constant 96 : index
    %207 = vector.load %arg8[%c28_263, %c96_264] : memref<196x288xf32, #tpu.memory_space<vmem>>, vector<7x32xf32>
    tpu.vector_store %arg8[%c28_263, %c96_264], %206 {strides = array<i32>} : memref<196x288xf32, #tpu.memory_space<vmem>>, vector<7x32xf32>,
    %c2_265 = arith.constant 2 : index
    %c5_266 = arith.constant 5 : index
    %c0_267 = arith.constant 0 : index
    %c0_268 = arith.constant 0 : index
    %208 = vector.load %arg7[%c2_265, %c5_266, %c0_267, %c0_268] : memref<4x8x8x32xf32, #tpu.memory_space<vmem>>, vector<1x1x7x32xf32>
    %209 = vector.shape_cast %208 : vector<1x1x7x32xf32> to vector<7x32xf32>
    %c35_269 = arith.constant 35 : index
    %c96_270 = arith.constant 96 : index
    %210 = vector.load %arg8[%c35_269, %c96_270] : memref<196x288xf32, #tpu.memory_space<vmem>>, vector<7x32xf32>
    tpu.vector_store %arg8[%c35_269, %c96_270], %209 {strides = array<i32>} : memref<196x288xf32, #tpu.memory_space<vmem>>, vector<7x32xf32>,
    %c2_271 = arith.constant 2 : index
    %c6_272 = arith.constant 6 : index
    %c0_273 = arith.constant 0 : index
    %c0_274 = arith.constant 0 : index
    %211 = vector.load %arg7[%c2_271, %c6_272, %c0_273, %c0_274] : memref<4x8x8x32xf32, #tpu.memory_space<vmem>>, vector<1x1x7x32xf32>
    %212 = vector.shape_cast %211 : vector<1x1x7x32xf32> to vector<7x32xf32>
    %c42_275 = arith.constant 42 : index
    %c96_276 = arith.constant 96 : index
    %213 = vector.load %arg8[%c42_275, %c96_276] : memref<196x288xf32, #tpu.memory_space<vmem>>, vector<7x32xf32>
    tpu.vector_store %arg8[%c42_275, %c96_276], %212 {strides = array<i32>} : memref<196x288xf32, #tpu.memory_space<vmem>>, vector<7x32xf32>,
    %c3_277 = arith.constant 3 : index
    %c0_278 = arith.constant 0 : index
    %c0_279 = arith.constant 0 : index
    %c0_280 = arith.constant 0 : index
    %214 = vector.load %arg7[%c3_277, %c0_278, %c0_279, %c0_280] : memref<4x8x8x32xf32, #tpu.memory_space<vmem>>, vector<1x1x7x32xf32>
    %215 = vector.shape_cast %214 : vector<1x1x7x32xf32> to vector<7x32xf32>
    %c0_281 = arith.constant 0 : index
    %c128 = arith.constant 128 : index
    %216 = vector.load %arg8[%c0_281, %c128] : memref<196x288xf32, #tpu.memory_space<vmem>>, vector<7x32xf32>
    tpu.vector_store %arg8[%c0_281, %c128], %215 {strides = array<i32>} : memref<196x288xf32, #tpu.memory_space<vmem>>, vector<7x32xf32>,
    %c3_282 = arith.constant 3 : index
    %c1_283 = arith.constant 1 : index
    %c0_284 = arith.constant 0 : index
    %c0_285 = arith.constant 0 : index
    %217 = vector.load %arg7[%c3_282, %c1_283, %c0_284, %c0_285] : memref<4x8x8x32xf32, #tpu.memory_space<vmem>>, vector<1x1x7x32xf32>
    %218 = vector.shape_cast %217 : vector<1x1x7x32xf32> to vector<7x32xf32>
    %c7_286 = arith.constant 7 : index
    %c128_287 = arith.constant 128 : index
    %219 = vector.load %arg8[%c7_286, %c128_287] : memref<196x288xf32, #tpu.memory_space<vmem>>, vector<7x32xf32>
    tpu.vector_store %arg8[%c7_286, %c128_287], %218 {strides = array<i32>} : memref<196x288xf32, #tpu.memory_space<vmem>>, vector<7x32xf32>,
    %c3_288 = arith.constant 3 : index
    %c2_289 = arith.constant 2 : index
    %c0_290 = arith.constant 0 : index
    %c0_291 = arith.constant 0 : index
    %220 = vector.load %arg7[%c3_288, %c2_289, %c0_290, %c0_291] : memref<4x8x8x32xf32, #tpu.memory_space<vmem>>, vector<1x1x7x32xf32>
    %221 = vector.shape_cast %220 : vector<1x1x7x32xf32> to vector<7x32xf32>
    %c14_292 = arith.constant 14 : index
    %c128_293 = arith.constant 128 : index
    %222 = vector.load %arg8[%c14_292, %c128_293] : memref<196x288xf32, #tpu.memory_space<vmem>>, vector<7x32xf32>
    tpu.vector_store %arg8[%c14_292, %c128_293], %221 {strides = array<i32>} : memref<196x288xf32, #tpu.memory_space<vmem>>, vector<7x32xf32>,
    %c3_294 = arith.constant 3 : index
    %c3_295 = arith.constant 3 : index
    %c0_296 = arith.constant 0 : index
    %c0_297 = arith.constant 0 : index
    %223 = vector.load %arg7[%c3_294, %c3_295, %c0_296, %c0_297] : memref<4x8x8x32xf32, #tpu.memory_space<vmem>>, vector<1x1x7x32xf32>
    %224 = vector.shape_cast %223 : vector<1x1x7x32xf32> to vector<7x32xf32>
    %c21_298 = arith.constant 21 : index
    %c128_299 = arith.constant 128 : index
    %225 = vector.load %arg8[%c21_298, %c128_299] : memref<196x288xf32, #tpu.memory_space<vmem>>, vector<7x32xf32>
    tpu.vector_store %arg8[%c21_298, %c128_299], %224 {strides = array<i32>} : memref<196x288xf32, #tpu.memory_space<vmem>>, vector<7x32xf32>,
    %c3_300 = arith.constant 3 : index
    %c4_301 = arith.constant 4 : index
    %c0_302 = arith.constant 0 : index
    %c0_303 = arith.constant 0 : index
    %226 = vector.load %arg7[%c3_300, %c4_301, %c0_302, %c0_303] : memref<4x8x8x32xf32, #tpu.memory_space<vmem>>, vector<1x1x7x32xf32>
    %227 = vector.shape_cast %226 : vector<1x1x7x32xf32> to vector<7x32xf32>
    %c28_304 = arith.constant 28 : index
    %c128_305 = arith.constant 128 : index
    %228 = vector.load %arg8[%c28_304, %c128_305] : memref<196x288xf32, #tpu.memory_space<vmem>>, vector<7x32xf32>
    tpu.vector_store %arg8[%c28_304, %c128_305], %227 {strides = array<i32>} : memref<196x288xf32, #tpu.memory_space<vmem>>, vector<7x32xf32>,
    %c3_306 = arith.constant 3 : index
    %c5_307 = arith.constant 5 : index
    %c0_308 = arith.constant 0 : index
    %c0_309 = arith.constant 0 : index
    %229 = vector.load %arg7[%c3_306, %c5_307, %c0_308, %c0_309] : memref<4x8x8x32xf32, #tpu.memory_space<vmem>>, vector<1x1x7x32xf32>
    %230 = vector.shape_cast %229 : vector<1x1x7x32xf32> to vector<7x32xf32>
    %c35_310 = arith.constant 35 : index
    %c128_311 = arith.constant 128 : index
    %231 = vector.load %arg8[%c35_310, %c128_311] : memref<196x288xf32, #tpu.memory_space<vmem>>, vector<7x32xf32>
    tpu.vector_store %arg8[%c35_310, %c128_311], %230 {strides = array<i32>} : memref<196x288xf32, #tpu.memory_space<vmem>>, vector<7x32xf32>,
    %c3_312 = arith.constant 3 : index
    %c6_313 = arith.constant 6 : index
    %c0_314 = arith.constant 0 : index
    %c0_315 = arith.constant 0 : index
    %232 = vector.load %arg7[%c3_312, %c6_313, %c0_314, %c0_315] : memref<4x8x8x32xf32, #tpu.memory_space<vmem>>, vector<1x1x7x32xf32>
    %233 = vector.shape_cast %232 : vector<1x1x7x32xf32> to vector<7x32xf32>
    %c42_316 = arith.constant 42 : index
    %c128_317 = arith.constant 128 : index
    %234 = vector.load %arg8[%c42_316, %c128_317] : memref<196x288xf32, #tpu.memory_space<vmem>>, vector<7x32xf32>
    tpu.vector_store %arg8[%c42_316, %c128_317], %233 {strides = array<i32>} : memref<196x288xf32, #tpu.memory_space<vmem>>, vector<7x32xf32>,
    %c2_318 = arith.constant 2 : index
    %c0_319 = arith.constant 0 : index
    %c1_320 = arith.constant 1 : index
    %c0_321 = arith.constant 0 : index
    %235 = vector.load %arg7[%c2_318, %c0_319, %c1_320, %c0_321] : memref<4x8x8x32xf32, #tpu.memory_space<vmem>>, vector<1x1x7x32xf32>
    %236 = vector.shape_cast %235 : vector<1x1x7x32xf32> to vector<7x32xf32>
    %c0_322 = arith.constant 0 : index
    %c160 = arith.constant 160 : index
    %237 = vector.load %arg8[%c0_322, %c160] : memref<196x288xf32, #tpu.memory_space<vmem>>, vector<7x32xf32>
    tpu.vector_store %arg8[%c0_322, %c160], %236 {strides = array<i32>} : memref<196x288xf32, #tpu.memory_space<vmem>>, vector<7x32xf32>,
    %c2_323 = arith.constant 2 : index
    %c1_324 = arith.constant 1 : index
    %c1_325 = arith.constant 1 : index
    %c0_326 = arith.constant 0 : index
    %238 = vector.load %arg7[%c2_323, %c1_324, %c1_325, %c0_326] : memref<4x8x8x32xf32, #tpu.memory_space<vmem>>, vector<1x1x7x32xf32>
    %239 = vector.shape_cast %238 : vector<1x1x7x32xf32> to vector<7x32xf32>
    %c7_327 = arith.constant 7 : index
    %c160_328 = arith.constant 160 : index
    %240 = vector.load %arg8[%c7_327, %c160_328] : memref<196x288xf32, #tpu.memory_space<vmem>>, vector<7x32xf32>
    tpu.vector_store %arg8[%c7_327, %c160_328], %239 {strides = array<i32>} : memref<196x288xf32, #tpu.memory_space<vmem>>, vector<7x32xf32>,
    %c2_329 = arith.constant 2 : index
    %c2_330 = arith.constant 2 : index
    %c1_331 = arith.constant 1 : index
    %c0_332 = arith.constant 0 : index
    %241 = vector.load %arg7[%c2_329, %c2_330, %c1_331, %c0_332] : memref<4x8x8x32xf32, #tpu.memory_space<vmem>>, vector<1x1x7x32xf32>
    %242 = vector.shape_cast %241 : vector<1x1x7x32xf32> to vector<7x32xf32>
    %c14_333 = arith.constant 14 : index
    %c160_334 = arith.constant 160 : index
    %243 = vector.load %arg8[%c14_333, %c160_334] : memref<196x288xf32, #tpu.memory_space<vmem>>, vector<7x32xf32>
    tpu.vector_store %arg8[%c14_333, %c160_334], %242 {strides = array<i32>} : memref<196x288xf32, #tpu.memory_space<vmem>>, vector<7x32xf32>,
    %c2_335 = arith.constant 2 : index
    %c3_336 = arith.constant 3 : index
    %c1_337 = arith.constant 1 : index
    %c0_338 = arith.constant 0 : index
    %244 = vector.load %arg7[%c2_335, %c3_336, %c1_337, %c0_338] : memref<4x8x8x32xf32, #tpu.memory_space<vmem>>, vector<1x1x7x32xf32>
    %245 = vector.shape_cast %244 : vector<1x1x7x32xf32> to vector<7x32xf32>
    %c21_339 = arith.constant 21 : index
    %c160_340 = arith.constant 160 : index
    %246 = vector.load %arg8[%c21_339, %c160_340] : memref<196x288xf32, #tpu.memory_space<vmem>>, vector<7x32xf32>
    tpu.vector_store %arg8[%c21_339, %c160_340], %245 {strides = array<i32>} : memref<196x288xf32, #tpu.memory_space<vmem>>, vector<7x32xf32>,
    %c2_341 = arith.constant 2 : index
    %c4_342 = arith.constant 4 : index
    %c1_343 = arith.constant 1 : index
    %c0_344 = arith.constant 0 : index
    %247 = vector.load %arg7[%c2_341, %c4_342, %c1_343, %c0_344] : memref<4x8x8x32xf32, #tpu.memory_space<vmem>>, vector<1x1x7x32xf32>
    %248 = vector.shape_cast %247 : vector<1x1x7x32xf32> to vector<7x32xf32>
    %c28_345 = arith.constant 28 : index
    %c160_346 = arith.constant 160 : index
    %249 = vector.load %arg8[%c28_345, %c160_346] : memref<196x288xf32, #tpu.memory_space<vmem>>, vector<7x32xf32>
    tpu.vector_store %arg8[%c28_345, %c160_346], %248 {strides = array<i32>} : memref<196x288xf32, #tpu.memory_space<vmem>>, vector<7x32xf32>,
    %c2_347 = arith.constant 2 : index
    %c5_348 = arith.constant 5 : index
    %c1_349 = arith.constant 1 : index
    %c0_350 = arith.constant 0 : index
    %250 = vector.load %arg7[%c2_347, %c5_348, %c1_349, %c0_350] : memref<4x8x8x32xf32, #tpu.memory_space<vmem>>, vector<1x1x7x32xf32>
    %251 = vector.shape_cast %250 : vector<1x1x7x32xf32> to vector<7x32xf32>
    %c35_351 = arith.constant 35 : index
    %c160_352 = arith.constant 160 : index
    %252 = vector.load %arg8[%c35_351, %c160_352] : memref<196x288xf32, #tpu.memory_space<vmem>>, vector<7x32xf32>
    tpu.vector_store %arg8[%c35_351, %c160_352], %251 {strides = array<i32>} : memref<196x288xf32, #tpu.memory_space<vmem>>, vector<7x32xf32>,
    %c2_353 = arith.constant 2 : index
    %c6_354 = arith.constant 6 : index
    %c1_355 = arith.constant 1 : index
    %c0_356 = arith.constant 0 : index
    %253 = vector.load %arg7[%c2_353, %c6_354, %c1_355, %c0_356] : memref<4x8x8x32xf32, #tpu.memory_space<vmem>>, vector<1x1x7x32xf32>
    %254 = vector.shape_cast %253 : vector<1x1x7x32xf32> to vector<7x32xf32>
    %c42_357 = arith.constant 42 : index
    %c160_358 = arith.constant 160 : index
    %255 = vector.load %arg8[%c42_357, %c160_358] : memref<196x288xf32, #tpu.memory_space<vmem>>, vector<7x32xf32>
    tpu.vector_store %arg8[%c42_357, %c160_358], %254 {strides = array<i32>} : memref<196x288xf32, #tpu.memory_space<vmem>>, vector<7x32xf32>,
    %c0_359 = arith.constant 0 : index
    %c1_360 = arith.constant 1 : index
    %c0_361 = arith.constant 0 : index
    %c0_362 = arith.constant 0 : index
    %256 = vector.load %arg7[%c0_359, %c1_360, %c0_361, %c0_362] : memref<4x8x8x32xf32, #tpu.memory_space<vmem>>, vector<1x1x7x32xf32>
    %257 = vector.shape_cast %256 : vector<1x1x7x32xf32> to vector<7x32xf32>
    %c0_363 = arith.constant 0 : index
    %c192 = arith.constant 192 : index
    %258 = vector.load %arg8[%c0_363, %c192] : memref<196x288xf32, #tpu.memory_space<vmem>>, vector<7x32xf32>
    tpu.vector_store %arg8[%c0_363, %c192], %257 {strides = array<i32>} : memref<196x288xf32, #tpu.memory_space<vmem>>, vector<7x32xf32>,
    %c0_364 = arith.constant 0 : index
    %c2_365 = arith.constant 2 : index
    %c0_366 = arith.constant 0 : index
    %c0_367 = arith.constant 0 : index
    %259 = vector.load %arg7[%c0_364, %c2_365, %c0_366, %c0_367] : memref<4x8x8x32xf32, #tpu.memory_space<vmem>>, vector<1x1x7x32xf32>
    %260 = vector.shape_cast %259 : vector<1x1x7x32xf32> to vector<7x32xf32>
    %c7_368 = arith.constant 7 : index
    %c192_369 = arith.constant 192 : index
    %261 = vector.load %arg8[%c7_368, %c192_369] : memref<196x288xf32, #tpu.memory_space<vmem>>, vector<7x32xf32>
    tpu.vector_store %arg8[%c7_368, %c192_369], %260 {strides = array<i32>} : memref<196x288xf32, #tpu.memory_space<vmem>>, vector<7x32xf32>,
    %c0_370 = arith.constant 0 : index
    %c3_371 = arith.constant 3 : index
    %c0_372 = arith.constant 0 : index
    %c0_373 = arith.constant 0 : index
    %262 = vector.load %arg7[%c0_370, %c3_371, %c0_372, %c0_373] : memref<4x8x8x32xf32, #tpu.memory_space<vmem>>, vector<1x1x7x32xf32>
    %263 = vector.shape_cast %262 : vector<1x1x7x32xf32> to vector<7x32xf32>
    %c14_374 = arith.constant 14 : index
    %c192_375 = arith.constant 192 : index
    %264 = vector.load %arg8[%c14_374, %c192_375] : memref<196x288xf32, #tpu.memory_space<vmem>>, vector<7x32xf32>
    tpu.vector_store %arg8[%c14_374, %c192_375], %263 {strides = array<i32>} : memref<196x288xf32, #tpu.memory_space<vmem>>, vector<7x32xf32>,
    %c0_376 = arith.constant 0 : index
    %c4_377 = arith.constant 4 : index
    %c0_378 = arith.constant 0 : index
    %c0_379 = arith.constant 0 : index
    %265 = vector.load %arg7[%c0_376, %c4_377, %c0_378, %c0_379] : memref<4x8x8x32xf32, #tpu.memory_space<vmem>>, vector<1x1x7x32xf32>
    %266 = vector.shape_cast %265 : vector<1x1x7x32xf32> to vector<7x32xf32>
    %c21_380 = arith.constant 21 : index
    %c192_381 = arith.constant 192 : index
    %267 = vector.load %arg8[%c21_380, %c192_381] : memref<196x288xf32, #tpu.memory_space<vmem>>, vector<7x32xf32>
    tpu.vector_store %arg8[%c21_380, %c192_381], %266 {strides = array<i32>} : memref<196x288xf32, #tpu.memory_space<vmem>>, vector<7x32xf32>,
    %c0_382 = arith.constant 0 : index
    %c5_383 = arith.constant 5 : index
    %c0_384 = arith.constant 0 : index
    %c0_385 = arith.constant 0 : index
    %268 = vector.load %arg7[%c0_382, %c5_383, %c0_384, %c0_385] : memref<4x8x8x32xf32, #tpu.memory_space<vmem>>, vector<1x1x7x32xf32>
    %269 = vector.shape_cast %268 : vector<1x1x7x32xf32> to vector<7x32xf32>
    %c28_386 = arith.constant 28 : index
    %c192_387 = arith.constant 192 : index
    %270 = vector.load %arg8[%c28_386, %c192_387] : memref<196x288xf32, #tpu.memory_space<vmem>>, vector<7x32xf32>
    tpu.vector_store %arg8[%c28_386, %c192_387], %269 {strides = array<i32>} : memref<196x288xf32, #tpu.memory_space<vmem>>, vector<7x32xf32>,
    %c0_388 = arith.constant 0 : index
    %c6_389 = arith.constant 6 : index
    %c0_390 = arith.constant 0 : index
    %c0_391 = arith.constant 0 : index
    %271 = vector.load %arg7[%c0_388, %c6_389, %c0_390, %c0_391] : memref<4x8x8x32xf32, #tpu.memory_space<vmem>>, vector<1x1x7x32xf32>
    %272 = vector.shape_cast %271 : vector<1x1x7x32xf32> to vector<7x32xf32>
    %c35_392 = arith.constant 35 : index
    %c192_393 = arith.constant 192 : index
    %273 = vector.load %arg8[%c35_392, %c192_393] : memref<196x288xf32, #tpu.memory_space<vmem>>, vector<7x32xf32>
    tpu.vector_store %arg8[%c35_392, %c192_393], %272 {strides = array<i32>} : memref<196x288xf32, #tpu.memory_space<vmem>>, vector<7x32xf32>,
    %c0_394 = arith.constant 0 : index
    %c7_395 = arith.constant 7 : index
    %c0_396 = arith.constant 0 : index
    %c0_397 = arith.constant 0 : index
    %274 = vector.load %arg7[%c0_394, %c7_395, %c0_396, %c0_397] : memref<4x8x8x32xf32, #tpu.memory_space<vmem>>, vector<1x1x7x32xf32>
    %275 = vector.shape_cast %274 : vector<1x1x7x32xf32> to vector<7x32xf32>
    %c42_398 = arith.constant 42 : index
    %c192_399 = arith.constant 192 : index
    %276 = vector.load %arg8[%c42_398, %c192_399] : memref<196x288xf32, #tpu.memory_space<vmem>>, vector<7x32xf32>
    tpu.vector_store %arg8[%c42_398, %c192_399], %275 {strides = array<i32>} : memref<196x288xf32, #tpu.memory_space<vmem>>, vector<7x32xf32>,
    %c1_400 = arith.constant 1 : index
    %c1_401 = arith.constant 1 : index
    %c0_402 = arith.constant 0 : index
    %c0_403 = arith.constant 0 : index
    %277 = vector.load %arg7[%c1_400, %c1_401, %c0_402, %c0_403] : memref<4x8x8x32xf32, #tpu.memory_space<vmem>>, vector<1x1x7x32xf32>
    %278 = vector.shape_cast %277 : vector<1x1x7x32xf32> to vector<7x32xf32>
    %c0_404 = arith.constant 0 : index
    %c224 = arith.constant 224 : index
    %279 = vector.load %arg8[%c0_404, %c224] : memref<196x288xf32, #tpu.memory_space<vmem>>, vector<7x32xf32>
    tpu.vector_store %arg8[%c0_404, %c224], %278 {strides = array<i32>} : memref<196x288xf32, #tpu.memory_space<vmem>>, vector<7x32xf32>,
    %c1_405 = arith.constant 1 : index
    %c2_406 = arith.constant 2 : index
    %c0_407 = arith.constant 0 : index
    %c0_408 = arith.constant 0 : index
    %280 = vector.load %arg7[%c1_405, %c2_406, %c0_407, %c0_408] : memref<4x8x8x32xf32, #tpu.memory_space<vmem>>, vector<1x1x7x32xf32>
    %281 = vector.shape_cast %280 : vector<1x1x7x32xf32> to vector<7x32xf32>
    %c7_409 = arith.constant 7 : index
    %c224_410 = arith.constant 224 : index
    %282 = vector.load %arg8[%c7_409, %c224_410] : memref<196x288xf32, #tpu.memory_space<vmem>>, vector<7x32xf32>
    tpu.vector_store %arg8[%c7_409, %c224_410], %281 {strides = array<i32>} : memref<196x288xf32, #tpu.memory_space<vmem>>, vector<7x32xf32>,
    %c1_411 = arith.constant 1 : index
    %c3_412 = arith.constant 3 : index
    %c0_413 = arith.constant 0 : index
    %c0_414 = arith.constant 0 : index
    %283 = vector.load %arg7[%c1_411, %c3_412, %c0_413, %c0_414] : memref<4x8x8x32xf32, #tpu.memory_space<vmem>>, vector<1x1x7x32xf32>
    %284 = vector.shape_cast %283 : vector<1x1x7x32xf32> to vector<7x32xf32>
    %c14_415 = arith.constant 14 : index
    %c224_416 = arith.constant 224 : index
    %285 = vector.load %arg8[%c14_415, %c224_416] : memref<196x288xf32, #tpu.memory_space<vmem>>, vector<7x32xf32>
    tpu.vector_store %arg8[%c14_415, %c224_416], %284 {strides = array<i32>} : memref<196x288xf32, #tpu.memory_space<vmem>>, vector<7x32xf32>,
    %c1_417 = arith.constant 1 : index
    %c4_418 = arith.constant 4 : index
    %c0_419 = arith.constant 0 : index
    %c0_420 = arith.constant 0 : index
    %286 = vector.load %arg7[%c1_417, %c4_418, %c0_419, %c0_420] : memref<4x8x8x32xf32, #tpu.memory_space<vmem>>, vector<1x1x7x32xf32>
    %287 = vector.shape_cast %286 : vector<1x1x7x32xf32> to vector<7x32xf32>
    %c21_421 = arith.constant 21 : index
    %c224_422 = arith.constant 224 : index
    %288 = vector.load %arg8[%c21_421, %c224_422] : memref<196x288xf32, #tpu.memory_space<vmem>>, vector<7x32xf32>
    tpu.vector_store %arg8[%c21_421, %c224_422], %287 {strides = array<i32>} : memref<196x288xf32, #tpu.memory_space<vmem>>, vector<7x32xf32>,
    %c1_423 = arith.constant 1 : index
    %c5_424 = arith.constant 5 : index
    %c0_425 = arith.constant 0 : index
    %c0_426 = arith.constant 0 : index
    %289 = vector.load %arg7[%c1_423, %c5_424, %c0_425, %c0_426] : memref<4x8x8x32xf32, #tpu.memory_space<vmem>>, vector<1x1x7x32xf32>
    %290 = vector.shape_cast %289 : vector<1x1x7x32xf32> to vector<7x32xf32>
    %c28_427 = arith.constant 28 : index
    %c224_428 = arith.constant 224 : index
    %291 = vector.load %arg8[%c28_427, %c224_428] : memref<196x288xf32, #tpu.memory_space<vmem>>, vector<7x32xf32>
    tpu.vector_store %arg8[%c28_427, %c224_428], %290 {strides = array<i32>} : memref<196x288xf32, #tpu.memory_space<vmem>>, vector<7x32xf32>,
    %c1_429 = arith.constant 1 : index
    %c6_430 = arith.constant 6 : index
    %c0_431 = arith.constant 0 : index
    %c0_432 = arith.constant 0 : index
    %292 = vector.load %arg7[%c1_429, %c6_430, %c0_431, %c0_432] : memref<4x8x8x32xf32, #tpu.memory_space<vmem>>, vector<1x1x7x32xf32>
    %293 = vector.shape_cast %292 : vector<1x1x7x32xf32> to vector<7x32xf32>
    %c35_433 = arith.constant 35 : index
    %c224_434 = arith.constant 224 : index
    %294 = vector.load %arg8[%c35_433, %c224_434] : memref<196x288xf32, #tpu.memory_space<vmem>>, vector<7x32xf32>
    tpu.vector_store %arg8[%c35_433, %c224_434], %293 {strides = array<i32>} : memref<196x288xf32, #tpu.memory_space<vmem>>, vector<7x32xf32>,
    %c1_435 = arith.constant 1 : index
    %c7_436 = arith.constant 7 : index
    %c0_437 = arith.constant 0 : index
    %c0_438 = arith.constant 0 : index
    %295 = vector.load %arg7[%c1_435, %c7_436, %c0_437, %c0_438] : memref<4x8x8x32xf32, #tpu.memory_space<vmem>>, vector<1x1x7x32xf32>
    %296 = vector.shape_cast %295 : vector<1x1x7x32xf32> to vector<7x32xf32>
    %c42_439 = arith.constant 42 : index
    %c224_440 = arith.constant 224 : index
    %297 = vector.load %arg8[%c42_439, %c224_440] : memref<196x288xf32, #tpu.memory_space<vmem>>, vector<7x32xf32>
    tpu.vector_store %arg8[%c42_439, %c224_440], %296 {strides = array<i32>} : memref<196x288xf32, #tpu.memory_space<vmem>>, vector<7x32xf32>,
    %c0_441 = arith.constant 0 : index
    %c1_442 = arith.constant 1 : index
    %c1_443 = arith.constant 1 : index
    %c0_444 = arith.constant 0 : index
    %298 = vector.load %arg7[%c0_441, %c1_442, %c1_443, %c0_444] : memref<4x8x8x32xf32, #tpu.memory_space<vmem>>, vector<1x1x7x32xf32>
    %299 = vector.shape_cast %298 : vector<1x1x7x32xf32> to vector<7x32xf32>
    %c0_445 = arith.constant 0 : index
    %c256 = arith.constant 256 : index
    %300 = vector.load %arg8[%c0_445, %c256] : memref<196x288xf32, #tpu.memory_space<vmem>>, vector<7x32xf32>
    tpu.vector_store %arg8[%c0_445, %c256], %299 {strides = array<i32>} : memref<196x288xf32, #tpu.memory_space<vmem>>, vector<7x32xf32>,
    %c0_446 = arith.constant 0 : index
    %c2_447 = arith.constant 2 : index
    %c1_448 = arith.constant 1 : index
    %c0_449 = arith.constant 0 : index
    %301 = vector.load %arg7[%c0_446, %c2_447, %c1_448, %c0_449] : memref<4x8x8x32xf32, #tpu.memory_space<vmem>>, vector<1x1x7x32xf32>
    %302 = vector.shape_cast %301 : vector<1x1x7x32xf32> to vector<7x32xf32>
    %c7_450 = arith.constant 7 : index
    %c256_451 = arith.constant 256 : index
    %303 = vector.load %arg8[%c7_450, %c256_451] : memref<196x288xf32, #tpu.memory_space<vmem>>, vector<7x32xf32>
    tpu.vector_store %arg8[%c7_450, %c256_451], %302 {strides = array<i32>} : memref<196x288xf32, #tpu.memory_space<vmem>>, vector<7x32xf32>,
    %c0_452 = arith.constant 0 : index
    %c3_453 = arith.constant 3 : index
    %c1_454 = arith.constant 1 : index
    %c0_455 = arith.constant 0 : index
    %304 = vector.load %arg7[%c0_452, %c3_453, %c1_454, %c0_455] : memref<4x8x8x32xf32, #tpu.memory_space<vmem>>, vector<1x1x7x32xf32>
    %305 = vector.shape_cast %304 : vector<1x1x7x32xf32> to vector<7x32xf32>
    %c14_456 = arith.constant 14 : index
    %c256_457 = arith.constant 256 : index
    %306 = vector.load %arg8[%c14_456, %c256_457] : memref<196x288xf32, #tpu.memory_space<vmem>>, vector<7x32xf32>
    tpu.vector_store %arg8[%c14_456, %c256_457], %305 {strides = array<i32>} : memref<196x288xf32, #tpu.memory_space<vmem>>, vector<7x32xf32>,
    %c0_458 = arith.constant 0 : index
    %c4_459 = arith.constant 4 : index
    %c1_460 = arith.constant 1 : index
    %c0_461 = arith.constant 0 : index
    %307 = vector.load %arg7[%c0_458, %c4_459, %c1_460, %c0_461] : memref<4x8x8x32xf32, #tpu.memory_space<vmem>>, vector<1x1x7x32xf32>
    %308 = vector.shape_cast %307 : vector<1x1x7x32xf32> to vector<7x32xf32>
    %c21_462 = arith.constant 21 : index
    %c256_463 = arith.constant 256 : index
    %309 = vector.load %arg8[%c21_462, %c256_463] : memref<196x288xf32, #tpu.memory_space<vmem>>, vector<7x32xf32>
    tpu.vector_store %arg8[%c21_462, %c256_463], %308 {strides = array<i32>} : memref<196x288xf32, #tpu.memory_space<vmem>>, vector<7x32xf32>,
    %c0_464 = arith.constant 0 : index
    %c5_465 = arith.constant 5 : index
    %c1_466 = arith.constant 1 : index
    %c0_467 = arith.constant 0 : index
    %310 = vector.load %arg7[%c0_464, %c5_465, %c1_466, %c0_467] : memref<4x8x8x32xf32, #tpu.memory_space<vmem>>, vector<1x1x7x32xf32>
    %311 = vector.shape_cast %310 : vector<1x1x7x32xf32> to vector<7x32xf32>
    %c28_468 = arith.constant 28 : index
    %c256_469 = arith.constant 256 : index
    %312 = vector.load %arg8[%c28_468, %c256_469] : memref<196x288xf32, #tpu.memory_space<vmem>>, vector<7x32xf32>
    tpu.vector_store %arg8[%c28_468, %c256_469], %311 {strides = array<i32>} : memref<196x288xf32, #tpu.memory_space<vmem>>, vector<7x32xf32>,
    %c0_470 = arith.constant 0 : index
    %c6_471 = arith.constant 6 : index
    %c1_472 = arith.constant 1 : index
    %c0_473 = arith.constant 0 : index
    %313 = vector.load %arg7[%c0_470, %c6_471, %c1_472, %c0_473] : memref<4x8x8x32xf32, #tpu.memory_space<vmem>>, vector<1x1x7x32xf32>
    %314 = vector.shape_cast %313 : vector<1x1x7x32xf32> to vector<7x32xf32>
    %c35_474 = arith.constant 35 : index
    %c256_475 = arith.constant 256 : index
    %315 = vector.load %arg8[%c35_474, %c256_475] : memref<196x288xf32, #tpu.memory_space<vmem>>, vector<7x32xf32>
    tpu.vector_store %arg8[%c35_474, %c256_475], %314 {strides = array<i32>} : memref<196x288xf32, #tpu.memory_space<vmem>>, vector<7x32xf32>,
    %c0_476 = arith.constant 0 : index
    %c7_477 = arith.constant 7 : index
    %c1_478 = arith.constant 1 : index
    %c0_479 = arith.constant 0 : index
    %316 = vector.load %arg7[%c0_476, %c7_477, %c1_478, %c0_479] : memref<4x8x8x32xf32, #tpu.memory_space<vmem>>, vector<1x1x7x32xf32>
    %317 = vector.shape_cast %316 : vector<1x1x7x32xf32> to vector<7x32xf32>
    %c42_480 = arith.constant 42 : index
    %c256_481 = arith.constant 256 : index
    %318 = vector.load %arg8[%c42_480, %c256_481] : memref<196x288xf32, #tpu.memory_space<vmem>>, vector<7x32xf32>
    tpu.vector_store %arg8[%c42_480, %c256_481], %317 {strides = array<i32>} : memref<196x288xf32, #tpu.memory_space<vmem>>, vector<7x32xf32>,
    %c1_482 = arith.constant 1 : index
    %c0_483 = arith.constant 0 : index
    %c0_484 = arith.constant 0 : index
    %c0_485 = arith.constant 0 : index
    %319 = vector.load %arg7[%c1_482, %c0_483, %c0_484, %c0_485] : memref<4x8x8x32xf32, #tpu.memory_space<vmem>>, vector<1x1x7x32xf32>
    %320 = vector.shape_cast %319 : vector<1x1x7x32xf32> to vector<7x32xf32>
    %c49 = arith.constant 49 : index
    %c0_486 = arith.constant 0 : index
    %321 = vector.load %arg8[%c49, %c0_486] : memref<196x288xf32, #tpu.memory_space<vmem>>, vector<7x32xf32>
    tpu.vector_store %arg8[%c49, %c0_486], %320 {strides = array<i32>} : memref<196x288xf32, #tpu.memory_space<vmem>>, vector<7x32xf32>,
    %c1_487 = arith.constant 1 : index
    %c1_488 = arith.constant 1 : index
    %c0_489 = arith.constant 0 : index
    %c0_490 = arith.constant 0 : index
    %322 = vector.load %arg7[%c1_487, %c1_488, %c0_489, %c0_490] : memref<4x8x8x32xf32, #tpu.memory_space<vmem>>, vector<1x1x7x32xf32>
    %323 = vector.shape_cast %322 : vector<1x1x7x32xf32> to vector<7x32xf32>
    %c56 = arith.constant 56 : index
    %c0_491 = arith.constant 0 : index
    %324 = vector.load %arg8[%c56, %c0_491] : memref<196x288xf32, #tpu.memory_space<vmem>>, vector<7x32xf32>
    tpu.vector_store %arg8[%c56, %c0_491], %323 {strides = array<i32>} : memref<196x288xf32, #tpu.memory_space<vmem>>, vector<7x32xf32>,
    %c1_492 = arith.constant 1 : index
    %c2_493 = arith.constant 2 : index
    %c0_494 = arith.constant 0 : index
    %c0_495 = arith.constant 0 : index
    %325 = vector.load %arg7[%c1_492, %c2_493, %c0_494, %c0_495] : memref<4x8x8x32xf32, #tpu.memory_space<vmem>>, vector<1x1x7x32xf32>
    %326 = vector.shape_cast %325 : vector<1x1x7x32xf32> to vector<7x32xf32>
    %c63 = arith.constant 63 : index
    %c0_496 = arith.constant 0 : index
    %327 = vector.load %arg8[%c63, %c0_496] : memref<196x288xf32, #tpu.memory_space<vmem>>, vector<7x32xf32>
    tpu.vector_store %arg8[%c63, %c0_496], %326 {strides = array<i32>} : memref<196x288xf32, #tpu.memory_space<vmem>>, vector<7x32xf32>,
    %c1_497 = arith.constant 1 : index
    %c3_498 = arith.constant 3 : index
    %c0_499 = arith.constant 0 : index
    %c0_500 = arith.constant 0 : index
    %328 = vector.load %arg7[%c1_497, %c3_498, %c0_499, %c0_500] : memref<4x8x8x32xf32, #tpu.memory_space<vmem>>, vector<1x1x7x32xf32>
    %329 = vector.shape_cast %328 : vector<1x1x7x32xf32> to vector<7x32xf32>
    %c70 = arith.constant 70 : index
    %c0_501 = arith.constant 0 : index
    %330 = vector.load %arg8[%c70, %c0_501] : memref<196x288xf32, #tpu.memory_space<vmem>>, vector<7x32xf32>
    tpu.vector_store %arg8[%c70, %c0_501], %329 {strides = array<i32>} : memref<196x288xf32, #tpu.memory_space<vmem>>, vector<7x32xf32>,
    %c1_502 = arith.constant 1 : index
    %c4_503 = arith.constant 4 : index
    %c0_504 = arith.constant 0 : index
    %c0_505 = arith.constant 0 : index
    %331 = vector.load %arg7[%c1_502, %c4_503, %c0_504, %c0_505] : memref<4x8x8x32xf32, #tpu.memory_space<vmem>>, vector<1x1x7x32xf32>
    %332 = vector.shape_cast %331 : vector<1x1x7x32xf32> to vector<7x32xf32>
    %c77 = arith.constant 77 : index
    %c0_506 = arith.constant 0 : index
    %333 = vector.load %arg8[%c77, %c0_506] : memref<196x288xf32, #tpu.memory_space<vmem>>, vector<7x32xf32>
    tpu.vector_store %arg8[%c77, %c0_506], %332 {strides = array<i32>} : memref<196x288xf32, #tpu.memory_space<vmem>>, vector<7x32xf32>,
    %c1_507 = arith.constant 1 : index
    %c5_508 = arith.constant 5 : index
    %c0_509 = arith.constant 0 : index
    %c0_510 = arith.constant 0 : index
    %334 = vector.load %arg7[%c1_507, %c5_508, %c0_509, %c0_510] : memref<4x8x8x32xf32, #tpu.memory_space<vmem>>, vector<1x1x7x32xf32>
    %335 = vector.shape_cast %334 : vector<1x1x7x32xf32> to vector<7x32xf32>
    %c84 = arith.constant 84 : index
    %c0_511 = arith.constant 0 : index
    %336 = vector.load %arg8[%c84, %c0_511] : memref<196x288xf32, #tpu.memory_space<vmem>>, vector<7x32xf32>
    tpu.vector_store %arg8[%c84, %c0_511], %335 {strides = array<i32>} : memref<196x288xf32, #tpu.memory_space<vmem>>, vector<7x32xf32>,
    %c1_512 = arith.constant 1 : index
    %c6_513 = arith.constant 6 : index
    %c0_514 = arith.constant 0 : index
    %c0_515 = arith.constant 0 : index
    %337 = vector.load %arg7[%c1_512, %c6_513, %c0_514, %c0_515] : memref<4x8x8x32xf32, #tpu.memory_space<vmem>>, vector<1x1x7x32xf32>
    %338 = vector.shape_cast %337 : vector<1x1x7x32xf32> to vector<7x32xf32>
    %c91 = arith.constant 91 : index
    %c0_516 = arith.constant 0 : index
    %339 = vector.load %arg8[%c91, %c0_516] : memref<196x288xf32, #tpu.memory_space<vmem>>, vector<7x32xf32>
    tpu.vector_store %arg8[%c91, %c0_516], %338 {strides = array<i32>} : memref<196x288xf32, #tpu.memory_space<vmem>>, vector<7x32xf32>,
    %c0_517 = arith.constant 0 : index
    %c0_518 = arith.constant 0 : index
    %c1_519 = arith.constant 1 : index
    %c0_520 = arith.constant 0 : index
    %340 = vector.load %arg7[%c0_517, %c0_518, %c1_519, %c0_520] : memref<4x8x8x32xf32, #tpu.memory_space<vmem>>, vector<1x1x7x32xf32>
    %341 = vector.shape_cast %340 : vector<1x1x7x32xf32> to vector<7x32xf32>
    %c49_521 = arith.constant 49 : index
    %c32_522 = arith.constant 32 : index
    %342 = vector.load %arg8[%c49_521, %c32_522] : memref<196x288xf32, #tpu.memory_space<vmem>>, vector<7x32xf32>
    tpu.vector_store %arg8[%c49_521, %c32_522], %341 {strides = array<i32>} : memref<196x288xf32, #tpu.memory_space<vmem>>, vector<7x32xf32>,
    %c0_523 = arith.constant 0 : index
    %c1_524 = arith.constant 1 : index
    %c1_525 = arith.constant 1 : index
    %c0_526 = arith.constant 0 : index
    %343 = vector.load %arg7[%c0_523, %c1_524, %c1_525, %c0_526] : memref<4x8x8x32xf32, #tpu.memory_space<vmem>>, vector<1x1x7x32xf32>
    %344 = vector.shape_cast %343 : vector<1x1x7x32xf32> to vector<7x32xf32>
    %c56_527 = arith.constant 56 : index
    %c32_528 = arith.constant 32 : index
    %345 = vector.load %arg8[%c56_527, %c32_528] : memref<196x288xf32, #tpu.memory_space<vmem>>, vector<7x32xf32>
    tpu.vector_store %arg8[%c56_527, %c32_528], %344 {strides = array<i32>} : memref<196x288xf32, #tpu.memory_space<vmem>>, vector<7x32xf32>,
    %c0_529 = arith.constant 0 : index
    %c2_530 = arith.constant 2 : index
    %c1_531 = arith.constant 1 : index
    %c0_532 = arith.constant 0 : index
    %346 = vector.load %arg7[%c0_529, %c2_530, %c1_531, %c0_532] : memref<4x8x8x32xf32, #tpu.memory_space<vmem>>, vector<1x1x7x32xf32>
    %347 = vector.shape_cast %346 : vector<1x1x7x32xf32> to vector<7x32xf32>
    %c63_533 = arith.constant 63 : index
    %c32_534 = arith.constant 32 : index
    %348 = vector.load %arg8[%c63_533, %c32_534] : memref<196x288xf32, #tpu.memory_space<vmem>>, vector<7x32xf32>
    tpu.vector_store %arg8[%c63_533, %c32_534], %347 {strides = array<i32>} : memref<196x288xf32, #tpu.memory_space<vmem>>, vector<7x32xf32>,
    %c0_535 = arith.constant 0 : index
    %c3_536 = arith.constant 3 : index
    %c1_537 = arith.constant 1 : index
    %c0_538 = arith.constant 0 : index
    %349 = vector.load %arg7[%c0_535, %c3_536, %c1_537, %c0_538] : memref<4x8x8x32xf32, #tpu.memory_space<vmem>>, vector<1x1x7x32xf32>
    %350 = vector.shape_cast %349 : vector<1x1x7x32xf32> to vector<7x32xf32>
    %c70_539 = arith.constant 70 : index
    %c32_540 = arith.constant 32 : index
    %351 = vector.load %arg8[%c70_539, %c32_540] : memref<196x288xf32, #tpu.memory_space<vmem>>, vector<7x32xf32>
    tpu.vector_store %arg8[%c70_539, %c32_540], %350 {strides = array<i32>} : memref<196x288xf32, #tpu.memory_space<vmem>>, vector<7x32xf32>,
    %c0_541 = arith.constant 0 : index
    %c4_542 = arith.constant 4 : index
    %c1_543 = arith.constant 1 : index
    %c0_544 = arith.constant 0 : index
    %352 = vector.load %arg7[%c0_541, %c4_542, %c1_543, %c0_544] : memref<4x8x8x32xf32, #tpu.memory_space<vmem>>, vector<1x1x7x32xf32>
    %353 = vector.shape_cast %352 : vector<1x1x7x32xf32> to vector<7x32xf32>
    %c77_545 = arith.constant 77 : index
    %c32_546 = arith.constant 32 : index
    %354 = vector.load %arg8[%c77_545, %c32_546] : memref<196x288xf32, #tpu.memory_space<vmem>>, vector<7x32xf32>
    tpu.vector_store %arg8[%c77_545, %c32_546], %353 {strides = array<i32>} : memref<196x288xf32, #tpu.memory_space<vmem>>, vector<7x32xf32>,
    %c0_547 = arith.constant 0 : index
    %c5_548 = arith.constant 5 : index
    %c1_549 = arith.constant 1 : index
    %c0_550 = arith.constant 0 : index
    %355 = vector.load %arg7[%c0_547, %c5_548, %c1_549, %c0_550] : memref<4x8x8x32xf32, #tpu.memory_space<vmem>>, vector<1x1x7x32xf32>
    %356 = vector.shape_cast %355 : vector<1x1x7x32xf32> to vector<7x32xf32>
    %c84_551 = arith.constant 84 : index
    %c32_552 = arith.constant 32 : index
    %357 = vector.load %arg8[%c84_551, %c32_552] : memref<196x288xf32, #tpu.memory_space<vmem>>, vector<7x32xf32>
    tpu.vector_store %arg8[%c84_551, %c32_552], %356 {strides = array<i32>} : memref<196x288xf32, #tpu.memory_space<vmem>>, vector<7x32xf32>,
    %c0_553 = arith.constant 0 : index
    %c6_554 = arith.constant 6 : index
    %c1_555 = arith.constant 1 : index
    %c0_556 = arith.constant 0 : index
    %358 = vector.load %arg7[%c0_553, %c6_554, %c1_555, %c0_556] : memref<4x8x8x32xf32, #tpu.memory_space<vmem>>, vector<1x1x7x32xf32>
    %359 = vector.shape_cast %358 : vector<1x1x7x32xf32> to vector<7x32xf32>
    %c91_557 = arith.constant 91 : index
    %c32_558 = arith.constant 32 : index
    %360 = vector.load %arg8[%c91_557, %c32_558] : memref<196x288xf32, #tpu.memory_space<vmem>>, vector<7x32xf32>
    tpu.vector_store %arg8[%c91_557, %c32_558], %359 {strides = array<i32>} : memref<196x288xf32, #tpu.memory_space<vmem>>, vector<7x32xf32>,
    %c1_559 = arith.constant 1 : index
    %c0_560 = arith.constant 0 : index
    %c1_561 = arith.constant 1 : index
    %c0_562 = arith.constant 0 : index
    %361 = vector.load %arg7[%c1_559, %c0_560, %c1_561, %c0_562] : memref<4x8x8x32xf32, #tpu.memory_space<vmem>>, vector<1x1x7x32xf32>
    %362 = vector.shape_cast %361 : vector<1x1x7x32xf32> to vector<7x32xf32>
    %c49_563 = arith.constant 49 : index
    %c64_564 = arith.constant 64 : index
    %363 = vector.load %arg8[%c49_563, %c64_564] : memref<196x288xf32, #tpu.memory_space<vmem>>, vector<7x32xf32>
    tpu.vector_store %arg8[%c49_563, %c64_564], %362 {strides = array<i32>} : memref<196x288xf32, #tpu.memory_space<vmem>>, vector<7x32xf32>,
    %c1_565 = arith.constant 1 : index
    %c1_566 = arith.constant 1 : index
    %c1_567 = arith.constant 1 : index
    %c0_568 = arith.constant 0 : index
    %364 = vector.load %arg7[%c1_565, %c1_566, %c1_567, %c0_568] : memref<4x8x8x32xf32, #tpu.memory_space<vmem>>, vector<1x1x7x32xf32>
    %365 = vector.shape_cast %364 : vector<1x1x7x32xf32> to vector<7x32xf32>
    %c56_569 = arith.constant 56 : index
    %c64_570 = arith.constant 64 : index
    %366 = vector.load %arg8[%c56_569, %c64_570] : memref<196x288xf32, #tpu.memory_space<vmem>>, vector<7x32xf32>
    tpu.vector_store %arg8[%c56_569, %c64_570], %365 {strides = array<i32>} : memref<196x288xf32, #tpu.memory_space<vmem>>, vector<7x32xf32>,
    %c1_571 = arith.constant 1 : index
    %c2_572 = arith.constant 2 : index
    %c1_573 = arith.constant 1 : index
    %c0_574 = arith.constant 0 : index
    %367 = vector.load %arg7[%c1_571, %c2_572, %c1_573, %c0_574] : memref<4x8x8x32xf32, #tpu.memory_space<vmem>>, vector<1x1x7x32xf32>
    %368 = vector.shape_cast %367 : vector<1x1x7x32xf32> to vector<7x32xf32>
    %c63_575 = arith.constant 63 : index
    %c64_576 = arith.constant 64 : index
    %369 = vector.load %arg8[%c63_575, %c64_576] : memref<196x288xf32, #tpu.memory_space<vmem>>, vector<7x32xf32>
    tpu.vector_store %arg8[%c63_575, %c64_576], %368 {strides = array<i32>} : memref<196x288xf32, #tpu.memory_space<vmem>>, vector<7x32xf32>,
    %c1_577 = arith.constant 1 : index
    %c3_578 = arith.constant 3 : index
    %c1_579 = arith.constant 1 : index
    %c0_580 = arith.constant 0 : index
    %370 = vector.load %arg7[%c1_577, %c3_578, %c1_579, %c0_580] : memref<4x8x8x32xf32, #tpu.memory_space<vmem>>, vector<1x1x7x32xf32>
    %371 = vector.shape_cast %370 : vector<1x1x7x32xf32> to vector<7x32xf32>
    %c70_581 = arith.constant 70 : index
    %c64_582 = arith.constant 64 : index
    %372 = vector.load %arg8[%c70_581, %c64_582] : memref<196x288xf32, #tpu.memory_space<vmem>>, vector<7x32xf32>
    tpu.vector_store %arg8[%c70_581, %c64_582], %371 {strides = array<i32>} : memref<196x288xf32, #tpu.memory_space<vmem>>, vector<7x32xf32>,
    %c1_583 = arith.constant 1 : index
    %c4_584 = arith.constant 4 : index
    %c1_585 = arith.constant 1 : index
    %c0_586 = arith.constant 0 : index
    %373 = vector.load %arg7[%c1_583, %c4_584, %c1_585, %c0_586] : memref<4x8x8x32xf32, #tpu.memory_space<vmem>>, vector<1x1x7x32xf32>
    %374 = vector.shape_cast %373 : vector<1x1x7x32xf32> to vector<7x32xf32>
    %c77_587 = arith.constant 77 : index
    %c64_588 = arith.constant 64 : index
    %375 = vector.load %arg8[%c77_587, %c64_588] : memref<196x288xf32, #tpu.memory_space<vmem>>, vector<7x32xf32>
    tpu.vector_store %arg8[%c77_587, %c64_588], %374 {strides = array<i32>} : memref<196x288xf32, #tpu.memory_space<vmem>>, vector<7x32xf32>,
    %c1_589 = arith.constant 1 : index
    %c5_590 = arith.constant 5 : index
    %c1_591 = arith.constant 1 : index
    %c0_592 = arith.constant 0 : index
    %376 = vector.load %arg7[%c1_589, %c5_590, %c1_591, %c0_592] : memref<4x8x8x32xf32, #tpu.memory_space<vmem>>, vector<1x1x7x32xf32>
    %377 = vector.shape_cast %376 : vector<1x1x7x32xf32> to vector<7x32xf32>
    %c84_593 = arith.constant 84 : index
    %c64_594 = arith.constant 64 : index
    %378 = vector.load %arg8[%c84_593, %c64_594] : memref<196x288xf32, #tpu.memory_space<vmem>>, vector<7x32xf32>
    tpu.vector_store %arg8[%c84_593, %c64_594], %377 {strides = array<i32>} : memref<196x288xf32, #tpu.memory_space<vmem>>, vector<7x32xf32>,
    %c1_595 = arith.constant 1 : index
    %c6_596 = arith.constant 6 : index
    %c1_597 = arith.constant 1 : index
    %c0_598 = arith.constant 0 : index
    %379 = vector.load %arg7[%c1_595, %c6_596, %c1_597, %c0_598] : memref<4x8x8x32xf32, #tpu.memory_space<vmem>>, vector<1x1x7x32xf32>
    %380 = vector.shape_cast %379 : vector<1x1x7x32xf32> to vector<7x32xf32>
    %c91_599 = arith.constant 91 : index
    %c64_600 = arith.constant 64 : index
    %381 = vector.load %arg8[%c91_599, %c64_600] : memref<196x288xf32, #tpu.memory_space<vmem>>, vector<7x32xf32>
    tpu.vector_store %arg8[%c91_599, %c64_600], %380 {strides = array<i32>} : memref<196x288xf32, #tpu.memory_space<vmem>>, vector<7x32xf32>,
    %c3_601 = arith.constant 3 : index
    %c0_602 = arith.constant 0 : index
    %c0_603 = arith.constant 0 : index
    %c0_604 = arith.constant 0 : index
    %382 = vector.load %arg7[%c3_601, %c0_602, %c0_603, %c0_604] : memref<4x8x8x32xf32, #tpu.memory_space<vmem>>, vector<1x1x7x32xf32>
    %383 = vector.shape_cast %382 : vector<1x1x7x32xf32> to vector<7x32xf32>
    %c49_605 = arith.constant 49 : index
    %c96_606 = arith.constant 96 : index
    %384 = vector.load %arg8[%c49_605, %c96_606] : memref<196x288xf32, #tpu.memory_space<vmem>>, vector<7x32xf32>
    tpu.vector_store %arg8[%c49_605, %c96_606], %383 {strides = array<i32>} : memref<196x288xf32, #tpu.memory_space<vmem>>, vector<7x32xf32>,
    %c3_607 = arith.constant 3 : index
    %c1_608 = arith.constant 1 : index
    %c0_609 = arith.constant 0 : index
    %c0_610 = arith.constant 0 : index
    %385 = vector.load %arg7[%c3_607, %c1_608, %c0_609, %c0_610] : memref<4x8x8x32xf32, #tpu.memory_space<vmem>>, vector<1x1x7x32xf32>
    %386 = vector.shape_cast %385 : vector<1x1x7x32xf32> to vector<7x32xf32>
    %c56_611 = arith.constant 56 : index
    %c96_612 = arith.constant 96 : index
    %387 = vector.load %arg8[%c56_611, %c96_612] : memref<196x288xf32, #tpu.memory_space<vmem>>, vector<7x32xf32>
    tpu.vector_store %arg8[%c56_611, %c96_612], %386 {strides = array<i32>} : memref<196x288xf32, #tpu.memory_space<vmem>>, vector<7x32xf32>,
    %c3_613 = arith.constant 3 : index
    %c2_614 = arith.constant 2 : index
    %c0_615 = arith.constant 0 : index
    %c0_616 = arith.constant 0 : index
    %388 = vector.load %arg7[%c3_613, %c2_614, %c0_615, %c0_616] : memref<4x8x8x32xf32, #tpu.memory_space<vmem>>, vector<1x1x7x32xf32>
    %389 = vector.shape_cast %388 : vector<1x1x7x32xf32> to vector<7x32xf32>
    %c63_617 = arith.constant 63 : index
    %c96_618 = arith.constant 96 : index
    %390 = vector.load %arg8[%c63_617, %c96_618] : memref<196x288xf32, #tpu.memory_space<vmem>>, vector<7x32xf32>
    tpu.vector_store %arg8[%c63_617, %c96_618], %389 {strides = array<i32>} : memref<196x288xf32, #tpu.memory_space<vmem>>, vector<7x32xf32>,
    %c3_619 = arith.constant 3 : index
    %c3_620 = arith.constant 3 : index
    %c0_621 = arith.constant 0 : index
    %c0_622 = arith.constant 0 : index
    %391 = vector.load %arg7[%c3_619, %c3_620, %c0_621, %c0_622] : memref<4x8x8x32xf32, #tpu.memory_space<vmem>>, vector<1x1x7x32xf32>
    %392 = vector.shape_cast %391 : vector<1x1x7x32xf32> to vector<7x32xf32>
    %c70_623 = arith.constant 70 : index
    %c96_624 = arith.constant 96 : index
    %393 = vector.load %arg8[%c70_623, %c96_624] : memref<196x288xf32, #tpu.memory_space<vmem>>, vector<7x32xf32>
    tpu.vector_store %arg8[%c70_623, %c96_624], %392 {strides = array<i32>} : memref<196x288xf32, #tpu.memory_space<vmem>>, vector<7x32xf32>,
    %c3_625 = arith.constant 3 : index
    %c4_626 = arith.constant 4 : index
    %c0_627 = arith.constant 0 : index
    %c0_628 = arith.constant 0 : index
    %394 = vector.load %arg7[%c3_625, %c4_626, %c0_627, %c0_628] : memref<4x8x8x32xf32, #tpu.memory_space<vmem>>, vector<1x1x7x32xf32>
    %395 = vector.shape_cast %394 : vector<1x1x7x32xf32> to vector<7x32xf32>
    %c77_629 = arith.constant 77 : index
    %c96_630 = arith.constant 96 : index
    %396 = vector.load %arg8[%c77_629, %c96_630] : memref<196x288xf32, #tpu.memory_space<vmem>>, vector<7x32xf32>
    tpu.vector_store %arg8[%c77_629, %c96_630], %395 {strides = array<i32>} : memref<196x288xf32, #tpu.memory_space<vmem>>, vector<7x32xf32>,
    %c3_631 = arith.constant 3 : index
    %c5_632 = arith.constant 5 : index
    %c0_633 = arith.constant 0 : index
    %c0_634 = arith.constant 0 : index
    %397 = vector.load %arg7[%c3_631, %c5_632, %c0_633, %c0_634] : memref<4x8x8x32xf32, #tpu.memory_space<vmem>>, vector<1x1x7x32xf32>
    %398 = vector.shape_cast %397 : vector<1x1x7x32xf32> to vector<7x32xf32>
    %c84_635 = arith.constant 84 : index
    %c96_636 = arith.constant 96 : index
    %399 = vector.load %arg8[%c84_635, %c96_636] : memref<196x288xf32, #tpu.memory_space<vmem>>, vector<7x32xf32>
    tpu.vector_store %arg8[%c84_635, %c96_636], %398 {strides = array<i32>} : memref<196x288xf32, #tpu.memory_space<vmem>>, vector<7x32xf32>,
    %c3_637 = arith.constant 3 : index
    %c6_638 = arith.constant 6 : index
    %c0_639 = arith.constant 0 : index
    %c0_640 = arith.constant 0 : index
    %400 = vector.load %arg7[%c3_637, %c6_638, %c0_639, %c0_640] : memref<4x8x8x32xf32, #tpu.memory_space<vmem>>, vector<1x1x7x32xf32>
    %401 = vector.shape_cast %400 : vector<1x1x7x32xf32> to vector<7x32xf32>
    %c91_641 = arith.constant 91 : index
    %c96_642 = arith.constant 96 : index
    %402 = vector.load %arg8[%c91_641, %c96_642] : memref<196x288xf32, #tpu.memory_space<vmem>>, vector<7x32xf32>
    tpu.vector_store %arg8[%c91_641, %c96_642], %401 {strides = array<i32>} : memref<196x288xf32, #tpu.memory_space<vmem>>, vector<7x32xf32>,
    %c2_643 = arith.constant 2 : index
    %c0_644 = arith.constant 0 : index
    %c1_645 = arith.constant 1 : index
    %c0_646 = arith.constant 0 : index
    %403 = vector.load %arg7[%c2_643, %c0_644, %c1_645, %c0_646] : memref<4x8x8x32xf32, #tpu.memory_space<vmem>>, vector<1x1x7x32xf32>
    %404 = vector.shape_cast %403 : vector<1x1x7x32xf32> to vector<7x32xf32>
    %c49_647 = arith.constant 49 : index
    %c128_648 = arith.constant 128 : index
    %405 = vector.load %arg8[%c49_647, %c128_648] : memref<196x288xf32, #tpu.memory_space<vmem>>, vector<7x32xf32>
    tpu.vector_store %arg8[%c49_647, %c128_648], %404 {strides = array<i32>} : memref<196x288xf32, #tpu.memory_space<vmem>>, vector<7x32xf32>,
    %c2_649 = arith.constant 2 : index
    %c1_650 = arith.constant 1 : index
    %c1_651 = arith.constant 1 : index
    %c0_652 = arith.constant 0 : index
    %406 = vector.load %arg7[%c2_649, %c1_650, %c1_651, %c0_652] : memref<4x8x8x32xf32, #tpu.memory_space<vmem>>, vector<1x1x7x32xf32>
    %407 = vector.shape_cast %406 : vector<1x1x7x32xf32> to vector<7x32xf32>
    %c56_653 = arith.constant 56 : index
    %c128_654 = arith.constant 128 : index
    %408 = vector.load %arg8[%c56_653, %c128_654] : memref<196x288xf32, #tpu.memory_space<vmem>>, vector<7x32xf32>
    tpu.vector_store %arg8[%c56_653, %c128_654], %407 {strides = array<i32>} : memref<196x288xf32, #tpu.memory_space<vmem>>, vector<7x32xf32>,
    %c2_655 = arith.constant 2 : index
    %c2_656 = arith.constant 2 : index
    %c1_657 = arith.constant 1 : index
    %c0_658 = arith.constant 0 : index
    %409 = vector.load %arg7[%c2_655, %c2_656, %c1_657, %c0_658] : memref<4x8x8x32xf32, #tpu.memory_space<vmem>>, vector<1x1x7x32xf32>
    %410 = vector.shape_cast %409 : vector<1x1x7x32xf32> to vector<7x32xf32>
    %c63_659 = arith.constant 63 : index
    %c128_660 = arith.constant 128 : index
    %411 = vector.load %arg8[%c63_659, %c128_660] : memref<196x288xf32, #tpu.memory_space<vmem>>, vector<7x32xf32>
    tpu.vector_store %arg8[%c63_659, %c128_660], %410 {strides = array<i32>} : memref<196x288xf32, #tpu.memory_space<vmem>>, vector<7x32xf32>,
    %c2_661 = arith.constant 2 : index
    %c3_662 = arith.constant 3 : index
    %c1_663 = arith.constant 1 : index
    %c0_664 = arith.constant 0 : index
    %412 = vector.load %arg7[%c2_661, %c3_662, %c1_663, %c0_664] : memref<4x8x8x32xf32, #tpu.memory_space<vmem>>, vector<1x1x7x32xf32>
    %413 = vector.shape_cast %412 : vector<1x1x7x32xf32> to vector<7x32xf32>
    %c70_665 = arith.constant 70 : index
    %c128_666 = arith.constant 128 : index
    %414 = vector.load %arg8[%c70_665, %c128_666] : memref<196x288xf32, #tpu.memory_space<vmem>>, vector<7x32xf32>
    tpu.vector_store %arg8[%c70_665, %c128_666], %413 {strides = array<i32>} : memref<196x288xf32, #tpu.memory_space<vmem>>, vector<7x32xf32>,
    %c2_667 = arith.constant 2 : index
    %c4_668 = arith.constant 4 : index
    %c1_669 = arith.constant 1 : index
    %c0_670 = arith.constant 0 : index
    %415 = vector.load %arg7[%c2_667, %c4_668, %c1_669, %c0_670] : memref<4x8x8x32xf32, #tpu.memory_space<vmem>>, vector<1x1x7x32xf32>
    %416 = vector.shape_cast %415 : vector<1x1x7x32xf32> to vector<7x32xf32>
    %c77_671 = arith.constant 77 : index
    %c128_672 = arith.constant 128 : index
    %417 = vector.load %arg8[%c77_671, %c128_672] : memref<196x288xf32, #tpu.memory_space<vmem>>, vector<7x32xf32>
    tpu.vector_store %arg8[%c77_671, %c128_672], %416 {strides = array<i32>} : memref<196x288xf32, #tpu.memory_space<vmem>>, vector<7x32xf32>,
    %c2_673 = arith.constant 2 : index
    %c5_674 = arith.constant 5 : index
    %c1_675 = arith.constant 1 : index
    %c0_676 = arith.constant 0 : index
    %418 = vector.load %arg7[%c2_673, %c5_674, %c1_675, %c0_676] : memref<4x8x8x32xf32, #tpu.memory_space<vmem>>, vector<1x1x7x32xf32>
    %419 = vector.shape_cast %418 : vector<1x1x7x32xf32> to vector<7x32xf32>
    %c84_677 = arith.constant 84 : index
    %c128_678 = arith.constant 128 : index
    %420 = vector.load %arg8[%c84_677, %c128_678] : memref<196x288xf32, #tpu.memory_space<vmem>>, vector<7x32xf32>
    tpu.vector_store %arg8[%c84_677, %c128_678], %419 {strides = array<i32>} : memref<196x288xf32, #tpu.memory_space<vmem>>, vector<7x32xf32>,
    %c2_679 = arith.constant 2 : index
    %c6_680 = arith.constant 6 : index
    %c1_681 = arith.constant 1 : index
    %c0_682 = arith.constant 0 : index
    %421 = vector.load %arg7[%c2_679, %c6_680, %c1_681, %c0_682] : memref<4x8x8x32xf32, #tpu.memory_space<vmem>>, vector<1x1x7x32xf32>
    %422 = vector.shape_cast %421 : vector<1x1x7x32xf32> to vector<7x32xf32>
    %c91_683 = arith.constant 91 : index
    %c128_684 = arith.constant 128 : index
    %423 = vector.load %arg8[%c91_683, %c128_684] : memref<196x288xf32, #tpu.memory_space<vmem>>, vector<7x32xf32>
    tpu.vector_store %arg8[%c91_683, %c128_684], %422 {strides = array<i32>} : memref<196x288xf32, #tpu.memory_space<vmem>>, vector<7x32xf32>,
    %c3_685 = arith.constant 3 : index
    %c0_686 = arith.constant 0 : index
    %c1_687 = arith.constant 1 : index
    %c0_688 = arith.constant 0 : index
    %424 = vector.load %arg7[%c3_685, %c0_686, %c1_687, %c0_688] : memref<4x8x8x32xf32, #tpu.memory_space<vmem>>, vector<1x1x7x32xf32>
    %425 = vector.shape_cast %424 : vector<1x1x7x32xf32> to vector<7x32xf32>
    %c49_689 = arith.constant 49 : index
    %c160_690 = arith.constant 160 : index
    %426 = vector.load %arg8[%c49_689, %c160_690] : memref<196x288xf32, #tpu.memory_space<vmem>>, vector<7x32xf32>
    tpu.vector_store %arg8[%c49_689, %c160_690], %425 {strides = array<i32>} : memref<196x288xf32, #tpu.memory_space<vmem>>, vector<7x32xf32>,
    %c3_691 = arith.constant 3 : index
    %c1_692 = arith.constant 1 : index
    %c1_693 = arith.constant 1 : index
    %c0_694 = arith.constant 0 : index
    %427 = vector.load %arg7[%c3_691, %c1_692, %c1_693, %c0_694] : memref<4x8x8x32xf32, #tpu.memory_space<vmem>>, vector<1x1x7x32xf32>
    %428 = vector.shape_cast %427 : vector<1x1x7x32xf32> to vector<7x32xf32>
    %c56_695 = arith.constant 56 : index
    %c160_696 = arith.constant 160 : index
    %429 = vector.load %arg8[%c56_695, %c160_696] : memref<196x288xf32, #tpu.memory_space<vmem>>, vector<7x32xf32>
    tpu.vector_store %arg8[%c56_695, %c160_696], %428 {strides = array<i32>} : memref<196x288xf32, #tpu.memory_space<vmem>>, vector<7x32xf32>,
    %c3_697 = arith.constant 3 : index
    %c2_698 = arith.constant 2 : index
    %c1_699 = arith.constant 1 : index
    %c0_700 = arith.constant 0 : index
    %430 = vector.load %arg7[%c3_697, %c2_698, %c1_699, %c0_700] : memref<4x8x8x32xf32, #tpu.memory_space<vmem>>, vector<1x1x7x32xf32>
    %431 = vector.shape_cast %430 : vector<1x1x7x32xf32> to vector<7x32xf32>
    %c63_701 = arith.constant 63 : index
    %c160_702 = arith.constant 160 : index
    %432 = vector.load %arg8[%c63_701, %c160_702] : memref<196x288xf32, #tpu.memory_space<vmem>>, vector<7x32xf32>
    tpu.vector_store %arg8[%c63_701, %c160_702], %431 {strides = array<i32>} : memref<196x288xf32, #tpu.memory_space<vmem>>, vector<7x32xf32>,
    %c3_703 = arith.constant 3 : index
    %c3_704 = arith.constant 3 : index
    %c1_705 = arith.constant 1 : index
    %c0_706 = arith.constant 0 : index
    %433 = vector.load %arg7[%c3_703, %c3_704, %c1_705, %c0_706] : memref<4x8x8x32xf32, #tpu.memory_space<vmem>>, vector<1x1x7x32xf32>
    %434 = vector.shape_cast %433 : vector<1x1x7x32xf32> to vector<7x32xf32>
    %c70_707 = arith.constant 70 : index
    %c160_708 = arith.constant 160 : index
    %435 = vector.load %arg8[%c70_707, %c160_708] : memref<196x288xf32, #tpu.memory_space<vmem>>, vector<7x32xf32>
    tpu.vector_store %arg8[%c70_707, %c160_708], %434 {strides = array<i32>} : memref<196x288xf32, #tpu.memory_space<vmem>>, vector<7x32xf32>,
    %c3_709 = arith.constant 3 : index
    %c4_710 = arith.constant 4 : index
    %c1_711 = arith.constant 1 : index
    %c0_712 = arith.constant 0 : index
    %436 = vector.load %arg7[%c3_709, %c4_710, %c1_711, %c0_712] : memref<4x8x8x32xf32, #tpu.memory_space<vmem>>, vector<1x1x7x32xf32>
    %437 = vector.shape_cast %436 : vector<1x1x7x32xf32> to vector<7x32xf32>
    %c77_713 = arith.constant 77 : index
    %c160_714 = arith.constant 160 : index
    %438 = vector.load %arg8[%c77_713, %c160_714] : memref<196x288xf32, #tpu.memory_space<vmem>>, vector<7x32xf32>
    tpu.vector_store %arg8[%c77_713, %c160_714], %437 {strides = array<i32>} : memref<196x288xf32, #tpu.memory_space<vmem>>, vector<7x32xf32>,
    %c3_715 = arith.constant 3 : index
    %c5_716 = arith.constant 5 : index
    %c1_717 = arith.constant 1 : index
    %c0_718 = arith.constant 0 : index
    %439 = vector.load %arg7[%c3_715, %c5_716, %c1_717, %c0_718] : memref<4x8x8x32xf32, #tpu.memory_space<vmem>>, vector<1x1x7x32xf32>
    %440 = vector.shape_cast %439 : vector<1x1x7x32xf32> to vector<7x32xf32>
    %c84_719 = arith.constant 84 : index
    %c160_720 = arith.constant 160 : index
    %441 = vector.load %arg8[%c84_719, %c160_720] : memref<196x288xf32, #tpu.memory_space<vmem>>, vector<7x32xf32>
    tpu.vector_store %arg8[%c84_719, %c160_720], %440 {strides = array<i32>} : memref<196x288xf32, #tpu.memory_space<vmem>>, vector<7x32xf32>,
    %c3_721 = arith.constant 3 : index
    %c6_722 = arith.constant 6 : index
    %c1_723 = arith.constant 1 : index
    %c0_724 = arith.constant 0 : index
    %442 = vector.load %arg7[%c3_721, %c6_722, %c1_723, %c0_724] : memref<4x8x8x32xf32, #tpu.memory_space<vmem>>, vector<1x1x7x32xf32>
    %443 = vector.shape_cast %442 : vector<1x1x7x32xf32> to vector<7x32xf32>
    %c91_725 = arith.constant 91 : index
    %c160_726 = arith.constant 160 : index
    %444 = vector.load %arg8[%c91_725, %c160_726] : memref<196x288xf32, #tpu.memory_space<vmem>>, vector<7x32xf32>
    tpu.vector_store %arg8[%c91_725, %c160_726], %443 {strides = array<i32>} : memref<196x288xf32, #tpu.memory_space<vmem>>, vector<7x32xf32>,
    %c1_727 = arith.constant 1 : index
    %c1_728 = arith.constant 1 : index
    %c0_729 = arith.constant 0 : index
    %c0_730 = arith.constant 0 : index
    %445 = vector.load %arg7[%c1_727, %c1_728, %c0_729, %c0_730] : memref<4x8x8x32xf32, #tpu.memory_space<vmem>>, vector<1x1x7x32xf32>
    %446 = vector.shape_cast %445 : vector<1x1x7x32xf32> to vector<7x32xf32>
    %c49_731 = arith.constant 49 : index
    %c192_732 = arith.constant 192 : index
    %447 = vector.load %arg8[%c49_731, %c192_732] : memref<196x288xf32, #tpu.memory_space<vmem>>, vector<7x32xf32>
    tpu.vector_store %arg8[%c49_731, %c192_732], %446 {strides = array<i32>} : memref<196x288xf32, #tpu.memory_space<vmem>>, vector<7x32xf32>,
    %c1_733 = arith.constant 1 : index
    %c2_734 = arith.constant 2 : index
    %c0_735 = arith.constant 0 : index
    %c0_736 = arith.constant 0 : index
    %448 = vector.load %arg7[%c1_733, %c2_734, %c0_735, %c0_736] : memref<4x8x8x32xf32, #tpu.memory_space<vmem>>, vector<1x1x7x32xf32>
    %449 = vector.shape_cast %448 : vector<1x1x7x32xf32> to vector<7x32xf32>
    %c56_737 = arith.constant 56 : index
    %c192_738 = arith.constant 192 : index
    %450 = vector.load %arg8[%c56_737, %c192_738] : memref<196x288xf32, #tpu.memory_space<vmem>>, vector<7x32xf32>
    tpu.vector_store %arg8[%c56_737, %c192_738], %449 {strides = array<i32>} : memref<196x288xf32, #tpu.memory_space<vmem>>, vector<7x32xf32>,
    %c1_739 = arith.constant 1 : index
    %c3_740 = arith.constant 3 : index
    %c0_741 = arith.constant 0 : index
    %c0_742 = arith.constant 0 : index
    %451 = vector.load %arg7[%c1_739, %c3_740, %c0_741, %c0_742] : memref<4x8x8x32xf32, #tpu.memory_space<vmem>>, vector<1x1x7x32xf32>
    %452 = vector.shape_cast %451 : vector<1x1x7x32xf32> to vector<7x32xf32>
    %c63_743 = arith.constant 63 : index
    %c192_744 = arith.constant 192 : index
    %453 = vector.load %arg8[%c63_743, %c192_744] : memref<196x288xf32, #tpu.memory_space<vmem>>, vector<7x32xf32>
    tpu.vector_store %arg8[%c63_743, %c192_744], %452 {strides = array<i32>} : memref<196x288xf32, #tpu.memory_space<vmem>>, vector<7x32xf32>,
    %c1_745 = arith.constant 1 : index
    %c4_746 = arith.constant 4 : index
    %c0_747 = arith.constant 0 : index
    %c0_748 = arith.constant 0 : index
    %454 = vector.load %arg7[%c1_745, %c4_746, %c0_747, %c0_748] : memref<4x8x8x32xf32, #tpu.memory_space<vmem>>, vector<1x1x7x32xf32>
    %455 = vector.shape_cast %454 : vector<1x1x7x32xf32> to vector<7x32xf32>
    %c70_749 = arith.constant 70 : index
    %c192_750 = arith.constant 192 : index
    %456 = vector.load %arg8[%c70_749, %c192_750] : memref<196x288xf32, #tpu.memory_space<vmem>>, vector<7x32xf32>
    tpu.vector_store %arg8[%c70_749, %c192_750], %455 {strides = array<i32>} : memref<196x288xf32, #tpu.memory_space<vmem>>, vector<7x32xf32>,
    %c1_751 = arith.constant 1 : index
    %c5_752 = arith.constant 5 : index
    %c0_753 = arith.constant 0 : index
    %c0_754 = arith.constant 0 : index
    %457 = vector.load %arg7[%c1_751, %c5_752, %c0_753, %c0_754] : memref<4x8x8x32xf32, #tpu.memory_space<vmem>>, vector<1x1x7x32xf32>
    %458 = vector.shape_cast %457 : vector<1x1x7x32xf32> to vector<7x32xf32>
    %c77_755 = arith.constant 77 : index
    %c192_756 = arith.constant 192 : index
    %459 = vector.load %arg8[%c77_755, %c192_756] : memref<196x288xf32, #tpu.memory_space<vmem>>, vector<7x32xf32>
    tpu.vector_store %arg8[%c77_755, %c192_756], %458 {strides = array<i32>} : memref<196x288xf32, #tpu.memory_space<vmem>>, vector<7x32xf32>,
    %c1_757 = arith.constant 1 : index
    %c6_758 = arith.constant 6 : index
    %c0_759 = arith.constant 0 : index
    %c0_760 = arith.constant 0 : index
    %460 = vector.load %arg7[%c1_757, %c6_758, %c0_759, %c0_760] : memref<4x8x8x32xf32, #tpu.memory_space<vmem>>, vector<1x1x7x32xf32>
    %461 = vector.shape_cast %460 : vector<1x1x7x32xf32> to vector<7x32xf32>
    %c84_761 = arith.constant 84 : index
    %c192_762 = arith.constant 192 : index
    %462 = vector.load %arg8[%c84_761, %c192_762] : memref<196x288xf32, #tpu.memory_space<vmem>>, vector<7x32xf32>
    tpu.vector_store %arg8[%c84_761, %c192_762], %461 {strides = array<i32>} : memref<196x288xf32, #tpu.memory_space<vmem>>, vector<7x32xf32>,
    %c1_763 = arith.constant 1 : index
    %c7_764 = arith.constant 7 : index
    %c0_765 = arith.constant 0 : index
    %c0_766 = arith.constant 0 : index
    %463 = vector.load %arg7[%c1_763, %c7_764, %c0_765, %c0_766] : memref<4x8x8x32xf32, #tpu.memory_space<vmem>>, vector<1x1x7x32xf32>
    %464 = vector.shape_cast %463 : vector<1x1x7x32xf32> to vector<7x32xf32>
    %c91_767 = arith.constant 91 : index
    %c192_768 = arith.constant 192 : index
    %465 = vector.load %arg8[%c91_767, %c192_768] : memref<196x288xf32, #tpu.memory_space<vmem>>, vector<7x32xf32>
    tpu.vector_store %arg8[%c91_767, %c192_768], %464 {strides = array<i32>} : memref<196x288xf32, #tpu.memory_space<vmem>>, vector<7x32xf32>,
    %c0_769 = arith.constant 0 : index
    %c1_770 = arith.constant 1 : index
    %c1_771 = arith.constant 1 : index
    %c0_772 = arith.constant 0 : index
    %466 = vector.load %arg7[%c0_769, %c1_770, %c1_771, %c0_772] : memref<4x8x8x32xf32, #tpu.memory_space<vmem>>, vector<1x1x7x32xf32>
    %467 = vector.shape_cast %466 : vector<1x1x7x32xf32> to vector<7x32xf32>
    %c49_773 = arith.constant 49 : index
    %c224_774 = arith.constant 224 : index
    %468 = vector.load %arg8[%c49_773, %c224_774] : memref<196x288xf32, #tpu.memory_space<vmem>>, vector<7x32xf32>
    tpu.vector_store %arg8[%c49_773, %c224_774], %467 {strides = array<i32>} : memref<196x288xf32, #tpu.memory_space<vmem>>, vector<7x32xf32>,
    %c0_775 = arith.constant 0 : index
    %c2_776 = arith.constant 2 : index
    %c1_777 = arith.constant 1 : index
    %c0_778 = arith.constant 0 : index
    %469 = vector.load %arg7[%c0_775, %c2_776, %c1_777, %c0_778] : memref<4x8x8x32xf32, #tpu.memory_space<vmem>>, vector<1x1x7x32xf32>
    %470 = vector.shape_cast %469 : vector<1x1x7x32xf32> to vector<7x32xf32>
    %c56_779 = arith.constant 56 : index
    %c224_780 = arith.constant 224 : index
    %471 = vector.load %arg8[%c56_779, %c224_780] : memref<196x288xf32, #tpu.memory_space<vmem>>, vector<7x32xf32>
    tpu.vector_store %arg8[%c56_779, %c224_780], %470 {strides = array<i32>} : memref<196x288xf32, #tpu.memory_space<vmem>>, vector<7x32xf32>,
    %c0_781 = arith.constant 0 : index
    %c3_782 = arith.constant 3 : index
    %c1_783 = arith.constant 1 : index
    %c0_784 = arith.constant 0 : index
    %472 = vector.load %arg7[%c0_781, %c3_782, %c1_783, %c0_784] : memref<4x8x8x32xf32, #tpu.memory_space<vmem>>, vector<1x1x7x32xf32>
    %473 = vector.shape_cast %472 : vector<1x1x7x32xf32> to vector<7x32xf32>
    %c63_785 = arith.constant 63 : index
    %c224_786 = arith.constant 224 : index
    %474 = vector.load %arg8[%c63_785, %c224_786] : memref<196x288xf32, #tpu.memory_space<vmem>>, vector<7x32xf32>
    tpu.vector_store %arg8[%c63_785, %c224_786], %473 {strides = array<i32>} : memref<196x288xf32, #tpu.memory_space<vmem>>, vector<7x32xf32>,
    %c0_787 = arith.constant 0 : index
    %c4_788 = arith.constant 4 : index
    %c1_789 = arith.constant 1 : index
    %c0_790 = arith.constant 0 : index
    %475 = vector.load %arg7[%c0_787, %c4_788, %c1_789, %c0_790] : memref<4x8x8x32xf32, #tpu.memory_space<vmem>>, vector<1x1x7x32xf32>
    %476 = vector.shape_cast %475 : vector<1x1x7x32xf32> to vector<7x32xf32>
    %c70_791 = arith.constant 70 : index
    %c224_792 = arith.constant 224 : index
    %477 = vector.load %arg8[%c70_791, %c224_792] : memref<196x288xf32, #tpu.memory_space<vmem>>, vector<7x32xf32>
    tpu.vector_store %arg8[%c70_791, %c224_792], %476 {strides = array<i32>} : memref<196x288xf32, #tpu.memory_space<vmem>>, vector<7x32xf32>,
    %c0_793 = arith.constant 0 : index
    %c5_794 = arith.constant 5 : index
    %c1_795 = arith.constant 1 : index
    %c0_796 = arith.constant 0 : index
    %478 = vector.load %arg7[%c0_793, %c5_794, %c1_795, %c0_796] : memref<4x8x8x32xf32, #tpu.memory_space<vmem>>, vector<1x1x7x32xf32>
    %479 = vector.shape_cast %478 : vector<1x1x7x32xf32> to vector<7x32xf32>
    %c77_797 = arith.constant 77 : index
    %c224_798 = arith.constant 224 : index
    %480 = vector.load %arg8[%c77_797, %c224_798] : memref<196x288xf32, #tpu.memory_space<vmem>>, vector<7x32xf32>
    tpu.vector_store %arg8[%c77_797, %c224_798], %479 {strides = array<i32>} : memref<196x288xf32, #tpu.memory_space<vmem>>, vector<7x32xf32>,
    %c0_799 = arith.constant 0 : index
    %c6_800 = arith.constant 6 : index
    %c1_801 = arith.constant 1 : index
    %c0_802 = arith.constant 0 : index
    %481 = vector.load %arg7[%c0_799, %c6_800, %c1_801, %c0_802] : memref<4x8x8x32xf32, #tpu.memory_space<vmem>>, vector<1x1x7x32xf32>
    %482 = vector.shape_cast %481 : vector<1x1x7x32xf32> to vector<7x32xf32>
    %c84_803 = arith.constant 84 : index
    %c224_804 = arith.constant 224 : index
    %483 = vector.load %arg8[%c84_803, %c224_804] : memref<196x288xf32, #tpu.memory_space<vmem>>, vector<7x32xf32>
    tpu.vector_store %arg8[%c84_803, %c224_804], %482 {strides = array<i32>} : memref<196x288xf32, #tpu.memory_space<vmem>>, vector<7x32xf32>,
    %c0_805 = arith.constant 0 : index
    %c7_806 = arith.constant 7 : index
    %c1_807 = arith.constant 1 : index
    %c0_808 = arith.constant 0 : index
    %484 = vector.load %arg7[%c0_805, %c7_806, %c1_807, %c0_808] : memref<4x8x8x32xf32, #tpu.memory_space<vmem>>, vector<1x1x7x32xf32>
    %485 = vector.shape_cast %484 : vector<1x1x7x32xf32> to vector<7x32xf32>
    %c91_809 = arith.constant 91 : index
    %c224_810 = arith.constant 224 : index
    %486 = vector.load %arg8[%c91_809, %c224_810] : memref<196x288xf32, #tpu.memory_space<vmem>>, vector<7x32xf32>
    tpu.vector_store %arg8[%c91_809, %c224_810], %485 {strides = array<i32>} : memref<196x288xf32, #tpu.memory_space<vmem>>, vector<7x32xf32>,
    %c1_811 = arith.constant 1 : index
    %c1_812 = arith.constant 1 : index
    %c1_813 = arith.constant 1 : index
    %c0_814 = arith.constant 0 : index
    %487 = vector.load %arg7[%c1_811, %c1_812, %c1_813, %c0_814] : memref<4x8x8x32xf32, #tpu.memory_space<vmem>>, vector<1x1x7x32xf32>
    %488 = vector.shape_cast %487 : vector<1x1x7x32xf32> to vector<7x32xf32>
    %c49_815 = arith.constant 49 : index
    %c256_816 = arith.constant 256 : index
    %489 = vector.load %arg8[%c49_815, %c256_816] : memref<196x288xf32, #tpu.memory_space<vmem>>, vector<7x32xf32>
    tpu.vector_store %arg8[%c49_815, %c256_816], %488 {strides = array<i32>} : memref<196x288xf32, #tpu.memory_space<vmem>>, vector<7x32xf32>,
    %c1_817 = arith.constant 1 : index
    %c2_818 = arith.constant 2 : index
    %c1_819 = arith.constant 1 : index
    %c0_820 = arith.constant 0 : index
    %490 = vector.load %arg7[%c1_817, %c2_818, %c1_819, %c0_820] : memref<4x8x8x32xf32, #tpu.memory_space<vmem>>, vector<1x1x7x32xf32>
    %491 = vector.shape_cast %490 : vector<1x1x7x32xf32> to vector<7x32xf32>
    %c56_821 = arith.constant 56 : index
    %c256_822 = arith.constant 256 : index
    %492 = vector.load %arg8[%c56_821, %c256_822] : memref<196x288xf32, #tpu.memory_space<vmem>>, vector<7x32xf32>
    tpu.vector_store %arg8[%c56_821, %c256_822], %491 {strides = array<i32>} : memref<196x288xf32, #tpu.memory_space<vmem>>, vector<7x32xf32>,
    %c1_823 = arith.constant 1 : index
    %c3_824 = arith.constant 3 : index
    %c1_825 = arith.constant 1 : index
    %c0_826 = arith.constant 0 : index
    %493 = vector.load %arg7[%c1_823, %c3_824, %c1_825, %c0_826] : memref<4x8x8x32xf32, #tpu.memory_space<vmem>>, vector<1x1x7x32xf32>
    %494 = vector.shape_cast %493 : vector<1x1x7x32xf32> to vector<7x32xf32>
    %c63_827 = arith.constant 63 : index
    %c256_828 = arith.constant 256 : index
    %495 = vector.load %arg8[%c63_827, %c256_828] : memref<196x288xf32, #tpu.memory_space<vmem>>, vector<7x32xf32>
    tpu.vector_store %arg8[%c63_827, %c256_828], %494 {strides = array<i32>} : memref<196x288xf32, #tpu.memory_space<vmem>>, vector<7x32xf32>,
    %c1_829 = arith.constant 1 : index
    %c4_830 = arith.constant 4 : index
    %c1_831 = arith.constant 1 : index
    %c0_832 = arith.constant 0 : index
    %496 = vector.load %arg7[%c1_829, %c4_830, %c1_831, %c0_832] : memref<4x8x8x32xf32, #tpu.memory_space<vmem>>, vector<1x1x7x32xf32>
    %497 = vector.shape_cast %496 : vector<1x1x7x32xf32> to vector<7x32xf32>
    %c70_833 = arith.constant 70 : index
    %c256_834 = arith.constant 256 : index
    %498 = vector.load %arg8[%c70_833, %c256_834] : memref<196x288xf32, #tpu.memory_space<vmem>>, vector<7x32xf32>
    tpu.vector_store %arg8[%c70_833, %c256_834], %497 {strides = array<i32>} : memref<196x288xf32, #tpu.memory_space<vmem>>, vector<7x32xf32>,
    %c1_835 = arith.constant 1 : index
    %c5_836 = arith.constant 5 : index
    %c1_837 = arith.constant 1 : index
    %c0_838 = arith.constant 0 : index
    %499 = vector.load %arg7[%c1_835, %c5_836, %c1_837, %c0_838] : memref<4x8x8x32xf32, #tpu.memory_space<vmem>>, vector<1x1x7x32xf32>
    %500 = vector.shape_cast %499 : vector<1x1x7x32xf32> to vector<7x32xf32>
    %c77_839 = arith.constant 77 : index
    %c256_840 = arith.constant 256 : index
    %501 = vector.load %arg8[%c77_839, %c256_840] : memref<196x288xf32, #tpu.memory_space<vmem>>, vector<7x32xf32>
    tpu.vector_store %arg8[%c77_839, %c256_840], %500 {strides = array<i32>} : memref<196x288xf32, #tpu.memory_space<vmem>>, vector<7x32xf32>,
    %c1_841 = arith.constant 1 : index
    %c6_842 = arith.constant 6 : index
    %c1_843 = arith.constant 1 : index
    %c0_844 = arith.constant 0 : index
    %502 = vector.load %arg7[%c1_841, %c6_842, %c1_843, %c0_844] : memref<4x8x8x32xf32, #tpu.memory_space<vmem>>, vector<1x1x7x32xf32>
    %503 = vector.shape_cast %502 : vector<1x1x7x32xf32> to vector<7x32xf32>
    %c84_845 = arith.constant 84 : index
    %c256_846 = arith.constant 256 : index
    %504 = vector.load %arg8[%c84_845, %c256_846] : memref<196x288xf32, #tpu.memory_space<vmem>>, vector<7x32xf32>
    tpu.vector_store %arg8[%c84_845, %c256_846], %503 {strides = array<i32>} : memref<196x288xf32, #tpu.memory_space<vmem>>, vector<7x32xf32>,
    %c1_847 = arith.constant 1 : index
    %c7_848 = arith.constant 7 : index
    %c1_849 = arith.constant 1 : index
    %c0_850 = arith.constant 0 : index
    %505 = vector.load %arg7[%c1_847, %c7_848, %c1_849, %c0_850] : memref<4x8x8x32xf32, #tpu.memory_space<vmem>>, vector<1x1x7x32xf32>
    %506 = vector.shape_cast %505 : vector<1x1x7x32xf32> to vector<7x32xf32>
    %c91_851 = arith.constant 91 : index
    %c256_852 = arith.constant 256 : index
    %507 = vector.load %arg8[%c91_851, %c256_852] : memref<196x288xf32, #tpu.memory_space<vmem>>, vector<7x32xf32>
    tpu.vector_store %arg8[%c91_851, %c256_852], %506 {strides = array<i32>} : memref<196x288xf32, #tpu.memory_space<vmem>>, vector<7x32xf32>,
    %c2_853 = arith.constant 2 : index
    %c0_854 = arith.constant 0 : index
    %c0_855 = arith.constant 0 : index
    %c0_856 = arith.constant 0 : index
    %508 = vector.load %arg7[%c2_853, %c0_854, %c0_855, %c0_856] : memref<4x8x8x32xf32, #tpu.memory_space<vmem>>, vector<1x1x7x32xf32>
    %509 = vector.shape_cast %508 : vector<1x1x7x32xf32> to vector<7x32xf32>
    %c98 = arith.constant 98 : index
    %c0_857 = arith.constant 0 : index
    %510 = vector.load %arg8[%c98, %c0_857] : memref<196x288xf32, #tpu.memory_space<vmem>>, vector<7x32xf32>
    tpu.vector_store %arg8[%c98, %c0_857], %509 {strides = array<i32>} : memref<196x288xf32, #tpu.memory_space<vmem>>, vector<7x32xf32>,
    %c2_858 = arith.constant 2 : index
    %c1_859 = arith.constant 1 : index
    %c0_860 = arith.constant 0 : index
    %c0_861 = arith.constant 0 : index
    %511 = vector.load %arg7[%c2_858, %c1_859, %c0_860, %c0_861] : memref<4x8x8x32xf32, #tpu.memory_space<vmem>>, vector<1x1x7x32xf32>
    %512 = vector.shape_cast %511 : vector<1x1x7x32xf32> to vector<7x32xf32>
    %c105 = arith.constant 105 : index
    %c0_862 = arith.constant 0 : index
    %513 = vector.load %arg8[%c105, %c0_862] : memref<196x288xf32, #tpu.memory_space<vmem>>, vector<7x32xf32>
    tpu.vector_store %arg8[%c105, %c0_862], %512 {strides = array<i32>} : memref<196x288xf32, #tpu.memory_space<vmem>>, vector<7x32xf32>,
    %c2_863 = arith.constant 2 : index
    %c2_864 = arith.constant 2 : index
    %c0_865 = arith.constant 0 : index
    %c0_866 = arith.constant 0 : index
    %514 = vector.load %arg7[%c2_863, %c2_864, %c0_865, %c0_866] : memref<4x8x8x32xf32, #tpu.memory_space<vmem>>, vector<1x1x7x32xf32>
    %515 = vector.shape_cast %514 : vector<1x1x7x32xf32> to vector<7x32xf32>
    %c112 = arith.constant 112 : index
    %c0_867 = arith.constant 0 : index
    %516 = vector.load %arg8[%c112, %c0_867] : memref<196x288xf32, #tpu.memory_space<vmem>>, vector<7x32xf32>
    tpu.vector_store %arg8[%c112, %c0_867], %515 {strides = array<i32>} : memref<196x288xf32, #tpu.memory_space<vmem>>, vector<7x32xf32>,
    %c2_868 = arith.constant 2 : index
    %c3_869 = arith.constant 3 : index
    %c0_870 = arith.constant 0 : index
    %c0_871 = arith.constant 0 : index
    %517 = vector.load %arg7[%c2_868, %c3_869, %c0_870, %c0_871] : memref<4x8x8x32xf32, #tpu.memory_space<vmem>>, vector<1x1x7x32xf32>
    %518 = vector.shape_cast %517 : vector<1x1x7x32xf32> to vector<7x32xf32>
    %c119 = arith.constant 119 : index
    %c0_872 = arith.constant 0 : index
    %519 = vector.load %arg8[%c119, %c0_872] : memref<196x288xf32, #tpu.memory_space<vmem>>, vector<7x32xf32>
    tpu.vector_store %arg8[%c119, %c0_872], %518 {strides = array<i32>} : memref<196x288xf32, #tpu.memory_space<vmem>>, vector<7x32xf32>,
    %c2_873 = arith.constant 2 : index
    %c4_874 = arith.constant 4 : index
    %c0_875 = arith.constant 0 : index
    %c0_876 = arith.constant 0 : index
    %520 = vector.load %arg7[%c2_873, %c4_874, %c0_875, %c0_876] : memref<4x8x8x32xf32, #tpu.memory_space<vmem>>, vector<1x1x7x32xf32>
    %521 = vector.shape_cast %520 : vector<1x1x7x32xf32> to vector<7x32xf32>
    %c126 = arith.constant 126 : index
    %c0_877 = arith.constant 0 : index
    %522 = vector.load %arg8[%c126, %c0_877] : memref<196x288xf32, #tpu.memory_space<vmem>>, vector<7x32xf32>
    tpu.vector_store %arg8[%c126, %c0_877], %521 {strides = array<i32>} : memref<196x288xf32, #tpu.memory_space<vmem>>, vector<7x32xf32>,
    %c2_878 = arith.constant 2 : index
    %c5_879 = arith.constant 5 : index
    %c0_880 = arith.constant 0 : index
    %c0_881 = arith.constant 0 : index
    %523 = vector.load %arg7[%c2_878, %c5_879, %c0_880, %c0_881] : memref<4x8x8x32xf32, #tpu.memory_space<vmem>>, vector<1x1x7x32xf32>
    %524 = vector.shape_cast %523 : vector<1x1x7x32xf32> to vector<7x32xf32>
    %c133 = arith.constant 133 : index
    %c0_882 = arith.constant 0 : index
    %525 = vector.load %arg8[%c133, %c0_882] : memref<196x288xf32, #tpu.memory_space<vmem>>, vector<7x32xf32>
    tpu.vector_store %arg8[%c133, %c0_882], %524 {strides = array<i32>} : memref<196x288xf32, #tpu.memory_space<vmem>>, vector<7x32xf32>,
    %c2_883 = arith.constant 2 : index
    %c6_884 = arith.constant 6 : index
    %c0_885 = arith.constant 0 : index
    %c0_886 = arith.constant 0 : index
    %526 = vector.load %arg7[%c2_883, %c6_884, %c0_885, %c0_886] : memref<4x8x8x32xf32, #tpu.memory_space<vmem>>, vector<1x1x7x32xf32>
    %527 = vector.shape_cast %526 : vector<1x1x7x32xf32> to vector<7x32xf32>
    %c140 = arith.constant 140 : index
    %c0_887 = arith.constant 0 : index
    %528 = vector.load %arg8[%c140, %c0_887] : memref<196x288xf32, #tpu.memory_space<vmem>>, vector<7x32xf32>
    tpu.vector_store %arg8[%c140, %c0_887], %527 {strides = array<i32>} : memref<196x288xf32, #tpu.memory_space<vmem>>, vector<7x32xf32>,
    %c3_888 = arith.constant 3 : index
    %c0_889 = arith.constant 0 : index
    %c0_890 = arith.constant 0 : index
    %c0_891 = arith.constant 0 : index
    %529 = vector.load %arg7[%c3_888, %c0_889, %c0_890, %c0_891] : memref<4x8x8x32xf32, #tpu.memory_space<vmem>>, vector<1x1x7x32xf32>
    %530 = vector.shape_cast %529 : vector<1x1x7x32xf32> to vector<7x32xf32>
    %c98_892 = arith.constant 98 : index
    %c32_893 = arith.constant 32 : index
    %531 = vector.load %arg8[%c98_892, %c32_893] : memref<196x288xf32, #tpu.memory_space<vmem>>, vector<7x32xf32>
    tpu.vector_store %arg8[%c98_892, %c32_893], %530 {strides = array<i32>} : memref<196x288xf32, #tpu.memory_space<vmem>>, vector<7x32xf32>,
    %c3_894 = arith.constant 3 : index
    %c1_895 = arith.constant 1 : index
    %c0_896 = arith.constant 0 : index
    %c0_897 = arith.constant 0 : index
    %532 = vector.load %arg7[%c3_894, %c1_895, %c0_896, %c0_897] : memref<4x8x8x32xf32, #tpu.memory_space<vmem>>, vector<1x1x7x32xf32>
    %533 = vector.shape_cast %532 : vector<1x1x7x32xf32> to vector<7x32xf32>
    %c105_898 = arith.constant 105 : index
    %c32_899 = arith.constant 32 : index
    %534 = vector.load %arg8[%c105_898, %c32_899] : memref<196x288xf32, #tpu.memory_space<vmem>>, vector<7x32xf32>
    tpu.vector_store %arg8[%c105_898, %c32_899], %533 {strides = array<i32>} : memref<196x288xf32, #tpu.memory_space<vmem>>, vector<7x32xf32>,
    %c3_900 = arith.constant 3 : index
    %c2_901 = arith.constant 2 : index
    %c0_902 = arith.constant 0 : index
    %c0_903 = arith.constant 0 : index
    %535 = vector.load %arg7[%c3_900, %c2_901, %c0_902, %c0_903] : memref<4x8x8x32xf32, #tpu.memory_space<vmem>>, vector<1x1x7x32xf32>
    %536 = vector.shape_cast %535 : vector<1x1x7x32xf32> to vector<7x32xf32>
    %c112_904 = arith.constant 112 : index
    %c32_905 = arith.constant 32 : index
    %537 = vector.load %arg8[%c112_904, %c32_905] : memref<196x288xf32, #tpu.memory_space<vmem>>, vector<7x32xf32>
    tpu.vector_store %arg8[%c112_904, %c32_905], %536 {strides = array<i32>} : memref<196x288xf32, #tpu.memory_space<vmem>>, vector<7x32xf32>,
    %c3_906 = arith.constant 3 : index
    %c3_907 = arith.constant 3 : index
    %c0_908 = arith.constant 0 : index
    %c0_909 = arith.constant 0 : index
    %538 = vector.load %arg7[%c3_906, %c3_907, %c0_908, %c0_909] : memref<4x8x8x32xf32, #tpu.memory_space<vmem>>, vector<1x1x7x32xf32>
    %539 = vector.shape_cast %538 : vector<1x1x7x32xf32> to vector<7x32xf32>
    %c119_910 = arith.constant 119 : index
    %c32_911 = arith.constant 32 : index
    %540 = vector.load %arg8[%c119_910, %c32_911] : memref<196x288xf32, #tpu.memory_space<vmem>>, vector<7x32xf32>
    tpu.vector_store %arg8[%c119_910, %c32_911], %539 {strides = array<i32>} : memref<196x288xf32, #tpu.memory_space<vmem>>, vector<7x32xf32>,
    %c3_912 = arith.constant 3 : index
    %c4_913 = arith.constant 4 : index
    %c0_914 = arith.constant 0 : index
    %c0_915 = arith.constant 0 : index
    %541 = vector.load %arg7[%c3_912, %c4_913, %c0_914, %c0_915] : memref<4x8x8x32xf32, #tpu.memory_space<vmem>>, vector<1x1x7x32xf32>
    %542 = vector.shape_cast %541 : vector<1x1x7x32xf32> to vector<7x32xf32>
    %c126_916 = arith.constant 126 : index
    %c32_917 = arith.constant 32 : index
    %543 = vector.load %arg8[%c126_916, %c32_917] : memref<196x288xf32, #tpu.memory_space<vmem>>, vector<7x32xf32>
    tpu.vector_store %arg8[%c126_916, %c32_917], %542 {strides = array<i32>} : memref<196x288xf32, #tpu.memory_space<vmem>>, vector<7x32xf32>,
    %c3_918 = arith.constant 3 : index
    %c5_919 = arith.constant 5 : index
    %c0_920 = arith.constant 0 : index
    %c0_921 = arith.constant 0 : index
    %544 = vector.load %arg7[%c3_918, %c5_919, %c0_920, %c0_921] : memref<4x8x8x32xf32, #tpu.memory_space<vmem>>, vector<1x1x7x32xf32>
    %545 = vector.shape_cast %544 : vector<1x1x7x32xf32> to vector<7x32xf32>
    %c133_922 = arith.constant 133 : index
    %c32_923 = arith.constant 32 : index
    %546 = vector.load %arg8[%c133_922, %c32_923] : memref<196x288xf32, #tpu.memory_space<vmem>>, vector<7x32xf32>
    tpu.vector_store %arg8[%c133_922, %c32_923], %545 {strides = array<i32>} : memref<196x288xf32, #tpu.memory_space<vmem>>, vector<7x32xf32>,
    %c3_924 = arith.constant 3 : index
    %c6_925 = arith.constant 6 : index
    %c0_926 = arith.constant 0 : index
    %c0_927 = arith.constant 0 : index
    %547 = vector.load %arg7[%c3_924, %c6_925, %c0_926, %c0_927] : memref<4x8x8x32xf32, #tpu.memory_space<vmem>>, vector<1x1x7x32xf32>
    %548 = vector.shape_cast %547 : vector<1x1x7x32xf32> to vector<7x32xf32>
    %c140_928 = arith.constant 140 : index
    %c32_929 = arith.constant 32 : index
    %549 = vector.load %arg8[%c140_928, %c32_929] : memref<196x288xf32, #tpu.memory_space<vmem>>, vector<7x32xf32>
    tpu.vector_store %arg8[%c140_928, %c32_929], %548 {strides = array<i32>} : memref<196x288xf32, #tpu.memory_space<vmem>>, vector<7x32xf32>,
    %c2_930 = arith.constant 2 : index
    %c0_931 = arith.constant 0 : index
    %c1_932 = arith.constant 1 : index
    %c0_933 = arith.constant 0 : index
    %550 = vector.load %arg7[%c2_930, %c0_931, %c1_932, %c0_933] : memref<4x8x8x32xf32, #tpu.memory_space<vmem>>, vector<1x1x7x32xf32>
    %551 = vector.shape_cast %550 : vector<1x1x7x32xf32> to vector<7x32xf32>
    %c98_934 = arith.constant 98 : index
    %c64_935 = arith.constant 64 : index
    %552 = vector.load %arg8[%c98_934, %c64_935] : memref<196x288xf32, #tpu.memory_space<vmem>>, vector<7x32xf32>
    tpu.vector_store %arg8[%c98_934, %c64_935], %551 {strides = array<i32>} : memref<196x288xf32, #tpu.memory_space<vmem>>, vector<7x32xf32>,
    %c2_936 = arith.constant 2 : index
    %c1_937 = arith.constant 1 : index
    %c1_938 = arith.constant 1 : index
    %c0_939 = arith.constant 0 : index
    %553 = vector.load %arg7[%c2_936, %c1_937, %c1_938, %c0_939] : memref<4x8x8x32xf32, #tpu.memory_space<vmem>>, vector<1x1x7x32xf32>
    %554 = vector.shape_cast %553 : vector<1x1x7x32xf32> to vector<7x32xf32>
    %c105_940 = arith.constant 105 : index
    %c64_941 = arith.constant 64 : index
    %555 = vector.load %arg8[%c105_940, %c64_941] : memref<196x288xf32, #tpu.memory_space<vmem>>, vector<7x32xf32>
    tpu.vector_store %arg8[%c105_940, %c64_941], %554 {strides = array<i32>} : memref<196x288xf32, #tpu.memory_space<vmem>>, vector<7x32xf32>,
    %c2_942 = arith.constant 2 : index
    %c2_943 = arith.constant 2 : index
    %c1_944 = arith.constant 1 : index
    %c0_945 = arith.constant 0 : index
    %556 = vector.load %arg7[%c2_942, %c2_943, %c1_944, %c0_945] : memref<4x8x8x32xf32, #tpu.memory_space<vmem>>, vector<1x1x7x32xf32>
    %557 = vector.shape_cast %556 : vector<1x1x7x32xf32> to vector<7x32xf32>
    %c112_946 = arith.constant 112 : index
    %c64_947 = arith.constant 64 : index
    %558 = vector.load %arg8[%c112_946, %c64_947] : memref<196x288xf32, #tpu.memory_space<vmem>>, vector<7x32xf32>
    tpu.vector_store %arg8[%c112_946, %c64_947], %557 {strides = array<i32>} : memref<196x288xf32, #tpu.memory_space<vmem>>, vector<7x32xf32>,
    %c2_948 = arith.constant 2 : index
    %c3_949 = arith.constant 3 : index
    %c1_950 = arith.constant 1 : index
    %c0_951 = arith.constant 0 : index
    %559 = vector.load %arg7[%c2_948, %c3_949, %c1_950, %c0_951] : memref<4x8x8x32xf32, #tpu.memory_space<vmem>>, vector<1x1x7x32xf32>
    %560 = vector.shape_cast %559 : vector<1x1x7x32xf32> to vector<7x32xf32>
    %c119_952 = arith.constant 119 : index
    %c64_953 = arith.constant 64 : index
    %561 = vector.load %arg8[%c119_952, %c64_953] : memref<196x288xf32, #tpu.memory_space<vmem>>, vector<7x32xf32>
    tpu.vector_store %arg8[%c119_952, %c64_953], %560 {strides = array<i32>} : memref<196x288xf32, #tpu.memory_space<vmem>>, vector<7x32xf32>,
    %c2_954 = arith.constant 2 : index
    %c4_955 = arith.constant 4 : index
    %c1_956 = arith.constant 1 : index
    %c0_957 = arith.constant 0 : index
    %562 = vector.load %arg7[%c2_954, %c4_955, %c1_956, %c0_957] : memref<4x8x8x32xf32, #tpu.memory_space<vmem>>, vector<1x1x7x32xf32>
    %563 = vector.shape_cast %562 : vector<1x1x7x32xf32> to vector<7x32xf32>
    %c126_958 = arith.constant 126 : index
    %c64_959 = arith.constant 64 : index
    %564 = vector.load %arg8[%c126_958, %c64_959] : memref<196x288xf32, #tpu.memory_space<vmem>>, vector<7x32xf32>
    tpu.vector_store %arg8[%c126_958, %c64_959], %563 {strides = array<i32>} : memref<196x288xf32, #tpu.memory_space<vmem>>, vector<7x32xf32>,
    %c2_960 = arith.constant 2 : index
    %c5_961 = arith.constant 5 : index
    %c1_962 = arith.constant 1 : index
    %c0_963 = arith.constant 0 : index
    %565 = vector.load %arg7[%c2_960, %c5_961, %c1_962, %c0_963] : memref<4x8x8x32xf32, #tpu.memory_space<vmem>>, vector<1x1x7x32xf32>
    %566 = vector.shape_cast %565 : vector<1x1x7x32xf32> to vector<7x32xf32>
    %c133_964 = arith.constant 133 : index
    %c64_965 = arith.constant 64 : index
    %567 = vector.load %arg8[%c133_964, %c64_965] : memref<196x288xf32, #tpu.memory_space<vmem>>, vector<7x32xf32>
    tpu.vector_store %arg8[%c133_964, %c64_965], %566 {strides = array<i32>} : memref<196x288xf32, #tpu.memory_space<vmem>>, vector<7x32xf32>,
    %c2_966 = arith.constant 2 : index
    %c6_967 = arith.constant 6 : index
    %c1_968 = arith.constant 1 : index
    %c0_969 = arith.constant 0 : index
    %568 = vector.load %arg7[%c2_966, %c6_967, %c1_968, %c0_969] : memref<4x8x8x32xf32, #tpu.memory_space<vmem>>, vector<1x1x7x32xf32>
    %569 = vector.shape_cast %568 : vector<1x1x7x32xf32> to vector<7x32xf32>
    %c140_970 = arith.constant 140 : index
    %c64_971 = arith.constant 64 : index
    %570 = vector.load %arg8[%c140_970, %c64_971] : memref<196x288xf32, #tpu.memory_space<vmem>>, vector<7x32xf32>
    tpu.vector_store %arg8[%c140_970, %c64_971], %569 {strides = array<i32>} : memref<196x288xf32, #tpu.memory_space<vmem>>, vector<7x32xf32>,
    %c0_972 = arith.constant 0 : index
    %c1_973 = arith.constant 1 : index
    %c0_974 = arith.constant 0 : index
    %c0_975 = arith.constant 0 : index
    %571 = vector.load %arg7[%c0_972, %c1_973, %c0_974, %c0_975] : memref<4x8x8x32xf32, #tpu.memory_space<vmem>>, vector<1x1x7x32xf32>
    %572 = vector.shape_cast %571 : vector<1x1x7x32xf32> to vector<7x32xf32>
    %c98_976 = arith.constant 98 : index
    %c96_977 = arith.constant 96 : index
    %573 = vector.load %arg8[%c98_976, %c96_977] : memref<196x288xf32, #tpu.memory_space<vmem>>, vector<7x32xf32>
    tpu.vector_store %arg8[%c98_976, %c96_977], %572 {strides = array<i32>} : memref<196x288xf32, #tpu.memory_space<vmem>>, vector<7x32xf32>,
    %c0_978 = arith.constant 0 : index
    %c2_979 = arith.constant 2 : index
    %c0_980 = arith.constant 0 : index
    %c0_981 = arith.constant 0 : index
    %574 = vector.load %arg7[%c0_978, %c2_979, %c0_980, %c0_981] : memref<4x8x8x32xf32, #tpu.memory_space<vmem>>, vector<1x1x7x32xf32>
    %575 = vector.shape_cast %574 : vector<1x1x7x32xf32> to vector<7x32xf32>
    %c105_982 = arith.constant 105 : index
    %c96_983 = arith.constant 96 : index
    %576 = vector.load %arg8[%c105_982, %c96_983] : memref<196x288xf32, #tpu.memory_space<vmem>>, vector<7x32xf32>
    tpu.vector_store %arg8[%c105_982, %c96_983], %575 {strides = array<i32>} : memref<196x288xf32, #tpu.memory_space<vmem>>, vector<7x32xf32>,
    %c0_984 = arith.constant 0 : index
    %c3_985 = arith.constant 3 : index
    %c0_986 = arith.constant 0 : index
    %c0_987 = arith.constant 0 : index
    %577 = vector.load %arg7[%c0_984, %c3_985, %c0_986, %c0_987] : memref<4x8x8x32xf32, #tpu.memory_space<vmem>>, vector<1x1x7x32xf32>
    %578 = vector.shape_cast %577 : vector<1x1x7x32xf32> to vector<7x32xf32>
    %c112_988 = arith.constant 112 : index
    %c96_989 = arith.constant 96 : index
    %579 = vector.load %arg8[%c112_988, %c96_989] : memref<196x288xf32, #tpu.memory_space<vmem>>, vector<7x32xf32>
    tpu.vector_store %arg8[%c112_988, %c96_989], %578 {strides = array<i32>} : memref<196x288xf32, #tpu.memory_space<vmem>>, vector<7x32xf32>,
    %c0_990 = arith.constant 0 : index
    %c4_991 = arith.constant 4 : index
    %c0_992 = arith.constant 0 : index
    %c0_993 = arith.constant 0 : index
    %580 = vector.load %arg7[%c0_990, %c4_991, %c0_992, %c0_993] : memref<4x8x8x32xf32, #tpu.memory_space<vmem>>, vector<1x1x7x32xf32>
    %581 = vector.shape_cast %580 : vector<1x1x7x32xf32> to vector<7x32xf32>
    %c119_994 = arith.constant 119 : index
    %c96_995 = arith.constant 96 : index
    %582 = vector.load %arg8[%c119_994, %c96_995] : memref<196x288xf32, #tpu.memory_space<vmem>>, vector<7x32xf32>
    tpu.vector_store %arg8[%c119_994, %c96_995], %581 {strides = array<i32>} : memref<196x288xf32, #tpu.memory_space<vmem>>, vector<7x32xf32>,
    %c0_996 = arith.constant 0 : index
    %c5_997 = arith.constant 5 : index
    %c0_998 = arith.constant 0 : index
    %c0_999 = arith.constant 0 : index
    %583 = vector.load %arg7[%c0_996, %c5_997, %c0_998, %c0_999] : memref<4x8x8x32xf32, #tpu.memory_space<vmem>>, vector<1x1x7x32xf32>
    %584 = vector.shape_cast %583 : vector<1x1x7x32xf32> to vector<7x32xf32>
    %c126_1000 = arith.constant 126 : index
    %c96_1001 = arith.constant 96 : index
    %585 = vector.load %arg8[%c126_1000, %c96_1001] : memref<196x288xf32, #tpu.memory_space<vmem>>, vector<7x32xf32>
    tpu.vector_store %arg8[%c126_1000, %c96_1001], %584 {strides = array<i32>} : memref<196x288xf32, #tpu.memory_space<vmem>>, vector<7x32xf32>,
    %c0_1002 = arith.constant 0 : index
    %c6_1003 = arith.constant 6 : index
    %c0_1004 = arith.constant 0 : index
    %c0_1005 = arith.constant 0 : index
    %586 = vector.load %arg7[%c0_1002, %c6_1003, %c0_1004, %c0_1005] : memref<4x8x8x32xf32, #tpu.memory_space<vmem>>, vector<1x1x7x32xf32>
    %587 = vector.shape_cast %586 : vector<1x1x7x32xf32> to vector<7x32xf32>
    %c133_1006 = arith.constant 133 : index
    %c96_1007 = arith.constant 96 : index
    %588 = vector.load %arg8[%c133_1006, %c96_1007] : memref<196x288xf32, #tpu.memory_space<vmem>>, vector<7x32xf32>
    tpu.vector_store %arg8[%c133_1006, %c96_1007], %587 {strides = array<i32>} : memref<196x288xf32, #tpu.memory_space<vmem>>, vector<7x32xf32>,
    %c0_1008 = arith.constant 0 : index
    %c7_1009 = arith.constant 7 : index
    %c0_1010 = arith.constant 0 : index
    %c0_1011 = arith.constant 0 : index
    %589 = vector.load %arg7[%c0_1008, %c7_1009, %c0_1010, %c0_1011] : memref<4x8x8x32xf32, #tpu.memory_space<vmem>>, vector<1x1x7x32xf32>
    %590 = vector.shape_cast %589 : vector<1x1x7x32xf32> to vector<7x32xf32>
    %c140_1012 = arith.constant 140 : index
    %c96_1013 = arith.constant 96 : index
    %591 = vector.load %arg8[%c140_1012, %c96_1013] : memref<196x288xf32, #tpu.memory_space<vmem>>, vector<7x32xf32>
    tpu.vector_store %arg8[%c140_1012, %c96_1013], %590 {strides = array<i32>} : memref<196x288xf32, #tpu.memory_space<vmem>>, vector<7x32xf32>,
    %c1_1014 = arith.constant 1 : index
    %c1_1015 = arith.constant 1 : index
    %c0_1016 = arith.constant 0 : index
    %c0_1017 = arith.constant 0 : index
    %592 = vector.load %arg7[%c1_1014, %c1_1015, %c0_1016, %c0_1017] : memref<4x8x8x32xf32, #tpu.memory_space<vmem>>, vector<1x1x7x32xf32>
    %593 = vector.shape_cast %592 : vector<1x1x7x32xf32> to vector<7x32xf32>
    %c98_1018 = arith.constant 98 : index
    %c128_1019 = arith.constant 128 : index
    %594 = vector.load %arg8[%c98_1018, %c128_1019] : memref<196x288xf32, #tpu.memory_space<vmem>>, vector<7x32xf32>
    tpu.vector_store %arg8[%c98_1018, %c128_1019], %593 {strides = array<i32>} : memref<196x288xf32, #tpu.memory_space<vmem>>, vector<7x32xf32>,
    %c1_1020 = arith.constant 1 : index
    %c2_1021 = arith.constant 2 : index
    %c0_1022 = arith.constant 0 : index
    %c0_1023 = arith.constant 0 : index
    %595 = vector.load %arg7[%c1_1020, %c2_1021, %c0_1022, %c0_1023] : memref<4x8x8x32xf32, #tpu.memory_space<vmem>>, vector<1x1x7x32xf32>
    %596 = vector.shape_cast %595 : vector<1x1x7x32xf32> to vector<7x32xf32>
    %c105_1024 = arith.constant 105 : index
    %c128_1025 = arith.constant 128 : index
    %597 = vector.load %arg8[%c105_1024, %c128_1025] : memref<196x288xf32, #tpu.memory_space<vmem>>, vector<7x32xf32>
    tpu.vector_store %arg8[%c105_1024, %c128_1025], %596 {strides = array<i32>} : memref<196x288xf32, #tpu.memory_space<vmem>>, vector<7x32xf32>,
    %c1_1026 = arith.constant 1 : index
    %c3_1027 = arith.constant 3 : index
    %c0_1028 = arith.constant 0 : index
    %c0_1029 = arith.constant 0 : index
    %598 = vector.load %arg7[%c1_1026, %c3_1027, %c0_1028, %c0_1029] : memref<4x8x8x32xf32, #tpu.memory_space<vmem>>, vector<1x1x7x32xf32>
    %599 = vector.shape_cast %598 : vector<1x1x7x32xf32> to vector<7x32xf32>
    %c112_1030 = arith.constant 112 : index
    %c128_1031 = arith.constant 128 : index
    %600 = vector.load %arg8[%c112_1030, %c128_1031] : memref<196x288xf32, #tpu.memory_space<vmem>>, vector<7x32xf32>
    tpu.vector_store %arg8[%c112_1030, %c128_1031], %599 {strides = array<i32>} : memref<196x288xf32, #tpu.memory_space<vmem>>, vector<7x32xf32>,
    %c1_1032 = arith.constant 1 : index
    %c4_1033 = arith.constant 4 : index
    %c0_1034 = arith.constant 0 : index
    %c0_1035 = arith.constant 0 : index
    %601 = vector.load %arg7[%c1_1032, %c4_1033, %c0_1034, %c0_1035] : memref<4x8x8x32xf32, #tpu.memory_space<vmem>>, vector<1x1x7x32xf32>
    %602 = vector.shape_cast %601 : vector<1x1x7x32xf32> to vector<7x32xf32>
    %c119_1036 = arith.constant 119 : index
    %c128_1037 = arith.constant 128 : index
    %603 = vector.load %arg8[%c119_1036, %c128_1037] : memref<196x288xf32, #tpu.memory_space<vmem>>, vector<7x32xf32>
    tpu.vector_store %arg8[%c119_1036, %c128_1037], %602 {strides = array<i32>} : memref<196x288xf32, #tpu.memory_space<vmem>>, vector<7x32xf32>,
    %c1_1038 = arith.constant 1 : index
    %c5_1039 = arith.constant 5 : index
    %c0_1040 = arith.constant 0 : index
    %c0_1041 = arith.constant 0 : index
    %604 = vector.load %arg7[%c1_1038, %c5_1039, %c0_1040, %c0_1041] : memref<4x8x8x32xf32, #tpu.memory_space<vmem>>, vector<1x1x7x32xf32>
    %605 = vector.shape_cast %604 : vector<1x1x7x32xf32> to vector<7x32xf32>
    %c126_1042 = arith.constant 126 : index
    %c128_1043 = arith.constant 128 : index
    %606 = vector.load %arg8[%c126_1042, %c128_1043] : memref<196x288xf32, #tpu.memory_space<vmem>>, vector<7x32xf32>
    tpu.vector_store %arg8[%c126_1042, %c128_1043], %605 {strides = array<i32>} : memref<196x288xf32, #tpu.memory_space<vmem>>, vector<7x32xf32>,
    %c1_1044 = arith.constant 1 : index
    %c6_1045 = arith.constant 6 : index
    %c0_1046 = arith.constant 0 : index
    %c0_1047 = arith.constant 0 : index
    %607 = vector.load %arg7[%c1_1044, %c6_1045, %c0_1046, %c0_1047] : memref<4x8x8x32xf32, #tpu.memory_space<vmem>>, vector<1x1x7x32xf32>
    %608 = vector.shape_cast %607 : vector<1x1x7x32xf32> to vector<7x32xf32>
    %c133_1048 = arith.constant 133 : index
    %c128_1049 = arith.constant 128 : index
    %609 = vector.load %arg8[%c133_1048, %c128_1049] : memref<196x288xf32, #tpu.memory_space<vmem>>, vector<7x32xf32>
    tpu.vector_store %arg8[%c133_1048, %c128_1049], %608 {strides = array<i32>} : memref<196x288xf32, #tpu.memory_space<vmem>>, vector<7x32xf32>,
    %c1_1050 = arith.constant 1 : index
    %c7_1051 = arith.constant 7 : index
    %c0_1052 = arith.constant 0 : index
    %c0_1053 = arith.constant 0 : index
    %610 = vector.load %arg7[%c1_1050, %c7_1051, %c0_1052, %c0_1053] : memref<4x8x8x32xf32, #tpu.memory_space<vmem>>, vector<1x1x7x32xf32>
    %611 = vector.shape_cast %610 : vector<1x1x7x32xf32> to vector<7x32xf32>
    %c140_1054 = arith.constant 140 : index
    %c128_1055 = arith.constant 128 : index
    %612 = vector.load %arg8[%c140_1054, %c128_1055] : memref<196x288xf32, #tpu.memory_space<vmem>>, vector<7x32xf32>
    tpu.vector_store %arg8[%c140_1054, %c128_1055], %611 {strides = array<i32>} : memref<196x288xf32, #tpu.memory_space<vmem>>, vector<7x32xf32>,
    %c0_1056 = arith.constant 0 : index
    %c1_1057 = arith.constant 1 : index
    %c1_1058 = arith.constant 1 : index
    %c0_1059 = arith.constant 0 : index
    %613 = vector.load %arg7[%c0_1056, %c1_1057, %c1_1058, %c0_1059] : memref<4x8x8x32xf32, #tpu.memory_space<vmem>>, vector<1x1x7x32xf32>
    %614 = vector.shape_cast %613 : vector<1x1x7x32xf32> to vector<7x32xf32>
    %c98_1060 = arith.constant 98 : index
    %c160_1061 = arith.constant 160 : index
    %615 = vector.load %arg8[%c98_1060, %c160_1061] : memref<196x288xf32, #tpu.memory_space<vmem>>, vector<7x32xf32>
    tpu.vector_store %arg8[%c98_1060, %c160_1061], %614 {strides = array<i32>} : memref<196x288xf32, #tpu.memory_space<vmem>>, vector<7x32xf32>,
    %c0_1062 = arith.constant 0 : index
    %c2_1063 = arith.constant 2 : index
    %c1_1064 = arith.constant 1 : index
    %c0_1065 = arith.constant 0 : index
    %616 = vector.load %arg7[%c0_1062, %c2_1063, %c1_1064, %c0_1065] : memref<4x8x8x32xf32, #tpu.memory_space<vmem>>, vector<1x1x7x32xf32>
    %617 = vector.shape_cast %616 : vector<1x1x7x32xf32> to vector<7x32xf32>
    %c105_1066 = arith.constant 105 : index
    %c160_1067 = arith.constant 160 : index
    %618 = vector.load %arg8[%c105_1066, %c160_1067] : memref<196x288xf32, #tpu.memory_space<vmem>>, vector<7x32xf32>
    tpu.vector_store %arg8[%c105_1066, %c160_1067], %617 {strides = array<i32>} : memref<196x288xf32, #tpu.memory_space<vmem>>, vector<7x32xf32>,
    %c0_1068 = arith.constant 0 : index
    %c3_1069 = arith.constant 3 : index
    %c1_1070 = arith.constant 1 : index
    %c0_1071 = arith.constant 0 : index
    %619 = vector.load %arg7[%c0_1068, %c3_1069, %c1_1070, %c0_1071] : memref<4x8x8x32xf32, #tpu.memory_space<vmem>>, vector<1x1x7x32xf32>
    %620 = vector.shape_cast %619 : vector<1x1x7x32xf32> to vector<7x32xf32>
    %c112_1072 = arith.constant 112 : index
    %c160_1073 = arith.constant 160 : index
    %621 = vector.load %arg8[%c112_1072, %c160_1073] : memref<196x288xf32, #tpu.memory_space<vmem>>, vector<7x32xf32>
    tpu.vector_store %arg8[%c112_1072, %c160_1073], %620 {strides = array<i32>} : memref<196x288xf32, #tpu.memory_space<vmem>>, vector<7x32xf32>,
    %c0_1074 = arith.constant 0 : index
    %c4_1075 = arith.constant 4 : index
    %c1_1076 = arith.constant 1 : index
    %c0_1077 = arith.constant 0 : index
    %622 = vector.load %arg7[%c0_1074, %c4_1075, %c1_1076, %c0_1077] : memref<4x8x8x32xf32, #tpu.memory_space<vmem>>, vector<1x1x7x32xf32>
    %623 = vector.shape_cast %622 : vector<1x1x7x32xf32> to vector<7x32xf32>
    %c119_1078 = arith.constant 119 : index
    %c160_1079 = arith.constant 160 : index
    %624 = vector.load %arg8[%c119_1078, %c160_1079] : memref<196x288xf32, #tpu.memory_space<vmem>>, vector<7x32xf32>
    tpu.vector_store %arg8[%c119_1078, %c160_1079], %623 {strides = array<i32>} : memref<196x288xf32, #tpu.memory_space<vmem>>, vector<7x32xf32>,
    %c0_1080 = arith.constant 0 : index
    %c5_1081 = arith.constant 5 : index
    %c1_1082 = arith.constant 1 : index
    %c0_1083 = arith.constant 0 : index
    %625 = vector.load %arg7[%c0_1080, %c5_1081, %c1_1082, %c0_1083] : memref<4x8x8x32xf32, #tpu.memory_space<vmem>>, vector<1x1x7x32xf32>
    %626 = vector.shape_cast %625 : vector<1x1x7x32xf32> to vector<7x32xf32>
    %c126_1084 = arith.constant 126 : index
    %c160_1085 = arith.constant 160 : index
    %627 = vector.load %arg8[%c126_1084, %c160_1085] : memref<196x288xf32, #tpu.memory_space<vmem>>, vector<7x32xf32>
    tpu.vector_store %arg8[%c126_1084, %c160_1085], %626 {strides = array<i32>} : memref<196x288xf32, #tpu.memory_space<vmem>>, vector<7x32xf32>,
    %c0_1086 = arith.constant 0 : index
    %c6_1087 = arith.constant 6 : index
    %c1_1088 = arith.constant 1 : index
    %c0_1089 = arith.constant 0 : index
    %628 = vector.load %arg7[%c0_1086, %c6_1087, %c1_1088, %c0_1089] : memref<4x8x8x32xf32, #tpu.memory_space<vmem>>, vector<1x1x7x32xf32>
    %629 = vector.shape_cast %628 : vector<1x1x7x32xf32> to vector<7x32xf32>
    %c133_1090 = arith.constant 133 : index
    %c160_1091 = arith.constant 160 : index
    %630 = vector.load %arg8[%c133_1090, %c160_1091] : memref<196x288xf32, #tpu.memory_space<vmem>>, vector<7x32xf32>
    tpu.vector_store %arg8[%c133_1090, %c160_1091], %629 {strides = array<i32>} : memref<196x288xf32, #tpu.memory_space<vmem>>, vector<7x32xf32>,
    %c0_1092 = arith.constant 0 : index
    %c7_1093 = arith.constant 7 : index
    %c1_1094 = arith.constant 1 : index
    %c0_1095 = arith.constant 0 : index
    %631 = vector.load %arg7[%c0_1092, %c7_1093, %c1_1094, %c0_1095] : memref<4x8x8x32xf32, #tpu.memory_space<vmem>>, vector<1x1x7x32xf32>
    %632 = vector.shape_cast %631 : vector<1x1x7x32xf32> to vector<7x32xf32>
    %c140_1096 = arith.constant 140 : index
    %c160_1097 = arith.constant 160 : index
    %633 = vector.load %arg8[%c140_1096, %c160_1097] : memref<196x288xf32, #tpu.memory_space<vmem>>, vector<7x32xf32>
    tpu.vector_store %arg8[%c140_1096, %c160_1097], %632 {strides = array<i32>} : memref<196x288xf32, #tpu.memory_space<vmem>>, vector<7x32xf32>,
    %c2_1098 = arith.constant 2 : index
    %c1_1099 = arith.constant 1 : index
    %c0_1100 = arith.constant 0 : index
    %c0_1101 = arith.constant 0 : index
    %634 = vector.load %arg7[%c2_1098, %c1_1099, %c0_1100, %c0_1101] : memref<4x8x8x32xf32, #tpu.memory_space<vmem>>, vector<1x1x7x32xf32>
    %635 = vector.shape_cast %634 : vector<1x1x7x32xf32> to vector<7x32xf32>
    %c98_1102 = arith.constant 98 : index
    %c192_1103 = arith.constant 192 : index
    %636 = vector.load %arg8[%c98_1102, %c192_1103] : memref<196x288xf32, #tpu.memory_space<vmem>>, vector<7x32xf32>
    tpu.vector_store %arg8[%c98_1102, %c192_1103], %635 {strides = array<i32>} : memref<196x288xf32, #tpu.memory_space<vmem>>, vector<7x32xf32>,
    %c2_1104 = arith.constant 2 : index
    %c2_1105 = arith.constant 2 : index
    %c0_1106 = arith.constant 0 : index
    %c0_1107 = arith.constant 0 : index
    %637 = vector.load %arg7[%c2_1104, %c2_1105, %c0_1106, %c0_1107] : memref<4x8x8x32xf32, #tpu.memory_space<vmem>>, vector<1x1x7x32xf32>
    %638 = vector.shape_cast %637 : vector<1x1x7x32xf32> to vector<7x32xf32>
    %c105_1108 = arith.constant 105 : index
    %c192_1109 = arith.constant 192 : index
    %639 = vector.load %arg8[%c105_1108, %c192_1109] : memref<196x288xf32, #tpu.memory_space<vmem>>, vector<7x32xf32>
    tpu.vector_store %arg8[%c105_1108, %c192_1109], %638 {strides = array<i32>} : memref<196x288xf32, #tpu.memory_space<vmem>>, vector<7x32xf32>,
    %c2_1110 = arith.constant 2 : index
    %c3_1111 = arith.constant 3 : index
    %c0_1112 = arith.constant 0 : index
    %c0_1113 = arith.constant 0 : index
    %640 = vector.load %arg7[%c2_1110, %c3_1111, %c0_1112, %c0_1113] : memref<4x8x8x32xf32, #tpu.memory_space<vmem>>, vector<1x1x7x32xf32>
    %641 = vector.shape_cast %640 : vector<1x1x7x32xf32> to vector<7x32xf32>
    %c112_1114 = arith.constant 112 : index
    %c192_1115 = arith.constant 192 : index
    %642 = vector.load %arg8[%c112_1114, %c192_1115] : memref<196x288xf32, #tpu.memory_space<vmem>>, vector<7x32xf32>
    tpu.vector_store %arg8[%c112_1114, %c192_1115], %641 {strides = array<i32>} : memref<196x288xf32, #tpu.memory_space<vmem>>, vector<7x32xf32>,
    %c2_1116 = arith.constant 2 : index
    %c4_1117 = arith.constant 4 : index
    %c0_1118 = arith.constant 0 : index
    %c0_1119 = arith.constant 0 : index
    %643 = vector.load %arg7[%c2_1116, %c4_1117, %c0_1118, %c0_1119] : memref<4x8x8x32xf32, #tpu.memory_space<vmem>>, vector<1x1x7x32xf32>
    %644 = vector.shape_cast %643 : vector<1x1x7x32xf32> to vector<7x32xf32>
    %c119_1120 = arith.constant 119 : index
    %c192_1121 = arith.constant 192 : index
    %645 = vector.load %arg8[%c119_1120, %c192_1121] : memref<196x288xf32, #tpu.memory_space<vmem>>, vector<7x32xf32>
    tpu.vector_store %arg8[%c119_1120, %c192_1121], %644 {strides = array<i32>} : memref<196x288xf32, #tpu.memory_space<vmem>>, vector<7x32xf32>,
    %c2_1122 = arith.constant 2 : index
    %c5_1123 = arith.constant 5 : index
    %c0_1124 = arith.constant 0 : index
    %c0_1125 = arith.constant 0 : index
    %646 = vector.load %arg7[%c2_1122, %c5_1123, %c0_1124, %c0_1125] : memref<4x8x8x32xf32, #tpu.memory_space<vmem>>, vector<1x1x7x32xf32>
    %647 = vector.shape_cast %646 : vector<1x1x7x32xf32> to vector<7x32xf32>
    %c126_1126 = arith.constant 126 : index
    %c192_1127 = arith.constant 192 : index
    %648 = vector.load %arg8[%c126_1126, %c192_1127] : memref<196x288xf32, #tpu.memory_space<vmem>>, vector<7x32xf32>
    tpu.vector_store %arg8[%c126_1126, %c192_1127], %647 {strides = array<i32>} : memref<196x288xf32, #tpu.memory_space<vmem>>, vector<7x32xf32>,
    %c2_1128 = arith.constant 2 : index
    %c6_1129 = arith.constant 6 : index
    %c0_1130 = arith.constant 0 : index
    %c0_1131 = arith.constant 0 : index
    %649 = vector.load %arg7[%c2_1128, %c6_1129, %c0_1130, %c0_1131] : memref<4x8x8x32xf32, #tpu.memory_space<vmem>>, vector<1x1x7x32xf32>
    %650 = vector.shape_cast %649 : vector<1x1x7x32xf32> to vector<7x32xf32>
    %c133_1132 = arith.constant 133 : index
    %c192_1133 = arith.constant 192 : index
    %651 = vector.load %arg8[%c133_1132, %c192_1133] : memref<196x288xf32, #tpu.memory_space<vmem>>, vector<7x32xf32>
    tpu.vector_store %arg8[%c133_1132, %c192_1133], %650 {strides = array<i32>} : memref<196x288xf32, #tpu.memory_space<vmem>>, vector<7x32xf32>,
    %c2_1134 = arith.constant 2 : index
    %c7_1135 = arith.constant 7 : index
    %c0_1136 = arith.constant 0 : index
    %c0_1137 = arith.constant 0 : index
    %652 = vector.load %arg7[%c2_1134, %c7_1135, %c0_1136, %c0_1137] : memref<4x8x8x32xf32, #tpu.memory_space<vmem>>, vector<1x1x7x32xf32>
    %653 = vector.shape_cast %652 : vector<1x1x7x32xf32> to vector<7x32xf32>
    %c140_1138 = arith.constant 140 : index
    %c192_1139 = arith.constant 192 : index
    %654 = vector.load %arg8[%c140_1138, %c192_1139] : memref<196x288xf32, #tpu.memory_space<vmem>>, vector<7x32xf32>
    tpu.vector_store %arg8[%c140_1138, %c192_1139], %653 {strides = array<i32>} : memref<196x288xf32, #tpu.memory_space<vmem>>, vector<7x32xf32>,
    %c3_1140 = arith.constant 3 : index
    %c1_1141 = arith.constant 1 : index
    %c0_1142 = arith.constant 0 : index
    %c0_1143 = arith.constant 0 : index
    %655 = vector.load %arg7[%c3_1140, %c1_1141, %c0_1142, %c0_1143] : memref<4x8x8x32xf32, #tpu.memory_space<vmem>>, vector<1x1x7x32xf32>
    %656 = vector.shape_cast %655 : vector<1x1x7x32xf32> to vector<7x32xf32>
    %c98_1144 = arith.constant 98 : index
    %c224_1145 = arith.constant 224 : index
    %657 = vector.load %arg8[%c98_1144, %c224_1145] : memref<196x288xf32, #tpu.memory_space<vmem>>, vector<7x32xf32>
    tpu.vector_store %arg8[%c98_1144, %c224_1145], %656 {strides = array<i32>} : memref<196x288xf32, #tpu.memory_space<vmem>>, vector<7x32xf32>,
    %c3_1146 = arith.constant 3 : index
    %c2_1147 = arith.constant 2 : index
    %c0_1148 = arith.constant 0 : index
    %c0_1149 = arith.constant 0 : index
    %658 = vector.load %arg7[%c3_1146, %c2_1147, %c0_1148, %c0_1149] : memref<4x8x8x32xf32, #tpu.memory_space<vmem>>, vector<1x1x7x32xf32>
    %659 = vector.shape_cast %658 : vector<1x1x7x32xf32> to vector<7x32xf32>
    %c105_1150 = arith.constant 105 : index
    %c224_1151 = arith.constant 224 : index
    %660 = vector.load %arg8[%c105_1150, %c224_1151] : memref<196x288xf32, #tpu.memory_space<vmem>>, vector<7x32xf32>
    tpu.vector_store %arg8[%c105_1150, %c224_1151], %659 {strides = array<i32>} : memref<196x288xf32, #tpu.memory_space<vmem>>, vector<7x32xf32>,
    %c3_1152 = arith.constant 3 : index
    %c3_1153 = arith.constant 3 : index
    %c0_1154 = arith.constant 0 : index
    %c0_1155 = arith.constant 0 : index
    %661 = vector.load %arg7[%c3_1152, %c3_1153, %c0_1154, %c0_1155] : memref<4x8x8x32xf32, #tpu.memory_space<vmem>>, vector<1x1x7x32xf32>
    %662 = vector.shape_cast %661 : vector<1x1x7x32xf32> to vector<7x32xf32>
    %c112_1156 = arith.constant 112 : index
    %c224_1157 = arith.constant 224 : index
    %663 = vector.load %arg8[%c112_1156, %c224_1157] : memref<196x288xf32, #tpu.memory_space<vmem>>, vector<7x32xf32>
    tpu.vector_store %arg8[%c112_1156, %c224_1157], %662 {strides = array<i32>} : memref<196x288xf32, #tpu.memory_space<vmem>>, vector<7x32xf32>,
    %c3_1158 = arith.constant 3 : index
    %c4_1159 = arith.constant 4 : index
    %c0_1160 = arith.constant 0 : index
    %c0_1161 = arith.constant 0 : index
    %664 = vector.load %arg7[%c3_1158, %c4_1159, %c0_1160, %c0_1161] : memref<4x8x8x32xf32, #tpu.memory_space<vmem>>, vector<1x1x7x32xf32>
    %665 = vector.shape_cast %664 : vector<1x1x7x32xf32> to vector<7x32xf32>
    %c119_1162 = arith.constant 119 : index
    %c224_1163 = arith.constant 224 : index
    %666 = vector.load %arg8[%c119_1162, %c224_1163] : memref<196x288xf32, #tpu.memory_space<vmem>>, vector<7x32xf32>
    tpu.vector_store %arg8[%c119_1162, %c224_1163], %665 {strides = array<i32>} : memref<196x288xf32, #tpu.memory_space<vmem>>, vector<7x32xf32>,
    %c3_1164 = arith.constant 3 : index
    %c5_1165 = arith.constant 5 : index
    %c0_1166 = arith.constant 0 : index
    %c0_1167 = arith.constant 0 : index
    %667 = vector.load %arg7[%c3_1164, %c5_1165, %c0_1166, %c0_1167] : memref<4x8x8x32xf32, #tpu.memory_space<vmem>>, vector<1x1x7x32xf32>
    %668 = vector.shape_cast %667 : vector<1x1x7x32xf32> to vector<7x32xf32>
    %c126_1168 = arith.constant 126 : index
    %c224_1169 = arith.constant 224 : index
    %669 = vector.load %arg8[%c126_1168, %c224_1169] : memref<196x288xf32, #tpu.memory_space<vmem>>, vector<7x32xf32>
    tpu.vector_store %arg8[%c126_1168, %c224_1169], %668 {strides = array<i32>} : memref<196x288xf32, #tpu.memory_space<vmem>>, vector<7x32xf32>,
    %c3_1170 = arith.constant 3 : index
    %c6_1171 = arith.constant 6 : index
    %c0_1172 = arith.constant 0 : index
    %c0_1173 = arith.constant 0 : index
    %670 = vector.load %arg7[%c3_1170, %c6_1171, %c0_1172, %c0_1173] : memref<4x8x8x32xf32, #tpu.memory_space<vmem>>, vector<1x1x7x32xf32>
    %671 = vector.shape_cast %670 : vector<1x1x7x32xf32> to vector<7x32xf32>
    %c133_1174 = arith.constant 133 : index
    %c224_1175 = arith.constant 224 : index
    %672 = vector.load %arg8[%c133_1174, %c224_1175] : memref<196x288xf32, #tpu.memory_space<vmem>>, vector<7x32xf32>
    tpu.vector_store %arg8[%c133_1174, %c224_1175], %671 {strides = array<i32>} : memref<196x288xf32, #tpu.memory_space<vmem>>, vector<7x32xf32>,
    %c3_1176 = arith.constant 3 : index
    %c7_1177 = arith.constant 7 : index
    %c0_1178 = arith.constant 0 : index
    %c0_1179 = arith.constant 0 : index
    %673 = vector.load %arg7[%c3_1176, %c7_1177, %c0_1178, %c0_1179] : memref<4x8x8x32xf32, #tpu.memory_space<vmem>>, vector<1x1x7x32xf32>
    %674 = vector.shape_cast %673 : vector<1x1x7x32xf32> to vector<7x32xf32>
    %c140_1180 = arith.constant 140 : index
    %c224_1181 = arith.constant 224 : index
    %675 = vector.load %arg8[%c140_1180, %c224_1181] : memref<196x288xf32, #tpu.memory_space<vmem>>, vector<7x32xf32>
    tpu.vector_store %arg8[%c140_1180, %c224_1181], %674 {strides = array<i32>} : memref<196x288xf32, #tpu.memory_space<vmem>>, vector<7x32xf32>,
    %c2_1182 = arith.constant 2 : index
    %c1_1183 = arith.constant 1 : index
    %c1_1184 = arith.constant 1 : index
    %c0_1185 = arith.constant 0 : index
    %676 = vector.load %arg7[%c2_1182, %c1_1183, %c1_1184, %c0_1185] : memref<4x8x8x32xf32, #tpu.memory_space<vmem>>, vector<1x1x7x32xf32>
    %677 = vector.shape_cast %676 : vector<1x1x7x32xf32> to vector<7x32xf32>
    %c98_1186 = arith.constant 98 : index
    %c256_1187 = arith.constant 256 : index
    %678 = vector.load %arg8[%c98_1186, %c256_1187] : memref<196x288xf32, #tpu.memory_space<vmem>>, vector<7x32xf32>
    tpu.vector_store %arg8[%c98_1186, %c256_1187], %677 {strides = array<i32>} : memref<196x288xf32, #tpu.memory_space<vmem>>, vector<7x32xf32>,
    %c2_1188 = arith.constant 2 : index
    %c2_1189 = arith.constant 2 : index
    %c1_1190 = arith.constant 1 : index
    %c0_1191 = arith.constant 0 : index
    %679 = vector.load %arg7[%c2_1188, %c2_1189, %c1_1190, %c0_1191] : memref<4x8x8x32xf32, #tpu.memory_space<vmem>>, vector<1x1x7x32xf32>
    %680 = vector.shape_cast %679 : vector<1x1x7x32xf32> to vector<7x32xf32>
    %c105_1192 = arith.constant 105 : index
    %c256_1193 = arith.constant 256 : index
    %681 = vector.load %arg8[%c105_1192, %c256_1193] : memref<196x288xf32, #tpu.memory_space<vmem>>, vector<7x32xf32>
    tpu.vector_store %arg8[%c105_1192, %c256_1193], %680 {strides = array<i32>} : memref<196x288xf32, #tpu.memory_space<vmem>>, vector<7x32xf32>,
    %c2_1194 = arith.constant 2 : index
    %c3_1195 = arith.constant 3 : index
    %c1_1196 = arith.constant 1 : index
    %c0_1197 = arith.constant 0 : index
    %682 = vector.load %arg7[%c2_1194, %c3_1195, %c1_1196, %c0_1197] : memref<4x8x8x32xf32, #tpu.memory_space<vmem>>, vector<1x1x7x32xf32>
    %683 = vector.shape_cast %682 : vector<1x1x7x32xf32> to vector<7x32xf32>
    %c112_1198 = arith.constant 112 : index
    %c256_1199 = arith.constant 256 : index
    %684 = vector.load %arg8[%c112_1198, %c256_1199] : memref<196x288xf32, #tpu.memory_space<vmem>>, vector<7x32xf32>
    tpu.vector_store %arg8[%c112_1198, %c256_1199], %683 {strides = array<i32>} : memref<196x288xf32, #tpu.memory_space<vmem>>, vector<7x32xf32>,
    %c2_1200 = arith.constant 2 : index
    %c4_1201 = arith.constant 4 : index
    %c1_1202 = arith.constant 1 : index
    %c0_1203 = arith.constant 0 : index
    %685 = vector.load %arg7[%c2_1200, %c4_1201, %c1_1202, %c0_1203] : memref<4x8x8x32xf32, #tpu.memory_space<vmem>>, vector<1x1x7x32xf32>
    %686 = vector.shape_cast %685 : vector<1x1x7x32xf32> to vector<7x32xf32>
    %c119_1204 = arith.constant 119 : index
    %c256_1205 = arith.constant 256 : index
    %687 = vector.load %arg8[%c119_1204, %c256_1205] : memref<196x288xf32, #tpu.memory_space<vmem>>, vector<7x32xf32>
    tpu.vector_store %arg8[%c119_1204, %c256_1205], %686 {strides = array<i32>} : memref<196x288xf32, #tpu.memory_space<vmem>>, vector<7x32xf32>,
    %c2_1206 = arith.constant 2 : index
    %c5_1207 = arith.constant 5 : index
    %c1_1208 = arith.constant 1 : index
    %c0_1209 = arith.constant 0 : index
    %688 = vector.load %arg7[%c2_1206, %c5_1207, %c1_1208, %c0_1209] : memref<4x8x8x32xf32, #tpu.memory_space<vmem>>, vector<1x1x7x32xf32>
    %689 = vector.shape_cast %688 : vector<1x1x7x32xf32> to vector<7x32xf32>
    %c126_1210 = arith.constant 126 : index
    %c256_1211 = arith.constant 256 : index
    %690 = vector.load %arg8[%c126_1210, %c256_1211] : memref<196x288xf32, #tpu.memory_space<vmem>>, vector<7x32xf32>
    tpu.vector_store %arg8[%c126_1210, %c256_1211], %689 {strides = array<i32>} : memref<196x288xf32, #tpu.memory_space<vmem>>, vector<7x32xf32>,
    %c2_1212 = arith.constant 2 : index
    %c6_1213 = arith.constant 6 : index
    %c1_1214 = arith.constant 1 : index
    %c0_1215 = arith.constant 0 : index
    %691 = vector.load %arg7[%c2_1212, %c6_1213, %c1_1214, %c0_1215] : memref<4x8x8x32xf32, #tpu.memory_space<vmem>>, vector<1x1x7x32xf32>
    %692 = vector.shape_cast %691 : vector<1x1x7x32xf32> to vector<7x32xf32>
    %c133_1216 = arith.constant 133 : index
    %c256_1217 = arith.constant 256 : index
    %693 = vector.load %arg8[%c133_1216, %c256_1217] : memref<196x288xf32, #tpu.memory_space<vmem>>, vector<7x32xf32>
    tpu.vector_store %arg8[%c133_1216, %c256_1217], %692 {strides = array<i32>} : memref<196x288xf32, #tpu.memory_space<vmem>>, vector<7x32xf32>,
    %c2_1218 = arith.constant 2 : index
    %c7_1219 = arith.constant 7 : index
    %c1_1220 = arith.constant 1 : index
    %c0_1221 = arith.constant 0 : index
    %694 = vector.load %arg7[%c2_1218, %c7_1219, %c1_1220, %c0_1221] : memref<4x8x8x32xf32, #tpu.memory_space<vmem>>, vector<1x1x7x32xf32>
    %695 = vector.shape_cast %694 : vector<1x1x7x32xf32> to vector<7x32xf32>
    %c140_1222 = arith.constant 140 : index
    %c256_1223 = arith.constant 256 : index
    %696 = vector.load %arg8[%c140_1222, %c256_1223] : memref<196x288xf32, #tpu.memory_space<vmem>>, vector<7x32xf32>
    tpu.vector_store %arg8[%c140_1222, %c256_1223], %695 {strides = array<i32>} : memref<196x288xf32, #tpu.memory_space<vmem>>, vector<7x32xf32>,
    %c3_1224 = arith.constant 3 : index
    %c0_1225 = arith.constant 0 : index
    %c0_1226 = arith.constant 0 : index
    %c0_1227 = arith.constant 0 : index
    %697 = vector.load %arg7[%c3_1224, %c0_1225, %c0_1226, %c0_1227] : memref<4x8x8x32xf32, #tpu.memory_space<vmem>>, vector<1x1x7x32xf32>
    %698 = vector.shape_cast %697 : vector<1x1x7x32xf32> to vector<7x32xf32>
    %c147 = arith.constant 147 : index
    %c0_1228 = arith.constant 0 : index
    %699 = vector.load %arg8[%c147, %c0_1228] : memref<196x288xf32, #tpu.memory_space<vmem>>, vector<7x32xf32>
    tpu.vector_store %arg8[%c147, %c0_1228], %698 {strides = array<i32>} : memref<196x288xf32, #tpu.memory_space<vmem>>, vector<7x32xf32>,
    %c3_1229 = arith.constant 3 : index
    %c1_1230 = arith.constant 1 : index
    %c0_1231 = arith.constant 0 : index
    %c0_1232 = arith.constant 0 : index
    %700 = vector.load %arg7[%c3_1229, %c1_1230, %c0_1231, %c0_1232] : memref<4x8x8x32xf32, #tpu.memory_space<vmem>>, vector<1x1x7x32xf32>
    %701 = vector.shape_cast %700 : vector<1x1x7x32xf32> to vector<7x32xf32>
    %c154 = arith.constant 154 : index
    %c0_1233 = arith.constant 0 : index
    %702 = vector.load %arg8[%c154, %c0_1233] : memref<196x288xf32, #tpu.memory_space<vmem>>, vector<7x32xf32>
    tpu.vector_store %arg8[%c154, %c0_1233], %701 {strides = array<i32>} : memref<196x288xf32, #tpu.memory_space<vmem>>, vector<7x32xf32>,
    %c3_1234 = arith.constant 3 : index
    %c2_1235 = arith.constant 2 : index
    %c0_1236 = arith.constant 0 : index
    %c0_1237 = arith.constant 0 : index
    %703 = vector.load %arg7[%c3_1234, %c2_1235, %c0_1236, %c0_1237] : memref<4x8x8x32xf32, #tpu.memory_space<vmem>>, vector<1x1x7x32xf32>
    %704 = vector.shape_cast %703 : vector<1x1x7x32xf32> to vector<7x32xf32>
    %c161 = arith.constant 161 : index
    %c0_1238 = arith.constant 0 : index
    %705 = vector.load %arg8[%c161, %c0_1238] : memref<196x288xf32, #tpu.memory_space<vmem>>, vector<7x32xf32>
    tpu.vector_store %arg8[%c161, %c0_1238], %704 {strides = array<i32>} : memref<196x288xf32, #tpu.memory_space<vmem>>, vector<7x32xf32>,
    %c3_1239 = arith.constant 3 : index
    %c3_1240 = arith.constant 3 : index
    %c0_1241 = arith.constant 0 : index
    %c0_1242 = arith.constant 0 : index
    %706 = vector.load %arg7[%c3_1239, %c3_1240, %c0_1241, %c0_1242] : memref<4x8x8x32xf32, #tpu.memory_space<vmem>>, vector<1x1x7x32xf32>
    %707 = vector.shape_cast %706 : vector<1x1x7x32xf32> to vector<7x32xf32>
    %c168 = arith.constant 168 : index
    %c0_1243 = arith.constant 0 : index
    %708 = vector.load %arg8[%c168, %c0_1243] : memref<196x288xf32, #tpu.memory_space<vmem>>, vector<7x32xf32>
    tpu.vector_store %arg8[%c168, %c0_1243], %707 {strides = array<i32>} : memref<196x288xf32, #tpu.memory_space<vmem>>, vector<7x32xf32>,
    %c3_1244 = arith.constant 3 : index
    %c4_1245 = arith.constant 4 : index
    %c0_1246 = arith.constant 0 : index
    %c0_1247 = arith.constant 0 : index
    %709 = vector.load %arg7[%c3_1244, %c4_1245, %c0_1246, %c0_1247] : memref<4x8x8x32xf32, #tpu.memory_space<vmem>>, vector<1x1x7x32xf32>
    %710 = vector.shape_cast %709 : vector<1x1x7x32xf32> to vector<7x32xf32>
    %c175 = arith.constant 175 : index
    %c0_1248 = arith.constant 0 : index
    %711 = vector.load %arg8[%c175, %c0_1248] : memref<196x288xf32, #tpu.memory_space<vmem>>, vector<7x32xf32>
    tpu.vector_store %arg8[%c175, %c0_1248], %710 {strides = array<i32>} : memref<196x288xf32, #tpu.memory_space<vmem>>, vector<7x32xf32>,
    %c3_1249 = arith.constant 3 : index
    %c5_1250 = arith.constant 5 : index
    %c0_1251 = arith.constant 0 : index
    %c0_1252 = arith.constant 0 : index
    %712 = vector.load %arg7[%c3_1249, %c5_1250, %c0_1251, %c0_1252] : memref<4x8x8x32xf32, #tpu.memory_space<vmem>>, vector<1x1x7x32xf32>
    %713 = vector.shape_cast %712 : vector<1x1x7x32xf32> to vector<7x32xf32>
    %c182 = arith.constant 182 : index
    %c0_1253 = arith.constant 0 : index
    %714 = vector.load %arg8[%c182, %c0_1253] : memref<196x288xf32, #tpu.memory_space<vmem>>, vector<7x32xf32>
    tpu.vector_store %arg8[%c182, %c0_1253], %713 {strides = array<i32>} : memref<196x288xf32, #tpu.memory_space<vmem>>, vector<7x32xf32>,
    %c3_1254 = arith.constant 3 : index
    %c6_1255 = arith.constant 6 : index
    %c0_1256 = arith.constant 0 : index
    %c0_1257 = arith.constant 0 : index
    %715 = vector.load %arg7[%c3_1254, %c6_1255, %c0_1256, %c0_1257] : memref<4x8x8x32xf32, #tpu.memory_space<vmem>>, vector<1x1x7x32xf32>
    %716 = vector.shape_cast %715 : vector<1x1x7x32xf32> to vector<7x32xf32>
    %c189 = arith.constant 189 : index
    %c0_1258 = arith.constant 0 : index
    %717 = vector.load %arg8[%c189, %c0_1258] : memref<196x288xf32, #tpu.memory_space<vmem>>, vector<7x32xf32>
    tpu.vector_store %arg8[%c189, %c0_1258], %716 {strides = array<i32>} : memref<196x288xf32, #tpu.memory_space<vmem>>, vector<7x32xf32>,
    %c2_1259 = arith.constant 2 : index
    %c0_1260 = arith.constant 0 : index
    %c1_1261 = arith.constant 1 : index
    %c0_1262 = arith.constant 0 : index
    %718 = vector.load %arg7[%c2_1259, %c0_1260, %c1_1261, %c0_1262] : memref<4x8x8x32xf32, #tpu.memory_space<vmem>>, vector<1x1x7x32xf32>
    %719 = vector.shape_cast %718 : vector<1x1x7x32xf32> to vector<7x32xf32>
    %c147_1263 = arith.constant 147 : index
    %c32_1264 = arith.constant 32 : index
    %720 = vector.load %arg8[%c147_1263, %c32_1264] : memref<196x288xf32, #tpu.memory_space<vmem>>, vector<7x32xf32>
    tpu.vector_store %arg8[%c147_1263, %c32_1264], %719 {strides = array<i32>} : memref<196x288xf32, #tpu.memory_space<vmem>>, vector<7x32xf32>,
    %c2_1265 = arith.constant 2 : index
    %c1_1266 = arith.constant 1 : index
    %c1_1267 = arith.constant 1 : index
    %c0_1268 = arith.constant 0 : index
    %721 = vector.load %arg7[%c2_1265, %c1_1266, %c1_1267, %c0_1268] : memref<4x8x8x32xf32, #tpu.memory_space<vmem>>, vector<1x1x7x32xf32>
    %722 = vector.shape_cast %721 : vector<1x1x7x32xf32> to vector<7x32xf32>
    %c154_1269 = arith.constant 154 : index
    %c32_1270 = arith.constant 32 : index
    %723 = vector.load %arg8[%c154_1269, %c32_1270] : memref<196x288xf32, #tpu.memory_space<vmem>>, vector<7x32xf32>
    tpu.vector_store %arg8[%c154_1269, %c32_1270], %722 {strides = array<i32>} : memref<196x288xf32, #tpu.memory_space<vmem>>, vector<7x32xf32>,
    %c2_1271 = arith.constant 2 : index
    %c2_1272 = arith.constant 2 : index
    %c1_1273 = arith.constant 1 : index
    %c0_1274 = arith.constant 0 : index
    %724 = vector.load %arg7[%c2_1271, %c2_1272, %c1_1273, %c0_1274] : memref<4x8x8x32xf32, #tpu.memory_space<vmem>>, vector<1x1x7x32xf32>
    %725 = vector.shape_cast %724 : vector<1x1x7x32xf32> to vector<7x32xf32>
    %c161_1275 = arith.constant 161 : index
    %c32_1276 = arith.constant 32 : index
    %726 = vector.load %arg8[%c161_1275, %c32_1276] : memref<196x288xf32, #tpu.memory_space<vmem>>, vector<7x32xf32>
    tpu.vector_store %arg8[%c161_1275, %c32_1276], %725 {strides = array<i32>} : memref<196x288xf32, #tpu.memory_space<vmem>>, vector<7x32xf32>,
    %c2_1277 = arith.constant 2 : index
    %c3_1278 = arith.constant 3 : index
    %c1_1279 = arith.constant 1 : index
    %c0_1280 = arith.constant 0 : index
    %727 = vector.load %arg7[%c2_1277, %c3_1278, %c1_1279, %c0_1280] : memref<4x8x8x32xf32, #tpu.memory_space<vmem>>, vector<1x1x7x32xf32>
    %728 = vector.shape_cast %727 : vector<1x1x7x32xf32> to vector<7x32xf32>
    %c168_1281 = arith.constant 168 : index
    %c32_1282 = arith.constant 32 : index
    %729 = vector.load %arg8[%c168_1281, %c32_1282] : memref<196x288xf32, #tpu.memory_space<vmem>>, vector<7x32xf32>
    tpu.vector_store %arg8[%c168_1281, %c32_1282], %728 {strides = array<i32>} : memref<196x288xf32, #tpu.memory_space<vmem>>, vector<7x32xf32>,
    %c2_1283 = arith.constant 2 : index
    %c4_1284 = arith.constant 4 : index
    %c1_1285 = arith.constant 1 : index
    %c0_1286 = arith.constant 0 : index
    %730 = vector.load %arg7[%c2_1283, %c4_1284, %c1_1285, %c0_1286] : memref<4x8x8x32xf32, #tpu.memory_space<vmem>>, vector<1x1x7x32xf32>
    %731 = vector.shape_cast %730 : vector<1x1x7x32xf32> to vector<7x32xf32>
    %c175_1287 = arith.constant 175 : index
    %c32_1288 = arith.constant 32 : index
    %732 = vector.load %arg8[%c175_1287, %c32_1288] : memref<196x288xf32, #tpu.memory_space<vmem>>, vector<7x32xf32>
    tpu.vector_store %arg8[%c175_1287, %c32_1288], %731 {strides = array<i32>} : memref<196x288xf32, #tpu.memory_space<vmem>>, vector<7x32xf32>,
    %c2_1289 = arith.constant 2 : index
    %c5_1290 = arith.constant 5 : index
    %c1_1291 = arith.constant 1 : index
    %c0_1292 = arith.constant 0 : index
    %733 = vector.load %arg7[%c2_1289, %c5_1290, %c1_1291, %c0_1292] : memref<4x8x8x32xf32, #tpu.memory_space<vmem>>, vector<1x1x7x32xf32>
    %734 = vector.shape_cast %733 : vector<1x1x7x32xf32> to vector<7x32xf32>
    %c182_1293 = arith.constant 182 : index
    %c32_1294 = arith.constant 32 : index
    %735 = vector.load %arg8[%c182_1293, %c32_1294] : memref<196x288xf32, #tpu.memory_space<vmem>>, vector<7x32xf32>
    tpu.vector_store %arg8[%c182_1293, %c32_1294], %734 {strides = array<i32>} : memref<196x288xf32, #tpu.memory_space<vmem>>, vector<7x32xf32>,
    %c2_1295 = arith.constant 2 : index
    %c6_1296 = arith.constant 6 : index
    %c1_1297 = arith.constant 1 : index
    %c0_1298 = arith.constant 0 : index
    %736 = vector.load %arg7[%c2_1295, %c6_1296, %c1_1297, %c0_1298] : memref<4x8x8x32xf32, #tpu.memory_space<vmem>>, vector<1x1x7x32xf32>
    %737 = vector.shape_cast %736 : vector<1x1x7x32xf32> to vector<7x32xf32>
    %c189_1299 = arith.constant 189 : index
    %c32_1300 = arith.constant 32 : index
    %738 = vector.load %arg8[%c189_1299, %c32_1300] : memref<196x288xf32, #tpu.memory_space<vmem>>, vector<7x32xf32>
    tpu.vector_store %arg8[%c189_1299, %c32_1300], %737 {strides = array<i32>} : memref<196x288xf32, #tpu.memory_space<vmem>>, vector<7x32xf32>,
    %c3_1301 = arith.constant 3 : index
    %c0_1302 = arith.constant 0 : index
    %c1_1303 = arith.constant 1 : index
    %c0_1304 = arith.constant 0 : index
    %739 = vector.load %arg7[%c3_1301, %c0_1302, %c1_1303, %c0_1304] : memref<4x8x8x32xf32, #tpu.memory_space<vmem>>, vector<1x1x7x32xf32>
    %740 = vector.shape_cast %739 : vector<1x1x7x32xf32> to vector<7x32xf32>
    %c147_1305 = arith.constant 147 : index
    %c64_1306 = arith.constant 64 : index
    %741 = vector.load %arg8[%c147_1305, %c64_1306] : memref<196x288xf32, #tpu.memory_space<vmem>>, vector<7x32xf32>
    tpu.vector_store %arg8[%c147_1305, %c64_1306], %740 {strides = array<i32>} : memref<196x288xf32, #tpu.memory_space<vmem>>, vector<7x32xf32>,
    %c3_1307 = arith.constant 3 : index
    %c1_1308 = arith.constant 1 : index
    %c1_1309 = arith.constant 1 : index
    %c0_1310 = arith.constant 0 : index
    %742 = vector.load %arg7[%c3_1307, %c1_1308, %c1_1309, %c0_1310] : memref<4x8x8x32xf32, #tpu.memory_space<vmem>>, vector<1x1x7x32xf32>
    %743 = vector.shape_cast %742 : vector<1x1x7x32xf32> to vector<7x32xf32>
    %c154_1311 = arith.constant 154 : index
    %c64_1312 = arith.constant 64 : index
    %744 = vector.load %arg8[%c154_1311, %c64_1312] : memref<196x288xf32, #tpu.memory_space<vmem>>, vector<7x32xf32>
    tpu.vector_store %arg8[%c154_1311, %c64_1312], %743 {strides = array<i32>} : memref<196x288xf32, #tpu.memory_space<vmem>>, vector<7x32xf32>,
    %c3_1313 = arith.constant 3 : index
    %c2_1314 = arith.constant 2 : index
    %c1_1315 = arith.constant 1 : index
    %c0_1316 = arith.constant 0 : index
    %745 = vector.load %arg7[%c3_1313, %c2_1314, %c1_1315, %c0_1316] : memref<4x8x8x32xf32, #tpu.memory_space<vmem>>, vector<1x1x7x32xf32>
    %746 = vector.shape_cast %745 : vector<1x1x7x32xf32> to vector<7x32xf32>
    %c161_1317 = arith.constant 161 : index
    %c64_1318 = arith.constant 64 : index
    %747 = vector.load %arg8[%c161_1317, %c64_1318] : memref<196x288xf32, #tpu.memory_space<vmem>>, vector<7x32xf32>
    tpu.vector_store %arg8[%c161_1317, %c64_1318], %746 {strides = array<i32>} : memref<196x288xf32, #tpu.memory_space<vmem>>, vector<7x32xf32>,
    %c3_1319 = arith.constant 3 : index
    %c3_1320 = arith.constant 3 : index
    %c1_1321 = arith.constant 1 : index
    %c0_1322 = arith.constant 0 : index
    %748 = vector.load %arg7[%c3_1319, %c3_1320, %c1_1321, %c0_1322] : memref<4x8x8x32xf32, #tpu.memory_space<vmem>>, vector<1x1x7x32xf32>
    %749 = vector.shape_cast %748 : vector<1x1x7x32xf32> to vector<7x32xf32>
    %c168_1323 = arith.constant 168 : index
    %c64_1324 = arith.constant 64 : index
    %750 = vector.load %arg8[%c168_1323, %c64_1324] : memref<196x288xf32, #tpu.memory_space<vmem>>, vector<7x32xf32>
    tpu.vector_store %arg8[%c168_1323, %c64_1324], %749 {strides = array<i32>} : memref<196x288xf32, #tpu.memory_space<vmem>>, vector<7x32xf32>,
    %c3_1325 = arith.constant 3 : index
    %c4_1326 = arith.constant 4 : index
    %c1_1327 = arith.constant 1 : index
    %c0_1328 = arith.constant 0 : index
    %751 = vector.load %arg7[%c3_1325, %c4_1326, %c1_1327, %c0_1328] : memref<4x8x8x32xf32, #tpu.memory_space<vmem>>, vector<1x1x7x32xf32>
    %752 = vector.shape_cast %751 : vector<1x1x7x32xf32> to vector<7x32xf32>
    %c175_1329 = arith.constant 175 : index
    %c64_1330 = arith.constant 64 : index
    %753 = vector.load %arg8[%c175_1329, %c64_1330] : memref<196x288xf32, #tpu.memory_space<vmem>>, vector<7x32xf32>
    tpu.vector_store %arg8[%c175_1329, %c64_1330], %752 {strides = array<i32>} : memref<196x288xf32, #tpu.memory_space<vmem>>, vector<7x32xf32>,
    %c3_1331 = arith.constant 3 : index
    %c5_1332 = arith.constant 5 : index
    %c1_1333 = arith.constant 1 : index
    %c0_1334 = arith.constant 0 : index
    %754 = vector.load %arg7[%c3_1331, %c5_1332, %c1_1333, %c0_1334] : memref<4x8x8x32xf32, #tpu.memory_space<vmem>>, vector<1x1x7x32xf32>
    %755 = vector.shape_cast %754 : vector<1x1x7x32xf32> to vector<7x32xf32>
    %c182_1335 = arith.constant 182 : index
    %c64_1336 = arith.constant 64 : index
    %756 = vector.load %arg8[%c182_1335, %c64_1336] : memref<196x288xf32, #tpu.memory_space<vmem>>, vector<7x32xf32>
    tpu.vector_store %arg8[%c182_1335, %c64_1336], %755 {strides = array<i32>} : memref<196x288xf32, #tpu.memory_space<vmem>>, vector<7x32xf32>,
    %c3_1337 = arith.constant 3 : index
    %c6_1338 = arith.constant 6 : index
    %c1_1339 = arith.constant 1 : index
    %c0_1340 = arith.constant 0 : index
    %757 = vector.load %arg7[%c3_1337, %c6_1338, %c1_1339, %c0_1340] : memref<4x8x8x32xf32, #tpu.memory_space<vmem>>, vector<1x1x7x32xf32>
    %758 = vector.shape_cast %757 : vector<1x1x7x32xf32> to vector<7x32xf32>
    %c189_1341 = arith.constant 189 : index
    %c64_1342 = arith.constant 64 : index
    %759 = vector.load %arg8[%c189_1341, %c64_1342] : memref<196x288xf32, #tpu.memory_space<vmem>>, vector<7x32xf32>
    tpu.vector_store %arg8[%c189_1341, %c64_1342], %758 {strides = array<i32>} : memref<196x288xf32, #tpu.memory_space<vmem>>, vector<7x32xf32>,
    %c1_1343 = arith.constant 1 : index
    %c1_1344 = arith.constant 1 : index
    %c0_1345 = arith.constant 0 : index
    %c0_1346 = arith.constant 0 : index
    %760 = vector.load %arg7[%c1_1343, %c1_1344, %c0_1345, %c0_1346] : memref<4x8x8x32xf32, #tpu.memory_space<vmem>>, vector<1x1x7x32xf32>
    %761 = vector.shape_cast %760 : vector<1x1x7x32xf32> to vector<7x32xf32>
    %c147_1347 = arith.constant 147 : index
    %c96_1348 = arith.constant 96 : index
    %762 = vector.load %arg8[%c147_1347, %c96_1348] : memref<196x288xf32, #tpu.memory_space<vmem>>, vector<7x32xf32>
    tpu.vector_store %arg8[%c147_1347, %c96_1348], %761 {strides = array<i32>} : memref<196x288xf32, #tpu.memory_space<vmem>>, vector<7x32xf32>,
    %c1_1349 = arith.constant 1 : index
    %c2_1350 = arith.constant 2 : index
    %c0_1351 = arith.constant 0 : index
    %c0_1352 = arith.constant 0 : index
    %763 = vector.load %arg7[%c1_1349, %c2_1350, %c0_1351, %c0_1352] : memref<4x8x8x32xf32, #tpu.memory_space<vmem>>, vector<1x1x7x32xf32>
    %764 = vector.shape_cast %763 : vector<1x1x7x32xf32> to vector<7x32xf32>
    %c154_1353 = arith.constant 154 : index
    %c96_1354 = arith.constant 96 : index
    %765 = vector.load %arg8[%c154_1353, %c96_1354] : memref<196x288xf32, #tpu.memory_space<vmem>>, vector<7x32xf32>
    tpu.vector_store %arg8[%c154_1353, %c96_1354], %764 {strides = array<i32>} : memref<196x288xf32, #tpu.memory_space<vmem>>, vector<7x32xf32>,
    %c1_1355 = arith.constant 1 : index
    %c3_1356 = arith.constant 3 : index
    %c0_1357 = arith.constant 0 : index
    %c0_1358 = arith.constant 0 : index
    %766 = vector.load %arg7[%c1_1355, %c3_1356, %c0_1357, %c0_1358] : memref<4x8x8x32xf32, #tpu.memory_space<vmem>>, vector<1x1x7x32xf32>
    %767 = vector.shape_cast %766 : vector<1x1x7x32xf32> to vector<7x32xf32>
    %c161_1359 = arith.constant 161 : index
    %c96_1360 = arith.constant 96 : index
    %768 = vector.load %arg8[%c161_1359, %c96_1360] : memref<196x288xf32, #tpu.memory_space<vmem>>, vector<7x32xf32>
    tpu.vector_store %arg8[%c161_1359, %c96_1360], %767 {strides = array<i32>} : memref<196x288xf32, #tpu.memory_space<vmem>>, vector<7x32xf32>,
    %c1_1361 = arith.constant 1 : index
    %c4_1362 = arith.constant 4 : index
    %c0_1363 = arith.constant 0 : index
    %c0_1364 = arith.constant 0 : index
    %769 = vector.load %arg7[%c1_1361, %c4_1362, %c0_1363, %c0_1364] : memref<4x8x8x32xf32, #tpu.memory_space<vmem>>, vector<1x1x7x32xf32>
    %770 = vector.shape_cast %769 : vector<1x1x7x32xf32> to vector<7x32xf32>
    %c168_1365 = arith.constant 168 : index
    %c96_1366 = arith.constant 96 : index
    %771 = vector.load %arg8[%c168_1365, %c96_1366] : memref<196x288xf32, #tpu.memory_space<vmem>>, vector<7x32xf32>
    tpu.vector_store %arg8[%c168_1365, %c96_1366], %770 {strides = array<i32>} : memref<196x288xf32, #tpu.memory_space<vmem>>, vector<7x32xf32>,
    %c1_1367 = arith.constant 1 : index
    %c5_1368 = arith.constant 5 : index
    %c0_1369 = arith.constant 0 : index
    %c0_1370 = arith.constant 0 : index
    %772 = vector.load %arg7[%c1_1367, %c5_1368, %c0_1369, %c0_1370] : memref<4x8x8x32xf32, #tpu.memory_space<vmem>>, vector<1x1x7x32xf32>
    %773 = vector.shape_cast %772 : vector<1x1x7x32xf32> to vector<7x32xf32>
    %c175_1371 = arith.constant 175 : index
    %c96_1372 = arith.constant 96 : index
    %774 = vector.load %arg8[%c175_1371, %c96_1372] : memref<196x288xf32, #tpu.memory_space<vmem>>, vector<7x32xf32>
    tpu.vector_store %arg8[%c175_1371, %c96_1372], %773 {strides = array<i32>} : memref<196x288xf32, #tpu.memory_space<vmem>>, vector<7x32xf32>,
    %c1_1373 = arith.constant 1 : index
    %c6_1374 = arith.constant 6 : index
    %c0_1375 = arith.constant 0 : index
    %c0_1376 = arith.constant 0 : index
    %775 = vector.load %arg7[%c1_1373, %c6_1374, %c0_1375, %c0_1376] : memref<4x8x8x32xf32, #tpu.memory_space<vmem>>, vector<1x1x7x32xf32>
    %776 = vector.shape_cast %775 : vector<1x1x7x32xf32> to vector<7x32xf32>
    %c182_1377 = arith.constant 182 : index
    %c96_1378 = arith.constant 96 : index
    %777 = vector.load %arg8[%c182_1377, %c96_1378] : memref<196x288xf32, #tpu.memory_space<vmem>>, vector<7x32xf32>
    tpu.vector_store %arg8[%c182_1377, %c96_1378], %776 {strides = array<i32>} : memref<196x288xf32, #tpu.memory_space<vmem>>, vector<7x32xf32>,
    %c1_1379 = arith.constant 1 : index
    %c7_1380 = arith.constant 7 : index
    %c0_1381 = arith.constant 0 : index
    %c0_1382 = arith.constant 0 : index
    %778 = vector.load %arg7[%c1_1379, %c7_1380, %c0_1381, %c0_1382] : memref<4x8x8x32xf32, #tpu.memory_space<vmem>>, vector<1x1x7x32xf32>
    %779 = vector.shape_cast %778 : vector<1x1x7x32xf32> to vector<7x32xf32>
    %c189_1383 = arith.constant 189 : index
    %c96_1384 = arith.constant 96 : index
    %780 = vector.load %arg8[%c189_1383, %c96_1384] : memref<196x288xf32, #tpu.memory_space<vmem>>, vector<7x32xf32>
    tpu.vector_store %arg8[%c189_1383, %c96_1384], %779 {strides = array<i32>} : memref<196x288xf32, #tpu.memory_space<vmem>>, vector<7x32xf32>,
    %c0_1385 = arith.constant 0 : index
    %c1_1386 = arith.constant 1 : index
    %c1_1387 = arith.constant 1 : index
    %c0_1388 = arith.constant 0 : index
    %781 = vector.load %arg7[%c0_1385, %c1_1386, %c1_1387, %c0_1388] : memref<4x8x8x32xf32, #tpu.memory_space<vmem>>, vector<1x1x7x32xf32>
    %782 = vector.shape_cast %781 : vector<1x1x7x32xf32> to vector<7x32xf32>
    %c147_1389 = arith.constant 147 : index
    %c128_1390 = arith.constant 128 : index
    %783 = vector.load %arg8[%c147_1389, %c128_1390] : memref<196x288xf32, #tpu.memory_space<vmem>>, vector<7x32xf32>
    tpu.vector_store %arg8[%c147_1389, %c128_1390], %782 {strides = array<i32>} : memref<196x288xf32, #tpu.memory_space<vmem>>, vector<7x32xf32>,
    %c0_1391 = arith.constant 0 : index
    %c2_1392 = arith.constant 2 : index
    %c1_1393 = arith.constant 1 : index
    %c0_1394 = arith.constant 0 : index
    %784 = vector.load %arg7[%c0_1391, %c2_1392, %c1_1393, %c0_1394] : memref<4x8x8x32xf32, #tpu.memory_space<vmem>>, vector<1x1x7x32xf32>
    %785 = vector.shape_cast %784 : vector<1x1x7x32xf32> to vector<7x32xf32>
    %c154_1395 = arith.constant 154 : index
    %c128_1396 = arith.constant 128 : index
    %786 = vector.load %arg8[%c154_1395, %c128_1396] : memref<196x288xf32, #tpu.memory_space<vmem>>, vector<7x32xf32>
    tpu.vector_store %arg8[%c154_1395, %c128_1396], %785 {strides = array<i32>} : memref<196x288xf32, #tpu.memory_space<vmem>>, vector<7x32xf32>,
    %c0_1397 = arith.constant 0 : index
    %c3_1398 = arith.constant 3 : index
    %c1_1399 = arith.constant 1 : index
    %c0_1400 = arith.constant 0 : index
    %787 = vector.load %arg7[%c0_1397, %c3_1398, %c1_1399, %c0_1400] : memref<4x8x8x32xf32, #tpu.memory_space<vmem>>, vector<1x1x7x32xf32>
    %788 = vector.shape_cast %787 : vector<1x1x7x32xf32> to vector<7x32xf32>
    %c161_1401 = arith.constant 161 : index
    %c128_1402 = arith.constant 128 : index
    %789 = vector.load %arg8[%c161_1401, %c128_1402] : memref<196x288xf32, #tpu.memory_space<vmem>>, vector<7x32xf32>
    tpu.vector_store %arg8[%c161_1401, %c128_1402], %788 {strides = array<i32>} : memref<196x288xf32, #tpu.memory_space<vmem>>, vector<7x32xf32>,
    %c0_1403 = arith.constant 0 : index
    %c4_1404 = arith.constant 4 : index
    %c1_1405 = arith.constant 1 : index
    %c0_1406 = arith.constant 0 : index
    %790 = vector.load %arg7[%c0_1403, %c4_1404, %c1_1405, %c0_1406] : memref<4x8x8x32xf32, #tpu.memory_space<vmem>>, vector<1x1x7x32xf32>
    %791 = vector.shape_cast %790 : vector<1x1x7x32xf32> to vector<7x32xf32>
    %c168_1407 = arith.constant 168 : index
    %c128_1408 = arith.constant 128 : index
    %792 = vector.load %arg8[%c168_1407, %c128_1408] : memref<196x288xf32, #tpu.memory_space<vmem>>, vector<7x32xf32>
    tpu.vector_store %arg8[%c168_1407, %c128_1408], %791 {strides = array<i32>} : memref<196x288xf32, #tpu.memory_space<vmem>>, vector<7x32xf32>,
    %c0_1409 = arith.constant 0 : index
    %c5_1410 = arith.constant 5 : index
    %c1_1411 = arith.constant 1 : index
    %c0_1412 = arith.constant 0 : index
    %793 = vector.load %arg7[%c0_1409, %c5_1410, %c1_1411, %c0_1412] : memref<4x8x8x32xf32, #tpu.memory_space<vmem>>, vector<1x1x7x32xf32>
    %794 = vector.shape_cast %793 : vector<1x1x7x32xf32> to vector<7x32xf32>
    %c175_1413 = arith.constant 175 : index
    %c128_1414 = arith.constant 128 : index
    %795 = vector.load %arg8[%c175_1413, %c128_1414] : memref<196x288xf32, #tpu.memory_space<vmem>>, vector<7x32xf32>
    tpu.vector_store %arg8[%c175_1413, %c128_1414], %794 {strides = array<i32>} : memref<196x288xf32, #tpu.memory_space<vmem>>, vector<7x32xf32>,
    %c0_1415 = arith.constant 0 : index
    %c6_1416 = arith.constant 6 : index
    %c1_1417 = arith.constant 1 : index
    %c0_1418 = arith.constant 0 : index
    %796 = vector.load %arg7[%c0_1415, %c6_1416, %c1_1417, %c0_1418] : memref<4x8x8x32xf32, #tpu.memory_space<vmem>>, vector<1x1x7x32xf32>
    %797 = vector.shape_cast %796 : vector<1x1x7x32xf32> to vector<7x32xf32>
    %c182_1419 = arith.constant 182 : index
    %c128_1420 = arith.constant 128 : index
    %798 = vector.load %arg8[%c182_1419, %c128_1420] : memref<196x288xf32, #tpu.memory_space<vmem>>, vector<7x32xf32>
    tpu.vector_store %arg8[%c182_1419, %c128_1420], %797 {strides = array<i32>} : memref<196x288xf32, #tpu.memory_space<vmem>>, vector<7x32xf32>,
    %c0_1421 = arith.constant 0 : index
    %c7_1422 = arith.constant 7 : index
    %c1_1423 = arith.constant 1 : index
    %c0_1424 = arith.constant 0 : index
    %799 = vector.load %arg7[%c0_1421, %c7_1422, %c1_1423, %c0_1424] : memref<4x8x8x32xf32, #tpu.memory_space<vmem>>, vector<1x1x7x32xf32>
    %800 = vector.shape_cast %799 : vector<1x1x7x32xf32> to vector<7x32xf32>
    %c189_1425 = arith.constant 189 : index
    %c128_1426 = arith.constant 128 : index
    %801 = vector.load %arg8[%c189_1425, %c128_1426] : memref<196x288xf32, #tpu.memory_space<vmem>>, vector<7x32xf32>
    tpu.vector_store %arg8[%c189_1425, %c128_1426], %800 {strides = array<i32>} : memref<196x288xf32, #tpu.memory_space<vmem>>, vector<7x32xf32>,
    %c1_1427 = arith.constant 1 : index
    %c1_1428 = arith.constant 1 : index
    %c1_1429 = arith.constant 1 : index
    %c0_1430 = arith.constant 0 : index
    %802 = vector.load %arg7[%c1_1427, %c1_1428, %c1_1429, %c0_1430] : memref<4x8x8x32xf32, #tpu.memory_space<vmem>>, vector<1x1x7x32xf32>
    %803 = vector.shape_cast %802 : vector<1x1x7x32xf32> to vector<7x32xf32>
    %c147_1431 = arith.constant 147 : index
    %c160_1432 = arith.constant 160 : index
    %804 = vector.load %arg8[%c147_1431, %c160_1432] : memref<196x288xf32, #tpu.memory_space<vmem>>, vector<7x32xf32>
    tpu.vector_store %arg8[%c147_1431, %c160_1432], %803 {strides = array<i32>} : memref<196x288xf32, #tpu.memory_space<vmem>>, vector<7x32xf32>,
    %c1_1433 = arith.constant 1 : index
    %c2_1434 = arith.constant 2 : index
    %c1_1435 = arith.constant 1 : index
    %c0_1436 = arith.constant 0 : index
    %805 = vector.load %arg7[%c1_1433, %c2_1434, %c1_1435, %c0_1436] : memref<4x8x8x32xf32, #tpu.memory_space<vmem>>, vector<1x1x7x32xf32>
    %806 = vector.shape_cast %805 : vector<1x1x7x32xf32> to vector<7x32xf32>
    %c154_1437 = arith.constant 154 : index
    %c160_1438 = arith.constant 160 : index
    %807 = vector.load %arg8[%c154_1437, %c160_1438] : memref<196x288xf32, #tpu.memory_space<vmem>>, vector<7x32xf32>
    tpu.vector_store %arg8[%c154_1437, %c160_1438], %806 {strides = array<i32>} : memref<196x288xf32, #tpu.memory_space<vmem>>, vector<7x32xf32>,
    %c1_1439 = arith.constant 1 : index
    %c3_1440 = arith.constant 3 : index
    %c1_1441 = arith.constant 1 : index
    %c0_1442 = arith.constant 0 : index
    %808 = vector.load %arg7[%c1_1439, %c3_1440, %c1_1441, %c0_1442] : memref<4x8x8x32xf32, #tpu.memory_space<vmem>>, vector<1x1x7x32xf32>
    %809 = vector.shape_cast %808 : vector<1x1x7x32xf32> to vector<7x32xf32>
    %c161_1443 = arith.constant 161 : index
    %c160_1444 = arith.constant 160 : index
    %810 = vector.load %arg8[%c161_1443, %c160_1444] : memref<196x288xf32, #tpu.memory_space<vmem>>, vector<7x32xf32>
    tpu.vector_store %arg8[%c161_1443, %c160_1444], %809 {strides = array<i32>} : memref<196x288xf32, #tpu.memory_space<vmem>>, vector<7x32xf32>,
    %c1_1445 = arith.constant 1 : index
    %c4_1446 = arith.constant 4 : index
    %c1_1447 = arith.constant 1 : index
    %c0_1448 = arith.constant 0 : index
    %811 = vector.load %arg7[%c1_1445, %c4_1446, %c1_1447, %c0_1448] : memref<4x8x8x32xf32, #tpu.memory_space<vmem>>, vector<1x1x7x32xf32>
    %812 = vector.shape_cast %811 : vector<1x1x7x32xf32> to vector<7x32xf32>
    %c168_1449 = arith.constant 168 : index
    %c160_1450 = arith.constant 160 : index
    %813 = vector.load %arg8[%c168_1449, %c160_1450] : memref<196x288xf32, #tpu.memory_space<vmem>>, vector<7x32xf32>
    tpu.vector_store %arg8[%c168_1449, %c160_1450], %812 {strides = array<i32>} : memref<196x288xf32, #tpu.memory_space<vmem>>, vector<7x32xf32>,
    %c1_1451 = arith.constant 1 : index
    %c5_1452 = arith.constant 5 : index
    %c1_1453 = arith.constant 1 : index
    %c0_1454 = arith.constant 0 : index
    %814 = vector.load %arg7[%c1_1451, %c5_1452, %c1_1453, %c0_1454] : memref<4x8x8x32xf32, #tpu.memory_space<vmem>>, vector<1x1x7x32xf32>
    %815 = vector.shape_cast %814 : vector<1x1x7x32xf32> to vector<7x32xf32>
    %c175_1455 = arith.constant 175 : index
    %c160_1456 = arith.constant 160 : index
    %816 = vector.load %arg8[%c175_1455, %c160_1456] : memref<196x288xf32, #tpu.memory_space<vmem>>, vector<7x32xf32>
    tpu.vector_store %arg8[%c175_1455, %c160_1456], %815 {strides = array<i32>} : memref<196x288xf32, #tpu.memory_space<vmem>>, vector<7x32xf32>,
    %c1_1457 = arith.constant 1 : index
    %c6_1458 = arith.constant 6 : index
    %c1_1459 = arith.constant 1 : index
    %c0_1460 = arith.constant 0 : index
    %817 = vector.load %arg7[%c1_1457, %c6_1458, %c1_1459, %c0_1460] : memref<4x8x8x32xf32, #tpu.memory_space<vmem>>, vector<1x1x7x32xf32>
    %818 = vector.shape_cast %817 : vector<1x1x7x32xf32> to vector<7x32xf32>
    %c182_1461 = arith.constant 182 : index
    %c160_1462 = arith.constant 160 : index
    %819 = vector.load %arg8[%c182_1461, %c160_1462] : memref<196x288xf32, #tpu.memory_space<vmem>>, vector<7x32xf32>
    tpu.vector_store %arg8[%c182_1461, %c160_1462], %818 {strides = array<i32>} : memref<196x288xf32, #tpu.memory_space<vmem>>, vector<7x32xf32>,
    %c1_1463 = arith.constant 1 : index
    %c7_1464 = arith.constant 7 : index
    %c1_1465 = arith.constant 1 : index
    %c0_1466 = arith.constant 0 : index
    %820 = vector.load %arg7[%c1_1463, %c7_1464, %c1_1465, %c0_1466] : memref<4x8x8x32xf32, #tpu.memory_space<vmem>>, vector<1x1x7x32xf32>
    %821 = vector.shape_cast %820 : vector<1x1x7x32xf32> to vector<7x32xf32>
    %c189_1467 = arith.constant 189 : index
    %c160_1468 = arith.constant 160 : index
    %822 = vector.load %arg8[%c189_1467, %c160_1468] : memref<196x288xf32, #tpu.memory_space<vmem>>, vector<7x32xf32>
    tpu.vector_store %arg8[%c189_1467, %c160_1468], %821 {strides = array<i32>} : memref<196x288xf32, #tpu.memory_space<vmem>>, vector<7x32xf32>,
    %c3_1469 = arith.constant 3 : index
    %c1_1470 = arith.constant 1 : index
    %c0_1471 = arith.constant 0 : index
    %c0_1472 = arith.constant 0 : index
    %823 = vector.load %arg7[%c3_1469, %c1_1470, %c0_1471, %c0_1472] : memref<4x8x8x32xf32, #tpu.memory_space<vmem>>, vector<1x1x7x32xf32>
    %824 = vector.shape_cast %823 : vector<1x1x7x32xf32> to vector<7x32xf32>
    %c147_1473 = arith.constant 147 : index
    %c192_1474 = arith.constant 192 : index
    %825 = vector.load %arg8[%c147_1473, %c192_1474] : memref<196x288xf32, #tpu.memory_space<vmem>>, vector<7x32xf32>
    tpu.vector_store %arg8[%c147_1473, %c192_1474], %824 {strides = array<i32>} : memref<196x288xf32, #tpu.memory_space<vmem>>, vector<7x32xf32>,
    %c3_1475 = arith.constant 3 : index
    %c2_1476 = arith.constant 2 : index
    %c0_1477 = arith.constant 0 : index
    %c0_1478 = arith.constant 0 : index
    %826 = vector.load %arg7[%c3_1475, %c2_1476, %c0_1477, %c0_1478] : memref<4x8x8x32xf32, #tpu.memory_space<vmem>>, vector<1x1x7x32xf32>
    %827 = vector.shape_cast %826 : vector<1x1x7x32xf32> to vector<7x32xf32>
    %c154_1479 = arith.constant 154 : index
    %c192_1480 = arith.constant 192 : index
    %828 = vector.load %arg8[%c154_1479, %c192_1480] : memref<196x288xf32, #tpu.memory_space<vmem>>, vector<7x32xf32>
    tpu.vector_store %arg8[%c154_1479, %c192_1480], %827 {strides = array<i32>} : memref<196x288xf32, #tpu.memory_space<vmem>>, vector<7x32xf32>,
    %c3_1481 = arith.constant 3 : index
    %c3_1482 = arith.constant 3 : index
    %c0_1483 = arith.constant 0 : index
    %c0_1484 = arith.constant 0 : index
    %829 = vector.load %arg7[%c3_1481, %c3_1482, %c0_1483, %c0_1484] : memref<4x8x8x32xf32, #tpu.memory_space<vmem>>, vector<1x1x7x32xf32>
    %830 = vector.shape_cast %829 : vector<1x1x7x32xf32> to vector<7x32xf32>
    %c161_1485 = arith.constant 161 : index
    %c192_1486 = arith.constant 192 : index
    %831 = vector.load %arg8[%c161_1485, %c192_1486] : memref<196x288xf32, #tpu.memory_space<vmem>>, vector<7x32xf32>
    tpu.vector_store %arg8[%c161_1485, %c192_1486], %830 {strides = array<i32>} : memref<196x288xf32, #tpu.memory_space<vmem>>, vector<7x32xf32>,
    %c3_1487 = arith.constant 3 : index
    %c4_1488 = arith.constant 4 : index
    %c0_1489 = arith.constant 0 : index
    %c0_1490 = arith.constant 0 : index
    %832 = vector.load %arg7[%c3_1487, %c4_1488, %c0_1489, %c0_1490] : memref<4x8x8x32xf32, #tpu.memory_space<vmem>>, vector<1x1x7x32xf32>
    %833 = vector.shape_cast %832 : vector<1x1x7x32xf32> to vector<7x32xf32>
    %c168_1491 = arith.constant 168 : index
    %c192_1492 = arith.constant 192 : index
    %834 = vector.load %arg8[%c168_1491, %c192_1492] : memref<196x288xf32, #tpu.memory_space<vmem>>, vector<7x32xf32>
    tpu.vector_store %arg8[%c168_1491, %c192_1492], %833 {strides = array<i32>} : memref<196x288xf32, #tpu.memory_space<vmem>>, vector<7x32xf32>,
    %c3_1493 = arith.constant 3 : index
    %c5_1494 = arith.constant 5 : index
    %c0_1495 = arith.constant 0 : index
    %c0_1496 = arith.constant 0 : index
    %835 = vector.load %arg7[%c3_1493, %c5_1494, %c0_1495, %c0_1496] : memref<4x8x8x32xf32, #tpu.memory_space<vmem>>, vector<1x1x7x32xf32>
    %836 = vector.shape_cast %835 : vector<1x1x7x32xf32> to vector<7x32xf32>
    %c175_1497 = arith.constant 175 : index
    %c192_1498 = arith.constant 192 : index
    %837 = vector.load %arg8[%c175_1497, %c192_1498] : memref<196x288xf32, #tpu.memory_space<vmem>>, vector<7x32xf32>
    tpu.vector_store %arg8[%c175_1497, %c192_1498], %836 {strides = array<i32>} : memref<196x288xf32, #tpu.memory_space<vmem>>, vector<7x32xf32>,
    %c3_1499 = arith.constant 3 : index
    %c6_1500 = arith.constant 6 : index
    %c0_1501 = arith.constant 0 : index
    %c0_1502 = arith.constant 0 : index
    %838 = vector.load %arg7[%c3_1499, %c6_1500, %c0_1501, %c0_1502] : memref<4x8x8x32xf32, #tpu.memory_space<vmem>>, vector<1x1x7x32xf32>
    %839 = vector.shape_cast %838 : vector<1x1x7x32xf32> to vector<7x32xf32>
    %c182_1503 = arith.constant 182 : index
    %c192_1504 = arith.constant 192 : index
    %840 = vector.load %arg8[%c182_1503, %c192_1504] : memref<196x288xf32, #tpu.memory_space<vmem>>, vector<7x32xf32>
    tpu.vector_store %arg8[%c182_1503, %c192_1504], %839 {strides = array<i32>} : memref<196x288xf32, #tpu.memory_space<vmem>>, vector<7x32xf32>,
    %c3_1505 = arith.constant 3 : index
    %c7_1506 = arith.constant 7 : index
    %c0_1507 = arith.constant 0 : index
    %c0_1508 = arith.constant 0 : index
    %841 = vector.load %arg7[%c3_1505, %c7_1506, %c0_1507, %c0_1508] : memref<4x8x8x32xf32, #tpu.memory_space<vmem>>, vector<1x1x7x32xf32>
    %842 = vector.shape_cast %841 : vector<1x1x7x32xf32> to vector<7x32xf32>
    %c189_1509 = arith.constant 189 : index
    %c192_1510 = arith.constant 192 : index
    %843 = vector.load %arg8[%c189_1509, %c192_1510] : memref<196x288xf32, #tpu.memory_space<vmem>>, vector<7x32xf32>
    tpu.vector_store %arg8[%c189_1509, %c192_1510], %842 {strides = array<i32>} : memref<196x288xf32, #tpu.memory_space<vmem>>, vector<7x32xf32>,
    %c2_1511 = arith.constant 2 : index
    %c1_1512 = arith.constant 1 : index
    %c1_1513 = arith.constant 1 : index
    %c0_1514 = arith.constant 0 : index
    %844 = vector.load %arg7[%c2_1511, %c1_1512, %c1_1513, %c0_1514] : memref<4x8x8x32xf32, #tpu.memory_space<vmem>>, vector<1x1x7x32xf32>
    %845 = vector.shape_cast %844 : vector<1x1x7x32xf32> to vector<7x32xf32>
    %c147_1515 = arith.constant 147 : index
    %c224_1516 = arith.constant 224 : index
    %846 = vector.load %arg8[%c147_1515, %c224_1516] : memref<196x288xf32, #tpu.memory_space<vmem>>, vector<7x32xf32>
    tpu.vector_store %arg8[%c147_1515, %c224_1516], %845 {strides = array<i32>} : memref<196x288xf32, #tpu.memory_space<vmem>>, vector<7x32xf32>,
    %c2_1517 = arith.constant 2 : index
    %c2_1518 = arith.constant 2 : index
    %c1_1519 = arith.constant 1 : index
    %c0_1520 = arith.constant 0 : index
    %847 = vector.load %arg7[%c2_1517, %c2_1518, %c1_1519, %c0_1520] : memref<4x8x8x32xf32, #tpu.memory_space<vmem>>, vector<1x1x7x32xf32>
    %848 = vector.shape_cast %847 : vector<1x1x7x32xf32> to vector<7x32xf32>
    %c154_1521 = arith.constant 154 : index
    %c224_1522 = arith.constant 224 : index
    %849 = vector.load %arg8[%c154_1521, %c224_1522] : memref<196x288xf32, #tpu.memory_space<vmem>>, vector<7x32xf32>
    tpu.vector_store %arg8[%c154_1521, %c224_1522], %848 {strides = array<i32>} : memref<196x288xf32, #tpu.memory_space<vmem>>, vector<7x32xf32>,
    %c2_1523 = arith.constant 2 : index
    %c3_1524 = arith.constant 3 : index
    %c1_1525 = arith.constant 1 : index
    %c0_1526 = arith.constant 0 : index
    %850 = vector.load %arg7[%c2_1523, %c3_1524, %c1_1525, %c0_1526] : memref<4x8x8x32xf32, #tpu.memory_space<vmem>>, vector<1x1x7x32xf32>
    %851 = vector.shape_cast %850 : vector<1x1x7x32xf32> to vector<7x32xf32>
    %c161_1527 = arith.constant 161 : index
    %c224_1528 = arith.constant 224 : index
    %852 = vector.load %arg8[%c161_1527, %c224_1528] : memref<196x288xf32, #tpu.memory_space<vmem>>, vector<7x32xf32>
    tpu.vector_store %arg8[%c161_1527, %c224_1528], %851 {strides = array<i32>} : memref<196x288xf32, #tpu.memory_space<vmem>>, vector<7x32xf32>,
    %c2_1529 = arith.constant 2 : index
    %c4_1530 = arith.constant 4 : index
    %c1_1531 = arith.constant 1 : index
    %c0_1532 = arith.constant 0 : index
    %853 = vector.load %arg7[%c2_1529, %c4_1530, %c1_1531, %c0_1532] : memref<4x8x8x32xf32, #tpu.memory_space<vmem>>, vector<1x1x7x32xf32>
    %854 = vector.shape_cast %853 : vector<1x1x7x32xf32> to vector<7x32xf32>
    %c168_1533 = arith.constant 168 : index
    %c224_1534 = arith.constant 224 : index
    %855 = vector.load %arg8[%c168_1533, %c224_1534] : memref<196x288xf32, #tpu.memory_space<vmem>>, vector<7x32xf32>
    tpu.vector_store %arg8[%c168_1533, %c224_1534], %854 {strides = array<i32>} : memref<196x288xf32, #tpu.memory_space<vmem>>, vector<7x32xf32>,
    %c2_1535 = arith.constant 2 : index
    %c5_1536 = arith.constant 5 : index
    %c1_1537 = arith.constant 1 : index
    %c0_1538 = arith.constant 0 : index
    %856 = vector.load %arg7[%c2_1535, %c5_1536, %c1_1537, %c0_1538] : memref<4x8x8x32xf32, #tpu.memory_space<vmem>>, vector<1x1x7x32xf32>
    %857 = vector.shape_cast %856 : vector<1x1x7x32xf32> to vector<7x32xf32>
    %c175_1539 = arith.constant 175 : index
    %c224_1540 = arith.constant 224 : index
    %858 = vector.load %arg8[%c175_1539, %c224_1540] : memref<196x288xf32, #tpu.memory_space<vmem>>, vector<7x32xf32>
    tpu.vector_store %arg8[%c175_1539, %c224_1540], %857 {strides = array<i32>} : memref<196x288xf32, #tpu.memory_space<vmem>>, vector<7x32xf32>,
    %c2_1541 = arith.constant 2 : index
    %c6_1542 = arith.constant 6 : index
    %c1_1543 = arith.constant 1 : index
    %c0_1544 = arith.constant 0 : index
    %859 = vector.load %arg7[%c2_1541, %c6_1542, %c1_1543, %c0_1544] : memref<4x8x8x32xf32, #tpu.memory_space<vmem>>, vector<1x1x7x32xf32>
    %860 = vector.shape_cast %859 : vector<1x1x7x32xf32> to vector<7x32xf32>
    %c182_1545 = arith.constant 182 : index
    %c224_1546 = arith.constant 224 : index
    %861 = vector.load %arg8[%c182_1545, %c224_1546] : memref<196x288xf32, #tpu.memory_space<vmem>>, vector<7x32xf32>
    tpu.vector_store %arg8[%c182_1545, %c224_1546], %860 {strides = array<i32>} : memref<196x288xf32, #tpu.memory_space<vmem>>, vector<7x32xf32>,
    %c2_1547 = arith.constant 2 : index
    %c7_1548 = arith.constant 7 : index
    %c1_1549 = arith.constant 1 : index
    %c0_1550 = arith.constant 0 : index
    %862 = vector.load %arg7[%c2_1547, %c7_1548, %c1_1549, %c0_1550] : memref<4x8x8x32xf32, #tpu.memory_space<vmem>>, vector<1x1x7x32xf32>
    %863 = vector.shape_cast %862 : vector<1x1x7x32xf32> to vector<7x32xf32>
    %c189_1551 = arith.constant 189 : index
    %c224_1552 = arith.constant 224 : index
    %864 = vector.load %arg8[%c189_1551, %c224_1552] : memref<196x288xf32, #tpu.memory_space<vmem>>, vector<7x32xf32>
    tpu.vector_store %arg8[%c189_1551, %c224_1552], %863 {strides = array<i32>} : memref<196x288xf32, #tpu.memory_space<vmem>>, vector<7x32xf32>,
    %c3_1553 = arith.constant 3 : index
    %c1_1554 = arith.constant 1 : index
    %c1_1555 = arith.constant 1 : index
    %c0_1556 = arith.constant 0 : index
    %865 = vector.load %arg7[%c3_1553, %c1_1554, %c1_1555, %c0_1556] : memref<4x8x8x32xf32, #tpu.memory_space<vmem>>, vector<1x1x7x32xf32>
    %866 = vector.shape_cast %865 : vector<1x1x7x32xf32> to vector<7x32xf32>
    %c147_1557 = arith.constant 147 : index
    %c256_1558 = arith.constant 256 : index
    %867 = vector.load %arg8[%c147_1557, %c256_1558] : memref<196x288xf32, #tpu.memory_space<vmem>>, vector<7x32xf32>
    tpu.vector_store %arg8[%c147_1557, %c256_1558], %866 {strides = array<i32>} : memref<196x288xf32, #tpu.memory_space<vmem>>, vector<7x32xf32>,
    %c3_1559 = arith.constant 3 : index
    %c2_1560 = arith.constant 2 : index
    %c1_1561 = arith.constant 1 : index
    %c0_1562 = arith.constant 0 : index
    %868 = vector.load %arg7[%c3_1559, %c2_1560, %c1_1561, %c0_1562] : memref<4x8x8x32xf32, #tpu.memory_space<vmem>>, vector<1x1x7x32xf32>
    %869 = vector.shape_cast %868 : vector<1x1x7x32xf32> to vector<7x32xf32>
    %c154_1563 = arith.constant 154 : index
    %c256_1564 = arith.constant 256 : index
    %870 = vector.load %arg8[%c154_1563, %c256_1564] : memref<196x288xf32, #tpu.memory_space<vmem>>, vector<7x32xf32>
    tpu.vector_store %arg8[%c154_1563, %c256_1564], %869 {strides = array<i32>} : memref<196x288xf32, #tpu.memory_space<vmem>>, vector<7x32xf32>,
    %c3_1565 = arith.constant 3 : index
    %c3_1566 = arith.constant 3 : index
    %c1_1567 = arith.constant 1 : index
    %c0_1568 = arith.constant 0 : index
    %871 = vector.load %arg7[%c3_1565, %c3_1566, %c1_1567, %c0_1568] : memref<4x8x8x32xf32, #tpu.memory_space<vmem>>, vector<1x1x7x32xf32>
    %872 = vector.shape_cast %871 : vector<1x1x7x32xf32> to vector<7x32xf32>
    %c161_1569 = arith.constant 161 : index
    %c256_1570 = arith.constant 256 : index
    %873 = vector.load %arg8[%c161_1569, %c256_1570] : memref<196x288xf32, #tpu.memory_space<vmem>>, vector<7x32xf32>
    tpu.vector_store %arg8[%c161_1569, %c256_1570], %872 {strides = array<i32>} : memref<196x288xf32, #tpu.memory_space<vmem>>, vector<7x32xf32>,
    %c3_1571 = arith.constant 3 : index
    %c4_1572 = arith.constant 4 : index
    %c1_1573 = arith.constant 1 : index
    %c0_1574 = arith.constant 0 : index
    %874 = vector.load %arg7[%c3_1571, %c4_1572, %c1_1573, %c0_1574] : memref<4x8x8x32xf32, #tpu.memory_space<vmem>>, vector<1x1x7x32xf32>
    %875 = vector.shape_cast %874 : vector<1x1x7x32xf32> to vector<7x32xf32>
    %c168_1575 = arith.constant 168 : index
    %c256_1576 = arith.constant 256 : index
    %876 = vector.load %arg8[%c168_1575, %c256_1576] : memref<196x288xf32, #tpu.memory_space<vmem>>, vector<7x32xf32>
    tpu.vector_store %arg8[%c168_1575, %c256_1576], %875 {strides = array<i32>} : memref<196x288xf32, #tpu.memory_space<vmem>>, vector<7x32xf32>,
    %c3_1577 = arith.constant 3 : index
    %c5_1578 = arith.constant 5 : index
    %c1_1579 = arith.constant 1 : index
    %c0_1580 = arith.constant 0 : index
    %877 = vector.load %arg7[%c3_1577, %c5_1578, %c1_1579, %c0_1580] : memref<4x8x8x32xf32, #tpu.memory_space<vmem>>, vector<1x1x7x32xf32>
    %878 = vector.shape_cast %877 : vector<1x1x7x32xf32> to vector<7x32xf32>
    %c175_1581 = arith.constant 175 : index
    %c256_1582 = arith.constant 256 : index
    %879 = vector.load %arg8[%c175_1581, %c256_1582] : memref<196x288xf32, #tpu.memory_space<vmem>>, vector<7x32xf32>
    tpu.vector_store %arg8[%c175_1581, %c256_1582], %878 {strides = array<i32>} : memref<196x288xf32, #tpu.memory_space<vmem>>, vector<7x32xf32>,
    %c3_1583 = arith.constant 3 : index
    %c6_1584 = arith.constant 6 : index
    %c1_1585 = arith.constant 1 : index
    %c0_1586 = arith.constant 0 : index
    %880 = vector.load %arg7[%c3_1583, %c6_1584, %c1_1585, %c0_1586] : memref<4x8x8x32xf32, #tpu.memory_space<vmem>>, vector<1x1x7x32xf32>
    %881 = vector.shape_cast %880 : vector<1x1x7x32xf32> to vector<7x32xf32>
    %c182_1587 = arith.constant 182 : index
    %c256_1588 = arith.constant 256 : index
    %882 = vector.load %arg8[%c182_1587, %c256_1588] : memref<196x288xf32, #tpu.memory_space<vmem>>, vector<7x32xf32>
    tpu.vector_store %arg8[%c182_1587, %c256_1588], %881 {strides = array<i32>} : memref<196x288xf32, #tpu.memory_space<vmem>>, vector<7x32xf32>,
    %c3_1589 = arith.constant 3 : index
    %c7_1590 = arith.constant 7 : index
    %c1_1591 = arith.constant 1 : index
    %c0_1592 = arith.constant 0 : index
    %883 = vector.load %arg7[%c3_1589, %c7_1590, %c1_1591, %c0_1592] : memref<4x8x8x32xf32, #tpu.memory_space<vmem>>, vector<1x1x7x32xf32>
    %884 = vector.shape_cast %883 : vector<1x1x7x32xf32> to vector<7x32xf32>
    %c189_1593 = arith.constant 189 : index
    %c256_1594 = arith.constant 256 : index
    %885 = vector.load %arg8[%c189_1593, %c256_1594] : memref<196x288xf32, #tpu.memory_space<vmem>>, vector<7x32xf32>
    tpu.vector_store %arg8[%c189_1593, %c256_1594], %884 {strides = array<i32>} : memref<196x288xf32, #tpu.memory_space<vmem>>, vector<7x32xf32>,
    %c0_1595 = arith.constant 0 : index
    %c0_1596 = arith.constant 0 : index
    %886 = vector.load %arg8[%c0_1595, %c0_1596] : memref<196x288xf32, #tpu.memory_space<vmem>>, vector<196x288xf32>
    %887 = arith.truncf %886 : vector<196x288xf32> to vector<196x288xbf16>
    %c0_1597 = arith.constant 0 : index
    %c0_1598 = arith.constant 0 : index
    %888 = vector.load %arg4[%c0_1597, %c0_1598] : memref<288x64xbf16, #tpu.memory_space<vmem>>, vector<288x64xbf16>
    %cst_1599 = arith.constant dense<0.000000e+00> : vector<196x64xf32>
    %889 = tpu.matmul %887, %888, %cst_1599 {dimension_numbers = #tpu.dot_dimension_numbers<[1], [0], [0], [1], [0, 0, 1, 1], [], []>} : vector<196x288xbf16>, vector<288x64xbf16>, vector<196x64xf32> -> vector<196x64xf32>
    %890 = vector.extract_strided_slice %889 {offsets = [0, 0], sizes = [49, 64], strides = [1, 1]} : vector<196x64xf32> to vector<49x64xf32>
    %891 = vector.extract_strided_slice %889 {offsets = [49, 0], sizes = [49, 64], strides = [1, 1]} : vector<196x64xf32> to vector<49x64xf32>
    %892 = arith.maximumf %890, %891 : vector<49x64xf32>
    %893 = vector.extract_strided_slice %889 {offsets = [98, 0], sizes = [49, 64], strides = [1, 1]} : vector<196x64xf32> to vector<49x64xf32>
    %894 = vector.extract_strided_slice %889 {offsets = [147, 0], sizes = [49, 64], strides = [1, 1]} : vector<196x64xf32> to vector<49x64xf32>
    %895 = arith.maximumf %893, %894 : vector<49x64xf32>
    %896 = arith.maximumf %892, %895 : vector<49x64xf32>
    %c0_1600 = arith.constant 0 : index
    %c0_1601 = arith.constant 0 : index
    %897 = vector.load %arg5[%c0_1600, %c0_1601] : memref<1x64xf32, #tpu.memory_space<vmem>>, vector<1x64xf32>
    %898 = vector.broadcast %897 : vector<1x64xf32> to vector<49x64xf32>
    %899 = arith.addf %896, %898 : vector<49x64xf32>
    %cst_1602 = arith.constant 0.000000e+00 : f32
    %900 = vector.broadcast %cst_1602 : f32 to vector<49x64xf32>
    %901 = arith.maximumf %899, %900 : vector<49x64xf32>
    %902 = arith.truncf %901 : vector<49x64xf32> to vector<49x64xbf16>
    %c0_1603 = arith.constant 0 : index
    %c0_1604 = arith.constant 0 : index
    %c0_1605 = arith.constant 0 : index
    %903 = vector.load %arg6[%c0_1603, %c0_1604, %c0_1605] : memref<1x49x64xbf16, #tpu.memory_space<vmem>>, vector<1x49x64xbf16>
    %904 = vector.shape_cast %903 : vector<1x49x64xbf16> to vector<49x64xbf16>
    %905 = vector.shape_cast %902 : vector<49x64xbf16> to vector<1x49x64xbf16>
    tpu.vector_store %arg6[%c0_1603, %c0_1604, %c0_1605], %905 {strides = array<i32>} : memref<1x49x64xbf16, #tpu.memory_space<vmem>>, vector<1x49x64xbf16>,
    return
  }
  func.func @transform_0(%arg0: i32) -> (i32, i32, i32) {
    %c0_i32 = arith.constant 0 : i32
    %c0_i32_0 = arith.constant 0 : i32
    %c0_i32_1 = arith.constant 0 : i32
    return %arg0, %c0_i32, %c0_i32_0 : i32, i32, i32
  }
  func.func @transform_1(%arg0: i32) -> (i32, i32) {
    %c0_i32 = arith.constant 0 : i32
    %c0_i32_0 = arith.constant 0 : i32
    %c0_i32_1 = arith.constant 0 : i32
    return %c0_i32, %c0_i32_0 : i32, i32
  }
  func.func @transform_2(%arg0: i32) -> (i32, i32) {
    %c0_i32 = arith.constant 0 : i32
    %c0_i32_0 = arith.constant 0 : i32
    %c0_i32_1 = arith.constant 0 : i32
    return %c0_i32, %c0_i32_0 : i32, i32
  }
  func.func @transform_3(%arg0: i32) -> (i32, i32) {
    %c0_i32 = arith.constant 0 : i32
    %c0_i32_0 = arith.constant 0 : i32
    %c0_i32_1 = arith.constant 0 : i32
    return %c0_i32, %c0_i32_0 : i32, i32
  }
  func.func @transform_4(%arg0: i32) -> (i32, i32) {
    %c0_i32 = arith.constant 0 : i32
    %c0_i32_0 = arith.constant 0 : i32
    %c0_i32_1 = arith.constant 0 : i32
    return %c0_i32, %c0_i32_0 : i32, i32
  }
  func.func @transform_5(%arg0: i32) -> (i32, i32, i32) {
    %c0_i32 = arith.constant 0 : i32
    %c0_i32_0 = arith.constant 0 : i32
    %c0_i32_1 = arith.constant 0 : i32
    return %arg0, %c0_i32, %c0_i32_0 : i32, i32, i32
  }
}

</mosaic_0001>

<llo_original>
// kernel: cnn_forward.3
$region0: #{cnn_forward.3}
  #allocation0 [shape = 'u32[]', space=smem, size = 0x4, offset = 0x4, fixed_abs, tag = 'smem constant byte address 0x4 - core index']
  #allocation1 [shape = 'u32[144,128]{1,0:T(1,128)}', space=vmem, size = 0x12000, scoped, tag = 'internal scratch']
  %s0 = inlined_call_operand.vmem [shape: bf16[2,3136], index: 0, kind: input, shape index: {}]
  %s1 = inlined_call_operand.hbm [shape: bf16[3136,1024], index: 1, kind: input, shape index: {}]
  %s2 = inlined_call_operand.hbm [shape: f32[1,1024], index: 2, kind: input, shape index: {}]
  %s3 = inlined_call_operand.vmem [shape: f32[1024,10], index: 3, kind: input, shape index: {}]
  %s4 = inlined_call_operand.vmem [shape: f32[4,2,10], index: 4, kind: output, shape index: {}]
  %s5 = sld [smem:[#allocation0]]
  $region57: #{cnn_forward.3} parent=0
    _
  %s7 = ssub.s32 1, %s5
  %s8 = scalar_select 0, %s7, %s5
  $region1: #{cnn_forward.3} parent=0
    #allocation2 [shape = 'u8[3211264]{0}', space=vmem, size = 0x310000, scoped, tag = 'input window, operand 1']
    #allocation3 [shape = 's32[2]{0}', space=sflag, size = 0x8, scoped, tag = 'scoped memory for cnn_forward.3']
    #allocation4 [shape = 'u8[2048]{0}', space=vmem, size = 0x800, scoped, tag = 'input window, operand 2']
    #allocation5 [shape = 's32[2]{0}', space=sflag, size = 0x8, scoped, tag = 'scoped memory for cnn_forward.3']
    %9 = vsyncpa [#allocation3], 0
    %s10 = scalar_lea.sflag [#allocation3], 1
    %11 = vsyncpa %s10, 0
    %12 = vsyncpa [#allocation5], 0
    %s13 = scalar_lea.sflag [#allocation5], 1
    %14 = vsyncpa %s13, 0
    loop: start=0, step=1, limit=6
    $region2: #{cnn_forward.3} parent=1 // loop_pre_header
      _
    $region3: #{cnn_forward.3} parent=1 // loop_header
      %s16 = sphi 0, %s20
      %p17 = scmp.ge.s32.totalorder %s16, 6
      %s24 = sphi 0, %s24
      %s26 = sphi 0, %s24
      %s27 = sphi 0, %s26
      %s41 = sphi 0, %s27
      %s47 = sphi 0, %s49
      %s50 = sphi 0, %s47
      %s51 = sphi 0, %s50
      %s67 = sphi 0, %s51
      %s73 = sphi 0, %s75
      %s76 = sphi 0, %s73
      %s77 = sphi 0, %s76
      %s93 = sphi 0, %s77
      %s99 = sphi 0, %s101
      %s102 = sphi 0, %s99
      %s103 = sphi 0, %s102
      %s119 = sphi 0, %s103
      %s125 = sphi 0, %s127
      %s128 = sphi 0, %s125
      %s129 = sphi 0, %s128
      %s145 = sphi 0, %s129
    $region4: #{cnn_forward.3} parent=1 // loop_header_branch
      %19 = sbr.rel (%p17) target = $region8
    $region5: #{cnn_forward.3} parent=1 // loop_body
      %s21 = ssub.s32 %s16, 1
      %s22 = ssub.s32 %s16, 2
      %s23 = sadd.s32 %s16, 1
      %s25 = sadd.s32 %s24, 1
      %p28 = scmp.eq.s32.totalorder %s16, 3
      %p29 = scmp.ne.s32.totalorder %s24, %s26
      %p30 = scmp.eq.s32.totalorder %s16, 0
      %p31 = por %p29, %p30
      %p32 = scmp.ne.s32.totalorder %s24, %s26
      %p33 = scmp.eq.s32.totalorder %s21, 3
      %p34 = por %p32, %p33
      %p35 = scmp.ne.s32.totalorder %s26, %s27
      %p36 = scmp.eq.s32.totalorder %s21, 0
      %p37 = por %p35, %p36
      %p38 = scmp.ne.s32.totalorder %s26, %s27
      %p39 = scmp.eq.s32.totalorder %s22, 3
      %p40 = por %p38, %p39
      %p42 = scmp.ne.s32.totalorder %s27, %s41
      %p43 = scmp.eq.s32.totalorder %s22, 0
      %p44 = por %p42, %p43
      %s45 = ssub.s32 %s16, %s23
      %p46 = scmp.eq.s32.totalorder %s45, 0
      %s48 = sadd.s32 %s47, 1
      %s49 = scalar_select %p46, %s47, %s48
      %p52 = pneg %p46
      %p53 = scmp.eq.s32.totalorder %s16, 3
      %p54 = por %p52, %p53
      %p55 = scmp.ne.s32.totalorder %s47, %s50
      %p56 = scmp.eq.s32.totalorder %s16, 0
      %p57 = por %p55, %p56
      %p58 = scmp.ne.s32.totalorder %s47, %s50
      %p59 = scmp.eq.s32.totalorder %s21, 3
      %p60 = por %p58, %p59
      %p61 = scmp.ne.s32.totalorder %s50, %s51
      %p62 = scmp.eq.s32.totalorder %s21, 0
      %p63 = por %p61, %p62
      %p64 = scmp.ne.s32.totalorder %s50, %s51
      %p65 = scmp.eq.s32.totalorder %s22, 3
      %p66 = por %p64, %p65
      %p68 = scmp.ne.s32.totalorder %s51, %s67
      %p69 = scmp.eq.s32.totalorder %s22, 0
      %p70 = por %p68, %p69
      %s71 = ssub.s32 %s16, %s23
      %p72 = scmp.eq.s32.totalorder %s71, 0
      %s74 = sadd.s32 %s73, 1
      %s75 = scalar_select %p72, %s73, %s74
      %p78 = pneg %p72
      %p79 = scmp.eq.s32.totalorder %s16, 3
      %p80 = por %p78, %p79
      %p81 = scmp.ne.s32.totalorder %s73, %s76
      %p82 = scmp.eq.s32.totalorder %s16, 0
      %p83 = por %p81, %p82
      %p84 = scmp.ne.s32.totalorder %s73, %s76
      %p85 = scmp.eq.s32.totalorder %s21, 3
      %p86 = por %p84, %p85
      %p87 = scmp.ne.s32.totalorder %s76, %s77
      %p88 = scmp.eq.s32.totalorder %s21, 0
      %p89 = por %p87, %p88
      %p90 = scmp.ne.s32.totalorder %s76, %s77
      %p91 = scmp.eq.s32.totalorder %s22, 3
      %p92 = por %p90, %p91
      %p94 = scmp.ne.s32.totalorder %s77, %s93
      %p95 = scmp.eq.s32.totalorder %s22, 0
      %p96 = por %p94, %p95
      %s97 = ssub.s32 %s16, %s23
      %p98 = scmp.eq.s32.totalorder %s97, 0
      %s100 = sadd.s32 %s99, 1
      %s101 = scalar_select %p98, %s99, %s100
      %p104 = pneg %p98
      %p105 = scmp.eq.s32.totalorder %s16, 3
      %p106 = por %p104, %p105
      %p107 = scmp.ne.s32.totalorder %s99, %s102
      %p108 = scmp.eq.s32.totalorder %s16, 0
      %p109 = por %p107, %p108
      %p110 = scmp.ne.s32.totalorder %s99, %s102
      %p111 = scmp.eq.s32.totalorder %s21, 3
      %p112 = por %p110, %p111
      %p113 = scmp.ne.s32.totalorder %s102, %s103
      %p114 = scmp.eq.s32.totalorder %s21, 0
      %p115 = por %p113, %p114
      %p116 = scmp.ne.s32.totalorder %s102, %s103
      %p117 = scmp.eq.s32.totalorder %s22, 3
      %p118 = por %p116, %p117
      %p120 = scmp.ne.s32.totalorder %s103, %s119
      %p121 = scmp.eq.s32.totalorder %s22, 0
      %p122 = por %p120, %p121
      %s123 = ssub.s32 %s16, %s23
      %p124 = scmp.eq.s32.totalorder %s123, 0
      %s126 = sadd.s32 %s125, 1
      %s127 = scalar_select %p124, %s125, %s126
      %p130 = pneg %p124
      %p131 = scmp.eq.s32.totalorder %s16, 3
      %p132 = por %p130, %p131
      %p133 = scmp.ne.s32.totalorder %s125, %s128
      %p134 = scmp.eq.s32.totalorder %s16, 0
      %p135 = por %p133, %p134
      %p136 = scmp.ne.s32.totalorder %s125, %s128
      %p137 = scmp.eq.s32.totalorder %s21, 3
      %p138 = por %p136, %p137
      %p139 = scmp.ne.s32.totalorder %s128, %s129
      %p140 = scmp.eq.s32.totalorder %s21, 0
      %p141 = por %p139, %p140
      %p142 = scmp.ne.s32.totalorder %s128, %s129
      %p143 = scmp.eq.s32.totalorder %s22, 3
      %p144 = por %p142, %p143
      %p146 = scmp.ne.s32.totalorder %s129, %s145
      %p147 = scmp.eq.s32.totalorder %s22, 0
      %p148 = por %p146, %p147
      %p149 = scmp.le.s32.totalorder 1, %s16
      %p150 = scmp.lt.s32.totalorder %s16, 5
      %p151 = pnand %p149, %p150
      %p152 = pneg %p151
      // Predicated region
      $region9: #{cnn_forward.3} parent=5 // pred_check
        _
      $region10: #{cnn_forward.3} parent=5 // pred_check_branch
        %154 = sbr.rel (%p151) target = $region12
      $region11: #{cnn_forward.3} parent=5 // pred_region
        %s155 = ssub.s32 %s16, 1
        // Predicated region
        $region13: #{cnn_forward.3} parent=11 // pred_check
          %p156 = pneg %p37
        $region14: #{cnn_forward.3} parent=11 // pred_check_branch
          %158 = sbr.rel (%p156) target = $region16
        $region15: #{cnn_forward.3} parent=11 // pred_region
          _
        $region16: #{cnn_forward.3} parent=11 // pred_fallthru
          _
      $region12: #{cnn_forward.3} parent=5 // pred_fallthru
        _
      %p159 = scmp.lt.s32.totalorder %s16, 4
      // Predicated region
      $region17: #{cnn_forward.3} parent=5 // pred_check
        %p160 = pneg %p159
      $region18: #{cnn_forward.3} parent=5 // pred_check_branch
        %162 = sbr.rel (%p160) target = $region20
      $region19: #{cnn_forward.3} parent=5 // pred_region
        // Predicated region
        $region21: #{cnn_forward.3} parent=19 // pred_check
          %p163 = pneg %p57
        $region22: #{cnn_forward.3} parent=19 // pred_check_branch
          %165 = sbr.rel (%p163) target = $region24
        $region23: #{cnn_forward.3} parent=19 // pred_region
          %s166 = sand.u32 %s47, 1
          %s167 = scalar_lea.sflag [#allocation3], %s166
          %s168 = sand.u32 %s47, 1
          %s169 = smul.addr %s168, 3136
          %s170 = scalar_lea.vmem [#allocation2], %s169
          %s171 = smul.u32 2, %s16
          %s173 = ssub.s32 50176, 50176
          %174 = vsyncadd %s167, %s173
          %s175 = smul.addr %s171, 64
          %s176 = scalar_lea.hbm %s1, %s175
          %s177 = sshll.u32 %s170, 4
          %s178 = int_to_ptr.vmem [resolvable:$true] %s177
          %183 = dma.hbm_to_vmem [thread:$0]  %s176, 50176, %s178, %s167, 512, 128, 8
        $region24: #{cnn_forward.3} parent=19 // pred_fallthru
          _
        // Predicated region
        $region25: #{cnn_forward.3} parent=19 // pred_check
          %p184 = pneg %p83
        $region26: #{cnn_forward.3} parent=19 // pred_check_branch
          %186 = sbr.rel (%p184) target = $region28
        $region27: #{cnn_forward.3} parent=19 // pred_region
          %s187 = sand.u32 %s73, 1
          %s188 = scalar_lea.sflag [#allocation5], %s187
          %s189 = sand.u32 %s73, 1
          %s190 = smul.addr %s189, 2
          %s191 = scalar_lea.vmem [#allocation4], %s190
          %s192 = smul.u32 2, %s16
          %s194 = ssub.s32 32, 32
          %195 = vsyncadd %s188, %s194
          %s196 = smul.addr %s192, 16
          %s197 = scalar_lea.hbm %s2, %s196
          %s199 = sshll.u32 %s191, 4
          %s200 = int_to_ptr.vmem [resolvable:$true] %s199
          %202 = dma.hbm_to_vmem [thread:$0]  %s197, 32, %s200, %s188
        $region28: #{cnn_forward.3} parent=19 // pred_fallthru
          _
        // Predicated region
        $region29: #{cnn_forward.3} parent=19 // pred_check
          %p203 = pneg %p109
        $region30: #{cnn_forward.3} parent=19 // pred_check_branch
          %205 = sbr.rel (%p203) target = $region32
        $region31: #{cnn_forward.3} parent=19 // pred_region
          %s206 = smul.u32 32, %s16
          %p207 = scmp.lt.s32.totalorder %s206, 127
          %s208 = scalar_select %p207, %s206, 127
          %s209 = smul.addr %s208, 8
          %s210 = scalar_lea.vmem %s3, %s209
          %s211 = smul.u32 32, %s16
        $region32: #{cnn_forward.3} parent=19 // pred_fallthru
          _
      $region20: #{cnn_forward.3} parent=5 // pred_fallthru
        _
      %p212 = scmp.le.s32.totalorder 1, %s16
      %p213 = scmp.lt.s32.totalorder %s16, 5
      %p214 = pnand %p212, %p213
      %p215 = pneg %p214
      // Predicated region
      $region33: #{cnn_forward.3} parent=5 // pred_check
        _
      $region34: #{cnn_forward.3} parent=5 // pred_check_branch
        %217 = sbr.rel (%p214) target = $region36
      $region35: #{cnn_forward.3} parent=5 // pred_region
        %s218 = ssub.s32 %s16, 1
        %s219 = sand.u32 %s50, 1
        %s220 = scalar_lea.sflag [#allocation3], %s219
        %s221 = sand.u32 %s50, 1
        %s222 = smul.addr %s221, 3136
        %s223 = scalar_lea.vmem [#allocation2], %s222
        // Predicated region
        $region37: #{cnn_forward.3} parent=35 // pred_check
          %p224 = pneg %p63
        $region38: #{cnn_forward.3} parent=35 // pred_check_branch
          %226 = sbr.rel (%p224) target = $region40
        $region39: #{cnn_forward.3} parent=35 // pred_region
          %227 = dma.done %s220, 50176
        $region40: #{cnn_forward.3} parent=35 // pred_fallthru
          _
        %s228 = sand.u32 %s76, 1
        %s229 = scalar_lea.sflag [#allocation5], %s228
        %s230 = sand.u32 %s76, 1
        %s231 = smul.addr %s230, 2
        %s232 = scalar_lea.vmem [#allocation4], %s231
        // Predicated region
        $region41: #{cnn_forward.3} parent=35 // pred_check
          %p233 = pneg %p89
        $region42: #{cnn_forward.3} parent=35 // pred_check_branch
          %235 = sbr.rel (%p233) target = $region44
        $region43: #{cnn_forward.3} parent=35 // pred_region
          %236 = dma.done %s229, 32
        $region44: #{cnn_forward.3} parent=35 // pred_fallthru
          _
        %p237 = pneg %p37
        %p238 = pneg %p34
        %s239 = sand.u32 %s50, 1
        %s240 = scalar_lea.sflag [#allocation3], %s239
        %s241 = sand.u32 %s50, 1
        %s242 = smul.addr %s241, 3136
        %s243 = scalar_lea.vmem [#allocation2], %s242
        %p244 = pneg %p63
        %p245 = pneg %p60
        %s246 = sand.u32 %s76, 1
        %s247 = scalar_lea.sflag [#allocation5], %s246
        %s248 = sand.u32 %s76, 1
        %s249 = smul.addr %s248, 2
        %s250 = scalar_lea.vmem [#allocation4], %s249
        %p251 = pneg %p89
        %p252 = pneg %p86
        %s253 = smul.u32 32, %s21
        %p254 = scmp.lt.s32.totalorder %s253, 127
        %s255 = scalar_select %p254, %s253, 127
        %s256 = smul.addr %s255, 8
        %s257 = scalar_lea.vmem %s3, %s256
        %p258 = pneg %p115
        %p259 = pneg %p112
        %p260 = pneg %p141
        %p261 = pneg %p138
        %p262 = scmp.lt.s32.totalorder %s21, 3
        %s263 = scalar_select %p262, %s21, 3
        %s264 = smul.addr %s263, 2
        %s265 = scalar_lea.vmem %s4, %s264
        %s266 = smul.u32 2, %s21
        %s267 = smul.u32 2, %s21
        %s268 = smul.u32 32, %s21
        %p269 = scmp.lt.s32.totalorder %s268, 127
        %s270 = scalar_select %p269, %s268, 127
        %s271 = smul.addr %s270, 8
        %s272 = scalar_lea.vmem %s3, %s271
        %s273 = smul.u32 32, %s21
        %p274 = scmp.lt.s32.totalorder %s21, 3
        %s275 = scalar_select %p274, %s21, 3
        %s276 = smul.addr %s275, 2
        %s277 = scalar_lea.vmem %s4, %s276
        %v279 = vld [vmem:[%s0] sm:$0xff]
        %v280 = vld [vmem:[%s0 + $0x8] sm:$0xff]
        %v281 = vld [vmem:[%s0 + $0x10] sm:$0xff]
        %v282 = vld [vmem:[%s0 + $0x18] sm:$0x1]
        %v283 = vld [vmem:[%s223] sm:$0xff]
        %v284 = vld [vmem:[%s223 + $0x8] sm:$0xff]
        %v285 = vld [vmem:[%s223 + $0x10] sm:$0xff]
        %v286 = vld [vmem:[%s223 + $0x18] sm:$0xff]
        %v287 = vld [vmem:[%s223 + $0x20] sm:$0xff]
        %v288 = vld [vmem:[%s223 + $0x28] sm:$0xff]
        %v289 = vld [vmem:[%s223 + $0x30] sm:$0xff]
        %v290 = vld [vmem:[%s223 + $0x38] sm:$0xff]
        %v291 = vld [vmem:[%s223 + $0x40] sm:$0xff]
        %v292 = vld [vmem:[%s223 + $0x48] sm:$0xff]
        %v293 = vld [vmem:[%s223 + $0x50] sm:$0xff]
        %v294 = vld [vmem:[%s223 + $0x58] sm:$0xff]
        %v295 = vld [vmem:[%s223 + $0x60] sm:$0xff]
        %v296 = vld [vmem:[%s223 + $0x68] sm:$0xff]
        %v297 = vld [vmem:[%s223 + $0x70] sm:$0xff]
        %v298 = vld [vmem:[%s223 + $0x78] sm:$0xff]
        %v299 = vld [vmem:[%s223 + $0x80] sm:$0xff]
        %v300 = vld [vmem:[%s223 + $0x88] sm:$0xff]
        %v301 = vld [vmem:[%s223 + $0x90] sm:$0xff]
        %v302 = vld [vmem:[%s223 + $0x98] sm:$0xff]
        %v303 = vld [vmem:[%s223 + $0xa0] sm:$0xff]
        %v304 = vld [vmem:[%s223 + $0xa8] sm:$0xff]
        %v305 = vld [vmem:[%s223 + $0xb0] sm:$0xff]
        %v306 = vld [vmem:[%s223 + $0xb8] sm:$0xff]
        %v307 = vld [vmem:[%s223 + $0xc0] sm:$0xff]
        %v308 = vld [vmem:[%s223 + $0xc8] sm:$0xff]
        %v309 = vld [vmem:[%s223 + $0xd0] sm:$0xff]
        %v310 = vld [vmem:[%s223 + $0xd8] sm:$0xff]
        %v311 = vld [vmem:[%s223 + $0xe0] sm:$0xff]
        %v312 = vld [vmem:[%s223 + $0xe8] sm:$0xff]
        %v313 = vld [vmem:[%s223 + $0xf0] sm:$0xff]
        %v314 = vld [vmem:[%s223 + $0xf8] sm:$0xff]
        %v315 = vld [vmem:[%s223 + $0x100] sm:$0xff]
        %v316 = vld [vmem:[%s223 + $0x108] sm:$0xff]
        %v317 = vld [vmem:[%s223 + $0x110] sm:$0xff]
        %v318 = vld [vmem:[%s223 + $0x118] sm:$0xff]
        %v319 = vld [vmem:[%s223 + $0x120] sm:$0xff]
        %v320 = vld [vmem:[%s223 + $0x128] sm:$0xff]
        %v321 = vld [vmem:[%s223 + $0x130] sm:$0xff]
        %v322 = vld [vmem:[%s223 + $0x138] sm:$0xff]
        %v323 = vld [vmem:[%s223 + $0x140] sm:$0xff]
        %v324 = vld [vmem:[%s223 + $0x148] sm:$0xff]
        %v325 = vld [vmem:[%s223 + $0x150] sm:$0xff]
        %v326 = vld [vmem:[%s223 + $0x158] sm:$0xff]
        %v327 = vld [vmem:[%s223 + $0x160] sm:$0xff]
        %v328 = vld [vmem:[%s223 + $0x168] sm:$0xff]
        %v329 = vld [vmem:[%s223 + $0x170] sm:$0xff]
        %v330 = vld [vmem:[%s223 + $0x178] sm:$0xff]
        %v331 = vld [vmem:[%s223 + $0x180] sm:$0xff]
        %v332 = vld [vmem:[%s223 + $0x188] sm:$0xff]
        %v333 = vld [vmem:[%s223 + $0x190] sm:$0xff]
        %v334 = vld [vmem:[%s223 + $0x198] sm:$0xff]
        %v335 = vld [vmem:[%s223 + $0x1a0] sm:$0xff]
        %v336 = vld [vmem:[%s223 + $0x1a8] sm:$0xff]
        %v337 = vld [vmem:[%s223 + $0x1b0] sm:$0xff]
        %v338 = vld [vmem:[%s223 + $0x1b8] sm:$0xff]
        %v339 = vld [vmem:[%s223 + $0x1c0] sm:$0xff]
        %v340 = vld [vmem:[%s223 + $0x1c8] sm:$0xff]
        %v341 = vld [vmem:[%s223 + $0x1d0] sm:$0xff]
        %v342 = vld [vmem:[%s223 + $0x1d8] sm:$0xff]
        %v343 = vld [vmem:[%s223 + $0x1e0] sm:$0xff]
        %v344 = vld [vmem:[%s223 + $0x1e8] sm:$0xff]
        %v345 = vld [vmem:[%s223 + $0x1f0] sm:$0xff]
        %v346 = vld [vmem:[%s223 + $0x1f8] sm:$0xff]
        %v347 = vld [vmem:[%s223 + $0x200] sm:$0xff]
        %v348 = vld [vmem:[%s223 + $0x208] sm:$0xff]
        %v349 = vld [vmem:[%s223 + $0x210] sm:$0xff]
        %v350 = vld [vmem:[%s223 + $0x218] sm:$0xff]
        %v351 = vld [vmem:[%s223 + $0x220] sm:$0xff]
        %v352 = vld [vmem:[%s223 + $0x228] sm:$0xff]
        %v353 = vld [vmem:[%s223 + $0x230] sm:$0xff]
        %v354 = vld [vmem:[%s223 + $0x238] sm:$0xff]
        %v355 = vld [vmem:[%s223 + $0x240] sm:$0xff]
        %v356 = vld [vmem:[%s223 + $0x248] sm:$0xff]
        %v357 = vld [vmem:[%s223 + $0x250] sm:$0xff]
        %v358 = vld [vmem:[%s223 + $0x258] sm:$0xff]
        %v359 = vld [vmem:[%s223 + $0x260] sm:$0xff]
        %v360 = vld [vmem:[%s223 + $0x268] sm:$0xff]
        %v361 = vld [vmem:[%s223 + $0x270] sm:$0xff]
        %v362 = vld [vmem:[%s223 + $0x278] sm:$0xff]
        %v363 = vld [vmem:[%s223 + $0x280] sm:$0xff]
        %v364 = vld [vmem:[%s223 + $0x288] sm:$0xff]
        %v365 = vld [vmem:[%s223 + $0x290] sm:$0xff]
        %v366 = vld [vmem:[%s223 + $0x298] sm:$0xff]
        %v367 = vld [vmem:[%s223 + $0x2a0] sm:$0xff]
        %v368 = vld [vmem:[%s223 + $0x2a8] sm:$0xff]
        %v369 = vld [vmem:[%s223 + $0x2b0] sm:$0xff]
        %v370 = vld [vmem:[%s223 + $0x2b8] sm:$0xff]
        %v371 = vld [vmem:[%s223 + $0x2c0] sm:$0xff]
        %v372 = vld [vmem:[%s223 + $0x2c8] sm:$0xff]
        %v373 = vld [vmem:[%s223 + $0x2d0] sm:$0xff]
        %v374 = vld [vmem:[%s223 + $0x2d8] sm:$0xff]
        %v375 = vld [vmem:[%s223 + $0x2e0] sm:$0xff]
        %v376 = vld [vmem:[%s223 + $0x2e8] sm:$0xff]
        %v377 = vld [vmem:[%s223 + $0x2f0] sm:$0xff]
        %v378 = vld [vmem:[%s223 + $0x2f8] sm:$0xff]
        %v379 = vld [vmem:[%s223 + $0x300] sm:$0xff]
        %v380 = vld [vmem:[%s223 + $0x308] sm:$0xff]
        %v381 = vld [vmem:[%s223 + $0x310] sm:$0xff]
        %v382 = vld [vmem:[%s223 + $0x318] sm:$0xff]
        %v383 = vld [vmem:[%s223 + $0x320] sm:$0xff]
        %v384 = vld [vmem:[%s223 + $0x328] sm:$0xff]
        %v385 = vld [vmem:[%s223 + $0x330] sm:$0xff]
        %v386 = vld [vmem:[%s223 + $0x338] sm:$0xff]
        %v387 = vld [vmem:[%s223 + $0x340] sm:$0xff]
        %v388 = vld [vmem:[%s223 + $0x348] sm:$0xff]
        %v389 = vld [vmem:[%s223 + $0x350] sm:$0xff]
        %v390 = vld [vmem:[%s223 + $0x358] sm:$0xff]
        %v391 = vld [vmem:[%s223 + $0x360] sm:$0xff]
        %v392 = vld [vmem:[%s223 + $0x368] sm:$0xff]
        %v393 = vld [vmem:[%s223 + $0x370] sm:$0xff]
        %v394 = vld [vmem:[%s223 + $0x378] sm:$0xff]
        %v395 = vld [vmem:[%s223 + $0x380] sm:$0xff]
        %v396 = vld [vmem:[%s223 + $0x388] sm:$0xff]
        %v397 = vld [vmem:[%s223 + $0x390] sm:$0xff]
        %v398 = vld [vmem:[%s223 + $0x398] sm:$0xff]
        %v399 = vld [vmem:[%s223 + $0x3a0] sm:$0xff]
        %v400 = vld [vmem:[%s223 + $0x3a8] sm:$0xff]
        %v401 = vld [vmem:[%s223 + $0x3b0] sm:$0xff]
        %v402 = vld [vmem:[%s223 + $0x3b8] sm:$0xff]
        %v403 = vld [vmem:[%s223 + $0x3c0] sm:$0xff]
        %v404 = vld [vmem:[%s223 + $0x3c8] sm:$0xff]
        %v405 = vld [vmem:[%s223 + $0x3d0] sm:$0xff]
        %v406 = vld [vmem:[%s223 + $0x3d8] sm:$0xff]
        %v407 = vld [vmem:[%s223 + $0x3e0] sm:$0xff]
        %v408 = vld [vmem:[%s223 + $0x3e8] sm:$0xff]
        %v409 = vld [vmem:[%s223 + $0x3f0] sm:$0xff]
        %v410 = vld [vmem:[%s223 + $0x3f8] sm:$0xff]
        %v411 = vld [vmem:[%s223 + $0x400] sm:$0xff]
        %v412 = vld [vmem:[%s223 + $0x408] sm:$0xff]
        %v413 = vld [vmem:[%s223 + $0x410] sm:$0xff]
        %v414 = vld [vmem:[%s223 + $0x418] sm:$0xff]
        %v415 = vld [vmem:[%s223 + $0x420] sm:$0xff]
        %v416 = vld [vmem:[%s223 + $0x428] sm:$0xff]
        %v417 = vld [vmem:[%s223 + $0x430] sm:$0xff]
        %v418 = vld [vmem:[%s223 + $0x438] sm:$0xff]
        %v419 = vld [vmem:[%s223 + $0x440] sm:$0xff]
        %v420 = vld [vmem:[%s223 + $0x448] sm:$0xff]
        %v421 = vld [vmem:[%s223 + $0x450] sm:$0xff]
        %v422 = vld [vmem:[%s223 + $0x458] sm:$0xff]
        %v423 = vld [vmem:[%s223 + $0x460] sm:$0xff]
        %v424 = vld [vmem:[%s223 + $0x468] sm:$0xff]
        %v425 = vld [vmem:[%s223 + $0x470] sm:$0xff]
        %v426 = vld [vmem:[%s223 + $0x478] sm:$0xff]
        %v427 = vld [vmem:[%s223 + $0x480] sm:$0xff]
        %v428 = vld [vmem:[%s223 + $0x488] sm:$0xff]
        %v429 = vld [vmem:[%s223 + $0x490] sm:$0xff]
        %v430 = vld [vmem:[%s223 + $0x498] sm:$0xff]
        %v431 = vld [vmem:[%s223 + $0x4a0] sm:$0xff]
        %v432 = vld [vmem:[%s223 + $0x4a8] sm:$0xff]
        %v433 = vld [vmem:[%s223 + $0x4b0] sm:$0xff]
        %v434 = vld [vmem:[%s223 + $0x4b8] sm:$0xff]
        %v435 = vld [vmem:[%s223 + $0x4c0] sm:$0xff]
        %v436 = vld [vmem:[%s223 + $0x4c8] sm:$0xff]
        %v437 = vld [vmem:[%s223 + $0x4d0] sm:$0xff]
        %v438 = vld [vmem:[%s223 + $0x4d8] sm:$0xff]
        %v439 = vld [vmem:[%s223 + $0x4e0] sm:$0xff]
        %v440 = vld [vmem:[%s223 + $0x4e8] sm:$0xff]
        %v441 = vld [vmem:[%s223 + $0x4f0] sm:$0xff]
        %v442 = vld [vmem:[%s223 + $0x4f8] sm:$0xff]
        %v443 = vld [vmem:[%s223 + $0x500] sm:$0xff]
        %v444 = vld [vmem:[%s223 + $0x508] sm:$0xff]
        %v445 = vld [vmem:[%s223 + $0x510] sm:$0xff]
        %v446 = vld [vmem:[%s223 + $0x518] sm:$0xff]
        %v447 = vld [vmem:[%s223 + $0x520] sm:$0xff]
        %v448 = vld [vmem:[%s223 + $0x528] sm:$0xff]
        %v449 = vld [vmem:[%s223 + $0x530] sm:$0xff]
        %v450 = vld [vmem:[%s223 + $0x538] sm:$0xff]
        %v451 = vld [vmem:[%s223 + $0x540] sm:$0xff]
        %v452 = vld [vmem:[%s223 + $0x548] sm:$0xff]
        %v453 = vld [vmem:[%s223 + $0x550] sm:$0xff]
        %v454 = vld [vmem:[%s223 + $0x558] sm:$0xff]
        %v455 = vld [vmem:[%s223 + $0x560] sm:$0xff]
        %v456 = vld [vmem:[%s223 + $0x568] sm:$0xff]
        %v457 = vld [vmem:[%s223 + $0x570] sm:$0xff]
        %v458 = vld [vmem:[%s223 + $0x578] sm:$0xff]
        %v459 = vld [vmem:[%s223 + $0x580] sm:$0xff]
        %v460 = vld [vmem:[%s223 + $0x588] sm:$0xff]
        %v461 = vld [vmem:[%s223 + $0x590] sm:$0xff]
        %v462 = vld [vmem:[%s223 + $0x598] sm:$0xff]
        %v463 = vld [vmem:[%s223 + $0x5a0] sm:$0xff]
        %v464 = vld [vmem:[%s223 + $0x5a8] sm:$0xff]
        %v465 = vld [vmem:[%s223 + $0x5b0] sm:$0xff]
        %v466 = vld [vmem:[%s223 + $0x5b8] sm:$0xff]
        %v467 = vld [vmem:[%s223 + $0x5c0] sm:$0xff]
        %v468 = vld [vmem:[%s223 + $0x5c8] sm:$0xff]
        %v469 = vld [vmem:[%s223 + $0x5d0] sm:$0xff]
        %v470 = vld [vmem:[%s223 + $0x5d8] sm:$0xff]
        %v471 = vld [vmem:[%s223 + $0x5e0] sm:$0xff]
        %v472 = vld [vmem:[%s223 + $0x5e8] sm:$0xff]
        %v473 = vld [vmem:[%s223 + $0x5f0] sm:$0xff]
        %v474 = vld [vmem:[%s223 + $0x5f8] sm:$0xff]
        %v475 = vld [vmem:[%s223 + $0x600] sm:$0xff]
        %v476 = vld [vmem:[%s223 + $0x608] sm:$0xff]
        %v477 = vld [vmem:[%s223 + $0x610] sm:$0xff]
        %v478 = vld [vmem:[%s223 + $0x618] sm:$0xff]
        %v479 = vld [vmem:[%s223 + $0x620] sm:$0xff]
        %v480 = vld [vmem:[%s223 + $0x628] sm:$0xff]
        %v481 = vld [vmem:[%s223 + $0x630] sm:$0xff]
        %v482 = vld [vmem:[%s223 + $0x638] sm:$0xff]
        %v483 = vld [vmem:[%s223 + $0x640] sm:$0xff]
        %v484 = vld [vmem:[%s223 + $0x648] sm:$0xff]
        %v485 = vld [vmem:[%s223 + $0x650] sm:$0xff]
        %v486 = vld [vmem:[%s223 + $0x658] sm:$0xff]
        %v487 = vld [vmem:[%s223 + $0x660] sm:$0xff]
        %v488 = vld [vmem:[%s223 + $0x668] sm:$0xff]
        %v489 = vld [vmem:[%s223 + $0x670] sm:$0xff]
        %v490 = vld [vmem:[%s223 + $0x678] sm:$0xff]
        %v491 = vld [vmem:[%s223 + $0x680] sm:$0xff]
        %v492 = vld [vmem:[%s223 + $0x688] sm:$0xff]
        %v493 = vld [vmem:[%s223 + $0x690] sm:$0xff]
        %v494 = vld [vmem:[%s223 + $0x698] sm:$0xff]
        %v495 = vld [vmem:[%s223 + $0x6a0] sm:$0xff]
        %v496 = vld [vmem:[%s223 + $0x6a8] sm:$0xff]
        %v497 = vld [vmem:[%s223 + $0x6b0] sm:$0xff]
        %v498 = vld [vmem:[%s223 + $0x6b8] sm:$0xff]
        %v499 = vld [vmem:[%s223 + $0x6c0] sm:$0xff]
        %v500 = vld [vmem:[%s223 + $0x6c8] sm:$0xff]
        %v501 = vld [vmem:[%s223 + $0x6d0] sm:$0xff]
        %v502 = vld [vmem:[%s223 + $0x6d8] sm:$0xff]
        %v503 = vld [vmem:[%s223 + $0x6e0] sm:$0xff]
        %v504 = vld [vmem:[%s223 + $0x6e8] sm:$0xff]
        %v505 = vld [vmem:[%s223 + $0x6f0] sm:$0xff]
        %v506 = vld [vmem:[%s223 + $0x6f8] sm:$0xff]
        %v507 = vld [vmem:[%s223 + $0x700] sm:$0xff]
        %v508 = vld [vmem:[%s223 + $0x708] sm:$0xff]
        %v509 = vld [vmem:[%s223 + $0x710] sm:$0xff]
        %v510 = vld [vmem:[%s223 + $0x718] sm:$0xff]
        %v511 = vld [vmem:[%s223 + $0x720] sm:$0xff]
        %v512 = vld [vmem:[%s223 + $0x728] sm:$0xff]
        %v513 = vld [vmem:[%s223 + $0x730] sm:$0xff]
        %v514 = vld [vmem:[%s223 + $0x738] sm:$0xff]
        %v515 = vld [vmem:[%s223 + $0x740] sm:$0xff]
        %v516 = vld [vmem:[%s223 + $0x748] sm:$0xff]
        %v517 = vld [vmem:[%s223 + $0x750] sm:$0xff]
        %v518 = vld [vmem:[%s223 + $0x758] sm:$0xff]
        %v519 = vld [vmem:[%s223 + $0x760] sm:$0xff]
        %v520 = vld [vmem:[%s223 + $0x768] sm:$0xff]
        %v521 = vld [vmem:[%s223 + $0x770] sm:$0xff]
        %v522 = vld [vmem:[%s223 + $0x778] sm:$0xff]
        %v523 = vld [vmem:[%s223 + $0x780] sm:$0xff]
        %v524 = vld [vmem:[%s223 + $0x788] sm:$0xff]
        %v525 = vld [vmem:[%s223 + $0x790] sm:$0xff]
        %v526 = vld [vmem:[%s223 + $0x798] sm:$0xff]
        %v527 = vld [vmem:[%s223 + $0x7a0] sm:$0xff]
        %v528 = vld [vmem:[%s223 + $0x7a8] sm:$0xff]
        %v529 = vld [vmem:[%s223 + $0x7b0] sm:$0xff]
        %v530 = vld [vmem:[%s223 + $0x7b8] sm:$0xff]
        %v531 = vld [vmem:[%s223 + $0x7c0] sm:$0xff]
        %v532 = vld [vmem:[%s223 + $0x7c8] sm:$0xff]
        %v533 = vld [vmem:[%s223 + $0x7d0] sm:$0xff]
        %v534 = vld [vmem:[%s223 + $0x7d8] sm:$0xff]
        %v535 = vld [vmem:[%s223 + $0x7e0] sm:$0xff]
        %v536 = vld [vmem:[%s223 + $0x7e8] sm:$0xff]
        %v537 = vld [vmem:[%s223 + $0x7f0] sm:$0xff]
        %v538 = vld [vmem:[%s223 + $0x7f8] sm:$0xff]
        %v539 = vld [vmem:[%s223 + $0x800] sm:$0xff]
        %v540 = vld [vmem:[%s223 + $0x808] sm:$0xff]
        %v541 = vld [vmem:[%s223 + $0x810] sm:$0xff]
        %v542 = vld [vmem:[%s223 + $0x818] sm:$0xff]
        %v543 = vld [vmem:[%s223 + $0x820] sm:$0xff]
        %v544 = vld [vmem:[%s223 + $0x828] sm:$0xff]
        %v545 = vld [vmem:[%s223 + $0x830] sm:$0xff]
        %v546 = vld [vmem:[%s223 + $0x838] sm:$0xff]
        %v547 = vld [vmem:[%s223 + $0x840] sm:$0xff]
        %v548 = vld [vmem:[%s223 + $0x848] sm:$0xff]
        %v549 = vld [vmem:[%s223 + $0x850] sm:$0xff]
        %v550 = vld [vmem:[%s223 + $0x858] sm:$0xff]
        %v551 = vld [vmem:[%s223 + $0x860] sm:$0xff]
        %v552 = vld [vmem:[%s223 + $0x868] sm:$0xff]
        %v553 = vld [vmem:[%s223 + $0x870] sm:$0xff]
        %v554 = vld [vmem:[%s223 + $0x878] sm:$0xff]
        %v555 = vld [vmem:[%s223 + $0x880] sm:$0xff]
        %v556 = vld [vmem:[%s223 + $0x888] sm:$0xff]
        %v557 = vld [vmem:[%s223 + $0x890] sm:$0xff]
        %v558 = vld [vmem:[%s223 + $0x898] sm:$0xff]
        %v559 = vld [vmem:[%s223 + $0x8a0] sm:$0xff]
        %v560 = vld [vmem:[%s223 + $0x8a8] sm:$0xff]
        %v561 = vld [vmem:[%s223 + $0x8b0] sm:$0xff]
        %v562 = vld [vmem:[%s223 + $0x8b8] sm:$0xff]
        %v563 = vld [vmem:[%s223 + $0x8c0] sm:$0xff]
        %v564 = vld [vmem:[%s223 + $0x8c8] sm:$0xff]
        %v565 = vld [vmem:[%s223 + $0x8d0] sm:$0xff]
        %v566 = vld [vmem:[%s223 + $0x8d8] sm:$0xff]
        %v567 = vld [vmem:[%s223 + $0x8e0] sm:$0xff]
        %v568 = vld [vmem:[%s223 + $0x8e8] sm:$0xff]
        %v569 = vld [vmem:[%s223 + $0x8f0] sm:$0xff]
        %v570 = vld [vmem:[%s223 + $0x8f8] sm:$0xff]
        %v571 = vld [vmem:[%s223 + $0x900] sm:$0xff]
        %v572 = vld [vmem:[%s223 + $0x908] sm:$0xff]
        %v573 = vld [vmem:[%s223 + $0x910] sm:$0xff]
        %v574 = vld [vmem:[%s223 + $0x918] sm:$0xff]
        %v575 = vld [vmem:[%s223 + $0x920] sm:$0xff]
        %v576 = vld [vmem:[%s223 + $0x928] sm:$0xff]
        %v577 = vld [vmem:[%s223 + $0x930] sm:$0xff]
        %v578 = vld [vmem:[%s223 + $0x938] sm:$0xff]
        %v579 = vld [vmem:[%s223 + $0x940] sm:$0xff]
        %v580 = vld [vmem:[%s223 + $0x948] sm:$0xff]
        %v581 = vld [vmem:[%s223 + $0x950] sm:$0xff]
        %v582 = vld [vmem:[%s223 + $0x958] sm:$0xff]
        %v583 = vld [vmem:[%s223 + $0x960] sm:$0xff]
        %v584 = vld [vmem:[%s223 + $0x968] sm:$0xff]
        %v585 = vld [vmem:[%s223 + $0x970] sm:$0xff]
        %v586 = vld [vmem:[%s223 + $0x978] sm:$0xff]
        %v587 = vld [vmem:[%s223 + $0x980] sm:$0xff]
        %v588 = vld [vmem:[%s223 + $0x988] sm:$0xff]
        %v589 = vld [vmem:[%s223 + $0x990] sm:$0xff]
        %v590 = vld [vmem:[%s223 + $0x998] sm:$0xff]
        %v591 = vld [vmem:[%s223 + $0x9a0] sm:$0xff]
        %v592 = vld [vmem:[%s223 + $0x9a8] sm:$0xff]
        %v593 = vld [vmem:[%s223 + $0x9b0] sm:$0xff]
        %v594 = vld [vmem:[%s223 + $0x9b8] sm:$0xff]
        %v595 = vld [vmem:[%s223 + $0x9c0] sm:$0xff]
        %v596 = vld [vmem:[%s223 + $0x9c8] sm:$0xff]
        %v597 = vld [vmem:[%s223 + $0x9d0] sm:$0xff]
        %v598 = vld [vmem:[%s223 + $0x9d8] sm:$0xff]
        %v599 = vld [vmem:[%s223 + $0x9e0] sm:$0xff]
        %v600 = vld [vmem:[%s223 + $0x9e8] sm:$0xff]
        %v601 = vld [vmem:[%s223 + $0x9f0] sm:$0xff]
        %v602 = vld [vmem:[%s223 + $0x9f8] sm:$0xff]
        %v603 = vld [vmem:[%s223 + $0xa00] sm:$0xff]
        %v604 = vld [vmem:[%s223 + $0xa08] sm:$0xff]
        %v605 = vld [vmem:[%s223 + $0xa10] sm:$0xff]
        %v606 = vld [vmem:[%s223 + $0xa18] sm:$0xff]
        %v607 = vld [vmem:[%s223 + $0xa20] sm:$0xff]
        %v608 = vld [vmem:[%s223 + $0xa28] sm:$0xff]
        %v609 = vld [vmem:[%s223 + $0xa30] sm:$0xff]
        %v610 = vld [vmem:[%s223 + $0xa38] sm:$0xff]
        %v611 = vld [vmem:[%s223 + $0xa40] sm:$0xff]
        %v612 = vld [vmem:[%s223 + $0xa48] sm:$0xff]
        %v613 = vld [vmem:[%s223 + $0xa50] sm:$0xff]
        %v614 = vld [vmem:[%s223 + $0xa58] sm:$0xff]
        %v615 = vld [vmem:[%s223 + $0xa60] sm:$0xff]
        %v616 = vld [vmem:[%s223 + $0xa68] sm:$0xff]
        %v617 = vld [vmem:[%s223 + $0xa70] sm:$0xff]
        %v618 = vld [vmem:[%s223 + $0xa78] sm:$0xff]
        %v619 = vld [vmem:[%s223 + $0xa80] sm:$0xff]
        %v620 = vld [vmem:[%s223 + $0xa88] sm:$0xff]
        %v621 = vld [vmem:[%s223 + $0xa90] sm:$0xff]
        %v622 = vld [vmem:[%s223 + $0xa98] sm:$0xff]
        %v623 = vld [vmem:[%s223 + $0xaa0] sm:$0xff]
        %v624 = vld [vmem:[%s223 + $0xaa8] sm:$0xff]
        %v625 = vld [vmem:[%s223 + $0xab0] sm:$0xff]
        %v626 = vld [vmem:[%s223 + $0xab8] sm:$0xff]
        %v627 = vld [vmem:[%s223 + $0xac0] sm:$0xff]
        %v628 = vld [vmem:[%s223 + $0xac8] sm:$0xff]
        %v629 = vld [vmem:[%s223 + $0xad0] sm:$0xff]
        %v630 = vld [vmem:[%s223 + $0xad8] sm:$0xff]
        %v631 = vld [vmem:[%s223 + $0xae0] sm:$0xff]
        %v632 = vld [vmem:[%s223 + $0xae8] sm:$0xff]
        %v633 = vld [vmem:[%s223 + $0xaf0] sm:$0xff]
        %v634 = vld [vmem:[%s223 + $0xaf8] sm:$0xff]
        %v635 = vld [vmem:[%s223 + $0xb00] sm:$0xff]
        %v636 = vld [vmem:[%s223 + $0xb08] sm:$0xff]
        %v637 = vld [vmem:[%s223 + $0xb10] sm:$0xff]
        %v638 = vld [vmem:[%s223 + $0xb18] sm:$0xff]
        %v639 = vld [vmem:[%s223 + $0xb20] sm:$0xff]
        %v640 = vld [vmem:[%s223 + $0xb28] sm:$0xff]
        %v641 = vld [vmem:[%s223 + $0xb30] sm:$0xff]
        %v642 = vld [vmem:[%s223 + $0xb38] sm:$0xff]
        %v643 = vld [vmem:[%s223 + $0xb40] sm:$0xff]
        %v644 = vld [vmem:[%s223 + $0xb48] sm:$0xff]
        %v645 = vld [vmem:[%s223 + $0xb50] sm:$0xff]
        %v646 = vld [vmem:[%s223 + $0xb58] sm:$0xff]
        %v647 = vld [vmem:[%s223 + $0xb60] sm:$0xff]
        %v648 = vld [vmem:[%s223 + $0xb68] sm:$0xff]
        %v649 = vld [vmem:[%s223 + $0xb70] sm:$0xff]
        %v650 = vld [vmem:[%s223 + $0xb78] sm:$0xff]
        %v651 = vld [vmem:[%s223 + $0xb80] sm:$0xff]
        %v652 = vld [vmem:[%s223 + $0xb88] sm:$0xff]
        %v653 = vld [vmem:[%s223 + $0xb90] sm:$0xff]
        %v654 = vld [vmem:[%s223 + $0xb98] sm:$0xff]
        %v655 = vld [vmem:[%s223 + $0xba0] sm:$0xff]
        %v656 = vld [vmem:[%s223 + $0xba8] sm:$0xff]
        %v657 = vld [vmem:[%s223 + $0xbb0] sm:$0xff]
        %v658 = vld [vmem:[%s223 + $0xbb8] sm:$0xff]
        %v659 = vld [vmem:[%s223 + $0xbc0] sm:$0xff]
        %v660 = vld [vmem:[%s223 + $0xbc8] sm:$0xff]
        %v661 = vld [vmem:[%s223 + $0xbd0] sm:$0xff]
        %v662 = vld [vmem:[%s223 + $0xbd8] sm:$0xff]
        %v663 = vld [vmem:[%s223 + $0xbe0] sm:$0xff]
        %v664 = vld [vmem:[%s223 + $0xbe8] sm:$0xff]
        %v665 = vld [vmem:[%s223 + $0xbf0] sm:$0xff]
        %v666 = vld [vmem:[%s223 + $0xbf8] sm:$0xff]
        %v667 = vld [vmem:[%s223 + $0xc00] sm:$0xff]
        %v668 = vld [vmem:[%s223 + $0xc08] sm:$0xff]
        %v669 = vld [vmem:[%s223 + $0xc10] sm:$0xff]
        %v670 = vld [vmem:[%s223 + $0xc18] sm:$0xff]
        %v671 = vld [vmem:[%s223 + $0xc20] sm:$0xff]
        %v672 = vld [vmem:[%s223 + $0xc28] sm:$0xff]
        %v673 = vld [vmem:[%s223 + $0xc30] sm:$0xff]
        %v674 = vld [vmem:[%s223 + $0xc38] sm:$0xff]
        %v675 = vld [vmem:[%s232] sm:$0x3]
        %v677 = vlaneseq
        %v678 = vshrl.u32 %v677, 7
        %v679 = vsub.s32 0, %v678
        %v680 = vrot.slane %v675, %v679
        %v681 = vlaneseq
        %v682 = vshrl.u32 %v681, 7
        %v683 = vsub.s32 1, %v682
        %v684 = vrot.slane %v675, %v683
        %v691 = vcombine.high %v279, %v279
        %v693 = vunpack.c.l.s4 1966171168
        %v694 = vunpack.c.0.s8 %v693
        %v695 = vlaneseq
        %v696 = vshrl.u32 %v695, 7
        %v697 = vsub.s32 %v694, %v696
        %v698 = vrot.slane %v279, %v697
        %v700 = vunpack.c.l.s4 1966171168
        %v701 = vunpack.c.0.s8 %v700
        %v702 = vlaneseq
        %v703 = vshrl.u32 %v702, 7
        %v704 = vsub.s32 %v701, %v703
        %v705 = vrot.slane %v691, %v704
        %v706 = vcombine.high %v698, %v698
        %v707 = vcombine.high %v705, %v705
        %v709 = vunpack.c.l.s4 1966171168
        %v710 = vunpack.c.0.s8 %v709
        %v711 = vlaneseq
        %v712 = vshrl.u32 %v711, 7
        %v713 = vsub.s32 %v710, %v712
        %v714 = vrot.slane %v698, %v713
        %v716 = vunpack.c.l.s4 1966171168
        %v717 = vunpack.c.0.s8 %v716
        %v718 = vlaneseq
        %v719 = vshrl.u32 %v718, 7
        %v720 = vsub.s32 %v717, %v719
        %v721 = vrot.slane %v705, %v720
        %v723 = vunpack.c.l.s4 1966171168
        %v724 = vunpack.c.0.s8 %v723
        %v725 = vlaneseq
        %v726 = vshrl.u32 %v725, 7
        %v727 = vsub.s32 %v724, %v726
        %v728 = vrot.slane %v706, %v727
        %v730 = vunpack.c.l.s4 1966171168
        %v731 = vunpack.c.0.s8 %v730
        %v732 = vlaneseq
        %v733 = vshrl.u32 %v732, 7
        %v734 = vsub.s32 %v731, %v733
        %v735 = vrot.slane %v707, %v734
        %v736 = vcombine.high %v714, %v714
        %v737 = vcombine.high %v721, %v721
        %v738 = vcombine.high %v728, %v728
        %v739 = vcombine.high %v735, %v735
        %v740 = vcombine.high %v280, %v280
        %v742 = vunpack.c.l.s4 1966171168
        %v743 = vunpack.c.0.s8 %v742
        %v744 = vlaneseq
        %v745 = vshrl.u32 %v744, 7
        %v746 = vsub.s32 %v743, %v745
        %v747 = vrot.slane %v280, %v746
        %v749 = vunpack.c.l.s4 1966171168
        %v750 = vunpack.c.0.s8 %v749
        %v751 = vlaneseq
        %v752 = vshrl.u32 %v751, 7
        %v753 = vsub.s32 %v750, %v752
        %v754 = vrot.slane %v740, %v753
        %v755 = vcombine.high %v747, %v747
        %v756 = vcombine.high %v754, %v754
        %v758 = vunpack.c.l.s4 1966171168
        %v759 = vunpack.c.0.s8 %v758
        %v760 = vlaneseq
        %v761 = vshrl.u32 %v760, 7
        %v762 = vsub.s32 %v759, %v761
        %v763 = vrot.slane %v747, %v762
        %v765 = vunpack.c.l.s4 1966171168
        %v766 = vunpack.c.0.s8 %v765
        %v767 = vlaneseq
        %v768 = vshrl.u32 %v767, 7
        %v769 = vsub.s32 %v766, %v768
        %v770 = vrot.slane %v754, %v769
        %v772 = vunpack.c.l.s4 1966171168
        %v773 = vunpack.c.0.s8 %v772
        %v774 = vlaneseq
        %v775 = vshrl.u32 %v774, 7
        %v776 = vsub.s32 %v773, %v775
        %v777 = vrot.slane %v755, %v776
        %v779 = vunpack.c.l.s4 1966171168
        %v780 = vunpack.c.0.s8 %v779
        %v781 = vlaneseq
        %v782 = vshrl.u32 %v781, 7
        %v783 = vsub.s32 %v780, %v782
        %v784 = vrot.slane %v756, %v783
        %v785 = vcombine.high %v763, %v763
        %v786 = vcombine.high %v770, %v770
        %v787 = vcombine.high %v777, %v777
        %v788 = vcombine.high %v784, %v784
        %v789 = vcombine.high %v281, %v281
        %v791 = vunpack.c.l.s4 1966171168
        %v792 = vunpack.c.0.s8 %v791
        %v793 = vlaneseq
        %v794 = vshrl.u32 %v793, 7
        %v795 = vsub.s32 %v792, %v794
        %v796 = vrot.slane %v281, %v795
        %v798 = vunpack.c.l.s4 1966171168
        %v799 = vunpack.c.0.s8 %v798
        %v800 = vlaneseq
        %v801 = vshrl.u32 %v800, 7
        %v802 = vsub.s32 %v799, %v801
        %v803 = vrot.slane %v789, %v802
        %v804 = vcombine.high %v796, %v796
        %v805 = vcombine.high %v803, %v803
        %v807 = vunpack.c.l.s4 1966171168
        %v808 = vunpack.c.0.s8 %v807
        %v809 = vlaneseq
        %v810 = vshrl.u32 %v809, 7
        %v811 = vsub.s32 %v808, %v810
        %v812 = vrot.slane %v796, %v811
        %v814 = vunpack.c.l.s4 1966171168
        %v815 = vunpack.c.0.s8 %v814
        %v816 = vlaneseq
        %v817 = vshrl.u32 %v816, 7
        %v818 = vsub.s32 %v815, %v817
        %v819 = vrot.slane %v803, %v818
        %v821 = vunpack.c.l.s4 1966171168
        %v822 = vunpack.c.0.s8 %v821
        %v823 = vlaneseq
        %v824 = vshrl.u32 %v823, 7
        %v825 = vsub.s32 %v822, %v824
        %v826 = vrot.slane %v804, %v825
        %v828 = vunpack.c.l.s4 1966171168
        %v829 = vunpack.c.0.s8 %v828
        %v830 = vlaneseq
        %v831 = vshrl.u32 %v830, 7
        %v832 = vsub.s32 %v829, %v831
        %v833 = vrot.slane %v805, %v832
        %v834 = vcombine.high %v812, %v812
        %v835 = vcombine.high %v819, %v819
        %v836 = vcombine.high %v826, %v826
        %v837 = vcombine.high %v833, %v833
        %v839 = vunpack.c.l.s4 1966171168
        %v840 = vunpack.c.0.s8 %v839
        %v841 = vlaneseq
        %v842 = vshrl.u32 %v841, 7
        %v843 = vsub.s32 %v840, %v842
        %v844 = vrot.slane %v282, %v843
        %v846 = vunpack.c.l.s4 1966171168
        %v847 = vunpack.c.0.s8 %v846
        %v848 = vlaneseq
        %v849 = vshrl.u32 %v848, 7
        %v850 = vsub.s32 %v847, %v849
        %v851 = vrot.slane %v844, %v850
        %v1268 = vunpack.c.l.b16 %v283
        %v1269 = vunpack.c.h.b16 %v283
        %v1270 = vunpack.c.l.b16 %v284
        %v1271 = vunpack.c.h.b16 %v284
        %v1272 = vunpack.c.l.b16 %v285
        %v1273 = vunpack.c.h.b16 %v285
        %v1274 = vunpack.c.l.b16 %v286
        %v1275 = vunpack.c.h.b16 %v286
        %v1276 = vunpack.c.l.b16 %v287
        %v1277 = vunpack.c.h.b16 %v287
        %v1278 = vunpack.c.l.b16 %v288
        %v1279 = vunpack.c.h.b16 %v288
        %v1280 = vunpack.c.l.b16 %v289
        %v1281 = vunpack.c.h.b16 %v289
        %v1282 = vunpack.c.l.b16 %v290
        %v1283 = vunpack.c.h.b16 %v290
        %v1284 = vunpack.c.l.b16 %v291
        %v1285 = vunpack.c.h.b16 %v291
        %v1286 = vunpack.c.l.b16 %v292
        %v1287 = vunpack.c.h.b16 %v292
        %v1288 = vunpack.c.l.b16 %v293
        %v1289 = vunpack.c.h.b16 %v293
        %v1290 = vunpack.c.l.b16 %v294
        %v1291 = vunpack.c.h.b16 %v294
        %v1292 = vunpack.c.l.b16 %v295
        %v1293 = vunpack.c.h.b16 %v295
        %v1294 = vunpack.c.l.b16 %v296
        %v1295 = vunpack.c.h.b16 %v296
        %v1296 = vunpack.c.l.b16 %v297
        %v1297 = vunpack.c.h.b16 %v297
        %v1298 = vunpack.c.l.b16 %v298
        %v1299 = vunpack.c.h.b16 %v298
        %v1300 = vunpack.c.l.b16 %v299
        %v1301 = vunpack.c.h.b16 %v299
        %v1302 = vunpack.c.l.b16 %v300
        %v1303 = vunpack.c.h.b16 %v300
        %v1304 = vunpack.c.l.b16 %v301
        %v1305 = vunpack.c.h.b16 %v301
        %v1306 = vunpack.c.l.b16 %v302
        %v1307 = vunpack.c.h.b16 %v302
        %v1308 = vunpack.c.l.b16 %v303
        %v1309 = vunpack.c.h.b16 %v303
        %v1310 = vunpack.c.l.b16 %v304
        %v1311 = vunpack.c.h.b16 %v304
        %v1312 = vunpack.c.l.b16 %v305
        %v1313 = vunpack.c.h.b16 %v305
        %v1314 = vunpack.c.l.b16 %v306
        %v1315 = vunpack.c.h.b16 %v306
        %v1316 = vunpack.c.l.b16 %v307
        %v1317 = vunpack.c.h.b16 %v307
        %v1318 = vunpack.c.l.b16 %v308
        %v1319 = vunpack.c.h.b16 %v308
        %v1320 = vunpack.c.l.b16 %v309
        %v1321 = vunpack.c.h.b16 %v309
        %v1322 = vunpack.c.l.b16 %v310
        %v1323 = vunpack.c.h.b16 %v310
        %v1324 = vunpack.c.l.b16 %v311
        %v1325 = vunpack.c.h.b16 %v311
        %v1326 = vunpack.c.l.b16 %v312
        %v1327 = vunpack.c.h.b16 %v312
        %v1328 = vunpack.c.l.b16 %v313
        %v1329 = vunpack.c.h.b16 %v313
        %v1330 = vunpack.c.l.b16 %v314
        %v1331 = vunpack.c.h.b16 %v314
        %v1332 = vunpack.c.l.b16 %v315
        %v1333 = vunpack.c.h.b16 %v315
        %v1334 = vunpack.c.l.b16 %v316
        %v1335 = vunpack.c.h.b16 %v316
        %v1336 = vunpack.c.l.b16 %v317
        %v1337 = vunpack.c.h.b16 %v317
        %v1338 = vunpack.c.l.b16 %v318
        %v1339 = vunpack.c.h.b16 %v318
        %v1340 = vunpack.c.l.b16 %v319
        %v1341 = vunpack.c.h.b16 %v319
        %v1342 = vunpack.c.l.b16 %v320
        %v1343 = vunpack.c.h.b16 %v320
        %v1344 = vunpack.c.l.b16 %v321
        %v1345 = vunpack.c.h.b16 %v321
        %v1346 = vunpack.c.l.b16 %v322
        %v1347 = vunpack.c.h.b16 %v322
        %v1348 = vunpack.c.l.b16 %v323
        %v1349 = vunpack.c.h.b16 %v323
        %v1350 = vunpack.c.l.b16 %v324
        %v1351 = vunpack.c.h.b16 %v324
        %v1352 = vunpack.c.l.b16 %v325
        %v1353 = vunpack.c.h.b16 %v325
        %v1354 = vunpack.c.l.b16 %v326
        %v1355 = vunpack.c.h.b16 %v326
        %v1356 = vunpack.c.l.b16 %v327
        %v1357 = vunpack.c.h.b16 %v327
        %v1358 = vunpack.c.l.b16 %v328
        %v1359 = vunpack.c.h.b16 %v328
        %v1360 = vunpack.c.l.b16 %v329
        %v1361 = vunpack.c.h.b16 %v329
        %v1362 = vunpack.c.l.b16 %v330
        %v1363 = vunpack.c.h.b16 %v330
        %v1364 = vunpack.c.l.b16 %v331
        %v1365 = vunpack.c.h.b16 %v331
        %v1366 = vunpack.c.l.b16 %v332
        %v1367 = vunpack.c.h.b16 %v332
        %v1368 = vunpack.c.l.b16 %v333
        %v1369 = vunpack.c.h.b16 %v333
        %v1370 = vunpack.c.l.b16 %v334
        %v1371 = vunpack.c.h.b16 %v334
        %v1372 = vunpack.c.l.b16 %v335
        %v1373 = vunpack.c.h.b16 %v335
        %v1374 = vunpack.c.l.b16 %v336
        %v1375 = vunpack.c.h.b16 %v336
        %v1376 = vunpack.c.l.b16 %v337
        %v1377 = vunpack.c.h.b16 %v337
        %v1378 = vunpack.c.l.b16 %v338
        %v1379 = vunpack.c.h.b16 %v338
        %v1380 = vunpack.c.l.b16 %v339
        %v1381 = vunpack.c.h.b16 %v339
        %v1382 = vunpack.c.l.b16 %v340
        %v1383 = vunpack.c.h.b16 %v340
        %v1384 = vunpack.c.l.b16 %v341
        %v1385 = vunpack.c.h.b16 %v341
        %v1386 = vunpack.c.l.b16 %v342
        %v1387 = vunpack.c.h.b16 %v342
        %v1388 = vunpack.c.l.b16 %v343
        %v1389 = vunpack.c.h.b16 %v343
        %v1390 = vunpack.c.l.b16 %v344
        %v1391 = vunpack.c.h.b16 %v344
        %v1392 = vunpack.c.l.b16 %v345
        %v1393 = vunpack.c.h.b16 %v345
        %v1394 = vunpack.c.l.b16 %v346
        %v1395 = vunpack.c.h.b16 %v346
        %v1396 = vunpack.c.l.b16 %v347
        %v1397 = vunpack.c.h.b16 %v347
        %v1398 = vunpack.c.l.b16 %v348
        %v1399 = vunpack.c.h.b16 %v348
        %v1400 = vunpack.c.l.b16 %v349
        %v1401 = vunpack.c.h.b16 %v349
        %v1402 = vunpack.c.l.b16 %v350
        %v1403 = vunpack.c.h.b16 %v350
        %v1404 = vunpack.c.l.b16 %v351
        %v1405 = vunpack.c.h.b16 %v351
        %v1406 = vunpack.c.l.b16 %v352
        %v1407 = vunpack.c.h.b16 %v352
        %v1408 = vunpack.c.l.b16 %v353
        %v1409 = vunpack.c.h.b16 %v353
        %v1410 = vunpack.c.l.b16 %v354
        %v1411 = vunpack.c.h.b16 %v354
        %v1412 = vunpack.c.l.b16 %v355
        %v1413 = vunpack.c.h.b16 %v355
        %v1414 = vunpack.c.l.b16 %v356
        %v1415 = vunpack.c.h.b16 %v356
        %v1416 = vunpack.c.l.b16 %v357
        %v1417 = vunpack.c.h.b16 %v357
        %v1418 = vunpack.c.l.b16 %v358
        %v1419 = vunpack.c.h.b16 %v358
        %v1420 = vunpack.c.l.b16 %v359
        %v1421 = vunpack.c.h.b16 %v359
        %v1422 = vunpack.c.l.b16 %v360
        %v1423 = vunpack.c.h.b16 %v360
        %v1424 = vunpack.c.l.b16 %v361
        %v1425 = vunpack.c.h.b16 %v361
        %v1426 = vunpack.c.l.b16 %v362
        %v1427 = vunpack.c.h.b16 %v362
        %v1428 = vunpack.c.l.b16 %v363
        %v1429 = vunpack.c.h.b16 %v363
        %v1430 = vunpack.c.l.b16 %v364
        %v1431 = vunpack.c.h.b16 %v364
        %v1432 = vunpack.c.l.b16 %v365
        %v1433 = vunpack.c.h.b16 %v365
        %v1434 = vunpack.c.l.b16 %v366
        %v1435 = vunpack.c.h.b16 %v366
        %v1436 = vunpack.c.l.b16 %v367
        %v1437 = vunpack.c.h.b16 %v367
        %v1438 = vunpack.c.l.b16 %v368
        %v1439 = vunpack.c.h.b16 %v368
        %v1440 = vunpack.c.l.b16 %v369
        %v1441 = vunpack.c.h.b16 %v369
        %v1442 = vunpack.c.l.b16 %v370
        %v1443 = vunpack.c.h.b16 %v370
        %v1444 = vunpack.c.l.b16 %v371
        %v1445 = vunpack.c.h.b16 %v371
        %v1446 = vunpack.c.l.b16 %v372
        %v1447 = vunpack.c.h.b16 %v372
        %v1448 = vunpack.c.l.b16 %v373
        %v1449 = vunpack.c.h.b16 %v373
        %v1450 = vunpack.c.l.b16 %v374
        %v1451 = vunpack.c.h.b16 %v374
        %v1452 = vunpack.c.l.b16 %v375
        %v1453 = vunpack.c.h.b16 %v375
        %v1454 = vunpack.c.l.b16 %v376
        %v1455 = vunpack.c.h.b16 %v376
        %v1456 = vunpack.c.l.b16 %v377
        %v1457 = vunpack.c.h.b16 %v377
        %v1458 = vunpack.c.l.b16 %v378
        %v1459 = vunpack.c.h.b16 %v378
        %v1460 = vunpack.c.l.b16 %v379
        %v1461 = vunpack.c.h.b16 %v379
        %v1462 = vunpack.c.l.b16 %v380
        %v1463 = vunpack.c.h.b16 %v380
        %v1464 = vunpack.c.l.b16 %v381
        %v1465 = vunpack.c.h.b16 %v381
        %v1466 = vunpack.c.l.b16 %v382
        %v1467 = vunpack.c.h.b16 %v382
        %v1468 = vunpack.c.l.b16 %v383
        %v1469 = vunpack.c.h.b16 %v383
        %v1470 = vunpack.c.l.b16 %v384
        %v1471 = vunpack.c.h.b16 %v384
        %v1472 = vunpack.c.l.b16 %v385
        %v1473 = vunpack.c.h.b16 %v385
        %v1474 = vunpack.c.l.b16 %v386
        %v1475 = vunpack.c.h.b16 %v386
        %v1476 = vunpack.c.l.b16 %v387
        %v1477 = vunpack.c.h.b16 %v387
        %v1478 = vunpack.c.l.b16 %v388
        %v1479 = vunpack.c.h.b16 %v388
        %v1480 = vunpack.c.l.b16 %v389
        %v1481 = vunpack.c.h.b16 %v389
        %v1482 = vunpack.c.l.b16 %v390
        %v1483 = vunpack.c.h.b16 %v390
        %v1484 = vunpack.c.l.b16 %v391
        %v1485 = vunpack.c.h.b16 %v391
        %v1486 = vunpack.c.l.b16 %v392
        %v1487 = vunpack.c.h.b16 %v392
        %v1488 = vunpack.c.l.b16 %v393
        %v1489 = vunpack.c.h.b16 %v393
        %v1490 = vunpack.c.l.b16 %v394
        %v1491 = vunpack.c.h.b16 %v394
        %v1492 = vunpack.c.l.b16 %v395
        %v1493 = vunpack.c.h.b16 %v395
        %v1494 = vunpack.c.l.b16 %v396
        %v1495 = vunpack.c.h.b16 %v396
        %v1496 = vunpack.c.l.b16 %v397
        %v1497 = vunpack.c.h.b16 %v397
        %v1498 = vunpack.c.l.b16 %v398
        %v1499 = vunpack.c.h.b16 %v398
        %v1500 = vunpack.c.l.b16 %v399
        %v1501 = vunpack.c.h.b16 %v399
        %v1502 = vunpack.c.l.b16 %v400
        %v1503 = vunpack.c.h.b16 %v400
        %v1504 = vunpack.c.l.b16 %v401
        %v1505 = vunpack.c.h.b16 %v401
        %v1506 = vunpack.c.l.b16 %v402
        %v1507 = vunpack.c.h.b16 %v402
        %v1508 = vunpack.c.l.b16 %v403
        %v1509 = vunpack.c.h.b16 %v403
        %v1510 = vunpack.c.l.b16 %v404
        %v1511 = vunpack.c.h.b16 %v404
        %v1512 = vunpack.c.l.b16 %v405
        %v1513 = vunpack.c.h.b16 %v405
        %v1514 = vunpack.c.l.b16 %v406
        %v1515 = vunpack.c.h.b16 %v406
        %v1516 = vunpack.c.l.b16 %v407
        %v1517 = vunpack.c.h.b16 %v407
        %v1518 = vunpack.c.l.b16 %v408
        %v1519 = vunpack.c.h.b16 %v408
        %v1520 = vunpack.c.l.b16 %v409
        %v1521 = vunpack.c.h.b16 %v409
        %v1522 = vunpack.c.l.b16 %v410
        %v1523 = vunpack.c.h.b16 %v410
        %v1524 = vunpack.c.l.b16 %v411
        %v1525 = vunpack.c.h.b16 %v411
        %v1526 = vunpack.c.l.b16 %v412
        %v1527 = vunpack.c.h.b16 %v412
        %v1528 = vunpack.c.l.b16 %v413
        %v1529 = vunpack.c.h.b16 %v413
        %v1530 = vunpack.c.l.b16 %v414
        %v1531 = vunpack.c.h.b16 %v414
        %v1532 = vunpack.c.l.b16 %v415
        %v1533 = vunpack.c.h.b16 %v415
        %v1534 = vunpack.c.l.b16 %v416
        %v1535 = vunpack.c.h.b16 %v416
        %v1536 = vunpack.c.l.b16 %v417
        %v1537 = vunpack.c.h.b16 %v417
        %v1538 = vunpack.c.l.b16 %v418
        %v1539 = vunpack.c.h.b16 %v418
        %v1540 = vunpack.c.l.b16 %v419
        %v1541 = vunpack.c.h.b16 %v419
        %v1542 = vunpack.c.l.b16 %v420
        %v1543 = vunpack.c.h.b16 %v420
        %v1544 = vunpack.c.l.b16 %v421
        %v1545 = vunpack.c.h.b16 %v421
        %v1546 = vunpack.c.l.b16 %v422
        %v1547 = vunpack.c.h.b16 %v422
        %v1548 = vunpack.c.l.b16 %v423
        %v1549 = vunpack.c.h.b16 %v423
        %v1550 = vunpack.c.l.b16 %v424
        %v1551 = vunpack.c.h.b16 %v424
        %v1552 = vunpack.c.l.b16 %v425
        %v1553 = vunpack.c.h.b16 %v425
        %v1554 = vunpack.c.l.b16 %v426
        %v1555 = vunpack.c.h.b16 %v426
        %v1556 = vunpack.c.l.b16 %v427
        %v1557 = vunpack.c.h.b16 %v427
        %v1558 = vunpack.c.l.b16 %v428
        %v1559 = vunpack.c.h.b16 %v428
        %v1560 = vunpack.c.l.b16 %v429
        %v1561 = vunpack.c.h.b16 %v429
        %v1562 = vunpack.c.l.b16 %v430
        %v1563 = vunpack.c.h.b16 %v430
        %v1564 = vunpack.c.l.b16 %v431
        %v1565 = vunpack.c.h.b16 %v431
        %v1566 = vunpack.c.l.b16 %v432
        %v1567 = vunpack.c.h.b16 %v432
        %v1568 = vunpack.c.l.b16 %v433
        %v1569 = vunpack.c.h.b16 %v433
        %v1570 = vunpack.c.l.b16 %v434
        %v1571 = vunpack.c.h.b16 %v434
        %v1572 = vunpack.c.l.b16 %v435
        %v1573 = vunpack.c.h.b16 %v435
        %v1574 = vunpack.c.l.b16 %v436
        %v1575 = vunpack.c.h.b16 %v436
        %v1576 = vunpack.c.l.b16 %v437
        %v1577 = vunpack.c.h.b16 %v437
        %v1578 = vunpack.c.l.b16 %v438
        %v1579 = vunpack.c.h.b16 %v438
        %v1580 = vunpack.c.l.b16 %v439
        %v1581 = vunpack.c.h.b16 %v439
        %v1582 = vunpack.c.l.b16 %v440
        %v1583 = vunpack.c.h.b16 %v440
        %v1584 = vunpack.c.l.b16 %v441
        %v1585 = vunpack.c.h.b16 %v441
        %v1586 = vunpack.c.l.b16 %v442
        %v1587 = vunpack.c.h.b16 %v442
        %v1588 = vunpack.c.l.b16 %v443
        %v1589 = vunpack.c.h.b16 %v443
        %v1590 = vunpack.c.l.b16 %v444
        %v1591 = vunpack.c.h.b16 %v444
        %v1592 = vunpack.c.l.b16 %v445
        %v1593 = vunpack.c.h.b16 %v445
        %v1594 = vunpack.c.l.b16 %v446
        %v1595 = vunpack.c.h.b16 %v446
        %v1596 = vunpack.c.l.b16 %v447
        %v1597 = vunpack.c.h.b16 %v447
        %v1598 = vunpack.c.l.b16 %v448
        %v1599 = vunpack.c.h.b16 %v448
        %v1600 = vunpack.c.l.b16 %v449
        %v1601 = vunpack.c.h.b16 %v449
        %v1602 = vunpack.c.l.b16 %v450
        %v1603 = vunpack.c.h.b16 %v450
        %v1604 = vunpack.c.l.b16 %v451
        %v1605 = vunpack.c.h.b16 %v451
        %v1606 = vunpack.c.l.b16 %v452
        %v1607 = vunpack.c.h.b16 %v452
        %v1608 = vunpack.c.l.b16 %v453
        %v1609 = vunpack.c.h.b16 %v453
        %v1610 = vunpack.c.l.b16 %v454
        %v1611 = vunpack.c.h.b16 %v454
        %v1612 = vunpack.c.l.b16 %v455
        %v1613 = vunpack.c.h.b16 %v455
        %v1614 = vunpack.c.l.b16 %v456
        %v1615 = vunpack.c.h.b16 %v456
        %v1616 = vunpack.c.l.b16 %v457
        %v1617 = vunpack.c.h.b16 %v457
        %v1618 = vunpack.c.l.b16 %v458
        %v1619 = vunpack.c.h.b16 %v458
        %v1620 = vunpack.c.l.b16 %v459
        %v1621 = vunpack.c.h.b16 %v459
        %v1622 = vunpack.c.l.b16 %v460
        %v1623 = vunpack.c.h.b16 %v460
        %v1624 = vunpack.c.l.b16 %v461
        %v1625 = vunpack.c.h.b16 %v461
        %v1626 = vunpack.c.l.b16 %v462
        %v1627 = vunpack.c.h.b16 %v462
        %v1628 = vunpack.c.l.b16 %v463
        %v1629 = vunpack.c.h.b16 %v463
        %v1630 = vunpack.c.l.b16 %v464
        %v1631 = vunpack.c.h.b16 %v464
        %v1632 = vunpack.c.l.b16 %v465
        %v1633 = vunpack.c.h.b16 %v465
        %v1634 = vunpack.c.l.b16 %v466
        %v1635 = vunpack.c.h.b16 %v466
        %v1636 = vunpack.c.l.b16 %v467
        %v1637 = vunpack.c.h.b16 %v467
        %v1638 = vunpack.c.l.b16 %v468
        %v1639 = vunpack.c.h.b16 %v468
        %v1640 = vunpack.c.l.b16 %v469
        %v1641 = vunpack.c.h.b16 %v469
        %v1642 = vunpack.c.l.b16 %v470
        %v1643 = vunpack.c.h.b16 %v470
        %v1644 = vunpack.c.l.b16 %v471
        %v1645 = vunpack.c.h.b16 %v471
        %v1646 = vunpack.c.l.b16 %v472
        %v1647 = vunpack.c.h.b16 %v472
        %v1648 = vunpack.c.l.b16 %v473
        %v1649 = vunpack.c.h.b16 %v473
        %v1650 = vunpack.c.l.b16 %v474
        %v1651 = vunpack.c.h.b16 %v474
        %v1652 = vunpack.c.l.b16 %v475
        %v1653 = vunpack.c.h.b16 %v475
        %v1654 = vunpack.c.l.b16 %v476
        %v1655 = vunpack.c.h.b16 %v476
        %v1656 = vunpack.c.l.b16 %v477
        %v1657 = vunpack.c.h.b16 %v477
        %v1658 = vunpack.c.l.b16 %v478
        %v1659 = vunpack.c.h.b16 %v478
        %v1660 = vunpack.c.l.b16 %v479
        %v1661 = vunpack.c.h.b16 %v479
        %v1662 = vunpack.c.l.b16 %v480
        %v1663 = vunpack.c.h.b16 %v480
        %v1664 = vunpack.c.l.b16 %v481
        %v1665 = vunpack.c.h.b16 %v481
        %v1666 = vunpack.c.l.b16 %v482
        %v1667 = vunpack.c.h.b16 %v482
        %v1668 = vunpack.c.l.b16 %v483
        %v1669 = vunpack.c.h.b16 %v483
        %v1670 = vunpack.c.l.b16 %v484
        %v1671 = vunpack.c.h.b16 %v484
        %v1672 = vunpack.c.l.b16 %v485
        %v1673 = vunpack.c.h.b16 %v485
        %v1674 = vunpack.c.l.b16 %v486
        %v1675 = vunpack.c.h.b16 %v486
        %v1676 = vunpack.c.l.b16 %v487
        %v1677 = vunpack.c.h.b16 %v487
        %v1678 = vunpack.c.l.b16 %v488
        %v1679 = vunpack.c.h.b16 %v488
        %v1680 = vunpack.c.l.b16 %v489
        %v1681 = vunpack.c.h.b16 %v489
        %v1682 = vunpack.c.l.b16 %v490
        %v1683 = vunpack.c.h.b16 %v490
        %v1684 = vunpack.c.l.b16 %v491
        %v1685 = vunpack.c.h.b16 %v491
        %v1686 = vunpack.c.l.b16 %v492
        %v1687 = vunpack.c.h.b16 %v492
        %v1688 = vunpack.c.l.b16 %v493
        %v1689 = vunpack.c.h.b16 %v493
        %v1690 = vunpack.c.l.b16 %v494
        %v1691 = vunpack.c.h.b16 %v494
        %v1692 = vunpack.c.l.b16 %v495
        %v1693 = vunpack.c.h.b16 %v495
        %v1694 = vunpack.c.l.b16 %v496
        %v1695 = vunpack.c.h.b16 %v496
        %v1696 = vunpack.c.l.b16 %v497
        %v1697 = vunpack.c.h.b16 %v497
        %v1698 = vunpack.c.l.b16 %v498
        %v1699 = vunpack.c.h.b16 %v498
        %v1700 = vunpack.c.l.b16 %v499
        %v1701 = vunpack.c.h.b16 %v499
        %v1702 = vunpack.c.l.b16 %v500
        %v1703 = vunpack.c.h.b16 %v500
        %v1704 = vunpack.c.l.b16 %v501
        %v1705 = vunpack.c.h.b16 %v501
        %v1706 = vunpack.c.l.b16 %v502
        %v1707 = vunpack.c.h.b16 %v502
        %v1708 = vunpack.c.l.b16 %v503
        %v1709 = vunpack.c.h.b16 %v503
        %v1710 = vunpack.c.l.b16 %v504
        %v1711 = vunpack.c.h.b16 %v504
        %v1712 = vunpack.c.l.b16 %v505
        %v1713 = vunpack.c.h.b16 %v505
        %v1714 = vunpack.c.l.b16 %v506
        %v1715 = vunpack.c.h.b16 %v506
        %v1716 = vunpack.c.l.b16 %v507
        %v1717 = vunpack.c.h.b16 %v507
        %v1718 = vunpack.c.l.b16 %v508
        %v1719 = vunpack.c.h.b16 %v508
        %v1720 = vunpack.c.l.b16 %v509
        %v1721 = vunpack.c.h.b16 %v509
        %v1722 = vunpack.c.l.b16 %v510
        %v1723 = vunpack.c.h.b16 %v510
        %v1724 = vunpack.c.l.b16 %v511
        %v1725 = vunpack.c.h.b16 %v511
        %v1726 = vunpack.c.l.b16 %v512
        %v1727 = vunpack.c.h.b16 %v512
        %v1728 = vunpack.c.l.b16 %v513
        %v1729 = vunpack.c.h.b16 %v513
        %v1730 = vunpack.c.l.b16 %v514
        %v1731 = vunpack.c.h.b16 %v514
        %v1732 = vunpack.c.l.b16 %v515
        %v1733 = vunpack.c.h.b16 %v515
        %v1734 = vunpack.c.l.b16 %v516
        %v1735 = vunpack.c.h.b16 %v516
        %v1736 = vunpack.c.l.b16 %v517
        %v1737 = vunpack.c.h.b16 %v517
        %v1738 = vunpack.c.l.b16 %v518
        %v1739 = vunpack.c.h.b16 %v518
        %v1740 = vunpack.c.l.b16 %v519
        %v1741 = vunpack.c.h.b16 %v519
        %v1742 = vunpack.c.l.b16 %v520
        %v1743 = vunpack.c.h.b16 %v520
        %v1744 = vunpack.c.l.b16 %v521
        %v1745 = vunpack.c.h.b16 %v521
        %v1746 = vunpack.c.l.b16 %v522
        %v1747 = vunpack.c.h.b16 %v522
        %v1748 = vunpack.c.l.b16 %v523
        %v1749 = vunpack.c.h.b16 %v523
        %v1750 = vunpack.c.l.b16 %v524
        %v1751 = vunpack.c.h.b16 %v524
        %v1752 = vunpack.c.l.b16 %v525
        %v1753 = vunpack.c.h.b16 %v525
        %v1754 = vunpack.c.l.b16 %v526
        %v1755 = vunpack.c.h.b16 %v526
        %v1756 = vunpack.c.l.b16 %v527
        %v1757 = vunpack.c.h.b16 %v527
        %v1758 = vunpack.c.l.b16 %v528
        %v1759 = vunpack.c.h.b16 %v528
        %v1760 = vunpack.c.l.b16 %v529
        %v1761 = vunpack.c.h.b16 %v529
        %v1762 = vunpack.c.l.b16 %v530
        %v1763 = vunpack.c.h.b16 %v530
        %v1764 = vunpack.c.l.b16 %v531
        %v1765 = vunpack.c.h.b16 %v531
        %v1766 = vunpack.c.l.b16 %v532
        %v1767 = vunpack.c.h.b16 %v532
        %v1768 = vunpack.c.l.b16 %v533
        %v1769 = vunpack.c.h.b16 %v533
        %v1770 = vunpack.c.l.b16 %v534
        %v1771 = vunpack.c.h.b16 %v534
        %v1772 = vunpack.c.l.b16 %v535
        %v1773 = vunpack.c.h.b16 %v535
        %v1774 = vunpack.c.l.b16 %v536
        %v1775 = vunpack.c.h.b16 %v536
        %v1776 = vunpack.c.l.b16 %v537
        %v1777 = vunpack.c.h.b16 %v537
        %v1778 = vunpack.c.l.b16 %v538
        %v1779 = vunpack.c.h.b16 %v538
        %v1780 = vunpack.c.l.b16 %v539
        %v1781 = vunpack.c.h.b16 %v539
        %v1782 = vunpack.c.l.b16 %v540
        %v1783 = vunpack.c.h.b16 %v540
        %v1784 = vunpack.c.l.b16 %v541
        %v1785 = vunpack.c.h.b16 %v541
        %v1786 = vunpack.c.l.b16 %v542
        %v1787 = vunpack.c.h.b16 %v542
        %v1788 = vunpack.c.l.b16 %v543
        %v1789 = vunpack.c.h.b16 %v543
        %v1790 = vunpack.c.l.b16 %v544
        %v1791 = vunpack.c.h.b16 %v544
        %v1792 = vunpack.c.l.b16 %v545
        %v1793 = vunpack.c.h.b16 %v545
        %v1794 = vunpack.c.l.b16 %v546
        %v1795 = vunpack.c.h.b16 %v546
        %v1796 = vunpack.c.l.b16 %v547
        %v1797 = vunpack.c.h.b16 %v547
        %v1798 = vunpack.c.l.b16 %v548
        %v1799 = vunpack.c.h.b16 %v548
        %v1800 = vunpack.c.l.b16 %v549
        %v1801 = vunpack.c.h.b16 %v549
        %v1802 = vunpack.c.l.b16 %v550
        %v1803 = vunpack.c.h.b16 %v550
        %v1804 = vunpack.c.l.b16 %v551
        %v1805 = vunpack.c.h.b16 %v551
        %v1806 = vunpack.c.l.b16 %v552
        %v1807 = vunpack.c.h.b16 %v552
        %v1808 = vunpack.c.l.b16 %v553
        %v1809 = vunpack.c.h.b16 %v553
        %v1810 = vunpack.c.l.b16 %v554
        %v1811 = vunpack.c.h.b16 %v554
        %v1812 = vunpack.c.l.b16 %v555
        %v1813 = vunpack.c.h.b16 %v555
        %v1814 = vunpack.c.l.b16 %v556
        %v1815 = vunpack.c.h.b16 %v556
        %v1816 = vunpack.c.l.b16 %v557
        %v1817 = vunpack.c.h.b16 %v557
        %v1818 = vunpack.c.l.b16 %v558
        %v1819 = vunpack.c.h.b16 %v558
        %v1820 = vunpack.c.l.b16 %v559
        %v1821 = vunpack.c.h.b16 %v559
        %v1822 = vunpack.c.l.b16 %v560
        %v1823 = vunpack.c.h.b16 %v560
        %v1824 = vunpack.c.l.b16 %v561
        %v1825 = vunpack.c.h.b16 %v561
        %v1826 = vunpack.c.l.b16 %v562
        %v1827 = vunpack.c.h.b16 %v562
        %v1828 = vunpack.c.l.b16 %v563
        %v1829 = vunpack.c.h.b16 %v563
        %v1830 = vunpack.c.l.b16 %v564
        %v1831 = vunpack.c.h.b16 %v564
        %v1832 = vunpack.c.l.b16 %v565
        %v1833 = vunpack.c.h.b16 %v565
        %v1834 = vunpack.c.l.b16 %v566
        %v1835 = vunpack.c.h.b16 %v566
        %v1836 = vunpack.c.l.b16 %v567
        %v1837 = vunpack.c.h.b16 %v567
        %v1838 = vunpack.c.l.b16 %v568
        %v1839 = vunpack.c.h.b16 %v568
        %v1840 = vunpack.c.l.b16 %v569
        %v1841 = vunpack.c.h.b16 %v569
        %v1842 = vunpack.c.l.b16 %v570
        %v1843 = vunpack.c.h.b16 %v570
        %v1844 = vunpack.c.l.b16 %v571
        %v1845 = vunpack.c.h.b16 %v571
        %v1846 = vunpack.c.l.b16 %v572
        %v1847 = vunpack.c.h.b16 %v572
        %v1848 = vunpack.c.l.b16 %v573
        %v1849 = vunpack.c.h.b16 %v573
        %v1850 = vunpack.c.l.b16 %v574
        %v1851 = vunpack.c.h.b16 %v574
        %v1852 = vunpack.c.l.b16 %v575
        %v1853 = vunpack.c.h.b16 %v575
        %v1854 = vunpack.c.l.b16 %v576
        %v1855 = vunpack.c.h.b16 %v576
        %v1856 = vunpack.c.l.b16 %v577
        %v1857 = vunpack.c.h.b16 %v577
        %v1858 = vunpack.c.l.b16 %v578
        %v1859 = vunpack.c.h.b16 %v578
        %v1860 = vunpack.c.l.b16 %v579
        %v1861 = vunpack.c.h.b16 %v579
        %v1862 = vunpack.c.l.b16 %v580
        %v1863 = vunpack.c.h.b16 %v580
        %v1864 = vunpack.c.l.b16 %v581
        %v1865 = vunpack.c.h.b16 %v581
        %v1866 = vunpack.c.l.b16 %v582
        %v1867 = vunpack.c.h.b16 %v582
        %v1868 = vunpack.c.l.b16 %v583
        %v1869 = vunpack.c.h.b16 %v583
        %v1870 = vunpack.c.l.b16 %v584
        %v1871 = vunpack.c.h.b16 %v584
        %v1872 = vunpack.c.l.b16 %v585
        %v1873 = vunpack.c.h.b16 %v585
        %v1874 = vunpack.c.l.b16 %v586
        %v1875 = vunpack.c.h.b16 %v586
        %v1876 = vunpack.c.l.b16 %v587
        %v1877 = vunpack.c.h.b16 %v587
        %v1878 = vunpack.c.l.b16 %v588
        %v1879 = vunpack.c.h.b16 %v588
        %v1880 = vunpack.c.l.b16 %v589
        %v1881 = vunpack.c.h.b16 %v589
        %v1882 = vunpack.c.l.b16 %v590
        %v1883 = vunpack.c.h.b16 %v590
        %v1884 = vunpack.c.l.b16 %v591
        %v1885 = vunpack.c.h.b16 %v591
        %v1886 = vunpack.c.l.b16 %v592
        %v1887 = vunpack.c.h.b16 %v592
        %v1888 = vunpack.c.l.b16 %v593
        %v1889 = vunpack.c.h.b16 %v593
        %v1890 = vunpack.c.l.b16 %v594
        %v1891 = vunpack.c.h.b16 %v594
        %v1892 = vunpack.c.l.b16 %v595
        %v1893 = vunpack.c.h.b16 %v595
        %v1894 = vunpack.c.l.b16 %v596
        %v1895 = vunpack.c.h.b16 %v596
        %v1896 = vunpack.c.l.b16 %v597
        %v1897 = vunpack.c.h.b16 %v597
        %v1898 = vunpack.c.l.b16 %v598
        %v1899 = vunpack.c.h.b16 %v598
        %v1900 = vunpack.c.l.b16 %v599
        %v1901 = vunpack.c.h.b16 %v599
        %v1902 = vunpack.c.l.b16 %v600
        %v1903 = vunpack.c.h.b16 %v600
        %v1904 = vunpack.c.l.b16 %v601
        %v1905 = vunpack.c.h.b16 %v601
        %v1906 = vunpack.c.l.b16 %v602
        %v1907 = vunpack.c.h.b16 %v602
        %v1908 = vunpack.c.l.b16 %v603
        %v1909 = vunpack.c.h.b16 %v603
        %v1910 = vunpack.c.l.b16 %v604
        %v1911 = vunpack.c.h.b16 %v604
        %v1912 = vunpack.c.l.b16 %v605
        %v1913 = vunpack.c.h.b16 %v605
        %v1914 = vunpack.c.l.b16 %v606
        %v1915 = vunpack.c.h.b16 %v606
        %v1916 = vunpack.c.l.b16 %v607
        %v1917 = vunpack.c.h.b16 %v607
        %v1918 = vunpack.c.l.b16 %v608
        %v1919 = vunpack.c.h.b16 %v608
        %v1920 = vunpack.c.l.b16 %v609
        %v1921 = vunpack.c.h.b16 %v609
        %v1922 = vunpack.c.l.b16 %v610
        %v1923 = vunpack.c.h.b16 %v610
        %v1924 = vunpack.c.l.b16 %v611
        %v1925 = vunpack.c.h.b16 %v611
        %v1926 = vunpack.c.l.b16 %v612
        %v1927 = vunpack.c.h.b16 %v612
        %v1928 = vunpack.c.l.b16 %v613
        %v1929 = vunpack.c.h.b16 %v613
        %v1930 = vunpack.c.l.b16 %v614
        %v1931 = vunpack.c.h.b16 %v614
        %v1932 = vunpack.c.l.b16 %v615
        %v1933 = vunpack.c.h.b16 %v615
        %v1934 = vunpack.c.l.b16 %v616
        %v1935 = vunpack.c.h.b16 %v616
        %v1936 = vunpack.c.l.b16 %v617
        %v1937 = vunpack.c.h.b16 %v617
        %v1938 = vunpack.c.l.b16 %v618
        %v1939 = vunpack.c.h.b16 %v618
        %v1940 = vunpack.c.l.b16 %v619
        %v1941 = vunpack.c.h.b16 %v619
        %v1942 = vunpack.c.l.b16 %v620
        %v1943 = vunpack.c.h.b16 %v620
        %v1944 = vunpack.c.l.b16 %v621
        %v1945 = vunpack.c.h.b16 %v621
        %v1946 = vunpack.c.l.b16 %v622
        %v1947 = vunpack.c.h.b16 %v622
        %v1948 = vunpack.c.l.b16 %v623
        %v1949 = vunpack.c.h.b16 %v623
        %v1950 = vunpack.c.l.b16 %v624
        %v1951 = vunpack.c.h.b16 %v624
        %v1952 = vunpack.c.l.b16 %v625
        %v1953 = vunpack.c.h.b16 %v625
        %v1954 = vunpack.c.l.b16 %v626
        %v1955 = vunpack.c.h.b16 %v626
        %v1956 = vunpack.c.l.b16 %v627
        %v1957 = vunpack.c.h.b16 %v627
        %v1958 = vunpack.c.l.b16 %v628
        %v1959 = vunpack.c.h.b16 %v628
        %v1960 = vunpack.c.l.b16 %v629
        %v1961 = vunpack.c.h.b16 %v629
        %v1962 = vunpack.c.l.b16 %v630
        %v1963 = vunpack.c.h.b16 %v630
        %v1964 = vunpack.c.l.b16 %v631
        %v1965 = vunpack.c.h.b16 %v631
        %v1966 = vunpack.c.l.b16 %v632
        %v1967 = vunpack.c.h.b16 %v632
        %v1968 = vunpack.c.l.b16 %v633
        %v1969 = vunpack.c.h.b16 %v633
        %v1970 = vunpack.c.l.b16 %v634
        %v1971 = vunpack.c.h.b16 %v634
        %v1972 = vunpack.c.l.b16 %v635
        %v1973 = vunpack.c.h.b16 %v635
        %v1974 = vunpack.c.l.b16 %v636
        %v1975 = vunpack.c.h.b16 %v636
        %v1976 = vunpack.c.l.b16 %v637
        %v1977 = vunpack.c.h.b16 %v637
        %v1978 = vunpack.c.l.b16 %v638
        %v1979 = vunpack.c.h.b16 %v638
        %v1980 = vunpack.c.l.b16 %v639
        %v1981 = vunpack.c.h.b16 %v639
        %v1982 = vunpack.c.l.b16 %v640
        %v1983 = vunpack.c.h.b16 %v640
        %v1984 = vunpack.c.l.b16 %v641
        %v1985 = vunpack.c.h.b16 %v641
        %v1986 = vunpack.c.l.b16 %v642
        %v1987 = vunpack.c.h.b16 %v642
        %v1988 = vunpack.c.l.b16 %v643
        %v1989 = vunpack.c.h.b16 %v643
        %v1990 = vunpack.c.l.b16 %v644
        %v1991 = vunpack.c.h.b16 %v644
        %v1992 = vunpack.c.l.b16 %v645
        %v1993 = vunpack.c.h.b16 %v645
        %v1994 = vunpack.c.l.b16 %v646
        %v1995 = vunpack.c.h.b16 %v646
        %v1996 = vunpack.c.l.b16 %v647
        %v1997 = vunpack.c.h.b16 %v647
        %v1998 = vunpack.c.l.b16 %v648
        %v1999 = vunpack.c.h.b16 %v648
        %v2000 = vunpack.c.l.b16 %v649
        %v2001 = vunpack.c.h.b16 %v649
        %v2002 = vunpack.c.l.b16 %v650
        %v2003 = vunpack.c.h.b16 %v650
        %v2004 = vunpack.c.l.b16 %v651
        %v2005 = vunpack.c.h.b16 %v651
        %v2006 = vunpack.c.l.b16 %v652
        %v2007 = vunpack.c.h.b16 %v652
        %v2008 = vunpack.c.l.b16 %v653
        %v2009 = vunpack.c.h.b16 %v653
        %v2010 = vunpack.c.l.b16 %v654
        %v2011 = vunpack.c.h.b16 %v654
        %v2012 = vunpack.c.l.b16 %v655
        %v2013 = vunpack.c.h.b16 %v655
        %v2014 = vunpack.c.l.b16 %v656
        %v2015 = vunpack.c.h.b16 %v656
        %v2016 = vunpack.c.l.b16 %v657
        %v2017 = vunpack.c.h.b16 %v657
        %v2018 = vunpack.c.l.b16 %v658
        %v2019 = vunpack.c.h.b16 %v658
        %v2020 = vunpack.c.l.b16 %v659
        %v2021 = vunpack.c.h.b16 %v659
        %v2022 = vunpack.c.l.b16 %v660
        %v2023 = vunpack.c.h.b16 %v660
        %v2024 = vunpack.c.l.b16 %v661
        %v2025 = vunpack.c.h.b16 %v661
        %v2026 = vunpack.c.l.b16 %v662
        %v2027 = vunpack.c.h.b16 %v662
        %v2028 = vunpack.c.l.b16 %v663
        %v2029 = vunpack.c.h.b16 %v663
        %v2030 = vunpack.c.l.b16 %v664
        %v2031 = vunpack.c.h.b16 %v664
        %v2032 = vunpack.c.l.b16 %v665
        %v2033 = vunpack.c.h.b16 %v665
        %v2034 = vunpack.c.l.b16 %v666
        %v2035 = vunpack.c.h.b16 %v666
        %v2036 = vunpack.c.l.b16 %v667
        %v2037 = vunpack.c.h.b16 %v667
        %v2038 = vunpack.c.l.b16 %v668
        %v2039 = vunpack.c.h.b16 %v668
        %v2040 = vunpack.c.l.b16 %v669
        %v2041 = vunpack.c.h.b16 %v669
        %v2042 = vunpack.c.l.b16 %v670
        %v2043 = vunpack.c.h.b16 %v670
        %v2044 = vunpack.c.l.b16 %v671
        %v2045 = vunpack.c.h.b16 %v671
        %v2046 = vunpack.c.l.b16 %v672
        %v2047 = vunpack.c.h.b16 %v672
        %v2048 = vunpack.c.l.b16 %v673
        %v2049 = vunpack.c.h.b16 %v673
        %v2050 = vunpack.c.l.b16 %v674
        %v2051 = vunpack.c.h.b16 %v674
        %v2052 = vpack.c.b16 %v1270, %v1268
        %v2053 = vpack.c.b16 %v1271, %v1269
        %v2054 = vpack.c.b16 %v1274, %v1272
        %v2055 = vpack.c.b16 %v1275, %v1273
        %v2056 = vpack.c.b16 %v1278, %v1276
        %v2057 = vpack.c.b16 %v1279, %v1277
        %v2058 = vpack.c.b16 %v1282, %v1280
        %v2059 = vpack.c.b16 %v1283, %v1281
        %v2060 = vpack.c.b16 %v1286, %v1284
        %v2061 = vpack.c.b16 %v1287, %v1285
        %v2062 = vpack.c.b16 %v1290, %v1288
        %v2063 = vpack.c.b16 %v1291, %v1289
        %v2064 = vpack.c.b16 %v1294, %v1292
        %v2065 = vpack.c.b16 %v1295, %v1293
        %v2066 = vpack.c.b16 %v1298, %v1296
        %v2067 = vpack.c.b16 %v1299, %v1297
        %v2068 = vpack.c.b16 %v1302, %v1300
        %v2069 = vpack.c.b16 %v1303, %v1301
        %v2070 = vpack.c.b16 %v1306, %v1304
        %v2071 = vpack.c.b16 %v1307, %v1305
        %v2072 = vpack.c.b16 %v1310, %v1308
        %v2073 = vpack.c.b16 %v1311, %v1309
        %v2074 = vpack.c.b16 %v1314, %v1312
        %v2075 = vpack.c.b16 %v1315, %v1313
        %v2076 = vpack.c.b16 %v1318, %v1316
        %v2077 = vpack.c.b16 %v1319, %v1317
        %v2078 = vpack.c.b16 %v1322, %v1320
        %v2079 = vpack.c.b16 %v1323, %v1321
        %v2080 = vpack.c.b16 %v1326, %v1324
        %v2081 = vpack.c.b16 %v1327, %v1325
        %v2082 = vpack.c.b16 %v1330, %v1328
        %v2083 = vpack.c.b16 %v1331, %v1329
        %v2084 = vpack.c.b16 %v1334, %v1332
        %v2085 = vpack.c.b16 %v1335, %v1333
        %v2086 = vpack.c.b16 %v1338, %v1336
        %v2087 = vpack.c.b16 %v1339, %v1337
        %v2088 = vpack.c.b16 %v1342, %v1340
        %v2089 = vpack.c.b16 %v1343, %v1341
        %v2090 = vpack.c.b16 %v1346, %v1344
        %v2091 = vpack.c.b16 %v1347, %v1345
        %v2092 = vpack.c.b16 %v1350, %v1348
        %v2093 = vpack.c.b16 %v1351, %v1349
        %v2094 = vpack.c.b16 %v1354, %v1352
        %v2095 = vpack.c.b16 %v1355, %v1353
        %v2096 = vpack.c.b16 %v1358, %v1356
        %v2097 = vpack.c.b16 %v1359, %v1357
        %v2098 = vpack.c.b16 %v1362, %v1360
        %v2099 = vpack.c.b16 %v1363, %v1361
        %v2100 = vpack.c.b16 %v1366, %v1364
        %v2101 = vpack.c.b16 %v1367, %v1365
        %v2102 = vpack.c.b16 %v1370, %v1368
        %v2103 = vpack.c.b16 %v1371, %v1369
        %v2104 = vpack.c.b16 %v1374, %v1372
        %v2105 = vpack.c.b16 %v1375, %v1373
        %v2106 = vpack.c.b16 %v1378, %v1376
        %v2107 = vpack.c.b16 %v1379, %v1377
        %v2108 = vpack.c.b16 %v1382, %v1380
        %v2109 = vpack.c.b16 %v1383, %v1381
        %v2110 = vpack.c.b16 %v1386, %v1384
        %v2111 = vpack.c.b16 %v1387, %v1385
        %v2112 = vpack.c.b16 %v1390, %v1388
        %v2113 = vpack.c.b16 %v1391, %v1389
        %v2114 = vpack.c.b16 %v1394, %v1392
        %v2115 = vpack.c.b16 %v1395, %v1393
        %v2116 = vpack.c.b16 %v1398, %v1396
        %v2117 = vpack.c.b16 %v1399, %v1397
        %v2118 = vpack.c.b16 %v1402, %v1400
        %v2119 = vpack.c.b16 %v1403, %v1401
        %v2120 = vpack.c.b16 %v1406, %v1404
        %v2121 = vpack.c.b16 %v1407, %v1405
        %v2122 = vpack.c.b16 %v1410, %v1408
        %v2123 = vpack.c.b16 %v1411, %v1409
        %v2124 = vpack.c.b16 %v1414, %v1412
        %v2125 = vpack.c.b16 %v1415, %v1413
        %v2126 = vpack.c.b16 %v1418, %v1416
        %v2127 = vpack.c.b16 %v1419, %v1417
        %v2128 = vpack.c.b16 %v1422, %v1420
        %v2129 = vpack.c.b16 %v1423, %v1421
        %v2130 = vpack.c.b16 %v1426, %v1424
        %v2131 = vpack.c.b16 %v1427, %v1425
        %v2132 = vpack.c.b16 %v1430, %v1428
        %v2133 = vpack.c.b16 %v1431, %v1429
        %v2134 = vpack.c.b16 %v1434, %v1432
        %v2135 = vpack.c.b16 %v1435, %v1433
        %v2136 = vpack.c.b16 %v1438, %v1436
        %v2137 = vpack.c.b16 %v1439, %v1437
        %v2138 = vpack.c.b16 %v1442, %v1440
        %v2139 = vpack.c.b16 %v1443, %v1441
        %v2140 = vpack.c.b16 %v1446, %v1444
        %v2141 = vpack.c.b16 %v1447, %v1445
        %v2142 = vpack.c.b16 %v1450, %v1448
        %v2143 = vpack.c.b16 %v1451, %v1449
        %v2144 = vpack.c.b16 %v1454, %v1452
        %v2145 = vpack.c.b16 %v1455, %v1453
        %v2146 = vpack.c.b16 %v1458, %v1456
        %v2147 = vpack.c.b16 %v1459, %v1457
        %v2148 = vpack.c.b16 %v1462, %v1460
        %v2149 = vpack.c.b16 %v1463, %v1461
        %v2150 = vpack.c.b16 %v1466, %v1464
        %v2151 = vpack.c.b16 %v1467, %v1465
        %v2152 = vpack.c.b16 %v1470, %v1468
        %v2153 = vpack.c.b16 %v1471, %v1469
        %v2154 = vpack.c.b16 %v1474, %v1472
        %v2155 = vpack.c.b16 %v1475, %v1473
        %v2156 = vpack.c.b16 %v1478, %v1476
        %v2157 = vpack.c.b16 %v1479, %v1477
        %v2158 = vpack.c.b16 %v1482, %v1480
        %v2159 = vpack.c.b16 %v1483, %v1481
        %v2160 = vpack.c.b16 %v1486, %v1484
        %v2161 = vpack.c.b16 %v1487, %v1485
        %v2162 = vpack.c.b16 %v1490, %v1488
        %v2163 = vpack.c.b16 %v1491, %v1489
        %v2164 = vpack.c.b16 %v1494, %v1492
        %v2165 = vpack.c.b16 %v1495, %v1493
        %v2166 = vpack.c.b16 %v1498, %v1496
        %v2167 = vpack.c.b16 %v1499, %v1497
        %v2168 = vpack.c.b16 %v1502, %v1500
        %v2169 = vpack.c.b16 %v1503, %v1501
        %v2170 = vpack.c.b16 %v1506, %v1504
        %v2171 = vpack.c.b16 %v1507, %v1505
        %v2172 = vpack.c.b16 %v1510, %v1508
        %v2173 = vpack.c.b16 %v1511, %v1509
        %v2174 = vpack.c.b16 %v1514, %v1512
        %v2175 = vpack.c.b16 %v1515, %v1513
        %v2176 = vpack.c.b16 %v1518, %v1516
        %v2177 = vpack.c.b16 %v1519, %v1517
        %v2178 = vpack.c.b16 %v1522, %v1520
        %v2179 = vpack.c.b16 %v1523, %v1521
        %v2180 = vpack.c.b16 %v1526, %v1524
        %v2181 = vpack.c.b16 %v1527, %v1525
        %v2182 = vpack.c.b16 %v1530, %v1528
        %v2183 = vpack.c.b16 %v1531, %v1529
        %v2184 = vpack.c.b16 %v1534, %v1532
        %v2185 = vpack.c.b16 %v1535, %v1533
        %v2186 = vpack.c.b16 %v1538, %v1536
        %v2187 = vpack.c.b16 %v1539, %v1537
        %v2188 = vpack.c.b16 %v1542, %v1540
        %v2189 = vpack.c.b16 %v1543, %v1541
        %v2190 = vpack.c.b16 %v1546, %v1544
        %v2191 = vpack.c.b16 %v1547, %v1545
        %v2192 = vpack.c.b16 %v1550, %v1548
        %v2193 = vpack.c.b16 %v1551, %v1549
        %v2194 = vpack.c.b16 %v1554, %v1552
        %v2195 = vpack.c.b16 %v1555, %v1553
        %v2196 = vpack.c.b16 %v1558, %v1556
        %v2197 = vpack.c.b16 %v1559, %v1557
        %v2198 = vpack.c.b16 %v1562, %v1560
        %v2199 = vpack.c.b16 %v1563, %v1561
        %v2200 = vpack.c.b16 %v1566, %v1564
        %v2201 = vpack.c.b16 %v1567, %v1565
        %v2202 = vpack.c.b16 %v1570, %v1568
        %v2203 = vpack.c.b16 %v1571, %v1569
        %v2204 = vpack.c.b16 %v1574, %v1572
        %v2205 = vpack.c.b16 %v1575, %v1573
        %v2206 = vpack.c.b16 %v1578, %v1576
        %v2207 = vpack.c.b16 %v1579, %v1577
        %v2208 = vpack.c.b16 %v1582, %v1580
        %v2209 = vpack.c.b16 %v1583, %v1581
        %v2210 = vpack.c.b16 %v1586, %v1584
        %v2211 = vpack.c.b16 %v1587, %v1585
        %v2212 = vpack.c.b16 %v1590, %v1588
        %v2213 = vpack.c.b16 %v1591, %v1589
        %v2214 = vpack.c.b16 %v1594, %v1592
        %v2215 = vpack.c.b16 %v1595, %v1593
        %v2216 = vpack.c.b16 %v1598, %v1596
        %v2217 = vpack.c.b16 %v1599, %v1597
        %v2218 = vpack.c.b16 %v1602, %v1600
        %v2219 = vpack.c.b16 %v1603, %v1601
        %v2220 = vpack.c.b16 %v1606, %v1604
        %v2221 = vpack.c.b16 %v1607, %v1605
        %v2222 = vpack.c.b16 %v1610, %v1608
        %v2223 = vpack.c.b16 %v1611, %v1609
        %v2224 = vpack.c.b16 %v1614, %v1612
        %v2225 = vpack.c.b16 %v1615, %v1613
        %v2226 = vpack.c.b16 %v1618, %v1616
        %v2227 = vpack.c.b16 %v1619, %v1617
        %v2228 = vpack.c.b16 %v1622, %v1620
        %v2229 = vpack.c.b16 %v1623, %v1621
        %v2230 = vpack.c.b16 %v1626, %v1624
        %v2231 = vpack.c.b16 %v1627, %v1625
        %v2232 = vpack.c.b16 %v1630, %v1628
        %v2233 = vpack.c.b16 %v1631, %v1629
        %v2234 = vpack.c.b16 %v1634, %v1632
        %v2235 = vpack.c.b16 %v1635, %v1633
        %v2236 = vpack.c.b16 %v1638, %v1636
        %v2237 = vpack.c.b16 %v1639, %v1637
        %v2238 = vpack.c.b16 %v1642, %v1640
        %v2239 = vpack.c.b16 %v1643, %v1641
        %v2240 = vpack.c.b16 %v1646, %v1644
        %v2241 = vpack.c.b16 %v1647, %v1645
        %v2242 = vpack.c.b16 %v1650, %v1648
        %v2243 = vpack.c.b16 %v1651, %v1649
        %v2244 = vpack.c.b16 %v1654, %v1652
        %v2245 = vpack.c.b16 %v1655, %v1653
        %v2246 = vpack.c.b16 %v1658, %v1656
        %v2247 = vpack.c.b16 %v1659, %v1657
        %v2248 = vpack.c.b16 %v1662, %v1660
        %v2249 = vpack.c.b16 %v1663, %v1661
        %v2250 = vpack.c.b16 %v1666, %v1664
        %v2251 = vpack.c.b16 %v1667, %v1665
        %v2252 = vpack.c.b16 %v1670, %v1668
        %v2253 = vpack.c.b16 %v1671, %v1669
        %v2254 = vpack.c.b16 %v1674, %v1672
        %v2255 = vpack.c.b16 %v1675, %v1673
        %v2256 = vpack.c.b16 %v1678, %v1676
        %v2257 = vpack.c.b16 %v1679, %v1677
        %v2258 = vpack.c.b16 %v1682, %v1680
        %v2259 = vpack.c.b16 %v1683, %v1681
        %v2260 = vpack.c.b16 %v1686, %v1684
        %v2261 = vpack.c.b16 %v1687, %v1685
        %v2262 = vpack.c.b16 %v1690, %v1688
        %v2263 = vpack.c.b16 %v1691, %v1689
        %v2264 = vpack.c.b16 %v1694, %v1692
        %v2265 = vpack.c.b16 %v1695, %v1693
        %v2266 = vpack.c.b16 %v1698, %v1696
        %v2267 = vpack.c.b16 %v1699, %v1697
        %v2268 = vpack.c.b16 %v1702, %v1700
        %v2269 = vpack.c.b16 %v1703, %v1701
        %v2270 = vpack.c.b16 %v1706, %v1704
        %v2271 = vpack.c.b16 %v1707, %v1705
        %v2272 = vpack.c.b16 %v1710, %v1708
        %v2273 = vpack.c.b16 %v1711, %v1709
        %v2274 = vpack.c.b16 %v1714, %v1712
        %v2275 = vpack.c.b16 %v1715, %v1713
        %v2276 = vpack.c.b16 %v1718, %v1716
        %v2277 = vpack.c.b16 %v1719, %v1717
        %v2278 = vpack.c.b16 %v1722, %v1720
        %v2279 = vpack.c.b16 %v1723, %v1721
        %v2280 = vpack.c.b16 %v1726, %v1724
        %v2281 = vpack.c.b16 %v1727, %v1725
        %v2282 = vpack.c.b16 %v1730, %v1728
        %v2283 = vpack.c.b16 %v1731, %v1729
        %v2284 = vpack.c.b16 %v1734, %v1732
        %v2285 = vpack.c.b16 %v1735, %v1733
        %v2286 = vpack.c.b16 %v1738, %v1736
        %v2287 = vpack.c.b16 %v1739, %v1737
        %v2288 = vpack.c.b16 %v1742, %v1740
        %v2289 = vpack.c.b16 %v1743, %v1741
        %v2290 = vpack.c.b16 %v1746, %v1744
        %v2291 = vpack.c.b16 %v1747, %v1745
        %v2292 = vpack.c.b16 %v1750, %v1748
        %v2293 = vpack.c.b16 %v1751, %v1749
        %v2294 = vpack.c.b16 %v1754, %v1752
        %v2295 = vpack.c.b16 %v1755, %v1753
        %v2296 = vpack.c.b16 %v1758, %v1756
        %v2297 = vpack.c.b16 %v1759, %v1757
        %v2298 = vpack.c.b16 %v1762, %v1760
        %v2299 = vpack.c.b16 %v1763, %v1761
        %v2300 = vpack.c.b16 %v1766, %v1764
        %v2301 = vpack.c.b16 %v1767, %v1765
        %v2302 = vpack.c.b16 %v1770, %v1768
        %v2303 = vpack.c.b16 %v1771, %v1769
        %v2304 = vpack.c.b16 %v1774, %v1772
        %v2305 = vpack.c.b16 %v1775, %v1773
        %v2306 = vpack.c.b16 %v1778, %v1776
        %v2307 = vpack.c.b16 %v1779, %v1777
        %v2308 = vpack.c.b16 %v1782, %v1780
        %v2309 = vpack.c.b16 %v1783, %v1781
        %v2310 = vpack.c.b16 %v1786, %v1784
        %v2311 = vpack.c.b16 %v1787, %v1785
        %v2312 = vpack.c.b16 %v1790, %v1788
        %v2313 = vpack.c.b16 %v1791, %v1789
        %v2314 = vpack.c.b16 %v1794, %v1792
        %v2315 = vpack.c.b16 %v1795, %v1793
        %v2316 = vpack.c.b16 %v1798, %v1796
        %v2317 = vpack.c.b16 %v1799, %v1797
        %v2318 = vpack.c.b16 %v1802, %v1800
        %v2319 = vpack.c.b16 %v1803, %v1801
        %v2320 = vpack.c.b16 %v1806, %v1804
        %v2321 = vpack.c.b16 %v1807, %v1805
        %v2322 = vpack.c.b16 %v1810, %v1808
        %v2323 = vpack.c.b16 %v1811, %v1809
        %v2324 = vpack.c.b16 %v1814, %v1812
        %v2325 = vpack.c.b16 %v1815, %v1813
        %v2326 = vpack.c.b16 %v1818, %v1816
        %v2327 = vpack.c.b16 %v1819, %v1817
        %v2328 = vpack.c.b16 %v1822, %v1820
        %v2329 = vpack.c.b16 %v1823, %v1821
        %v2330 = vpack.c.b16 %v1826, %v1824
        %v2331 = vpack.c.b16 %v1827, %v1825
        %v2332 = vpack.c.b16 %v1830, %v1828
        %v2333 = vpack.c.b16 %v1831, %v1829
        %v2334 = vpack.c.b16 %v1834, %v1832
        %v2335 = vpack.c.b16 %v1835, %v1833
        %v2336 = vpack.c.b16 %v1838, %v1836
        %v2337 = vpack.c.b16 %v1839, %v1837
        %v2338 = vpack.c.b16 %v1842, %v1840
        %v2339 = vpack.c.b16 %v1843, %v1841
        %v2340 = vpack.c.b16 %v1846, %v1844
        %v2341 = vpack.c.b16 %v1847, %v1845
        %v2342 = vpack.c.b16 %v1850, %v1848
        %v2343 = vpack.c.b16 %v1851, %v1849
        %v2344 = vpack.c.b16 %v1854, %v1852
        %v2345 = vpack.c.b16 %v1855, %v1853
        %v2346 = vpack.c.b16 %v1858, %v1856
        %v2347 = vpack.c.b16 %v1859, %v1857
        %v2348 = vpack.c.b16 %v1862, %v1860
        %v2349 = vpack.c.b16 %v1863, %v1861
        %v2350 = vpack.c.b16 %v1866, %v1864
        %v2351 = vpack.c.b16 %v1867, %v1865
        %v2352 = vpack.c.b16 %v1870, %v1868
        %v2353 = vpack.c.b16 %v1871, %v1869
        %v2354 = vpack.c.b16 %v1874, %v1872
        %v2355 = vpack.c.b16 %v1875, %v1873
        %v2356 = vpack.c.b16 %v1878, %v1876
        %v2357 = vpack.c.b16 %v1879, %v1877
        %v2358 = vpack.c.b16 %v1882, %v1880
        %v2359 = vpack.c.b16 %v1883, %v1881
        %v2360 = vpack.c.b16 %v1886, %v1884
        %v2361 = vpack.c.b16 %v1887, %v1885
        %v2362 = vpack.c.b16 %v1890, %v1888
        %v2363 = vpack.c.b16 %v1891, %v1889
        %v2364 = vpack.c.b16 %v1894, %v1892
        %v2365 = vpack.c.b16 %v1895, %v1893
        %v2366 = vpack.c.b16 %v1898, %v1896
        %v2367 = vpack.c.b16 %v1899, %v1897
        %v2368 = vpack.c.b16 %v1902, %v1900
        %v2369 = vpack.c.b16 %v1903, %v1901
        %v2370 = vpack.c.b16 %v1906, %v1904
        %v2371 = vpack.c.b16 %v1907, %v1905
        %v2372 = vpack.c.b16 %v1910, %v1908
        %v2373 = vpack.c.b16 %v1911, %v1909
        %v2374 = vpack.c.b16 %v1914, %v1912
        %v2375 = vpack.c.b16 %v1915, %v1913
        %v2376 = vpack.c.b16 %v1918, %v1916
        %v2377 = vpack.c.b16 %v1919, %v1917
        %v2378 = vpack.c.b16 %v1922, %v1920
        %v2379 = vpack.c.b16 %v1923, %v1921
        %v2380 = vpack.c.b16 %v1926, %v1924
        %v2381 = vpack.c.b16 %v1927, %v1925
        %v2382 = vpack.c.b16 %v1930, %v1928
        %v2383 = vpack.c.b16 %v1931, %v1929
        %v2384 = vpack.c.b16 %v1934, %v1932
        %v2385 = vpack.c.b16 %v1935, %v1933
        %v2386 = vpack.c.b16 %v1938, %v1936
        %v2387 = vpack.c.b16 %v1939, %v1937
        %v2388 = vpack.c.b16 %v1942, %v1940
        %v2389 = vpack.c.b16 %v1943, %v1941
        %v2390 = vpack.c.b16 %v1946, %v1944
        %v2391 = vpack.c.b16 %v1947, %v1945
        %v2392 = vpack.c.b16 %v1950, %v1948
        %v2393 = vpack.c.b16 %v1951, %v1949
        %v2394 = vpack.c.b16 %v1954, %v1952
        %v2395 = vpack.c.b16 %v1955, %v1953
        %v2396 = vpack.c.b16 %v1958, %v1956
        %v2397 = vpack.c.b16 %v1959, %v1957
        %v2398 = vpack.c.b16 %v1962, %v1960
        %v2399 = vpack.c.b16 %v1963, %v1961
        %v2400 = vpack.c.b16 %v1966, %v1964
        %v2401 = vpack.c.b16 %v1967, %v1965
        %v2402 = vpack.c.b16 %v1970, %v1968
        %v2403 = vpack.c.b16 %v1971, %v1969
        %v2404 = vpack.c.b16 %v1974, %v1972
        %v2405 = vpack.c.b16 %v1975, %v1973
        %v2406 = vpack.c.b16 %v1978, %v1976
        %v2407 = vpack.c.b16 %v1979, %v1977
        %v2408 = vpack.c.b16 %v1982, %v1980
        %v2409 = vpack.c.b16 %v1983, %v1981
        %v2410 = vpack.c.b16 %v1986, %v1984
        %v2411 = vpack.c.b16 %v1987, %v1985
        %v2412 = vpack.c.b16 %v1990, %v1988
        %v2413 = vpack.c.b16 %v1991, %v1989
        %v2414 = vpack.c.b16 %v1994, %v1992
        %v2415 = vpack.c.b16 %v1995, %v1993
        %v2416 = vpack.c.b16 %v1998, %v1996
        %v2417 = vpack.c.b16 %v1999, %v1997
        %v2418 = vpack.c.b16 %v2002, %v2000
        %v2419 = vpack.c.b16 %v2003, %v2001
        %v2420 = vpack.c.b16 %v2006, %v2004
        %v2421 = vpack.c.b16 %v2007, %v2005
        %v2422 = vpack.c.b16 %v2010, %v2008
        %v2423 = vpack.c.b16 %v2011, %v2009
        %v2424 = vpack.c.b16 %v2014, %v2012
        %v2425 = vpack.c.b16 %v2015, %v2013
        %v2426 = vpack.c.b16 %v2018, %v2016
        %v2427 = vpack.c.b16 %v2019, %v2017
        %v2428 = vpack.c.b16 %v2022, %v2020
        %v2429 = vpack.c.b16 %v2023, %v2021
        %v2430 = vpack.c.b16 %v2026, %v2024
        %v2431 = vpack.c.b16 %v2027, %v2025
        %v2432 = vpack.c.b16 %v2030, %v2028
        %v2433 = vpack.c.b16 %v2031, %v2029
        %v2434 = vpack.c.b16 %v2034, %v2032
        %v2435 = vpack.c.b16 %v2035, %v2033
        %v2436 = vpack.c.b16 %v2038, %v2036
        %v2437 = vpack.c.b16 %v2039, %v2037
        %v2438 = vpack.c.b16 %v2042, %v2040
        %v2439 = vpack.c.b16 %v2043, %v2041
        %v2440 = vpack.c.b16 %v2046, %v2044
        %v2441 = vpack.c.b16 %v2047, %v2045
        %v2442 = vpack.c.b16 %v2050, %v2048
        %v2443 = vpack.c.b16 %v2051, %v2049
        %vm2836 = vcmask 523264
        %v2838 = vsel %vm2836, %v851, 0
        %2840 = vmatprep.subr.bf16.mxu0 %v2067
        %2841 = vmatpush1.bf16.msra.mxu0 %v2066
        %2842 = vmatprep.subr.bf16.mxu0 %v2065
        %2843 = vmatpush1.bf16.msra.mxu0 %v2064
        %2844 = vmatprep.subr.bf16.mxu0 %v2063
        %2845 = vmatpush1.bf16.msra.mxu0 %v2062
        %2846 = vmatprep.subr.bf16.mxu0 %v2061
        %2847 = vmatpush1.bf16.msra.mxu0 %v2060
        %2848 = vmatprep.subr.bf16.mxu0 %v2059
        %2849 = vmatpush1.bf16.msra.mxu0 %v2058
        %2850 = vmatprep.subr.bf16.mxu0 %v2057
        %2851 = vmatpush1.bf16.msra.mxu0 %v2056
        %2852 = vmatprep.subr.bf16.mxu0 %v2055
        %2853 = vmatpush1.bf16.msra.mxu0 %v2054
        %2854 = vmatprep.subr.bf16.mxu0 %v2053
        %2855 = vmatpush1.bf16.msra.mxu0 %v2052
        %2856 = vmatprep.subr.bf16.mxu0 %v2083
        %2857 = vmatpush2.bf16.msra.mxu0 %v2082
        %2858 = vmatprep.subr.bf16.mxu0 %v2081
        %2859 = vmatpush2.bf16.msra.mxu0 %v2080
        %2860 = vmatprep.subr.bf16.mxu0 %v2079
        %2861 = vmatpush2.bf16.msra.mxu0 %v2078
        %2862 = vmatprep.subr.bf16.mxu0 %v2077
        %2863 = vmatpush2.bf16.msra.mxu0 %v2076
        %2864 = vmatprep.subr.bf16.mxu0 %v2075
        %2865 = vmatpush2.bf16.msra.mxu0 %v2074
        %2866 = vmatprep.subr.bf16.mxu0 %v2073
        %2867 = vmatpush2.bf16.msra.mxu0 %v2072
        %2868 = vmatprep.subr.bf16.mxu0 %v2071
        %2869 = vmatpush2.bf16.msra.mxu0 %v2070
        %2870 = vmatprep.subr.bf16.mxu0 %v2069
        %2871 = vmatpush2.bf16.msra.mxu0 %v2068
        %2872 = vmatprep.mubr.bf16.mxu0 %v728
        %2873 = vmatmul.mubr.bf16.gmra.mxu0 %v714
        %v2874 = vpop.f32.mrf.mxu0
        %v2875 = vadd.f32 %v680, %v2874
        %v2876 = vpop.f32.mrf.mxu0
        %v2877 = vadd.f32 %v684, %v2876
        %v2878 = vpop.f32.mrf.mxu0
        %v2879 = vpop.f32.mrf.mxu0
        %2880 = vdwg.mxu0
        %2881 = vmatprep.subr.bf16.mxu0 %v2099
        %2882 = vmatpush1.bf16.msra.mxu0 %v2098
        %2883 = vmatprep.subr.bf16.mxu0 %v2097
        %2884 = vmatpush1.bf16.msra.mxu0 %v2096
        %2885 = vmatprep.subr.bf16.mxu0 %v2095
        %2886 = vmatpush1.bf16.msra.mxu0 %v2094
        %2887 = vmatprep.subr.bf16.mxu0 %v2093
        %2888 = vmatpush1.bf16.msra.mxu0 %v2092
        %2889 = vmatprep.subr.bf16.mxu0 %v2091
        %2890 = vmatpush1.bf16.msra.mxu0 %v2090
        %2891 = vmatprep.subr.bf16.mxu0 %v2089
        %2892 = vmatpush1.bf16.msra.mxu0 %v2088
        %2893 = vmatprep.subr.bf16.mxu0 %v2087
        %2894 = vmatpush1.bf16.msra.mxu0 %v2086
        %2895 = vmatprep.subr.bf16.mxu0 %v2085
        %2896 = vmatpush1.bf16.msra.mxu0 %v2084
        %2897 = vmatprep.subr.bf16.mxu0 %v2115
        %2898 = vmatpush2.bf16.msra.mxu0 %v2114
        %2899 = vmatprep.subr.bf16.mxu0 %v2113
        %2900 = vmatpush2.bf16.msra.mxu0 %v2112
        %2901 = vmatprep.subr.bf16.mxu0 %v2111
        %2902 = vmatpush2.bf16.msra.mxu0 %v2110
        %2903 = vmatprep.subr.bf16.mxu0 %v2109
        %2904 = vmatpush2.bf16.msra.mxu0 %v2108
        %2905 = vmatprep.subr.bf16.mxu0 %v2107
        %2906 = vmatpush2.bf16.msra.mxu0 %v2106
        %2907 = vmatprep.subr.bf16.mxu0 %v2105
        %2908 = vmatpush2.bf16.msra.mxu0 %v2104
        %2909 = vmatprep.subr.bf16.mxu0 %v2103
        %2910 = vmatpush2.bf16.msra.mxu0 %v2102
        %2911 = vmatprep.subr.bf16.mxu0 %v2101
        %2912 = vmatpush2.bf16.msra.mxu0 %v2100
        %2913 = vmatprep.mubr.bf16.mxu0 %v738
        %2914 = vmatmul.mubr.bf16.gmra.mxu0 %v736
        %v2915 = vpop.f32.mrf.mxu0
        %v2916 = vadd.f32 %v2875, %v2915
        %v2917 = vpop.f32.mrf.mxu0
        %v2918 = vadd.f32 %v2877, %v2917
        %v2919 = vpop.f32.mrf.mxu0
        %v2920 = vpop.f32.mrf.mxu0
        %2921 = vdwg.mxu0
        %2922 = vmatprep.subr.bf16.mxu0 %v2131
        %2923 = vmatpush1.bf16.msra.mxu0 %v2130
        %2924 = vmatprep.subr.bf16.mxu0 %v2129
        %2925 = vmatpush1.bf16.msra.mxu0 %v2128
        %2926 = vmatprep.subr.bf16.mxu0 %v2127
        %2927 = vmatpush1.bf16.msra.mxu0 %v2126
        %2928 = vmatprep.subr.bf16.mxu0 %v2125
        %2929 = vmatpush1.bf16.msra.mxu0 %v2124
        %2930 = vmatprep.subr.bf16.mxu0 %v2123
        %2931 = vmatpush1.bf16.msra.mxu0 %v2122
        %2932 = vmatprep.subr.bf16.mxu0 %v2121
        %2933 = vmatpush1.bf16.msra.mxu0 %v2120
        %2934 = vmatprep.subr.bf16.mxu0 %v2119
        %2935 = vmatpush1.bf16.msra.mxu0 %v2118
        %2936 = vmatprep.subr.bf16.mxu0 %v2117
        %2937 = vmatpush1.bf16.msra.mxu0 %v2116
        %2938 = vmatprep.subr.bf16.mxu0 %v2147
        %2939 = vmatpush2.bf16.msra.mxu0 %v2146
        %2940 = vmatprep.subr.bf16.mxu0 %v2145
        %2941 = vmatpush2.bf16.msra.mxu0 %v2144
        %2942 = vmatprep.subr.bf16.mxu0 %v2143
        %2943 = vmatpush2.bf16.msra.mxu0 %v2142
        %2944 = vmatprep.subr.bf16.mxu0 %v2141
        %2945 = vmatpush2.bf16.msra.mxu0 %v2140
        %2946 = vmatprep.subr.bf16.mxu0 %v2139
        %2947 = vmatpush2.bf16.msra.mxu0 %v2138
        %2948 = vmatprep.subr.bf16.mxu0 %v2137
        %2949 = vmatpush2.bf16.msra.mxu0 %v2136
        %2950 = vmatprep.subr.bf16.mxu0 %v2135
        %2951 = vmatpush2.bf16.msra.mxu0 %v2134
        %2952 = vmatprep.subr.bf16.mxu0 %v2133
        %2953 = vmatpush2.bf16.msra.mxu0 %v2132
        %2954 = vmatprep.mubr.bf16.mxu0 %v735
        %2955 = vmatmul.mubr.bf16.gmra.mxu0 %v721
        %v2956 = vpop.f32.mrf.mxu0
        %v2957 = vadd.f32 %v2916, %v2956
        %v2958 = vpop.f32.mrf.mxu0
        %v2959 = vadd.f32 %v2918, %v2958
        %v2960 = vpop.f32.mrf.mxu0
        %v2961 = vpop.f32.mrf.mxu0
        %2962 = vdwg.mxu0
        %2963 = vmatprep.subr.bf16.mxu0 %v2163
        %2964 = vmatpush1.bf16.msra.mxu0 %v2162
        %2965 = vmatprep.subr.bf16.mxu0 %v2161
        %2966 = vmatpush1.bf16.msra.mxu0 %v2160
        %2967 = vmatprep.subr.bf16.mxu0 %v2159
        %2968 = vmatpush1.bf16.msra.mxu0 %v2158
        %2969 = vmatprep.subr.bf16.mxu0 %v2157
        %2970 = vmatpush1.bf16.msra.mxu0 %v2156
        %2971 = vmatprep.subr.bf16.mxu0 %v2155
        %2972 = vmatpush1.bf16.msra.mxu0 %v2154
        %2973 = vmatprep.subr.bf16.mxu0 %v2153
        %2974 = vmatpush1.bf16.msra.mxu0 %v2152
        %2975 = vmatprep.subr.bf16.mxu0 %v2151
        %2976 = vmatpush1.bf16.msra.mxu0 %v2150
        %2977 = vmatprep.subr.bf16.mxu0 %v2149
        %2978 = vmatpush1.bf16.msra.mxu0 %v2148
        %2979 = vmatprep.subr.bf16.mxu0 %v2179
        %2980 = vmatpush2.bf16.msra.mxu0 %v2178
        %2981 = vmatprep.subr.bf16.mxu0 %v2177
        %2982 = vmatpush2.bf16.msra.mxu0 %v2176
        %2983 = vmatprep.subr.bf16.mxu0 %v2175
        %2984 = vmatpush2.bf16.msra.mxu0 %v2174
        %2985 = vmatprep.subr.bf16.mxu0 %v2173
        %2986 = vmatpush2.bf16.msra.mxu0 %v2172
        %2987 = vmatprep.subr.bf16.mxu0 %v2171
        %2988 = vmatpush2.bf16.msra.mxu0 %v2170
        %2989 = vmatprep.subr.bf16.mxu0 %v2169
        %2990 = vmatpush2.bf16.msra.mxu0 %v2168
        %2991 = vmatprep.subr.bf16.mxu0 %v2167
        %2992 = vmatpush2.bf16.msra.mxu0 %v2166
        %2993 = vmatprep.subr.bf16.mxu0 %v2165
        %2994 = vmatpush2.bf16.msra.mxu0 %v2164
        %2995 = vmatprep.mubr.bf16.mxu0 %v739
        %2996 = vmatmul.mubr.bf16.gmra.mxu0 %v737
        %v2997 = vpop.f32.mrf.mxu0
        %v2998 = vadd.f32 %v2957, %v2997
        %v2999 = vpop.f32.mrf.mxu0
        %v3000 = vadd.f32 %v2959, %v2999
        %v3001 = vpop.f32.mrf.mxu0
        %v3002 = vpop.f32.mrf.mxu0
        %3003 = vdwg.mxu0
        %3004 = vmatprep.subr.bf16.mxu0 %v2195
        %3005 = vmatpush1.bf16.msra.mxu0 %v2194
        %3006 = vmatprep.subr.bf16.mxu0 %v2193
        %3007 = vmatpush1.bf16.msra.mxu0 %v2192
        %3008 = vmatprep.subr.bf16.mxu0 %v2191
        %3009 = vmatpush1.bf16.msra.mxu0 %v2190
        %3010 = vmatprep.subr.bf16.mxu0 %v2189
        %3011 = vmatpush1.bf16.msra.mxu0 %v2188
        %3012 = vmatprep.subr.bf16.mxu0 %v2187
        %3013 = vmatpush1.bf16.msra.mxu0 %v2186
        %3014 = vmatprep.subr.bf16.mxu0 %v2185
        %3015 = vmatpush1.bf16.msra.mxu0 %v2184
        %3016 = vmatprep.subr.bf16.mxu0 %v2183
        %3017 = vmatpush1.bf16.msra.mxu0 %v2182
        %3018 = vmatprep.subr.bf16.mxu0 %v2181
        %3019 = vmatpush1.bf16.msra.mxu0 %v2180
        %3020 = vmatprep.subr.bf16.mxu0 %v2211
        %3021 = vmatpush2.bf16.msra.mxu0 %v2210
        %3022 = vmatprep.subr.bf16.mxu0 %v2209
        %3023 = vmatpush2.bf16.msra.mxu0 %v2208
        %3024 = vmatprep.subr.bf16.mxu0 %v2207
        %3025 = vmatpush2.bf16.msra.mxu0 %v2206
        %3026 = vmatprep.subr.bf16.mxu0 %v2205
        %3027 = vmatpush2.bf16.msra.mxu0 %v2204
        %3028 = vmatprep.subr.bf16.mxu0 %v2203
        %3029 = vmatpush2.bf16.msra.mxu0 %v2202
        %3030 = vmatprep.subr.bf16.mxu0 %v2201
        %3031 = vmatpush2.bf16.msra.mxu0 %v2200
        %3032 = vmatprep.subr.bf16.mxu0 %v2199
        %3033 = vmatpush2.bf16.msra.mxu0 %v2198
        %3034 = vmatprep.subr.bf16.mxu0 %v2197
        %3035 = vmatpush2.bf16.msra.mxu0 %v2196
        %3036 = vmatprep.mubr.bf16.mxu0 %v777
        %3037 = vmatmul.mubr.bf16.gmra.mxu0 %v763
        %v3038 = vpop.f32.mrf.mxu0
        %v3039 = vadd.f32 %v2998, %v3038
        %v3040 = vpop.f32.mrf.mxu0
        %v3041 = vadd.f32 %v3000, %v3040
        %v3042 = vpop.f32.mrf.mxu0
        %v3043 = vpop.f32.mrf.mxu0
        %3044 = vdwg.mxu0
        %3045 = vmatprep.subr.bf16.mxu0 %v2227
        %3046 = vmatpush1.bf16.msra.mxu0 %v2226
        %3047 = vmatprep.subr.bf16.mxu0 %v2225
        %3048 = vmatpush1.bf16.msra.mxu0 %v2224
        %3049 = vmatprep.subr.bf16.mxu0 %v2223
        %3050 = vmatpush1.bf16.msra.mxu0 %v2222
        %3051 = vmatprep.subr.bf16.mxu0 %v2221
        %3052 = vmatpush1.bf16.msra.mxu0 %v2220
        %3053 = vmatprep.subr.bf16.mxu0 %v2219
        %3054 = vmatpush1.bf16.msra.mxu0 %v2218
        %3055 = vmatprep.subr.bf16.mxu0 %v2217
        %3056 = vmatpush1.bf16.msra.mxu0 %v2216
        %3057 = vmatprep.subr.bf16.mxu0 %v2215
        %3058 = vmatpush1.bf16.msra.mxu0 %v2214
        %3059 = vmatprep.subr.bf16.mxu0 %v2213
        %3060 = vmatpush1.bf16.msra.mxu0 %v2212
        %3061 = vmatprep.subr.bf16.mxu0 %v2243
        %3062 = vmatpush2.bf16.msra.mxu0 %v2242
        %3063 = vmatprep.subr.bf16.mxu0 %v2241
        %3064 = vmatpush2.bf16.msra.mxu0 %v2240
        %3065 = vmatprep.subr.bf16.mxu0 %v2239
        %3066 = vmatpush2.bf16.msra.mxu0 %v2238
        %3067 = vmatprep.subr.bf16.mxu0 %v2237
        %3068 = vmatpush2.bf16.msra.mxu0 %v2236
        %3069 = vmatprep.subr.bf16.mxu0 %v2235
        %3070 = vmatpush2.bf16.msra.mxu0 %v2234
        %3071 = vmatprep.subr.bf16.mxu0 %v2233
        %3072 = vmatpush2.bf16.msra.mxu0 %v2232
        %3073 = vmatprep.subr.bf16.mxu0 %v2231
        %3074 = vmatpush2.bf16.msra.mxu0 %v2230
        %3075 = vmatprep.subr.bf16.mxu0 %v2229
        %3076 = vmatpush2.bf16.msra.mxu0 %v2228
        %3077 = vmatprep.mubr.bf16.mxu0 %v787
        %3078 = vmatmul.mubr.bf16.gmra.mxu0 %v785
        %v3079 = vpop.f32.mrf.mxu0
        %v3080 = vadd.f32 %v3039, %v3079
        %v3081 = vpop.f32.mrf.mxu0
        %v3082 = vadd.f32 %v3041, %v3081
        %v3083 = vpop.f32.mrf.mxu0
        %v3084 = vpop.f32.mrf.mxu0
        %3085 = vdwg.mxu0
        %3086 = vmatprep.subr.bf16.mxu0 %v2259
        %3087 = vmatpush1.bf16.msra.mxu0 %v2258
        %3088 = vmatprep.subr.bf16.mxu0 %v2257
        %3089 = vmatpush1.bf16.msra.mxu0 %v2256
        %3090 = vmatprep.subr.bf16.mxu0 %v2255
        %3091 = vmatpush1.bf16.msra.mxu0 %v2254
        %3092 = vmatprep.subr.bf16.mxu0 %v2253
        %3093 = vmatpush1.bf16.msra.mxu0 %v2252
        %3094 = vmatprep.subr.bf16.mxu0 %v2251
        %3095 = vmatpush1.bf16.msra.mxu0 %v2250
        %3096 = vmatprep.subr.bf16.mxu0 %v2249
        %3097 = vmatpush1.bf16.msra.mxu0 %v2248
        %3098 = vmatprep.subr.bf16.mxu0 %v2247
        %3099 = vmatpush1.bf16.msra.mxu0 %v2246
        %3100 = vmatprep.subr.bf16.mxu0 %v2245
        %3101 = vmatpush1.bf16.msra.mxu0 %v2244
        %3102 = vmatprep.subr.bf16.mxu0 %v2275
        %3103 = vmatpush2.bf16.msra.mxu0 %v2274
        %3104 = vmatprep.subr.bf16.mxu0 %v2273
        %3105 = vmatpush2.bf16.msra.mxu0 %v2272
        %3106 = vmatprep.subr.bf16.mxu0 %v2271
        %3107 = vmatpush2.bf16.msra.mxu0 %v2270
        %3108 = vmatprep.subr.bf16.mxu0 %v2269
        %3109 = vmatpush2.bf16.msra.mxu0 %v2268
        %3110 = vmatprep.subr.bf16.mxu0 %v2267
        %3111 = vmatpush2.bf16.msra.mxu0 %v2266
        %3112 = vmatprep.subr.bf16.mxu0 %v2265
        %3113 = vmatpush2.bf16.msra.mxu0 %v2264
        %3114 = vmatprep.subr.bf16.mxu0 %v2263
        %3115 = vmatpush2.bf16.msra.mxu0 %v2262
        %3116 = vmatprep.subr.bf16.mxu0 %v2261
        %3117 = vmatpush2.bf16.msra.mxu0 %v2260
        %3118 = vmatprep.mubr.bf16.mxu0 %v784
        %3119 = vmatmul.mubr.bf16.gmra.mxu0 %v770
        %v3120 = vpop.f32.mrf.mxu0
        %v3121 = vadd.f32 %v3080, %v3120
        %v3122 = vpop.f32.mrf.mxu0
        %v3123 = vadd.f32 %v3082, %v3122
        %v3124 = vpop.f32.mrf.mxu0
        %v3125 = vpop.f32.mrf.mxu0
        %3126 = vdwg.mxu0
        %3127 = vmatprep.subr.bf16.mxu0 %v2291
        %3128 = vmatpush1.bf16.msra.mxu0 %v2290
        %3129 = vmatprep.subr.bf16.mxu0 %v2289
        %3130 = vmatpush1.bf16.msra.mxu0 %v2288
        %3131 = vmatprep.subr.bf16.mxu0 %v2287
        %3132 = vmatpush1.bf16.msra.mxu0 %v2286
        %3133 = vmatprep.subr.bf16.mxu0 %v2285
        %3134 = vmatpush1.bf16.msra.mxu0 %v2284
        %3135 = vmatprep.subr.bf16.mxu0 %v2283
        %3136 = vmatpush1.bf16.msra.mxu0 %v2282
        %3137 = vmatprep.subr.bf16.mxu0 %v2281
        %3138 = vmatpush1.bf16.msra.mxu0 %v2280
        %3139 = vmatprep.subr.bf16.mxu0 %v2279
        %3140 = vmatpush1.bf16.msra.mxu0 %v2278
        %3141 = vmatprep.subr.bf16.mxu0 %v2277
        %3142 = vmatpush1.bf16.msra.mxu0 %v2276
        %3143 = vmatprep.subr.bf16.mxu0 %v2307
        %3144 = vmatpush2.bf16.msra.mxu0 %v2306
        %3145 = vmatprep.subr.bf16.mxu0 %v2305
        %3146 = vmatpush2.bf16.msra.mxu0 %v2304
        %3147 = vmatprep.subr.bf16.mxu0 %v2303
        %3148 = vmatpush2.bf16.msra.mxu0 %v2302
        %3149 = vmatprep.subr.bf16.mxu0 %v2301
        %3150 = vmatpush2.bf16.msra.mxu0 %v2300
        %3151 = vmatprep.subr.bf16.mxu0 %v2299
        %3152 = vmatpush2.bf16.msra.mxu0 %v2298
        %3153 = vmatprep.subr.bf16.mxu0 %v2297
        %3154 = vmatpush2.bf16.msra.mxu0 %v2296
        %3155 = vmatprep.subr.bf16.mxu0 %v2295
        %3156 = vmatpush2.bf16.msra.mxu0 %v2294
        %3157 = vmatprep.subr.bf16.mxu0 %v2293
        %3158 = vmatpush2.bf16.msra.mxu0 %v2292
        %3159 = vmatprep.mubr.bf16.mxu0 %v788
        %3160 = vmatmul.mubr.bf16.gmra.mxu0 %v786
        %v3161 = vpop.f32.mrf.mxu0
        %v3162 = vadd.f32 %v3121, %v3161
        %v3163 = vpop.f32.mrf.mxu0
        %v3164 = vadd.f32 %v3123, %v3163
        %v3165 = vpop.f32.mrf.mxu0
        %v3166 = vpop.f32.mrf.mxu0
        %3167 = vdwg.mxu0
        %3168 = vmatprep.subr.bf16.mxu0 %v2323
        %3169 = vmatpush1.bf16.msra.mxu0 %v2322
        %3170 = vmatprep.subr.bf16.mxu0 %v2321
        %3171 = vmatpush1.bf16.msra.mxu0 %v2320
        %3172 = vmatprep.subr.bf16.mxu0 %v2319
        %3173 = vmatpush1.bf16.msra.mxu0 %v2318
        %3174 = vmatprep.subr.bf16.mxu0 %v2317
        %3175 = vmatpush1.bf16.msra.mxu0 %v2316
        %3176 = vmatprep.subr.bf16.mxu0 %v2315
        %3177 = vmatpush1.bf16.msra.mxu0 %v2314
        %3178 = vmatprep.subr.bf16.mxu0 %v2313
        %3179 = vmatpush1.bf16.msra.mxu0 %v2312
        %3180 = vmatprep.subr.bf16.mxu0 %v2311
        %3181 = vmatpush1.bf16.msra.mxu0 %v2310
        %3182 = vmatprep.subr.bf16.mxu0 %v2309
        %3183 = vmatpush1.bf16.msra.mxu0 %v2308
        %3184 = vmatprep.subr.bf16.mxu0 %v2339
        %3185 = vmatpush2.bf16.msra.mxu0 %v2338
        %3186 = vmatprep.subr.bf16.mxu0 %v2337
        %3187 = vmatpush2.bf16.msra.mxu0 %v2336
        %3188 = vmatprep.subr.bf16.mxu0 %v2335
        %3189 = vmatpush2.bf16.msra.mxu0 %v2334
        %3190 = vmatprep.subr.bf16.mxu0 %v2333
        %3191 = vmatpush2.bf16.msra.mxu0 %v2332
        %3192 = vmatprep.subr.bf16.mxu0 %v2331
        %3193 = vmatpush2.bf16.msra.mxu0 %v2330
        %3194 = vmatprep.subr.bf16.mxu0 %v2329
        %3195 = vmatpush2.bf16.msra.mxu0 %v2328
        %3196 = vmatprep.subr.bf16.mxu0 %v2327
        %3197 = vmatpush2.bf16.msra.mxu0 %v2326
        %3198 = vmatprep.subr.bf16.mxu0 %v2325
        %3199 = vmatpush2.bf16.msra.mxu0 %v2324
        %3200 = vmatprep.mubr.bf16.mxu0 %v826
        %3201 = vmatmul.mubr.bf16.gmra.mxu0 %v812
        %v3202 = vpop.f32.mrf.mxu0
        %v3203 = vadd.f32 %v3162, %v3202
        %v3204 = vpop.f32.mrf.mxu0
        %v3205 = vadd.f32 %v3164, %v3204
        %v3206 = vpop.f32.mrf.mxu0
        %v3207 = vpop.f32.mrf.mxu0
        %3208 = vdwg.mxu0
        %3209 = vmatprep.subr.bf16.mxu0 %v2355
        %3210 = vmatpush1.bf16.msra.mxu0 %v2354
        %3211 = vmatprep.subr.bf16.mxu0 %v2353
        %3212 = vmatpush1.bf16.msra.mxu0 %v2352
        %3213 = vmatprep.subr.bf16.mxu0 %v2351
        %3214 = vmatpush1.bf16.msra.mxu0 %v2350
        %3215 = vmatprep.subr.bf16.mxu0 %v2349
        %3216 = vmatpush1.bf16.msra.mxu0 %v2348
        %3217 = vmatprep.subr.bf16.mxu0 %v2347
        %3218 = vmatpush1.bf16.msra.mxu0 %v2346
        %3219 = vmatprep.subr.bf16.mxu0 %v2345
        %3220 = vmatpush1.bf16.msra.mxu0 %v2344
        %3221 = vmatprep.subr.bf16.mxu0 %v2343
        %3222 = vmatpush1.bf16.msra.mxu0 %v2342
        %3223 = vmatprep.subr.bf16.mxu0 %v2341
        %3224 = vmatpush1.bf16.msra.mxu0 %v2340
        %3225 = vmatprep.subr.bf16.mxu0 %v2371
        %3226 = vmatpush2.bf16.msra.mxu0 %v2370
        %3227 = vmatprep.subr.bf16.mxu0 %v2369
        %3228 = vmatpush2.bf16.msra.mxu0 %v2368
        %3229 = vmatprep.subr.bf16.mxu0 %v2367
        %3230 = vmatpush2.bf16.msra.mxu0 %v2366
        %3231 = vmatprep.subr.bf16.mxu0 %v2365
        %3232 = vmatpush2.bf16.msra.mxu0 %v2364
        %3233 = vmatprep.subr.bf16.mxu0 %v2363
        %3234 = vmatpush2.bf16.msra.mxu0 %v2362
        %3235 = vmatprep.subr.bf16.mxu0 %v2361
        %3236 = vmatpush2.bf16.msra.mxu0 %v2360
        %3237 = vmatprep.subr.bf16.mxu0 %v2359
        %3238 = vmatpush2.bf16.msra.mxu0 %v2358
        %3239 = vmatprep.subr.bf16.mxu0 %v2357
        %3240 = vmatpush2.bf16.msra.mxu0 %v2356
        %3241 = vmatprep.mubr.bf16.mxu0 %v836
        %3242 = vmatmul.mubr.bf16.gmra.mxu0 %v834
        %v3243 = vpop.f32.mrf.mxu0
        %v3244 = vadd.f32 %v3203, %v3243
        %v3245 = vpop.f32.mrf.mxu0
        %v3246 = vadd.f32 %v3205, %v3245
        %v3247 = vpop.f32.mrf.mxu0
        %v3248 = vpop.f32.mrf.mxu0
        %3249 = vdwg.mxu0
        %3250 = vmatprep.subr.bf16.mxu0 %v2387
        %3251 = vmatpush1.bf16.msra.mxu0 %v2386
        %3252 = vmatprep.subr.bf16.mxu0 %v2385
        %3253 = vmatpush1.bf16.msra.mxu0 %v2384
        %3254 = vmatprep.subr.bf16.mxu0 %v2383
        %3255 = vmatpush1.bf16.msra.mxu0 %v2382
        %3256 = vmatprep.subr.bf16.mxu0 %v2381
        %3257 = vmatpush1.bf16.msra.mxu0 %v2380
        %3258 = vmatprep.subr.bf16.mxu0 %v2379
        %3259 = vmatpush1.bf16.msra.mxu0 %v2378
        %3260 = vmatprep.subr.bf16.mxu0 %v2377
        %3261 = vmatpush1.bf16.msra.mxu0 %v2376
        %3262 = vmatprep.subr.bf16.mxu0 %v2375
        %3263 = vmatpush1.bf16.msra.mxu0 %v2374
        %3264 = vmatprep.subr.bf16.mxu0 %v2373
        %3265 = vmatpush1.bf16.msra.mxu0 %v2372
        %3266 = vmatprep.subr.bf16.mxu0 %v2403
        %3267 = vmatpush2.bf16.msra.mxu0 %v2402
        %3268 = vmatprep.subr.bf16.mxu0 %v2401
        %3269 = vmatpush2.bf16.msra.mxu0 %v2400
        %3270 = vmatprep.subr.bf16.mxu0 %v2399
        %3271 = vmatpush2.bf16.msra.mxu0 %v2398
        %3272 = vmatprep.subr.bf16.mxu0 %v2397
        %3273 = vmatpush2.bf16.msra.mxu0 %v2396
        %3274 = vmatprep.subr.bf16.mxu0 %v2395
        %3275 = vmatpush2.bf16.msra.mxu0 %v2394
        %3276 = vmatprep.subr.bf16.mxu0 %v2393
        %3277 = vmatpush2.bf16.msra.mxu0 %v2392
        %3278 = vmatprep.subr.bf16.mxu0 %v2391
        %3279 = vmatpush2.bf16.msra.mxu0 %v2390
        %3280 = vmatprep.subr.bf16.mxu0 %v2389
        %3281 = vmatpush2.bf16.msra.mxu0 %v2388
        %3282 = vmatprep.mubr.bf16.mxu0 %v833
        %3283 = vmatmul.mubr.bf16.gmra.mxu0 %v819
        %v3284 = vpop.f32.mrf.mxu0
        %v3285 = vadd.f32 %v3244, %v3284
        %v3286 = vpop.f32.mrf.mxu0
        %v3287 = vadd.f32 %v3246, %v3286
        %v3288 = vpop.f32.mrf.mxu0
        %v3289 = vpop.f32.mrf.mxu0
        %3290 = vdwg.mxu0
        %3291 = vmatprep.subr.bf16.mxu0 %v2419
        %3292 = vmatpush1.bf16.msra.mxu0 %v2418
        %3293 = vmatprep.subr.bf16.mxu0 %v2417
        %3294 = vmatpush1.bf16.msra.mxu0 %v2416
        %3295 = vmatprep.subr.bf16.mxu0 %v2415
        %3296 = vmatpush1.bf16.msra.mxu0 %v2414
        %3297 = vmatprep.subr.bf16.mxu0 %v2413
        %3298 = vmatpush1.bf16.msra.mxu0 %v2412
        %3299 = vmatprep.subr.bf16.mxu0 %v2411
        %3300 = vmatpush1.bf16.msra.mxu0 %v2410
        %3301 = vmatprep.subr.bf16.mxu0 %v2409
        %3302 = vmatpush1.bf16.msra.mxu0 %v2408
        %3303 = vmatprep.subr.bf16.mxu0 %v2407
        %3304 = vmatpush1.bf16.msra.mxu0 %v2406
        %3305 = vmatprep.subr.bf16.mxu0 %v2405
        %3306 = vmatpush1.bf16.msra.mxu0 %v2404
        %3307 = vmatprep.subr.bf16.mxu0 %v2435
        %3308 = vmatpush2.bf16.msra.mxu0 %v2434
        %3309 = vmatprep.subr.bf16.mxu0 %v2433
        %3310 = vmatpush2.bf16.msra.mxu0 %v2432
        %3311 = vmatprep.subr.bf16.mxu0 %v2431
        %3312 = vmatpush2.bf16.msra.mxu0 %v2430
        %3313 = vmatprep.subr.bf16.mxu0 %v2429
        %3314 = vmatpush2.bf16.msra.mxu0 %v2428
        %3315 = vmatprep.subr.bf16.mxu0 %v2427
        %3316 = vmatpush2.bf16.msra.mxu0 %v2426
        %3317 = vmatprep.subr.bf16.mxu0 %v2425
        %3318 = vmatpush2.bf16.msra.mxu0 %v2424
        %3319 = vmatprep.subr.bf16.mxu0 %v2423
        %3320 = vmatpush2.bf16.msra.mxu0 %v2422
        %3321 = vmatprep.subr.bf16.mxu0 %v2421
        %3322 = vmatpush2.bf16.msra.mxu0 %v2420
        %3323 = vmatprep.mubr.bf16.mxu0 %v837
        %3324 = vmatmul.mubr.bf16.gmra.mxu0 %v835
        %v3325 = vpop.f32.mrf.mxu0
        %v3326 = vadd.f32 %v3285, %v3325
        %v3327 = vpop.f32.mrf.mxu0
        %v3328 = vadd.f32 %v3287, %v3327
        %v3329 = vpop.f32.mrf.mxu0
        %v3330 = vpop.f32.mrf.mxu0
        %3331 = vdwg.mxu0
        %3332 = vmatprep.subr.bf16.mxu0 0
        %3333 = vmatpush1.bf16.msra.mxu0 0
        %3334 = vmatprep.subr.bf16.mxu0 0
        %3335 = vmatpush1.bf16.msra.mxu0 0
        %3336 = vmatprep.subr.bf16.mxu0 0
        %3337 = vmatpush1.bf16.msra.mxu0 0
        %3338 = vmatprep.subr.bf16.mxu0 0
        %3339 = vmatpush1.bf16.msra.mxu0 0
        %3340 = vmatprep.subr.bf16.mxu0 %v2443
        %3341 = vmatpush1.bf16.msra.mxu0 %v2442
        %3342 = vmatprep.subr.bf16.mxu0 %v2441
        %3343 = vmatpush1.bf16.msra.mxu0 %v2440
        %3344 = vmatprep.subr.bf16.mxu0 %v2439
        %3345 = vmatpush1.bf16.msra.mxu0 %v2438
        %3346 = vmatprep.subr.bf16.mxu0 %v2437
        %3347 = vmatpush1.bf16.msra.mxu0 %v2436
        %3348 = vmatprep.subr.bf16.mxu0 0
        %3349 = vmatpush2.bf16.msra.mxu0 0
        %3350 = vmatprep.subr.bf16.mxu0 0
        %3351 = vmatpush2.bf16.msra.mxu0 0
        %3352 = vmatprep.subr.bf16.mxu0 0
        %3353 = vmatpush2.bf16.msra.mxu0 0
        %3354 = vmatprep.subr.bf16.mxu0 0
        %3355 = vmatpush2.bf16.msra.mxu0 0
        %3356 = vmatprep.subr.bf16.mxu0 0
        %3357 = vmatpush2.bf16.msra.mxu0 0
        %3358 = vmatprep.subr.bf16.mxu0 0
        %3359 = vmatpush2.bf16.msra.mxu0 0
        %3360 = vmatprep.subr.bf16.mxu0 0
        %3361 = vmatpush2.bf16.msra.mxu0 0
        %3362 = vmatprep.subr.bf16.mxu0 0
        %3363 = vmatpush2.bf16.msra.mxu0 0
        %3364 = vmatprep.mubr.bf16.mxu0 0
        %3365 = vmatmul.mubr.bf16.gmra.mxu0 %v2838
        %v3366 = vpop.f32.mrf.mxu0
        %v3367 = vadd.f32 %v3326, %v3366
        %v3368 = vpop.f32.mrf.mxu0
        %v3369 = vadd.f32 %v3328, %v3368
        %v3370 = vpop.f32.mrf.mxu0
        %v3371 = vpop.f32.mrf.mxu0
        %3372 = vdwg.mxu0
        %v3373 = vmax.f32 %v3367, 0.0
        %v3374 = vmax.f32 %v3369, 0.0
        %v3375 = vld [vmem:[%s272] sm:$0xff]
        %v3376 = vld [vmem:[%s272 + $0x8] sm:$0xff]
        %v3377 = vld [vmem:[%s272 + $0x10] sm:$0xff]
        %v3378 = vld [vmem:[%s272 + $0x18] sm:$0xff]
        %v3379 = vld [vmem:[%s272 + $0x20] sm:$0xff]
        %v3380 = vld [vmem:[%s272 + $0x28] sm:$0xff]
        %v3381 = vld [vmem:[%s272 + $0x30] sm:$0xff]
        %v3382 = vld [vmem:[%s272 + $0x38] sm:$0xff]
        %v3383 = vld [vmem:[%s272 + $0x40] sm:$0xff]
        %v3384 = vld [vmem:[%s272 + $0x48] sm:$0xff]
        %v3385 = vld [vmem:[%s272 + $0x50] sm:$0xff]
        %v3386 = vld [vmem:[%s272 + $0x58] sm:$0xff]
        %v3387 = vld [vmem:[%s272 + $0x60] sm:$0xff]
        %v3388 = vld [vmem:[%s272 + $0x68] sm:$0xff]
        %v3389 = vld [vmem:[%s272 + $0x70] sm:$0xff]
        %v3390 = vld [vmem:[%s272 + $0x78] sm:$0xff]
        %v3391 = vld [vmem:[%s272 + $0x80] sm:$0xff]
        %v3392 = vld [vmem:[%s272 + $0x88] sm:$0xff]
        %v3393 = vld [vmem:[%s272 + $0x90] sm:$0xff]
        %v3394 = vld [vmem:[%s272 + $0x98] sm:$0xff]
        %v3395 = vld [vmem:[%s272 + $0xa0] sm:$0xff]
        %v3396 = vld [vmem:[%s272 + $0xa8] sm:$0xff]
        %v3397 = vld [vmem:[%s272 + $0xb0] sm:$0xff]
        %v3398 = vld [vmem:[%s272 + $0xb8] sm:$0xff]
        %v3399 = vld [vmem:[%s272 + $0xc0] sm:$0xff]
        %v3400 = vld [vmem:[%s272 + $0xc8] sm:$0xff]
        %v3401 = vld [vmem:[%s272 + $0xd0] sm:$0xff]
        %v3402 = vld [vmem:[%s272 + $0xd8] sm:$0xff]
        %v3403 = vld [vmem:[%s272 + $0xe0] sm:$0xff]
        %v3404 = vld [vmem:[%s272 + $0xe8] sm:$0xff]
        %v3405 = vld [vmem:[%s272 + $0xf0] sm:$0xff]
        %v3406 = vld [vmem:[%s272 + $0xf8] sm:$0xff]
        %3407 = vmatprep.subr.mxu0 0.0
        %3408 = vmatpush1.msra.mxu0 %v3390
        %3409 = vmatprep.subr.mxu0 0.0
        %3410 = vmatpush1.msra.mxu0 %v3389
        %3411 = vmatprep.subr.mxu0 0.0
        %3412 = vmatpush1.msra.mxu0 %v3388
        %3413 = vmatprep.subr.mxu0 0.0
        %3414 = vmatpush1.msra.mxu0 %v3387
        %3415 = vmatprep.subr.mxu0 0.0
        %3416 = vmatpush1.msra.mxu0 %v3386
        %3417 = vmatprep.subr.mxu0 0.0
        %3418 = vmatpush1.msra.mxu0 %v3385
        %3419 = vmatprep.subr.mxu0 0.0
        %3420 = vmatpush1.msra.mxu0 %v3384
        %3421 = vmatprep.subr.mxu0 0.0
        %3422 = vmatpush1.msra.mxu0 %v3383
        %3423 = vmatprep.subr.mxu0 0.0
        %3424 = vmatpush1.msra.mxu0 %v3382
        %3425 = vmatprep.subr.mxu0 0.0
        %3426 = vmatpush1.msra.mxu0 %v3381
        %3427 = vmatprep.subr.mxu0 0.0
        %3428 = vmatpush1.msra.mxu0 %v3380
        %3429 = vmatprep.subr.mxu0 0.0
        %3430 = vmatpush1.msra.mxu0 %v3379
        %3431 = vmatprep.subr.mxu0 0.0
        %3432 = vmatpush1.msra.mxu0 %v3378
        %3433 = vmatprep.subr.mxu0 0.0
        %3434 = vmatpush1.msra.mxu0 %v3377
        %3435 = vmatprep.subr.mxu0 0.0
        %3436 = vmatpush1.msra.mxu0 %v3376
        %3437 = vmatprep.subr.mxu0 0.0
        %3438 = vmatpush1.msra.mxu0 %v3375
        %3439 = vmatprep.subr.mxu0 0.0
        %3440 = vmatpush2.msra.mxu0 %v3406
        %3441 = vmatprep.subr.mxu0 0.0
        %3442 = vmatpush2.msra.mxu0 %v3405
        %3443 = vmatprep.subr.mxu0 0.0
        %3444 = vmatpush2.msra.mxu0 %v3404
        %3445 = vmatprep.subr.mxu0 0.0
        %3446 = vmatpush2.msra.mxu0 %v3403
        %3447 = vmatprep.subr.mxu0 0.0
        %3448 = vmatpush2.msra.mxu0 %v3402
        %3449 = vmatprep.subr.mxu0 0.0
        %3450 = vmatpush2.msra.mxu0 %v3401
        %3451 = vmatprep.subr.mxu0 0.0
        %3452 = vmatpush2.msra.mxu0 %v3400
        %3453 = vmatprep.subr.mxu0 0.0
        %3454 = vmatpush2.msra.mxu0 %v3399
        %3455 = vmatprep.subr.mxu0 0.0
        %3456 = vmatpush2.msra.mxu0 %v3398
        %3457 = vmatprep.subr.mxu0 0.0
        %3458 = vmatpush2.msra.mxu0 %v3397
        %3459 = vmatprep.subr.mxu0 0.0
        %3460 = vmatpush2.msra.mxu0 %v3396
        %3461 = vmatprep.subr.mxu0 0.0
        %3462 = vmatpush2.msra.mxu0 %v3395
        %3463 = vmatprep.subr.mxu0 0.0
        %3464 = vmatpush2.msra.mxu0 %v3394
        %3465 = vmatprep.subr.mxu0 0.0
        %3466 = vmatpush2.msra.mxu0 %v3393
        %3467 = vmatprep.subr.mxu0 0.0
        %3468 = vmatpush2.msra.mxu0 %v3392
        %3469 = vmatprep.subr.mxu0 0.0
        %3470 = vmatpush2.msra.mxu0 %v3391
        %3471 = vmatprep.mubr.f32.mxu0 %v3374
        %3472 = vmatmul.mubr.f32.gmra.mxu0 %v3373
        %v3473 = vpop.f32.mrf.mxu0
        %v3474 = vadd.f32 0.0, %v3473
        %v3475 = vpop.f32.mrf.mxu0
        %3476 = vdwg.mxu0
        %vm3477 = vcmask 74752
        %3478 = vst.msk [vmem:[%s277] sm:$0x3] %vm3477, %v3474
        %p3479 = scmp.lt.s32.totalorder %s21, 3
        %s3480 = scalar_select %p3479, %s21, 3
        %s3481 = smul.addr %s3480, 2
        %s3482 = scalar_lea.vmem %s4, %s3481
        // Predicated region
        $region45: #{cnn_forward.3} parent=35 // pred_check
          %p3483 = pneg %p138
        $region46: #{cnn_forward.3} parent=35 // pred_check_branch
          %3485 = sbr.rel (%p3483) target = $region48
        $region47: #{cnn_forward.3} parent=35 // pred_region
          _
        $region48: #{cnn_forward.3} parent=35 // pred_fallthru
          _
      $region36: #{cnn_forward.3} parent=5 // pred_fallthru
        _
      %p3486 = scmp.le.s32.totalorder 2, %s16
      // Predicated region
      $region49: #{cnn_forward.3} parent=5 // pred_check
        %p3487 = pneg %p3486
      $region50: #{cnn_forward.3} parent=5 // pred_check_branch
        %3489 = sbr.rel (%p3487) target = $region52
      $region51: #{cnn_forward.3} parent=5 // pred_region
        %s3490 = ssub.s32 %s16, 2
        // Predicated region
        $region53: #{cnn_forward.3} parent=51 // pred_check
          %p3491 = pneg %p144
        $region54: #{cnn_forward.3} parent=51 // pred_check_branch
          %3493 = sbr.rel (%p3491) target = $region56
        $region55: #{cnn_forward.3} parent=51 // pred_region
          %p3494 = scmp.lt.s32.totalorder %s22, 3
          %s3495 = scalar_select %p3494, %s22, 3
          %s3496 = smul.addr %s3495, 2
          %s3497 = scalar_lea.vmem %s4, %s3496
        $region56: #{cnn_forward.3} parent=51 // pred_fallthru
          _
      $region52: #{cnn_forward.3} parent=5 // pred_fallthru
        _
    $region6: #{cnn_forward.3} parent=1 // loop_footer
      %s20 = sadd.s32 1, %s16
    $region7: #{cnn_forward.3} parent=1 // loop_footer_branch
      %15 = sbr.rel target = $region3
    $region8: #{cnn_forward.3} parent=1 // loop_exit
      _
    %3498 = vsyncpa [#allocation3], 1
    %s3499 = scalar_lea.sflag [#allocation3], 1
    %3500 = vsyncpa %s3499, 1
    %3501 = vsyncpa [#allocation5], 1
    %s3502 = scalar_lea.sflag [#allocation5], 1
    %3503 = vsyncpa %s3502, 1

// kernel: cnn_forward.2
$region0: #{cnn_forward.2}
  #allocation0 [shape = 'u32[]', space=smem, size = 0x4, offset = 0x4, fixed_abs, tag = 'smem constant byte address 0x4 - core index']
  #allocation1 [shape = 'u32[144,128]{1,0:T(1,128)}', space=vmem, size = 0x12000, scoped, tag = 'internal scratch']
  #allocation2 [shape = 'f32[4,8,8,32]{3,2,1,0:T(8,128)}', space=vmem, size = 0x20000, scoped, tag = 'scratch operand']
  #allocation3 [shape = 'f32[196,288]{1,0:T(8,128)}', space=vmem, size = 0x4b000, scoped, tag = 'scratch operand']
  %s0 = inlined_call_operand.vmem [shape: bf16[2,196,36], index: 0, kind: input, shape index: {}]
  %s1 = inlined_call_operand.hbm [shape: bf16[36,128], index: 1, kind: input, shape index: {}]
  %s2 = inlined_call_operand.hbm [shape: f32[1,32], index: 2, kind: input, shape index: {}]
  %s3 = inlined_call_operand.vmem [shape: bf16[288,64], index: 3, kind: input, shape index: {}]
  %s4 = inlined_call_operand.hbm [shape: f32[1,64], index: 4, kind: input, shape index: {}]
  %s5 = inlined_call_operand.vmem [shape: bf16[2,49,64], index: 5, kind: output, shape index: {}]
  %s6 = sld [smem:[#allocation0]]
  $region65: #{cnn_forward.2} parent=0
    _
  %s8 = ssub.s32 1, %s6
  %s9 = scalar_select 0, %s8, %s6
  $region1: #{cnn_forward.2} parent=0
    #allocation4 [shape = 'u8[10240]{0}', space=vmem, size = 0x2800, scoped, tag = 'input window, operand 1, single buffered']
    #allocation5 [shape = 's32[2]{0}', space=sflag, size = 0x8, scoped, tag = 'scoped memory for cnn_forward.2']
    #allocation6 [shape = 'u8[512]{0}', space=vmem, size = 0x400, scoped, tag = 'input window, operand 2, single buffered']
    #allocation7 [shape = 's32[1]{0}', space=sflag, size = 0x4, scoped, tag = 'scoped memory for cnn_forward.2']
    #allocation8 [shape = 'u8[512]{0}', space=vmem, size = 0x400, scoped, tag = 'input window, operand 4, single buffered']
    %10 = vsyncpa [#allocation5], 0
    %11 = vsyncpa [#allocation7], 0
    loop: start=0, step=1, limit=4
    $region2: #{cnn_forward.2} parent=1 // loop_pre_header
      _
    $region3: #{cnn_forward.2} parent=1 // loop_header
      %s13 = sphi 0, %s17
      %p14 = scmp.ge.s32.totalorder %s13, 4
      %s23 = sphi 0, %s25
      %s26 = sphi 0, %s23
      %s27 = sphi 0, %s26
      %s43 = sphi 0, %s27
      %s47 = sphi 0, %s47
      %s49 = sphi 0, %s47
      %s50 = sphi 0, %s49
      %s64 = sphi 0, %s50
      %s68 = sphi 0, %s68
      %s70 = sphi 0, %s68
      %s71 = sphi 0, %s70
      %s85 = sphi 0, %s71
      %s89 = sphi 0, %s89
      %s91 = sphi 0, %s89
      %s92 = sphi 0, %s91
      %s106 = sphi 0, %s92
      %s110 = sphi 0, %s110
      %s112 = sphi 0, %s110
      %s113 = sphi 0, %s112
      %s127 = sphi 0, %s113
      %s133 = sphi 0, %s135
      %s136 = sphi 0, %s133
      %s137 = sphi 0, %s136
      %s153 = sphi 0, %s137
    $region4: #{cnn_forward.2} parent=1 // loop_header_branch
      %16 = sbr.rel (%p14) target = $region8
    $region5: #{cnn_forward.2} parent=1 // loop_body
      %s18 = ssub.s32 %s13, 1
      %s19 = ssub.s32 %s13, 2
      %s20 = sadd.s32 %s13, 1
      %s21 = ssub.s32 %s13, %s20
      %p22 = scmp.eq.s32.totalorder %s21, 0
      %s24 = sadd.s32 %s23, 1
      %s25 = scalar_select %p22, %s23, %s24
      %p28 = pneg %p22
      %p29 = scmp.eq.s32.totalorder %s13, 1
      %p30 = por %p28, %p29
      %p31 = scmp.ne.s32.totalorder %s23, %s26
      %p32 = scmp.eq.s32.totalorder %s13, 0
      %p33 = por %p31, %p32
      %p34 = scmp.ne.s32.totalorder %s23, %s26
      %p35 = scmp.eq.s32.totalorder %s18, 1
      %p36 = por %p34, %p35
      %p37 = scmp.ne.s32.totalorder %s26, %s27
      %p38 = scmp.eq.s32.totalorder %s18, 0
      %p39 = por %p37, %p38
      %p40 = scmp.ne.s32.totalorder %s26, %s27
      %p41 = scmp.eq.s32.totalorder %s19, 1
      %p42 = por %p40, %p41
      %p44 = scmp.ne.s32.totalorder %s27, %s43
      %p45 = scmp.eq.s32.totalorder %s19, 0
      %p46 = por %p44, %p45
      %s48 = sadd.s32 %s47, 1
      %p51 = scmp.eq.s32.totalorder %s13, 1
      %p52 = scmp.ne.s32.totalorder %s47, %s49
      %p53 = scmp.eq.s32.totalorder %s13, 0
      %p54 = por %p52, %p53
      %p55 = scmp.ne.s32.totalorder %s47, %s49
      %p56 = scmp.eq.s32.totalorder %s18, 1
      %p57 = por %p55, %p56
      %p58 = scmp.ne.s32.totalorder %s49, %s50
      %p59 = scmp.eq.s32.totalorder %s18, 0
      %p60 = por %p58, %p59
      %p61 = scmp.ne.s32.totalorder %s49, %s50
      %p62 = scmp.eq.s32.totalorder %s19, 1
      %p63 = por %p61, %p62
      %p65 = scmp.ne.s32.totalorder %s50, %s64
      %p66 = scmp.eq.s32.totalorder %s19, 0
      %p67 = por %p65, %p66
      %s69 = sadd.s32 %s68, 1
      %p72 = scmp.eq.s32.totalorder %s13, 1
      %p73 = scmp.ne.s32.totalorder %s68, %s70
      %p74 = scmp.eq.s32.totalorder %s13, 0
      %p75 = por %p73, %p74
      %p76 = scmp.ne.s32.totalorder %s68, %s70
      %p77 = scmp.eq.s32.totalorder %s18, 1
      %p78 = por %p76, %p77
      %p79 = scmp.ne.s32.totalorder %s70, %s71
      %p80 = scmp.eq.s32.totalorder %s18, 0
      %p81 = por %p79, %p80
      %p82 = scmp.ne.s32.totalorder %s70, %s71
      %p83 = scmp.eq.s32.totalorder %s19, 1
      %p84 = por %p82, %p83
      %p86 = scmp.ne.s32.totalorder %s71, %s85
      %p87 = scmp.eq.s32.totalorder %s19, 0
      %p88 = por %p86, %p87
      %s90 = sadd.s32 %s89, 1
      %p93 = scmp.eq.s32.totalorder %s13, 1
      %p94 = scmp.ne.s32.totalorder %s89, %s91
      %p95 = scmp.eq.s32.totalorder %s13, 0
      %p96 = por %p94, %p95
      %p97 = scmp.ne.s32.totalorder %s89, %s91
      %p98 = scmp.eq.s32.totalorder %s18, 1
      %p99 = por %p97, %p98
      %p100 = scmp.ne.s32.totalorder %s91, %s92
      %p101 = scmp.eq.s32.totalorder %s18, 0
      %p102 = por %p100, %p101
      %p103 = scmp.ne.s32.totalorder %s91, %s92
      %p104 = scmp.eq.s32.totalorder %s19, 1
      %p105 = por %p103, %p104
      %p107 = scmp.ne.s32.totalorder %s92, %s106
      %p108 = scmp.eq.s32.totalorder %s19, 0
      %p109 = por %p107, %p108
      %s111 = sadd.s32 %s110, 1
      %p114 = scmp.eq.s32.totalorder %s13, 1
      %p115 = scmp.ne.s32.totalorder %s110, %s112
      %p116 = scmp.eq.s32.totalorder %s13, 0
      %p117 = por %p115, %p116
      %p118 = scmp.ne.s32.totalorder %s110, %s112
      %p119 = scmp.eq.s32.totalorder %s18, 1
      %p120 = por %p118, %p119
      %p121 = scmp.ne.s32.totalorder %s112, %s113
      %p122 = scmp.eq.s32.totalorder %s18, 0
      %p123 = por %p121, %p122
      %p124 = scmp.ne.s32.totalorder %s112, %s113
      %p125 = scmp.eq.s32.totalorder %s19, 1
      %p126 = por %p124, %p125
      %p128 = scmp.ne.s32.totalorder %s113, %s127
      %p129 = scmp.eq.s32.totalorder %s19, 0
      %p130 = por %p128, %p129
      %s131 = ssub.s32 %s13, %s20
      %p132 = scmp.eq.s32.totalorder %s131, 0
      %s134 = sadd.s32 %s133, 1
      %s135 = scalar_select %p132, %s133, %s134
      %p138 = pneg %p132
      %p139 = scmp.eq.s32.totalorder %s13, 1
      %p140 = por %p138, %p139
      %p141 = scmp.ne.s32.totalorder %s133, %s136
      %p142 = scmp.eq.s32.totalorder %s13, 0
      %p143 = por %p141, %p142
      %p144 = scmp.ne.s32.totalorder %s133, %s136
      %p145 = scmp.eq.s32.totalorder %s18, 1
      %p146 = por %p144, %p145
      %p147 = scmp.ne.s32.totalorder %s136, %s137
      %p148 = scmp.eq.s32.totalorder %s18, 0
      %p149 = por %p147, %p148
      %p150 = scmp.ne.s32.totalorder %s136, %s137
      %p151 = scmp.eq.s32.totalorder %s19, 1
      %p152 = por %p150, %p151
      %p154 = scmp.ne.s32.totalorder %s137, %s153
      %p155 = scmp.eq.s32.totalorder %s19, 0
      %p156 = por %p154, %p155
      %p157 = scmp.le.s32.totalorder 1, %s13
      %p158 = scmp.lt.s32.totalorder %s13, 3
      %p159 = pnand %p157, %p158
      %p160 = pneg %p159
      // Predicated region
      $region9: #{cnn_forward.2} parent=5 // pred_check
        _
      $region10: #{cnn_forward.2} parent=5 // pred_check_branch
        %162 = sbr.rel (%p159) target = $region12
      $region11: #{cnn_forward.2} parent=5 // pred_region
        %s163 = ssub.s32 %s13, 1
        // Predicated region
        $region13: #{cnn_forward.2} parent=11 // pred_check
          %p164 = pneg %p60
        $region14: #{cnn_forward.2} parent=11 // pred_check_branch
          %166 = sbr.rel (%p164) target = $region16
        $region15: #{cnn_forward.2} parent=11 // pred_region
          %s168 = ssub.s32 320, 320
          %169 = vsyncadd [#allocation5], %s168
          %s170 = sshll.u32 [#allocation4], 4
          %s171 = int_to_ptr.vmem [resolvable:$true] %s170
          %176 = dma.hbm_to_vmem [thread:$0]  %s1, 320, %s171, [#allocation5], 64, 64, 4
        $region16: #{cnn_forward.2} parent=11 // pred_fallthru
          _
        // Predicated region
        $region17: #{cnn_forward.2} parent=11 // pred_check
          %p177 = pneg %p81
        $region18: #{cnn_forward.2} parent=11 // pred_check_branch
          %179 = sbr.rel (%p177) target = $region20
        $region19: #{cnn_forward.2} parent=11 // pred_region
          %s181 = ssub.s32 16, 16
          %182 = vsyncadd [#allocation7], %s181
          %s184 = sshll.u32 [#allocation6], 4
          %s185 = int_to_ptr.vmem [resolvable:$true] %s184
          %187 = dma.hbm_to_vmem [thread:$0]  %s2, 16, %s185, [#allocation7]
        $region20: #{cnn_forward.2} parent=11 // pred_fallthru
          _
        // Predicated region
        $region21: #{cnn_forward.2} parent=11 // pred_check
          %p188 = pneg %p102
        $region22: #{cnn_forward.2} parent=11 // pred_check_branch
          %190 = sbr.rel (%p188) target = $region24
        $region23: #{cnn_forward.2} parent=11 // pred_region
          _
        $region24: #{cnn_forward.2} parent=11 // pred_fallthru
          _
        // Predicated region
        $region25: #{cnn_forward.2} parent=11 // pred_check
          %p191 = pneg %p123
        $region26: #{cnn_forward.2} parent=11 // pred_check_branch
          %193 = sbr.rel (%p191) target = $region28
        $region27: #{cnn_forward.2} parent=11 // pred_region
          %s195 = ssub.s32 16, 16
          %196 = vsyncadd [#allocation7], %s195
          %s198 = sshll.u32 [#allocation8], 4
          %s199 = int_to_ptr.vmem [resolvable:$true] %s198
          %201 = dma.hbm_to_vmem [thread:$0]  %s4, 16, %s199, [#allocation7]
        $region28: #{cnn_forward.2} parent=11 // pred_fallthru
          _
      $region12: #{cnn_forward.2} parent=5 // pred_fallthru
        _
      %p202 = scmp.lt.s32.totalorder %s13, 2
      // Predicated region
      $region29: #{cnn_forward.2} parent=5 // pred_check
        %p203 = pneg %p202
      $region30: #{cnn_forward.2} parent=5 // pred_check_branch
        %205 = sbr.rel (%p203) target = $region32
      $region31: #{cnn_forward.2} parent=5 // pred_region
        // Predicated region
        $region33: #{cnn_forward.2} parent=31 // pred_check
          %p206 = pneg %p33
        $region34: #{cnn_forward.2} parent=31 // pred_check_branch
          %208 = sbr.rel (%p206) target = $region36
        $region35: #{cnn_forward.2} parent=31 // pred_region
          %p209 = scmp.lt.s32.totalorder %s13, 1
          %s210 = scalar_select %p209, %s13, 1
          %s211 = smul.addr %s210, 25
          %s212 = smul.addr %s211, 4
          %s213 = scalar_lea.vmem %s0, %s212
        $region36: #{cnn_forward.2} parent=31 // pred_fallthru
          _
      $region32: #{cnn_forward.2} parent=5 // pred_fallthru
        _
      %p214 = scmp.le.s32.totalorder 1, %s13
      %p215 = scmp.lt.s32.totalorder %s13, 3
      %p216 = pnand %p214, %p215
      %p217 = pneg %p216
      // Predicated region
      $region37: #{cnn_forward.2} parent=5 // pred_check
        _
      $region38: #{cnn_forward.2} parent=5 // pred_check_branch
        %219 = sbr.rel (%p216) target = $region40
      $region39: #{cnn_forward.2} parent=5 // pred_region
        %s220 = ssub.s32 %s13, 1
        // Predicated region
        $region41: #{cnn_forward.2} parent=39 // pred_check
          %p221 = pneg %p60
        $region42: #{cnn_forward.2} parent=39 // pred_check_branch
          %223 = sbr.rel (%p221) target = $region44
        $region43: #{cnn_forward.2} parent=39 // pred_region
          %224 = dma.done [#allocation5], 320
        $region44: #{cnn_forward.2} parent=39 // pred_fallthru
          _
        // Predicated region
        $region45: #{cnn_forward.2} parent=39 // pred_check
          %p225 = pneg %p81
        $region46: #{cnn_forward.2} parent=39 // pred_check_branch
          %227 = sbr.rel (%p225) target = $region48
        $region47: #{cnn_forward.2} parent=39 // pred_region
          %228 = dma.done [#allocation7], 16
        $region48: #{cnn_forward.2} parent=39 // pred_fallthru
          _
        // Predicated region
        $region49: #{cnn_forward.2} parent=39 // pred_check
          %p229 = pneg %p123
        $region50: #{cnn_forward.2} parent=39 // pred_check_branch
          %231 = sbr.rel (%p229) target = $region52
        $region51: #{cnn_forward.2} parent=39 // pred_region
          %232 = dma.done [#allocation7], 16
        $region52: #{cnn_forward.2} parent=39 // pred_fallthru
          _
        %p233 = scmp.lt.s32.totalorder %s18, 1
        %s234 = scalar_select %p233, %s18, 1
        %s235 = smul.addr %s234, 25
        %s236 = smul.addr %s235, 4
        %s237 = scalar_lea.vmem %s0, %s236
        %p238 = pneg %p39
        %p239 = pneg %p36
        %p240 = pneg %p60
        %p241 = pneg %p57
        %p242 = pneg %p81
        %p243 = pneg %p78
        %p244 = pneg %p102
        %p245 = pneg %p99
        %p246 = pneg %p123
        %p247 = pneg %p120
        %p248 = pneg %p149
        %p249 = pneg %p146
        %p250 = scmp.lt.s32.totalorder %s18, 1
        %s251 = scalar_select %p250, %s18, 1
        %s252 = smul.addr %s251, 7
        %s253 = smul.addr %s252, 4
        %s254 = scalar_lea.vmem %s5, %s253
        %p255 = scmp.lt.s32.totalorder %s18, 1
        %s256 = scalar_select %p255, %s18, 1
        %s257 = smul.addr %s256, 25
        %s258 = smul.addr %s257, 4
        %s259 = scalar_lea.vmem %s0, %s258
        %p260 = scmp.lt.s32.totalorder %s18, 1
        %s261 = scalar_select %p260, %s18, 1
        %s262 = smul.addr %s261, 7
        %s263 = smul.addr %s262, 4
        %s264 = scalar_lea.vmem %s5, %s263
        %v266 = vld [vmem:[%s259] sm:$0xf]
        %v267 = vld [vmem:[%s259 + $0x4] sm:$0xf]
        %v268 = vld [vmem:[%s259 + $0x8] sm:$0xf]
        %v269 = vld [vmem:[%s259 + $0xc] sm:$0xf]
        %v270 = vld [vmem:[%s259 + $0x10] sm:$0xf]
        %v271 = vld [vmem:[%s259 + $0x14] sm:$0xf]
        %v272 = vld [vmem:[%s259 + $0x18] sm:$0xf]
        %v273 = vld [vmem:[%s259 + $0x1c] sm:$0xf]
        %v274 = vld [vmem:[%s259 + $0x20] sm:$0xf]
        %v275 = vld [vmem:[%s259 + $0x24] sm:$0xf]
        %v276 = vld [vmem:[%s259 + $0x28] sm:$0xf]
        %v277 = vld [vmem:[%s259 + $0x2c] sm:$0xf]
        %v278 = vld [vmem:[%s259 + $0x30] sm:$0xf]
        %v279 = vld [vmem:[%s259 + $0x34] sm:$0xf]
        %v280 = vld [vmem:[%s259 + $0x38] sm:$0xf]
        %v281 = vld [vmem:[%s259 + $0x3c] sm:$0xf]
        %v282 = vld [vmem:[%s259 + $0x40] sm:$0xf]
        %v283 = vld [vmem:[%s259 + $0x44] sm:$0xf]
        %v284 = vld [vmem:[%s259 + $0x48] sm:$0xf]
        %v285 = vld [vmem:[%s259 + $0x4c] sm:$0xf]
        %v286 = vld [vmem:[%s259 + $0x50] sm:$0xf]
        %v287 = vld [vmem:[%s259 + $0x54] sm:$0xf]
        %v288 = vld [vmem:[%s259 + $0x58] sm:$0xf]
        %v289 = vld [vmem:[%s259 + $0x5c] sm:$0xf]
        %v290 = vld [vmem:[%s259 + $0x60] sm:$0x3]
        %v291 = vld [vmem:[#allocation4] sm:$0xf]
        %v292 = vld [vmem:[#allocation4 + $0x4] sm:$0xf]
        %v293 = vld [vmem:[#allocation4 + $0x8] sm:$0xf]
        %v294 = vld [vmem:[#allocation4 + $0xc] sm:$0xf]
        %v295 = vld [vmem:[#allocation4 + $0x10] sm:$0x3]
        %v321 = vunpack.c.l.b16 %v266
        %v322 = vunpack.c.l.b16 %v267
        %v323 = vunpack.c.l.b16 %v268
        %v324 = vunpack.c.l.b16 %v269
        %v325 = vunpack.c.l.b16 %v270
        %v326 = vunpack.c.l.b16 %v271
        %v327 = vunpack.c.l.b16 %v272
        %v328 = vunpack.c.l.b16 %v273
        %v329 = vunpack.c.l.b16 %v274
        %v330 = vunpack.c.l.b16 %v275
        %v331 = vunpack.c.l.b16 %v276
        %v332 = vunpack.c.l.b16 %v277
        %v333 = vunpack.c.l.b16 %v278
        %v334 = vunpack.c.l.b16 %v279
        %v335 = vunpack.c.l.b16 %v280
        %v336 = vunpack.c.l.b16 %v281
        %v337 = vunpack.c.l.b16 %v282
        %v338 = vunpack.c.l.b16 %v283
        %v339 = vunpack.c.l.b16 %v284
        %v340 = vunpack.c.l.b16 %v285
        %v341 = vunpack.c.l.b16 %v286
        %v342 = vunpack.c.l.b16 %v287
        %v343 = vunpack.c.l.b16 %v288
        %v344 = vunpack.c.l.b16 %v289
        %v345 = vunpack.c.l.b16 %v290
        %v346 = vpack.c.b16 %v322, %v321
        %v347 = vpack.c.b16 %v324, %v323
        %v348 = vpack.c.b16 %v326, %v325
        %v349 = vpack.c.b16 %v328, %v327
        %v350 = vpack.c.b16 %v330, %v329
        %v351 = vpack.c.b16 %v332, %v331
        %v352 = vpack.c.b16 %v334, %v333
        %v353 = vpack.c.b16 %v336, %v335
        %v354 = vpack.c.b16 %v338, %v337
        %v355 = vpack.c.b16 %v340, %v339
        %v356 = vpack.c.b16 %v342, %v341
        %v357 = vpack.c.b16 %v344, %v343
        %v358 = vpack.c.b16 %v345, %v345
        %v364 = vunpack.c.l.b16 %v291
        %v365 = vunpack.c.l.b16 %v292
        %v366 = vunpack.c.l.b16 %v293
        %v367 = vunpack.c.l.b16 %v294
        %v368 = vunpack.c.l.b16 %v295
        %v369 = vpack.c.b16 %v365, %v364
        %v370 = vpack.c.b16 %v367, %v366
        %v371 = vpack.c.b16 %v368, %v368
        %vm374 = vcmask 293888
        %v376 = vsel %vm374, %v346, 0
        %v379 = vsel %vm374, %v347, 0
        %v382 = vsel %vm374, %v348, 0
        %v385 = vsel %vm374, %v349, 0
        %v388 = vsel %vm374, %v350, 0
        %v391 = vsel %vm374, %v351, 0
        %v394 = vsel %vm374, %v352, 0
        %v397 = vsel %vm374, %v353, 0
        %v400 = vsel %vm374, %v354, 0
        %v403 = vsel %vm374, %v355, 0
        %v406 = vsel %vm374, %v356, 0
        %v409 = vsel %vm374, %v357, 0
        %v412 = vsel %vm374, %v358, 0
        %vm414 = vcmask 1041408
        %v416 = vsel %vm414, %v371, 0
        %418 = vmatprep.subr.bf16.mxu0 0
        %419 = vmatpush1.bf16.msra.mxu0 0
        %420 = vmatprep.subr.bf16.mxu0 0
        %421 = vmatpush1.bf16.msra.mxu0 0
        %422 = vmatprep.subr.bf16.mxu0 0
        %423 = vmatpush1.bf16.msra.mxu0 0
        %424 = vmatprep.subr.bf16.mxu0 0
        %425 = vmatpush1.bf16.msra.mxu0 0
        %426 = vmatprep.subr.bf16.mxu0 0
        %427 = vmatpush1.bf16.msra.mxu0 0
        %428 = vmatprep.subr.bf16.mxu0 0
        %429 = vmatpush1.bf16.msra.mxu0 %v416
        %430 = vmatprep.subr.bf16.mxu0 0
        %431 = vmatpush1.bf16.msra.mxu0 %v370
        %432 = vmatprep.subr.bf16.mxu0 0
        %433 = vmatpush1.bf16.msra.mxu0 %v369
        %434 = vmatprep.subr.bf16.mxu0 0
        %435 = vmatpush2.bf16.msra.mxu0 0
        %436 = vmatprep.subr.bf16.mxu0 0
        %437 = vmatpush2.bf16.msra.mxu0 0
        %438 = vmatprep.subr.bf16.mxu0 0
        %439 = vmatpush2.bf16.msra.mxu0 0
        %440 = vmatprep.subr.bf16.mxu0 0
        %441 = vmatpush2.bf16.msra.mxu0 0
        %442 = vmatprep.subr.bf16.mxu0 0
        %443 = vmatpush2.bf16.msra.mxu0 0
        %444 = vmatprep.subr.bf16.mxu0 0
        %445 = vmatpush2.bf16.msra.mxu0 0
        %446 = vmatprep.subr.bf16.mxu0 0
        %447 = vmatpush2.bf16.msra.mxu0 0
        %448 = vmatprep.subr.bf16.mxu0 0
        %449 = vmatpush2.bf16.msra.mxu0 0
        %450 = vmatprep.mubr.bf16.mxu0 0
        %451 = vmatmul.mubr.bf16.gmra.mxu0 %v376
        %v452 = vpop.f32.mrf.mxu0
        %v453 = vadd.f32 0.0, %v452
        %v454 = vpop.f32.mrf.mxu0
        %v455 = vpop.f32.mrf.mxu0
        %v456 = vadd.f32 0.0, %v455
        %v457 = vpop.f32.mrf.mxu0
        %458 = vmatprep.mubr.bf16.mxu0 0
        %459 = vmatmul.mubr.bf16.gmra.mxu0 %v379
        %v460 = vpop.f32.mrf.mxu0
        %v461 = vadd.f32 0.0, %v460
        %v462 = vpop.f32.mrf.mxu0
        %v463 = vpop.f32.mrf.mxu0
        %v464 = vadd.f32 0.0, %v463
        %v465 = vpop.f32.mrf.mxu0
        %466 = vmatprep.mubr.bf16.mxu0 0
        %467 = vmatmul.mubr.bf16.gmra.mxu0 %v382
        %v468 = vpop.f32.mrf.mxu0
        %v469 = vadd.f32 0.0, %v468
        %v470 = vpop.f32.mrf.mxu0
        %v471 = vpop.f32.mrf.mxu0
        %v472 = vadd.f32 0.0, %v471
        %v473 = vpop.f32.mrf.mxu0
        %474 = vmatprep.mubr.bf16.mxu0 0
        %475 = vmatmul.mubr.bf16.gmra.mxu0 %v385
        %v476 = vpop.f32.mrf.mxu0
        %v477 = vadd.f32 0.0, %v476
        %v478 = vpop.f32.mrf.mxu0
        %v479 = vpop.f32.mrf.mxu0
        %v480 = vadd.f32 0.0, %v479
        %v481 = vpop.f32.mrf.mxu0
        %482 = vmatprep.mubr.bf16.mxu0 0
        %483 = vmatmul.mubr.bf16.gmra.mxu0 %v388
        %v484 = vpop.f32.mrf.mxu0
        %v485 = vadd.f32 0.0, %v484
        %v486 = vpop.f32.mrf.mxu0
        %v487 = vpop.f32.mrf.mxu0
        %v488 = vadd.f32 0.0, %v487
        %v489 = vpop.f32.mrf.mxu0
        %490 = vmatprep.mubr.bf16.mxu0 0
        %491 = vmatmul.mubr.bf16.gmra.mxu0 %v391
        %v492 = vpop.f32.mrf.mxu0
        %v493 = vadd.f32 0.0, %v492
        %v494 = vpop.f32.mrf.mxu0
        %v495 = vpop.f32.mrf.mxu0
        %v496 = vadd.f32 0.0, %v495
        %v497 = vpop.f32.mrf.mxu0
        %498 = vmatprep.mubr.bf16.mxu0 0
        %499 = vmatmul.mubr.bf16.gmra.mxu0 %v394
        %v500 = vpop.f32.mrf.mxu0
        %v501 = vadd.f32 0.0, %v500
        %v502 = vpop.f32.mrf.mxu0
        %v503 = vpop.f32.mrf.mxu0
        %v504 = vadd.f32 0.0, %v503
        %v505 = vpop.f32.mrf.mxu0
        %506 = vmatprep.mubr.bf16.mxu0 0
        %507 = vmatmul.mubr.bf16.gmra.mxu0 %v397
        %v508 = vpop.f32.mrf.mxu0
        %v509 = vadd.f32 0.0, %v508
        %v510 = vpop.f32.mrf.mxu0
        %v511 = vpop.f32.mrf.mxu0
        %v512 = vadd.f32 0.0, %v511
        %v513 = vpop.f32.mrf.mxu0
        %514 = vmatprep.mubr.bf16.mxu0 0
        %515 = vmatmul.mubr.bf16.gmra.mxu0 %v400
        %v516 = vpop.f32.mrf.mxu0
        %v517 = vadd.f32 0.0, %v516
        %v518 = vpop.f32.mrf.mxu0
        %v519 = vpop.f32.mrf.mxu0
        %v520 = vadd.f32 0.0, %v519
        %v521 = vpop.f32.mrf.mxu0
        %522 = vmatprep.mubr.bf16.mxu0 0
        %523 = vmatmul.mubr.bf16.gmra.mxu0 %v403
        %v524 = vpop.f32.mrf.mxu0
        %v525 = vadd.f32 0.0, %v524
        %v526 = vpop.f32.mrf.mxu0
        %v527 = vpop.f32.mrf.mxu0
        %v528 = vadd.f32 0.0, %v527
        %v529 = vpop.f32.mrf.mxu0
        %530 = vmatprep.mubr.bf16.mxu0 0
        %531 = vmatmul.mubr.bf16.gmra.mxu0 %v406
        %v532 = vpop.f32.mrf.mxu0
        %v533 = vadd.f32 0.0, %v532
        %v534 = vpop.f32.mrf.mxu0
        %v535 = vpop.f32.mrf.mxu0
        %v536 = vadd.f32 0.0, %v535
        %v537 = vpop.f32.mrf.mxu0
        %538 = vmatprep.mubr.bf16.mxu0 0
        %539 = vmatmul.mubr.bf16.gmra.mxu0 %v409
        %v540 = vpop.f32.mrf.mxu0
        %v541 = vadd.f32 0.0, %v540
        %v542 = vpop.f32.mrf.mxu0
        %v543 = vpop.f32.mrf.mxu0
        %v544 = vadd.f32 0.0, %v543
        %v545 = vpop.f32.mrf.mxu0
        %546 = vmatprep.mubr.bf16.mxu0 0
        %547 = vmatmul.mubr.bf16.gmra.mxu0 %v412
        %v548 = vpop.f32.mrf.mxu0
        %v549 = vadd.f32 0.0, %v548
        %v550 = vpop.f32.mrf.mxu0
        %v551 = vpop.f32.mrf.mxu0
        %v552 = vpop.f32.mrf.mxu0
        %553 = vdwg.mxu0
        %579 = vrot.lane.b32.xlu0 %v453, 96
        %v580 = vpop.permute.xlu0 %579
        %581 = vrot.lane.b32.xlu0 %v456, 96
        %v582 = vpop.permute.xlu0 %581
        %583 = vrot.lane.b32.xlu0 %v461, 96
        %v584 = vpop.permute.xlu0 %583
        %585 = vrot.lane.b32.xlu0 %v464, 96
        %v586 = vpop.permute.xlu0 %585
        %587 = vrot.lane.b32.xlu0 %v469, 96
        %v588 = vpop.permute.xlu0 %587
        %589 = vrot.lane.b32.xlu0 %v472, 96
        %v590 = vpop.permute.xlu0 %589
        %591 = vrot.lane.b32.xlu0 %v477, 96
        %v592 = vpop.permute.xlu0 %591
        %593 = vrot.lane.b32.xlu0 %v480, 96
        %v594 = vpop.permute.xlu0 %593
        %595 = vrot.lane.b32.xlu0 %v485, 96
        %v596 = vpop.permute.xlu0 %595
        %597 = vrot.lane.b32.xlu0 %v488, 96
        %v598 = vpop.permute.xlu0 %597
        %599 = vrot.lane.b32.xlu0 %v493, 96
        %v600 = vpop.permute.xlu0 %599
        %601 = vrot.lane.b32.xlu0 %v496, 96
        %v602 = vpop.permute.xlu0 %601
        %603 = vrot.lane.b32.xlu0 %v501, 96
        %v604 = vpop.permute.xlu0 %603
        %605 = vrot.lane.b32.xlu0 %v504, 96
        %v606 = vpop.permute.xlu0 %605
        %607 = vrot.lane.b32.xlu0 %v509, 96
        %v608 = vpop.permute.xlu0 %607
        %609 = vrot.lane.b32.xlu0 %v512, 96
        %v610 = vpop.permute.xlu0 %609
        %611 = vrot.lane.b32.xlu0 %v517, 96
        %v612 = vpop.permute.xlu0 %611
        %613 = vrot.lane.b32.xlu0 %v520, 96
        %v614 = vpop.permute.xlu0 %613
        %615 = vrot.lane.b32.xlu0 %v525, 96
        %v616 = vpop.permute.xlu0 %615
        %617 = vrot.lane.b32.xlu0 %v528, 96
        %v618 = vpop.permute.xlu0 %617
        %619 = vrot.lane.b32.xlu0 %v533, 96
        %v620 = vpop.permute.xlu0 %619
        %621 = vrot.lane.b32.xlu0 %v536, 96
        %v622 = vpop.permute.xlu0 %621
        %623 = vrot.lane.b32.xlu0 %v541, 96
        %v624 = vpop.permute.xlu0 %623
        %625 = vrot.lane.b32.xlu0 %v544, 96
        %v626 = vpop.permute.xlu0 %625
        %627 = vrot.lane.b32.xlu0 %v549, 96
        %v628 = vpop.permute.xlu0 %627
        %v654 = vmax.f32 %v453, %v580
        %v655 = vmax.f32 %v456, %v582
        %v656 = vmax.f32 %v461, %v584
        %v657 = vmax.f32 %v464, %v586
        %v658 = vmax.f32 %v469, %v588
        %v659 = vmax.f32 %v472, %v590
        %v660 = vmax.f32 %v477, %v592
        %v661 = vmax.f32 %v480, %v594
        %v662 = vmax.f32 %v485, %v596
        %v663 = vmax.f32 %v488, %v598
        %v664 = vmax.f32 %v493, %v600
        %v665 = vmax.f32 %v496, %v602
        %v666 = vmax.f32 %v501, %v604
        %v667 = vmax.f32 %v504, %v606
        %v668 = vmax.f32 %v509, %v608
        %v669 = vmax.f32 %v512, %v610
        %v670 = vmax.f32 %v517, %v612
        %v671 = vmax.f32 %v520, %v614
        %v672 = vmax.f32 %v525, %v616
        %v673 = vmax.f32 %v528, %v618
        %v674 = vmax.f32 %v533, %v620
        %v675 = vmax.f32 %v536, %v622
        %v676 = vmax.f32 %v541, %v624
        %v677 = vmax.f32 %v544, %v626
        %v678 = vmax.f32 %v549, %v628
        %704 = vrot.lane.b32.xlu0 %v654, 64
        %v705 = vpop.permute.xlu0 %704
        %706 = vrot.lane.b32.xlu0 %v655, 64
        %v707 = vpop.permute.xlu0 %706
        %708 = vrot.lane.b32.xlu0 %v656, 64
        %v709 = vpop.permute.xlu0 %708
        %710 = vrot.lane.b32.xlu0 %v657, 64
        %v711 = vpop.permute.xlu0 %710
        %712 = vrot.lane.b32.xlu0 %v658, 64
        %v713 = vpop.permute.xlu0 %712
        %714 = vrot.lane.b32.xlu0 %v659, 64
        %v715 = vpop.permute.xlu0 %714
        %716 = vrot.lane.b32.xlu0 %v660, 64
        %v717 = vpop.permute.xlu0 %716
        %718 = vrot.lane.b32.xlu0 %v661, 64
        %v719 = vpop.permute.xlu0 %718
        %720 = vrot.lane.b32.xlu0 %v662, 64
        %v721 = vpop.permute.xlu0 %720
        %722 = vrot.lane.b32.xlu0 %v663, 64
        %v723 = vpop.permute.xlu0 %722
        %724 = vrot.lane.b32.xlu0 %v664, 64
        %v725 = vpop.permute.xlu0 %724
        %726 = vrot.lane.b32.xlu0 %v665, 64
        %v727 = vpop.permute.xlu0 %726
        %728 = vrot.lane.b32.xlu0 %v666, 64
        %v729 = vpop.permute.xlu0 %728
        %730 = vrot.lane.b32.xlu0 %v667, 64
        %v731 = vpop.permute.xlu0 %730
        %732 = vrot.lane.b32.xlu0 %v668, 64
        %v733 = vpop.permute.xlu0 %732
        %734 = vrot.lane.b32.xlu0 %v669, 64
        %v735 = vpop.permute.xlu0 %734
        %736 = vrot.lane.b32.xlu0 %v670, 64
        %v737 = vpop.permute.xlu0 %736
        %738 = vrot.lane.b32.xlu0 %v671, 64
        %v739 = vpop.permute.xlu0 %738
        %740 = vrot.lane.b32.xlu0 %v672, 64
        %v741 = vpop.permute.xlu0 %740
        %742 = vrot.lane.b32.xlu0 %v673, 64
        %v743 = vpop.permute.xlu0 %742
        %744 = vrot.lane.b32.xlu0 %v674, 64
        %v745 = vpop.permute.xlu0 %744
        %746 = vrot.lane.b32.xlu0 %v675, 64
        %v747 = vpop.permute.xlu0 %746
        %748 = vrot.lane.b32.xlu0 %v676, 64
        %v749 = vpop.permute.xlu0 %748
        %750 = vrot.lane.b32.xlu0 %v677, 64
        %v751 = vpop.permute.xlu0 %750
        %752 = vrot.lane.b32.xlu0 %v678, 64
        %v753 = vpop.permute.xlu0 %752
        %v779 = vmax.f32 %v654, %v705
        %v780 = vmax.f32 %v655, %v707
        %v781 = vmax.f32 %v656, %v709
        %v782 = vmax.f32 %v657, %v711
        %v783 = vmax.f32 %v658, %v713
        %v784 = vmax.f32 %v659, %v715
        %v785 = vmax.f32 %v660, %v717
        %v786 = vmax.f32 %v661, %v719
        %v787 = vmax.f32 %v662, %v721
        %v788 = vmax.f32 %v663, %v723
        %v789 = vmax.f32 %v664, %v725
        %v790 = vmax.f32 %v665, %v727
        %v791 = vmax.f32 %v666, %v729
        %v792 = vmax.f32 %v667, %v731
        %v793 = vmax.f32 %v668, %v733
        %v794 = vmax.f32 %v669, %v735
        %v795 = vmax.f32 %v670, %v737
        %v796 = vmax.f32 %v671, %v739
        %v797 = vmax.f32 %v672, %v741
        %v798 = vmax.f32 %v673, %v743
        %v799 = vmax.f32 %v674, %v745
        %v800 = vmax.f32 %v675, %v747
        %v801 = vmax.f32 %v676, %v749
        %v802 = vmax.f32 %v677, %v751
        %v803 = vmax.f32 %v678, %v753
        %v804 = vld [vmem:[#allocation6] sm:$0x1]
        %v806 = vlaneseq
        %v807 = vshrl.u32 %v806, 7
        %v808 = vsub.s32 0, %v807
        %v809 = vrot.slane %v804, %v808
        %v811 = vadd.f32 %v779, %v809
        %v812 = vadd.f32 %v780, %v809
        %v813 = vadd.f32 %v781, %v809
        %v814 = vadd.f32 %v782, %v809
        %v815 = vadd.f32 %v783, %v809
        %v816 = vadd.f32 %v784, %v809
        %v817 = vadd.f32 %v785, %v809
        %v818 = vadd.f32 %v786, %v809
        %v819 = vadd.f32 %v787, %v809
        %v820 = vadd.f32 %v788, %v809
        %v821 = vadd.f32 %v789, %v809
        %v822 = vadd.f32 %v790, %v809
        %v823 = vadd.f32 %v791, %v809
        %v824 = vadd.f32 %v792, %v809
        %v825 = vadd.f32 %v793, %v809
        %v826 = vadd.f32 %v794, %v809
        %v827 = vadd.f32 %v795, %v809
        %v828 = vadd.f32 %v796, %v809
        %v829 = vadd.f32 %v797, %v809
        %v830 = vadd.f32 %v798, %v809
        %v831 = vadd.f32 %v799, %v809
        %v832 = vadd.f32 %v800, %v809
        %v833 = vadd.f32 %v801, %v809
        %v834 = vadd.f32 %v802, %v809
        %v835 = vadd.f32 %v803, %v809
        %v836 = vmax.f32 %v811, 0.0
        %v837 = vmax.f32 %v812, 0.0
        %v838 = vmax.f32 %v813, 0.0
        %v839 = vmax.f32 %v814, 0.0
        %v840 = vmax.f32 %v815, 0.0
        %v841 = vmax.f32 %v816, 0.0
        %v842 = vmax.f32 %v817, 0.0
        %v843 = vmax.f32 %v818, 0.0
        %v844 = vmax.f32 %v819, 0.0
        %v845 = vmax.f32 %v820, 0.0
        %v846 = vmax.f32 %v821, 0.0
        %v847 = vmax.f32 %v822, 0.0
        %v848 = vmax.f32 %v823, 0.0
        %v849 = vmax.f32 %v824, 0.0
        %v850 = vmax.f32 %v825, 0.0
        %v851 = vmax.f32 %v826, 0.0
        %v852 = vmax.f32 %v827, 0.0
        %v853 = vmax.f32 %v828, 0.0
        %v854 = vmax.f32 %v829, 0.0
        %v855 = vmax.f32 %v830, 0.0
        %v856 = vmax.f32 %v831, 0.0
        %v857 = vmax.f32 %v832, 0.0
        %v858 = vmax.f32 %v833, 0.0
        %v859 = vmax.f32 %v834, 0.0
        %v860 = vmax.f32 %v835, 0.0
        %vm861 = vcmask 261120
        %862 = vst.msk [vmem:[#allocation2] sm:$0xff] %vm861, 0.0
        %863 = vst.msk [vmem:[#allocation2 + $0x8] sm:$0xff] %vm861, 0.0
        %864 = vst.msk [vmem:[#allocation2 + $0x10] sm:$0xff] %vm861, 0.0
        %865 = vst.msk [vmem:[#allocation2 + $0x18] sm:$0xff] %vm861, 0.0
        %866 = vst.msk [vmem:[#allocation2 + $0x20] sm:$0xff] %vm861, 0.0
        %867 = vst.msk [vmem:[#allocation2 + $0x28] sm:$0xff] %vm861, 0.0
        %868 = vst.msk [vmem:[#allocation2 + $0x30] sm:$0xff] %vm861, 0.0
        %869 = vst.msk [vmem:[#allocation2 + $0x38] sm:$0xff] %vm861, 0.0
        %870 = vst.msk [vmem:[#allocation2 + $0x40] sm:$0xff] %vm861, 0.0
        %871 = vst.msk [vmem:[#allocation2 + $0x48] sm:$0xff] %vm861, 0.0
        %872 = vst.msk [vmem:[#allocation2 + $0x50] sm:$0xff] %vm861, 0.0
        %873 = vst.msk [vmem:[#allocation2 + $0x58] sm:$0xff] %vm861, 0.0
        %874 = vst.msk [vmem:[#allocation2 + $0x60] sm:$0xff] %vm861, 0.0
        %875 = vst.msk [vmem:[#allocation2 + $0x68] sm:$0xff] %vm861, 0.0
        %876 = vst.msk [vmem:[#allocation2 + $0x70] sm:$0xff] %vm861, 0.0
        %877 = vst.msk [vmem:[#allocation2 + $0x78] sm:$0xff] %vm861, 0.0
        %878 = vst.msk [vmem:[#allocation2 + $0x80] sm:$0xff] %vm861, 0.0
        %879 = vst.msk [vmem:[#allocation2 + $0x88] sm:$0xff] %vm861, 0.0
        %880 = vst.msk [vmem:[#allocation2 + $0x90] sm:$0xff] %vm861, 0.0
        %881 = vst.msk [vmem:[#allocation2 + $0x98] sm:$0xff] %vm861, 0.0
        %882 = vst.msk [vmem:[#allocation2 + $0xa0] sm:$0xff] %vm861, 0.0
        %883 = vst.msk [vmem:[#allocation2 + $0xa8] sm:$0xff] %vm861, 0.0
        %884 = vst.msk [vmem:[#allocation2 + $0xb0] sm:$0xff] %vm861, 0.0
        %885 = vst.msk [vmem:[#allocation2 + $0xb8] sm:$0xff] %vm861, 0.0
        %886 = vst.msk [vmem:[#allocation2 + $0xc0] sm:$0xff] %vm861, 0.0
        %887 = vst.msk [vmem:[#allocation2 + $0xc8] sm:$0xff] %vm861, 0.0
        %888 = vst.msk [vmem:[#allocation2 + $0xd0] sm:$0xff] %vm861, 0.0
        %889 = vst.msk [vmem:[#allocation2 + $0xd8] sm:$0xff] %vm861, 0.0
        %890 = vst.msk [vmem:[#allocation2 + $0xe0] sm:$0xff] %vm861, 0.0
        %891 = vst.msk [vmem:[#allocation2 + $0xe8] sm:$0xff] %vm861, 0.0
        %892 = vst.msk [vmem:[#allocation2 + $0xf0] sm:$0xff] %vm861, 0.0
        %893 = vst.msk [vmem:[#allocation2 + $0xf8] sm:$0xff] %vm861, 0.0
        %s894 = scalar_lea.vmem [#allocation2], 8
        %vm895 = vcmask 260096
        %896 = vst.msk [vmem:[%s894 + $0x1] sm:$0x7f] %vm895, %v836
        %s897 = scalar_lea.vmem [#allocation2], 16
        %vm898 = vcmask 261127
        %899 = vst.msk [vmem:[%s897 - $0x6] sm:$0x80] %vm898, %v836
        %vm900 = vcmask 259072
        %901 = vst.msk [vmem:[%s897 + $0x2] sm:$0x3f] %vm900, %v837
        %s902 = scalar_lea.vmem [#allocation2], 24
        %vm903 = vcmask 261126
        %904 = vst.msk [vmem:[%s902 - $0x5] sm:$0xc0] %vm903, %v837
        %vm905 = vcmask 258048
        %906 = vst.msk [vmem:[%s902 + $0x3] sm:$0x1f] %vm905, %v838
        %s907 = scalar_lea.vmem [#allocation2], 32
        %vm908 = vcmask 261125
        %909 = vst.msk [vmem:[%s907 - $0x4] sm:$0xe0] %vm908, %v838
        %vm910 = vcmask 257024
        %911 = vst.msk [vmem:[%s907 + $0x4] sm:$0xf] %vm910, %v839
        %s912 = scalar_lea.vmem [#allocation2], 40
        %vm913 = vcmask 261124
        %914 = vst.msk [vmem:[%s912 - $0x3] sm:$0xf0] %vm913, %v839
        %vm915 = vcmask 256000
        %916 = vst.msk [vmem:[%s912 + $0x5] sm:$0x7] %vm915, %v840
        %s917 = scalar_lea.vmem [#allocation2], 48
        %vm918 = vcmask 261123
        %919 = vst.msk [vmem:[%s917 - $0x2] sm:$0xf8] %vm918, %v840
        %vm920 = vcmask 254976
        %921 = vst.msk [vmem:[%s917 + $0x6] sm:$0x3] %vm920, %v841
        %s922 = scalar_lea.vmem [#allocation2], 56
        %vm923 = vcmask 261122
        %924 = vst.msk [vmem:[%s922 - $0x1] sm:$0xfc] %vm923, %v841
        %vm925 = vcmask 253952
        %926 = vst.msk [vmem:[%s922 + $0x7] sm:$0x1] %vm925, %v842
        %s927 = scalar_lea.vmem [#allocation2], 72
        %vm928 = vcmask 261121
        %929 = vst.msk [vmem:[%s927 - $0x1] sm:$0xfe] %vm928, %v842
        %s930 = scalar_lea.vmem [#allocation2], 80
        %931 = vst.msk [vmem:[%s930] sm:$0x7f] %vm895, %v843
        %s932 = scalar_lea.vmem [#allocation2], 88
        %933 = vst.msk [vmem:[%s932 - $0x7] sm:$0x80] %vm898, %v843
        %934 = vst.msk [vmem:[%s932 + $0x1] sm:$0x3f] %vm900, %v844
        %s935 = scalar_lea.vmem [#allocation2], 96
        %936 = vst.msk [vmem:[%s935 - $0x6] sm:$0xc0] %vm903, %v844
        %937 = vst.msk [vmem:[%s935 + $0x2] sm:$0x1f] %vm905, %v845
        %s938 = scalar_lea.vmem [#allocation2], 104
        %939 = vst.msk [vmem:[%s938 - $0x5] sm:$0xe0] %vm908, %v845
        %940 = vst.msk [vmem:[%s938 + $0x3] sm:$0xf] %vm910, %v846
        %s941 = scalar_lea.vmem [#allocation2], 112
        %942 = vst.msk [vmem:[%s941 - $0x4] sm:$0xf0] %vm913, %v846
        %943 = vst.msk [vmem:[%s941 + $0x4] sm:$0x7] %vm915, %v847
        %s944 = scalar_lea.vmem [#allocation2], 120
        %945 = vst.msk [vmem:[%s944 - $0x3] sm:$0xf8] %vm918, %v847
        %946 = vst.msk [vmem:[%s944 + $0x5] sm:$0x3] %vm920, %v848
        %s947 = scalar_lea.vmem [#allocation2], 128
        %948 = vst.msk [vmem:[%s947 - $0x1] sm:$0xfc] %vm923, %v848
        %949 = vst.msk [vmem:[%s947 + $0x7] sm:$0x1] %vm925, %v849
        %s950 = scalar_lea.vmem [#allocation2], 136
        %951 = vst.msk [vmem:[%s950] sm:$0xfe] %vm928, %v849
        %s952 = scalar_lea.vmem [#allocation2], 144
        %953 = vst.msk [vmem:[%s952 + $0x1] sm:$0x7f] %vm895, %v850
        %s954 = scalar_lea.vmem [#allocation2], 152
        %955 = vst.msk [vmem:[%s954 - $0x6] sm:$0x80] %vm898, %v850
        %956 = vst.msk [vmem:[%s954 + $0x2] sm:$0x3f] %vm900, %v851
        %s957 = scalar_lea.vmem [#allocation2], 160
        %958 = vst.msk [vmem:[%s957 - $0x5] sm:$0xc0] %vm903, %v851
        %959 = vst.msk [vmem:[%s957 + $0x3] sm:$0x1f] %vm905, %v852
        %s960 = scalar_lea.vmem [#allocation2], 168
        %961 = vst.msk [vmem:[%s960 - $0x4] sm:$0xe0] %vm908, %v852
        %962 = vst.msk [vmem:[%s960 + $0x4] sm:$0xf] %vm910, %v853
        %s963 = scalar_lea.vmem [#allocation2], 176
        %964 = vst.msk [vmem:[%s963 - $0x3] sm:$0xf0] %vm913, %v853
        %965 = vst.msk [vmem:[%s963 + $0x5] sm:$0x7] %vm915, %v854
        %s966 = scalar_lea.vmem [#allocation2], 192
        %967 = vst.msk [vmem:[%s966 - $0x3] sm:$0xf8] %vm918, %v854
        %968 = vst.msk [vmem:[%s966 + $0x5] sm:$0x3] %vm920, %v855
        %s969 = scalar_lea.vmem [#allocation2], 200
        %970 = vst.msk [vmem:[%s969 - $0x2] sm:$0xfc] %vm923, %v855
        %971 = vst.msk [vmem:[%s969 + $0x6] sm:$0x1] %vm925, %v856
        %s972 = scalar_lea.vmem [#allocation2], 208
        %973 = vst.msk [vmem:[%s972 - $0x1] sm:$0xfe] %vm928, %v856
        %s974 = scalar_lea.vmem [#allocation2], 216
        %975 = vst.msk [vmem:[%s974] sm:$0x7f] %vm895, %v857
        %s976 = scalar_lea.vmem [#allocation2], 224
        %977 = vst.msk [vmem:[%s976 - $0x7] sm:$0x80] %vm898, %v857
        %978 = vst.msk [vmem:[%s976 + $0x1] sm:$0x3f] %vm900, %v858
        %s979 = scalar_lea.vmem [#allocation2], 232
        %980 = vst.msk [vmem:[%s979 - $0x6] sm:$0xc0] %vm903, %v858
        %981 = vst.msk [vmem:[%s979 + $0x2] sm:$0x1f] %vm905, %v859
        %s982 = scalar_lea.vmem [#allocation2], 240
        %983 = vst.msk [vmem:[%s982 - $0x5] sm:$0xe0] %vm908, %v859
        %984 = vst.msk [vmem:[%s982 + $0x3] sm:$0xf] %vm910, %v860
        %v985 = vld [vmem:[#allocation2] sm:$0x7f]
        %986 = vst.msk [vmem:[#allocation3] sm:$0x7f] %vm895, %v985
        %v987 = vld [vmem:[%s894] sm:$0x7f]
        %v989 = vrot.slane %v987, 1
        %991 = vst.msk [vmem:[#allocation3] sm:$0x80] %vm898, %v989
        %992 = vst.msk [vmem:[#allocation3 + $0x18] sm:$0x3f] %vm900, %v989
        %v993 = vld [vmem:[%s897] sm:$0x7f]
        %v995 = vrot.slane %v993, 2
        %997 = vst.msk [vmem:[#allocation3 + $0x18] sm:$0xc0] %vm903, %v995
        %998 = vst.msk [vmem:[#allocation3 + $0x30] sm:$0x1f] %vm905, %v995
        %v999 = vld [vmem:[%s902] sm:$0x7f]
        %v1001 = vrot.slane %v999, 3
        %1003 = vst.msk [vmem:[#allocation3 + $0x30] sm:$0xe0] %vm908, %v1001
        %1004 = vst.msk [vmem:[#allocation3 + $0x48] sm:$0xf] %vm910, %v1001
        %v1005 = vld [vmem:[%s907] sm:$0x7f]
        %v1007 = vrot.slane %v1005, 4
        %1009 = vst.msk [vmem:[#allocation3 + $0x48] sm:$0xf0] %vm913, %v1007
        %1010 = vst.msk [vmem:[#allocation3 + $0x60] sm:$0x7] %vm915, %v1007
        %v1011 = vld [vmem:[%s912] sm:$0x7f]
        %v1013 = vrot.slane %v1011, 5
        %1015 = vst.msk [vmem:[#allocation3 + $0x60] sm:$0xf8] %vm918, %v1013
        %1016 = vst.msk [vmem:[#allocation3 + $0x78] sm:$0x3] %vm920, %v1013
        %v1017 = vld [vmem:[%s917] sm:$0x7f]
        %v1019 = vrot.slane %v1017, 6
        %1021 = vst.msk [vmem:[#allocation3 + $0x78] sm:$0xfc] %vm923, %v1019
        %1022 = vst.msk [vmem:[#allocation3 + $0x90] sm:$0x1] %vm925, %v1019
        %s1023 = scalar_lea.vmem [#allocation2], 64
        %v1024 = vld [vmem:[%s1023] sm:$0x7f]
        %1026 = vrot.lane.b32.xlu0 %v1024, 32
        %v1027 = vpop.permute.xlu0 %1026
        %vm1029 = vcmask 522496
        %1030 = vst.msk [vmem:[#allocation3] sm:$0x7f] %vm1029, %v1027
        %v1031 = vld [vmem:[%s927] sm:$0x7f]
        %v1033 = vrot.slane %v1031, 1
        %1034 = vrot.lane.b32.xlu0 %v1033, 32
        %v1035 = vpop.permute.xlu0 %1034
        %vm1037 = vcmask 523527
        %1038 = vst.msk [vmem:[#allocation3] sm:$0x80] %vm1037, %v1035
        %vm1039 = vcmask 521472
        %1040 = vst.msk [vmem:[#allocation3 + $0x18] sm:$0x3f] %vm1039, %v1035
        %v1041 = vld [vmem:[%s930] sm:$0x7f]
        %v1043 = vrot.slane %v1041, 2
        %1044 = vrot.lane.b32.xlu0 %v1043, 32
        %v1045 = vpop.permute.xlu0 %1044
        %vm1047 = vcmask 523526
        %1048 = vst.msk [vmem:[#allocation3 + $0x18] sm:$0xc0] %vm1047, %v1045
        %vm1049 = vcmask 520448
        %1050 = vst.msk [vmem:[#allocation3 + $0x30] sm:$0x1f] %vm1049, %v1045
        %v1051 = vld [vmem:[%s932] sm:$0x7f]
        %v1053 = vrot.slane %v1051, 3
        %1054 = vrot.lane.b32.xlu0 %v1053, 32
        %v1055 = vpop.permute.xlu0 %1054
        %vm1057 = vcmask 523525
        %1058 = vst.msk [vmem:[#allocation3 + $0x30] sm:$0xe0] %vm1057, %v1055
        %vm1059 = vcmask 519424
        %1060 = vst.msk [vmem:[#allocation3 + $0x48] sm:$0xf] %vm1059, %v1055
        %v1061 = vld [vmem:[%s935] sm:$0x7f]
        %v1063 = vrot.slane %v1061, 4
        %1064 = vrot.lane.b32.xlu0 %v1063, 32
        %v1065 = vpop.permute.xlu0 %1064
        %vm1067 = vcmask 523524
        %1068 = vst.msk [vmem:[#allocation3 + $0x48] sm:$0xf0] %vm1067, %v1065
        %vm1069 = vcmask 518400
        %1070 = vst.msk [vmem:[#allocation3 + $0x60] sm:$0x7] %vm1069, %v1065
        %v1071 = vld [vmem:[%s938] sm:$0x7f]
        %v1073 = vrot.slane %v1071, 5
        %1074 = vrot.lane.b32.xlu0 %v1073, 32
        %v1075 = vpop.permute.xlu0 %1074
        %vm1077 = vcmask 523523
        %1078 = vst.msk [vmem:[#allocation3 + $0x60] sm:$0xf8] %vm1077, %v1075
        %vm1079 = vcmask 517376
        %1080 = vst.msk [vmem:[#allocation3 + $0x78] sm:$0x3] %vm1079, %v1075
        %v1081 = vld [vmem:[%s941] sm:$0x7f]
        %v1083 = vrot.slane %v1081, 6
        %1084 = vrot.lane.b32.xlu0 %v1083, 32
        %v1085 = vpop.permute.xlu0 %1084
        %vm1087 = vcmask 523522
        %1088 = vst.msk [vmem:[#allocation3 + $0x78] sm:$0xfc] %vm1087, %v1085
        %vm1089 = vcmask 516352
        %1090 = vst.msk [vmem:[#allocation3 + $0x90] sm:$0x1] %vm1089, %v1085
        %v1091 = vld [vmem:[#allocation2 + $0x1] sm:$0x7f]
        %1093 = vrot.lane.b32.xlu0 %v1091, 64
        %v1094 = vpop.permute.xlu0 %1093
        %vm1096 = vcmask 784896
        %1097 = vst.msk [vmem:[#allocation3] sm:$0x7f] %vm1096, %v1094
        %v1098 = vld [vmem:[%s894 + $0x1] sm:$0x7f]
        %v1100 = vrot.slane %v1098, 1
        %1101 = vrot.lane.b32.xlu0 %v1100, 64
        %v1102 = vpop.permute.xlu0 %1101
        %vm1104 = vcmask 785927
        %1105 = vst.msk [vmem:[#allocation3] sm:$0x80] %vm1104, %v1102
        %vm1106 = vcmask 783872
        %1107 = vst.msk [vmem:[#allocation3 + $0x18] sm:$0x3f] %vm1106, %v1102
        %v1108 = vld [vmem:[%s897 + $0x1] sm:$0x7f]
        %v1110 = vrot.slane %v1108, 2
        %1111 = vrot.lane.b32.xlu0 %v1110, 64
        %v1112 = vpop.permute.xlu0 %1111
        %vm1114 = vcmask 785926
        %1115 = vst.msk [vmem:[#allocation3 + $0x18] sm:$0xc0] %vm1114, %v1112
        %vm1116 = vcmask 782848
        %1117 = vst.msk [vmem:[#allocation3 + $0x30] sm:$0x1f] %vm1116, %v1112
        %v1118 = vld [vmem:[%s902 + $0x1] sm:$0x7f]
        %v1120 = vrot.slane %v1118, 3
        %1121 = vrot.lane.b32.xlu0 %v1120, 64
        %v1122 = vpop.permute.xlu0 %1121
        %vm1124 = vcmask 785925
        %1125 = vst.msk [vmem:[#allocation3 + $0x30] sm:$0xe0] %vm1124, %v1122
        %vm1126 = vcmask 781824
        %1127 = vst.msk [vmem:[#allocation3 + $0x48] sm:$0xf] %vm1126, %v1122
        %v1128 = vld [vmem:[%s907 + $0x1] sm:$0x7f]
        %v1130 = vrot.slane %v1128, 4
        %1131 = vrot.lane.b32.xlu0 %v1130, 64
        %v1132 = vpop.permute.xlu0 %1131
        %vm1134 = vcmask 785924
        %1135 = vst.msk [vmem:[#allocation3 + $0x48] sm:$0xf0] %vm1134, %v1132
        %vm1136 = vcmask 780800
        %1137 = vst.msk [vmem:[#allocation3 + $0x60] sm:$0x7] %vm1136, %v1132
        %v1138 = vld [vmem:[%s912 + $0x1] sm:$0x7f]
        %v1140 = vrot.slane %v1138, 5
        %1141 = vrot.lane.b32.xlu0 %v1140, 64
        %v1142 = vpop.permute.xlu0 %1141
        %vm1144 = vcmask 785923
        %1145 = vst.msk [vmem:[#allocation3 + $0x60] sm:$0xf8] %vm1144, %v1142
        %vm1146 = vcmask 779776
        %1147 = vst.msk [vmem:[#allocation3 + $0x78] sm:$0x3] %vm1146, %v1142
        %v1148 = vld [vmem:[%s917 + $0x1] sm:$0x7f]
        %v1150 = vrot.slane %v1148, 6
        %1151 = vrot.lane.b32.xlu0 %v1150, 64
        %v1152 = vpop.permute.xlu0 %1151
        %vm1154 = vcmask 785922
        %1155 = vst.msk [vmem:[#allocation3 + $0x78] sm:$0xfc] %vm1154, %v1152
        %vm1156 = vcmask 778752
        %1157 = vst.msk [vmem:[#allocation3 + $0x90] sm:$0x1] %vm1156, %v1152
        %v1158 = vld [vmem:[%s947] sm:$0x7f]
        %1160 = vrot.lane.b32.xlu0 %v1158, 96
        %v1161 = vpop.permute.xlu0 %1160
        %vm1163 = vcmask 1047296
        %1164 = vst.msk [vmem:[#allocation3] sm:$0x7f] %vm1163, %v1161
        %v1165 = vld [vmem:[%s950] sm:$0x7f]
        %v1167 = vrot.slane %v1165, 1
        %1168 = vrot.lane.b32.xlu0 %v1167, 96
        %v1169 = vpop.permute.xlu0 %1168
        %vm1171 = vcmask 1048327
        %1172 = vst.msk [vmem:[#allocation3] sm:$0x80] %vm1171, %v1169
        %vm1173 = vcmask 1046272
        %1174 = vst.msk [vmem:[#allocation3 + $0x18] sm:$0x3f] %vm1173, %v1169
        %v1175 = vld [vmem:[%s952] sm:$0x7f]
        %v1177 = vrot.slane %v1175, 2
        %1178 = vrot.lane.b32.xlu0 %v1177, 96
        %v1179 = vpop.permute.xlu0 %1178
        %vm1181 = vcmask 1048326
        %1182 = vst.msk [vmem:[#allocation3 + $0x18] sm:$0xc0] %vm1181, %v1179
        %vm1183 = vcmask 1045248
        %1184 = vst.msk [vmem:[#allocation3 + $0x30] sm:$0x1f] %vm1183, %v1179
        %v1185 = vld [vmem:[%s954] sm:$0x7f]
        %v1187 = vrot.slane %v1185, 3
        %1188 = vrot.lane.b32.xlu0 %v1187, 96
        %v1189 = vpop.permute.xlu0 %1188
        %vm1191 = vcmask 1048325
        %1192 = vst.msk [vmem:[#allocation3 + $0x30] sm:$0xe0] %vm1191, %v1189
        %vm1193 = vcmask 1044224
        %1194 = vst.msk [vmem:[#allocation3 + $0x48] sm:$0xf] %vm1193, %v1189
        %v1195 = vld [vmem:[%s957] sm:$0x7f]
        %v1197 = vrot.slane %v1195, 4
        %1198 = vrot.lane.b32.xlu0 %v1197, 96
        %v1199 = vpop.permute.xlu0 %1198
        %vm1201 = vcmask 1048324
        %1202 = vst.msk [vmem:[#allocation3 + $0x48] sm:$0xf0] %vm1201, %v1199
        %vm1203 = vcmask 1043200
        %1204 = vst.msk [vmem:[#allocation3 + $0x60] sm:$0x7] %vm1203, %v1199
        %v1205 = vld [vmem:[%s960] sm:$0x7f]
        %v1207 = vrot.slane %v1205, 5
        %1208 = vrot.lane.b32.xlu0 %v1207, 96
        %v1209 = vpop.permute.xlu0 %1208
        %vm1211 = vcmask 1048323
        %1212 = vst.msk [vmem:[#allocation3 + $0x60] sm:$0xf8] %vm1211, %v1209
        %vm1213 = vcmask 1042176
        %1214 = vst.msk [vmem:[#allocation3 + $0x78] sm:$0x3] %vm1213, %v1209
        %v1215 = vld [vmem:[%s963] sm:$0x7f]
        %v1217 = vrot.slane %v1215, 6
        %1218 = vrot.lane.b32.xlu0 %v1217, 96
        %v1219 = vpop.permute.xlu0 %1218
        %vm1221 = vcmask 1048322
        %1222 = vst.msk [vmem:[#allocation3 + $0x78] sm:$0xfc] %vm1221, %v1219
        %vm1223 = vcmask 1041152
        %1224 = vst.msk [vmem:[#allocation3 + $0x90] sm:$0x1] %vm1223, %v1219
        %v1225 = vld [vmem:[%s966] sm:$0x7f]
        %1226 = vst.msk [vmem:[#allocation3 + $0x8] sm:$0x7f] %vm895, %v1225
        %v1227 = vld [vmem:[%s969] sm:$0x7f]
        %v1229 = vrot.slane %v1227, 1
        %1231 = vst.msk [vmem:[#allocation3 + $0x8] sm:$0x80] %vm898, %v1229
        %1232 = vst.msk [vmem:[#allocation3 + $0x20] sm:$0x3f] %vm900, %v1229
        %v1233 = vld [vmem:[%s972] sm:$0x7f]
        %v1235 = vrot.slane %v1233, 2
        %1237 = vst.msk [vmem:[#allocation3 + $0x20] sm:$0xc0] %vm903, %v1235
        %1238 = vst.msk [vmem:[#allocation3 + $0x38] sm:$0x1f] %vm905, %v1235
        %v1239 = vld [vmem:[%s974] sm:$0x7f]
        %v1241 = vrot.slane %v1239, 3
        %1243 = vst.msk [vmem:[#allocation3 + $0x38] sm:$0xe0] %vm908, %v1241
        %1244 = vst.msk [vmem:[#allocation3 + $0x50] sm:$0xf] %vm910, %v1241
        %v1245 = vld [vmem:[%s976] sm:$0x7f]
        %v1247 = vrot.slane %v1245, 4
        %1249 = vst.msk [vmem:[#allocation3 + $0x50] sm:$0xf0] %vm913, %v1247
        %1250 = vst.msk [vmem:[#allocation3 + $0x68] sm:$0x7] %vm915, %v1247
        %v1251 = vld [vmem:[%s979] sm:$0x7f]
        %v1253 = vrot.slane %v1251, 5
        %1255 = vst.msk [vmem:[#allocation3 + $0x68] sm:$0xf8] %vm918, %v1253
        %1256 = vst.msk [vmem:[#allocation3 + $0x80] sm:$0x3] %vm920, %v1253
        %v1257 = vld [vmem:[%s982] sm:$0x7f]
        %v1259 = vrot.slane %v1257, 6
        %1261 = vst.msk [vmem:[#allocation3 + $0x80] sm:$0xfc] %vm923, %v1259
        %1262 = vst.msk [vmem:[#allocation3 + $0x98] sm:$0x1] %vm925, %v1259
        %v1263 = vld [vmem:[%s947 + $0x1] sm:$0x7f]
        %1265 = vrot.lane.b32.xlu0 %v1263, 32
        %v1266 = vpop.permute.xlu0 %1265
        %1268 = vst.msk [vmem:[#allocation3 + $0x8] sm:$0x7f] %vm1029, %v1266
        %v1269 = vld [vmem:[%s950 + $0x1] sm:$0x7f]
        %v1271 = vrot.slane %v1269, 1
        %1272 = vrot.lane.b32.xlu0 %v1271, 32
        %v1273 = vpop.permute.xlu0 %1272
        %1275 = vst.msk [vmem:[#allocation3 + $0x8] sm:$0x80] %vm1037, %v1273
        %1276 = vst.msk [vmem:[#allocation3 + $0x20] sm:$0x3f] %vm1039, %v1273
        %v1277 = vld [vmem:[%s952 + $0x1] sm:$0x7f]
        %v1279 = vrot.slane %v1277, 2
        %1280 = vrot.lane.b32.xlu0 %v1279, 32
        %v1281 = vpop.permute.xlu0 %1280
        %1283 = vst.msk [vmem:[#allocation3 + $0x20] sm:$0xc0] %vm1047, %v1281
        %1284 = vst.msk [vmem:[#allocation3 + $0x38] sm:$0x1f] %vm1049, %v1281
        %v1285 = vld [vmem:[%s954 + $0x1] sm:$0x7f]
        %v1287 = vrot.slane %v1285, 3
        %1288 = vrot.lane.b32.xlu0 %v1287, 32
        %v1289 = vpop.permute.xlu0 %1288
        %1291 = vst.msk [vmem:[#allocation3 + $0x38] sm:$0xe0] %vm1057, %v1289
        %1292 = vst.msk [vmem:[#allocation3 + $0x50] sm:$0xf] %vm1059, %v1289
        %v1293 = vld [vmem:[%s957 + $0x1] sm:$0x7f]
        %v1295 = vrot.slane %v1293, 4
        %1296 = vrot.lane.b32.xlu0 %v1295, 32
        %v1297 = vpop.permute.xlu0 %1296
        %1299 = vst.msk [vmem:[#allocation3 + $0x50] sm:$0xf0] %vm1067, %v1297
        %1300 = vst.msk [vmem:[#allocation3 + $0x68] sm:$0x7] %vm1069, %v1297
        %v1301 = vld [vmem:[%s960 + $0x1] sm:$0x7f]
        %v1303 = vrot.slane %v1301, 5
        %1304 = vrot.lane.b32.xlu0 %v1303, 32
        %v1305 = vpop.permute.xlu0 %1304
        %1307 = vst.msk [vmem:[#allocation3 + $0x68] sm:$0xf8] %vm1077, %v1305
        %1308 = vst.msk [vmem:[#allocation3 + $0x80] sm:$0x3] %vm1079, %v1305
        %v1309 = vld [vmem:[%s963 + $0x1] sm:$0x7f]
        %v1311 = vrot.slane %v1309, 6
        %1312 = vrot.lane.b32.xlu0 %v1311, 32
        %v1313 = vpop.permute.xlu0 %1312
        %1315 = vst.msk [vmem:[#allocation3 + $0x80] sm:$0xfc] %vm1087, %v1313
        %1316 = vst.msk [vmem:[#allocation3 + $0x98] sm:$0x1] %vm1089, %v1313
        %v1317 = vld [vmem:[%s894] sm:$0x7f]
        %1319 = vrot.lane.b32.xlu0 %v1317, 64
        %v1320 = vpop.permute.xlu0 %1319
        %1322 = vst.msk [vmem:[#allocation3 + $0x8] sm:$0x7f] %vm1096, %v1320
        %v1323 = vld [vmem:[%s897] sm:$0x7f]
        %v1325 = vrot.slane %v1323, 1
        %1326 = vrot.lane.b32.xlu0 %v1325, 64
        %v1327 = vpop.permute.xlu0 %1326
        %1329 = vst.msk [vmem:[#allocation3 + $0x8] sm:$0x80] %vm1104, %v1327
        %1330 = vst.msk [vmem:[#allocation3 + $0x20] sm:$0x3f] %vm1106, %v1327
        %v1331 = vld [vmem:[%s902] sm:$0x7f]
        %v1333 = vrot.slane %v1331, 2
        %1334 = vrot.lane.b32.xlu0 %v1333, 64
        %v1335 = vpop.permute.xlu0 %1334
        %1337 = vst.msk [vmem:[#allocation3 + $0x20] sm:$0xc0] %vm1114, %v1335
        %1338 = vst.msk [vmem:[#allocation3 + $0x38] sm:$0x1f] %vm1116, %v1335
        %v1339 = vld [vmem:[%s907] sm:$0x7f]
        %v1341 = vrot.slane %v1339, 3
        %1342 = vrot.lane.b32.xlu0 %v1341, 64
        %v1343 = vpop.permute.xlu0 %1342
        %1345 = vst.msk [vmem:[#allocation3 + $0x38] sm:$0xe0] %vm1124, %v1343
        %1346 = vst.msk [vmem:[#allocation3 + $0x50] sm:$0xf] %vm1126, %v1343
        %v1347 = vld [vmem:[%s912] sm:$0x7f]
        %v1349 = vrot.slane %v1347, 4
        %1350 = vrot.lane.b32.xlu0 %v1349, 64
        %v1351 = vpop.permute.xlu0 %1350
        %1353 = vst.msk [vmem:[#allocation3 + $0x50] sm:$0xf0] %vm1134, %v1351
        %1354 = vst.msk [vmem:[#allocation3 + $0x68] sm:$0x7] %vm1136, %v1351
        %v1355 = vld [vmem:[%s917] sm:$0x7f]
        %v1357 = vrot.slane %v1355, 5
        %1358 = vrot.lane.b32.xlu0 %v1357, 64
        %v1359 = vpop.permute.xlu0 %1358
        %1361 = vst.msk [vmem:[#allocation3 + $0x68] sm:$0xf8] %vm1144, %v1359
        %1362 = vst.msk [vmem:[#allocation3 + $0x80] sm:$0x3] %vm1146, %v1359
        %v1363 = vld [vmem:[%s922] sm:$0x7f]
        %v1365 = vrot.slane %v1363, 6
        %1366 = vrot.lane.b32.xlu0 %v1365, 64
        %v1367 = vpop.permute.xlu0 %1366
        %1369 = vst.msk [vmem:[#allocation3 + $0x80] sm:$0xfc] %vm1154, %v1367
        %1370 = vst.msk [vmem:[#allocation3 + $0x98] sm:$0x1] %vm1156, %v1367
        %v1371 = vld [vmem:[%s927] sm:$0x7f]
        %1373 = vrot.lane.b32.xlu0 %v1371, 96
        %v1374 = vpop.permute.xlu0 %1373
        %1376 = vst.msk [vmem:[#allocation3 + $0x8] sm:$0x7f] %vm1163, %v1374
        %v1377 = vld [vmem:[%s930] sm:$0x7f]
        %v1379 = vrot.slane %v1377, 1
        %1380 = vrot.lane.b32.xlu0 %v1379, 96
        %v1381 = vpop.permute.xlu0 %1380
        %1383 = vst.msk [vmem:[#allocation3 + $0x8] sm:$0x80] %vm1171, %v1381
        %1384 = vst.msk [vmem:[#allocation3 + $0x20] sm:$0x3f] %vm1173, %v1381
        %v1385 = vld [vmem:[%s932] sm:$0x7f]
        %v1387 = vrot.slane %v1385, 2
        %1388 = vrot.lane.b32.xlu0 %v1387, 96
        %v1389 = vpop.permute.xlu0 %1388
        %1391 = vst.msk [vmem:[#allocation3 + $0x20] sm:$0xc0] %vm1181, %v1389
        %1392 = vst.msk [vmem:[#allocation3 + $0x38] sm:$0x1f] %vm1183, %v1389
        %v1393 = vld [vmem:[%s935] sm:$0x7f]
        %v1395 = vrot.slane %v1393, 3
        %1396 = vrot.lane.b32.xlu0 %v1395, 96
        %v1397 = vpop.permute.xlu0 %1396
        %1399 = vst.msk [vmem:[#allocation3 + $0x38] sm:$0xe0] %vm1191, %v1397
        %1400 = vst.msk [vmem:[#allocation3 + $0x50] sm:$0xf] %vm1193, %v1397
        %v1401 = vld [vmem:[%s938] sm:$0x7f]
        %v1403 = vrot.slane %v1401, 4
        %1404 = vrot.lane.b32.xlu0 %v1403, 96
        %v1405 = vpop.permute.xlu0 %1404
        %1407 = vst.msk [vmem:[#allocation3 + $0x50] sm:$0xf0] %vm1201, %v1405
        %1408 = vst.msk [vmem:[#allocation3 + $0x68] sm:$0x7] %vm1203, %v1405
        %v1409 = vld [vmem:[%s941] sm:$0x7f]
        %v1411 = vrot.slane %v1409, 5
        %1412 = vrot.lane.b32.xlu0 %v1411, 96
        %v1413 = vpop.permute.xlu0 %1412
        %1415 = vst.msk [vmem:[#allocation3 + $0x68] sm:$0xf8] %vm1211, %v1413
        %1416 = vst.msk [vmem:[#allocation3 + $0x80] sm:$0x3] %vm1213, %v1413
        %v1417 = vld [vmem:[%s944] sm:$0x7f]
        %v1419 = vrot.slane %v1417, 6
        %1420 = vrot.lane.b32.xlu0 %v1419, 96
        %v1421 = vpop.permute.xlu0 %1420
        %1423 = vst.msk [vmem:[#allocation3 + $0x80] sm:$0xfc] %vm1221, %v1421
        %1424 = vst.msk [vmem:[#allocation3 + $0x98] sm:$0x1] %vm1223, %v1421
        %v1425 = vld [vmem:[%s894 + $0x1] sm:$0x7f]
        %1426 = vst.msk [vmem:[#allocation3 + $0x10] sm:$0x7f] %vm895, %v1425
        %v1427 = vld [vmem:[%s897 + $0x1] sm:$0x7f]
        %v1429 = vrot.slane %v1427, 1
        %1431 = vst.msk [vmem:[#allocation3 + $0x10] sm:$0x80] %vm898, %v1429
        %1432 = vst.msk [vmem:[#allocation3 + $0x28] sm:$0x3f] %vm900, %v1429
        %v1433 = vld [vmem:[%s902 + $0x1] sm:$0x7f]
        %v1435 = vrot.slane %v1433, 2
        %1437 = vst.msk [vmem:[#allocation3 + $0x28] sm:$0xc0] %vm903, %v1435
        %1438 = vst.msk [vmem:[#allocation3 + $0x40] sm:$0x1f] %vm905, %v1435
        %v1439 = vld [vmem:[%s907 + $0x1] sm:$0x7f]
        %v1441 = vrot.slane %v1439, 3
        %1443 = vst.msk [vmem:[#allocation3 + $0x40] sm:$0xe0] %vm908, %v1441
        %1444 = vst.msk [vmem:[#allocation3 + $0x58] sm:$0xf] %vm910, %v1441
        %v1445 = vld [vmem:[%s912 + $0x1] sm:$0x7f]
        %v1447 = vrot.slane %v1445, 4
        %1449 = vst.msk [vmem:[#allocation3 + $0x58] sm:$0xf0] %vm913, %v1447
        %1450 = vst.msk [vmem:[#allocation3 + $0x70] sm:$0x7] %vm915, %v1447
        %v1451 = vld [vmem:[%s917 + $0x1] sm:$0x7f]
        %v1453 = vrot.slane %v1451, 5
        %1455 = vst.msk [vmem:[#allocation3 + $0x70] sm:$0xf8] %vm918, %v1453
        %1456 = vst.msk [vmem:[#allocation3 + $0x88] sm:$0x3] %vm920, %v1453
        %v1457 = vld [vmem:[%s922 + $0x1] sm:$0x7f]
        %v1459 = vrot.slane %v1457, 6
        %1461 = vst.msk [vmem:[#allocation3 + $0x88] sm:$0xfc] %vm923, %v1459
        %1462 = vst.msk [vmem:[#allocation3 + $0xa0] sm:$0x1] %vm925, %v1459
        %v1463 = vld [vmem:[%s1023] sm:$0x7f]
        %v1465 = vrot.slane %v1463, 7
        %1467 = vst.msk [vmem:[#allocation3 + $0x90] sm:$0xfe] %vm928, %v1465
        %v1468 = vld [vmem:[%s927] sm:$0x7f]
        %1469 = vst.msk [vmem:[#allocation3 + $0xa8] sm:$0x7f] %vm895, %v1468
        %v1470 = vld [vmem:[%s930] sm:$0x7f]
        %v1472 = vrot.slane %v1470, 1
        %1474 = vst.msk [vmem:[#allocation3 + $0xa8] sm:$0x80] %vm898, %v1472
        %1475 = vst.msk [vmem:[#allocation3 + $0xc0] sm:$0x3f] %vm900, %v1472
        %v1476 = vld [vmem:[%s932] sm:$0x7f]
        %v1478 = vrot.slane %v1476, 2
        %1480 = vst.msk [vmem:[#allocation3 + $0xc0] sm:$0xc0] %vm903, %v1478
        %1481 = vst.msk [vmem:[#allocation3 + $0xd8] sm:$0x1f] %vm905, %v1478
        %v1482 = vld [vmem:[%s935] sm:$0x7f]
        %v1484 = vrot.slane %v1482, 3
        %1486 = vst.msk [vmem:[#allocation3 + $0xd8] sm:$0xe0] %vm908, %v1484
        %1487 = vst.msk [vmem:[#allocation3 + $0xf0] sm:$0xf] %vm910, %v1484
        %v1488 = vld [vmem:[%s938] sm:$0x7f]
        %v1490 = vrot.slane %v1488, 4
        %1492 = vst.msk [vmem:[#allocation3 + $0xf0] sm:$0xf0] %vm913, %v1490
        %1493 = vst.msk [vmem:[#allocation3 + $0x108] sm:$0x7] %vm915, %v1490
        %v1494 = vld [vmem:[%s941] sm:$0x7f]
        %v1496 = vrot.slane %v1494, 5
        %1498 = vst.msk [vmem:[#allocation3 + $0x108] sm:$0xf8] %vm918, %v1496
        %1499 = vst.msk [vmem:[#allocation3 + $0x120] sm:$0x3] %vm920, %v1496
        %v1500 = vld [vmem:[#allocation2 + $0x1] sm:$0x7f]
        %v1502 = vrot.slane %v1500, 7
        %1503 = vrot.lane.b32.xlu0 %v1502, 32
        %v1504 = vpop.permute.xlu0 %1503
        %vm1506 = vcmask 523521
        %1507 = vst.msk [vmem:[#allocation3 + $0x90] sm:$0xfe] %vm1506, %v1504
        %v1508 = vld [vmem:[%s894 + $0x1] sm:$0x7f]
        %1510 = vrot.lane.b32.xlu0 %v1508, 32
        %v1511 = vpop.permute.xlu0 %1510
        %1513 = vst.msk [vmem:[#allocation3 + $0xa8] sm:$0x7f] %vm1029, %v1511
        %v1514 = vld [vmem:[%s897 + $0x1] sm:$0x7f]
        %v1516 = vrot.slane %v1514, 1
        %1517 = vrot.lane.b32.xlu0 %v1516, 32
        %v1518 = vpop.permute.xlu0 %1517
        %1520 = vst.msk [vmem:[#allocation3 + $0xa8] sm:$0x80] %vm1037, %v1518
        %1521 = vst.msk [vmem:[#allocation3 + $0xc0] sm:$0x3f] %vm1039, %v1518
        %v1522 = vld [vmem:[%s902 + $0x1] sm:$0x7f]
        %v1524 = vrot.slane %v1522, 2
        %1525 = vrot.lane.b32.xlu0 %v1524, 32
        %v1526 = vpop.permute.xlu0 %1525
        %1528 = vst.msk [vmem:[#allocation3 + $0xc0] sm:$0xc0] %vm1047, %v1526
        %1529 = vst.msk [vmem:[#allocation3 + $0xd8] sm:$0x1f] %vm1049, %v1526
        %v1530 = vld [vmem:[%s907 + $0x1] sm:$0x7f]
        %v1532 = vrot.slane %v1530, 3
        %1533 = vrot.lane.b32.xlu0 %v1532, 32
        %v1534 = vpop.permute.xlu0 %1533
        %1536 = vst.msk [vmem:[#allocation3 + $0xd8] sm:$0xe0] %vm1057, %v1534
        %1537 = vst.msk [vmem:[#allocation3 + $0xf0] sm:$0xf] %vm1059, %v1534
        %v1538 = vld [vmem:[%s912 + $0x1] sm:$0x7f]
        %v1540 = vrot.slane %v1538, 4
        %1541 = vrot.lane.b32.xlu0 %v1540, 32
        %v1542 = vpop.permute.xlu0 %1541
        %1544 = vst.msk [vmem:[#allocation3 + $0xf0] sm:$0xf0] %vm1067, %v1542
        %1545 = vst.msk [vmem:[#allocation3 + $0x108] sm:$0x7] %vm1069, %v1542
        %v1546 = vld [vmem:[%s917 + $0x1] sm:$0x7f]
        %v1548 = vrot.slane %v1546, 5
        %1549 = vrot.lane.b32.xlu0 %v1548, 32
        %v1550 = vpop.permute.xlu0 %1549
        %1552 = vst.msk [vmem:[#allocation3 + $0x108] sm:$0xf8] %vm1077, %v1550
        %1553 = vst.msk [vmem:[#allocation3 + $0x120] sm:$0x3] %vm1079, %v1550
        %v1554 = vld [vmem:[%s1023 + $0x1] sm:$0x7f]
        %v1556 = vrot.slane %v1554, 7
        %1557 = vrot.lane.b32.xlu0 %v1556, 64
        %v1558 = vpop.permute.xlu0 %1557
        %vm1560 = vcmask 785921
        %1561 = vst.msk [vmem:[#allocation3 + $0x90] sm:$0xfe] %vm1560, %v1558
        %v1562 = vld [vmem:[%s927 + $0x1] sm:$0x7f]
        %1564 = vrot.lane.b32.xlu0 %v1562, 64
        %v1565 = vpop.permute.xlu0 %1564
        %1567 = vst.msk [vmem:[#allocation3 + $0xa8] sm:$0x7f] %vm1096, %v1565
        %v1568 = vld [vmem:[%s930 + $0x1] sm:$0x7f]
        %v1570 = vrot.slane %v1568, 1
        %1571 = vrot.lane.b32.xlu0 %v1570, 64
        %v1572 = vpop.permute.xlu0 %1571
        %1574 = vst.msk [vmem:[#allocation3 + $0xa8] sm:$0x80] %vm1104, %v1572
        %1575 = vst.msk [vmem:[#allocation3 + $0xc0] sm:$0x3f] %vm1106, %v1572
        %v1576 = vld [vmem:[%s932 + $0x1] sm:$0x7f]
        %v1578 = vrot.slane %v1576, 2
        %1579 = vrot.lane.b32.xlu0 %v1578, 64
        %v1580 = vpop.permute.xlu0 %1579
        %1582 = vst.msk [vmem:[#allocation3 + $0xc0] sm:$0xc0] %vm1114, %v1580
        %1583 = vst.msk [vmem:[#allocation3 + $0xd8] sm:$0x1f] %vm1116, %v1580
        %v1584 = vld [vmem:[%s935 + $0x1] sm:$0x7f]
        %v1586 = vrot.slane %v1584, 3
        %1587 = vrot.lane.b32.xlu0 %v1586, 64
        %v1588 = vpop.permute.xlu0 %1587
        %1590 = vst.msk [vmem:[#allocation3 + $0xd8] sm:$0xe0] %vm1124, %v1588
        %1591 = vst.msk [vmem:[#allocation3 + $0xf0] sm:$0xf] %vm1126, %v1588
        %v1592 = vld [vmem:[%s938 + $0x1] sm:$0x7f]
        %v1594 = vrot.slane %v1592, 4
        %1595 = vrot.lane.b32.xlu0 %v1594, 64
        %v1596 = vpop.permute.xlu0 %1595
        %1598 = vst.msk [vmem:[#allocation3 + $0xf0] sm:$0xf0] %vm1134, %v1596
        %1599 = vst.msk [vmem:[#allocation3 + $0x108] sm:$0x7] %vm1136, %v1596
        %v1600 = vld [vmem:[%s941 + $0x1] sm:$0x7f]
        %v1602 = vrot.slane %v1600, 5
        %1603 = vrot.lane.b32.xlu0 %v1602, 64
        %v1604 = vpop.permute.xlu0 %1603
        %1606 = vst.msk [vmem:[#allocation3 + $0x108] sm:$0xf8] %vm1144, %v1604
        %1607 = vst.msk [vmem:[#allocation3 + $0x120] sm:$0x3] %vm1146, %v1604
        %v1608 = vld [vmem:[%s966] sm:$0x7f]
        %v1610 = vrot.slane %v1608, 7
        %1611 = vrot.lane.b32.xlu0 %v1610, 96
        %v1612 = vpop.permute.xlu0 %1611
        %vm1614 = vcmask 1048321
        %1615 = vst.msk [vmem:[#allocation3 + $0x90] sm:$0xfe] %vm1614, %v1612
        %v1616 = vld [vmem:[%s969] sm:$0x7f]
        %1618 = vrot.lane.b32.xlu0 %v1616, 96
        %v1619 = vpop.permute.xlu0 %1618
        %1621 = vst.msk [vmem:[#allocation3 + $0xa8] sm:$0x7f] %vm1163, %v1619
        %v1622 = vld [vmem:[%s972] sm:$0x7f]
        %v1624 = vrot.slane %v1622, 1
        %1625 = vrot.lane.b32.xlu0 %v1624, 96
        %v1626 = vpop.permute.xlu0 %1625
        %1628 = vst.msk [vmem:[#allocation3 + $0xa8] sm:$0x80] %vm1171, %v1626
        %1629 = vst.msk [vmem:[#allocation3 + $0xc0] sm:$0x3f] %vm1173, %v1626
        %v1630 = vld [vmem:[%s974] sm:$0x7f]
        %v1632 = vrot.slane %v1630, 2
        %1633 = vrot.lane.b32.xlu0 %v1632, 96
        %v1634 = vpop.permute.xlu0 %1633
        %1636 = vst.msk [vmem:[#allocation3 + $0xc0] sm:$0xc0] %vm1181, %v1634
        %1637 = vst.msk [vmem:[#allocation3 + $0xd8] sm:$0x1f] %vm1183, %v1634
        %v1638 = vld [vmem:[%s976] sm:$0x7f]
        %v1640 = vrot.slane %v1638, 3
        %1641 = vrot.lane.b32.xlu0 %v1640, 96
        %v1642 = vpop.permute.xlu0 %1641
        %1644 = vst.msk [vmem:[#allocation3 + $0xd8] sm:$0xe0] %vm1191, %v1642
        %1645 = vst.msk [vmem:[#allocation3 + $0xf0] sm:$0xf] %vm1193, %v1642
        %v1646 = vld [vmem:[%s979] sm:$0x7f]
        %v1648 = vrot.slane %v1646, 4
        %1649 = vrot.lane.b32.xlu0 %v1648, 96
        %v1650 = vpop.permute.xlu0 %1649
        %1652 = vst.msk [vmem:[#allocation3 + $0xf0] sm:$0xf0] %vm1201, %v1650
        %1653 = vst.msk [vmem:[#allocation3 + $0x108] sm:$0x7] %vm1203, %v1650
        %v1654 = vld [vmem:[%s982] sm:$0x7f]
        %v1656 = vrot.slane %v1654, 5
        %1657 = vrot.lane.b32.xlu0 %v1656, 96
        %v1658 = vpop.permute.xlu0 %1657
        %1660 = vst.msk [vmem:[#allocation3 + $0x108] sm:$0xf8] %vm1211, %v1658
        %1661 = vst.msk [vmem:[#allocation3 + $0x120] sm:$0x3] %vm1213, %v1658
        %v1662 = vld [vmem:[%s947 + $0x1] sm:$0x7f]
        %v1664 = vrot.slane %v1662, 7
        %1666 = vst.msk [vmem:[#allocation3 + $0x98] sm:$0xfe] %vm928, %v1664
        %v1667 = vld [vmem:[%s950 + $0x1] sm:$0x7f]
        %1668 = vst.msk [vmem:[#allocation3 + $0xb0] sm:$0x7f] %vm895, %v1667
        %v1669 = vld [vmem:[%s952 + $0x1] sm:$0x7f]
        %v1671 = vrot.slane %v1669, 1
        %1673 = vst.msk [vmem:[#allocation3 + $0xb0] sm:$0x80] %vm898, %v1671
        %1674 = vst.msk [vmem:[#allocation3 + $0xc8] sm:$0x3f] %vm900, %v1671
        %v1675 = vld [vmem:[%s954 + $0x1] sm:$0x7f]
        %v1677 = vrot.slane %v1675, 2
        %1679 = vst.msk [vmem:[#allocation3 + $0xc8] sm:$0xc0] %vm903, %v1677
        %1680 = vst.msk [vmem:[#allocation3 + $0xe0] sm:$0x1f] %vm905, %v1677
        %v1681 = vld [vmem:[%s957 + $0x1] sm:$0x7f]
        %v1683 = vrot.slane %v1681, 3
        %1685 = vst.msk [vmem:[#allocation3 + $0xe0] sm:$0xe0] %vm908, %v1683
        %1686 = vst.msk [vmem:[#allocation3 + $0xf8] sm:$0xf] %vm910, %v1683
        %v1687 = vld [vmem:[%s960 + $0x1] sm:$0x7f]
        %v1689 = vrot.slane %v1687, 4
        %1691 = vst.msk [vmem:[#allocation3 + $0xf8] sm:$0xf0] %vm913, %v1689
        %1692 = vst.msk [vmem:[#allocation3 + $0x110] sm:$0x7] %vm915, %v1689
        %v1693 = vld [vmem:[%s963 + $0x1] sm:$0x7f]
        %v1695 = vrot.slane %v1693, 5
        %1697 = vst.msk [vmem:[#allocation3 + $0x110] sm:$0xf8] %vm918, %v1695
        %1698 = vst.msk [vmem:[#allocation3 + $0x128] sm:$0x3] %vm920, %v1695
        %v1699 = vld [vmem:[%s966 + $0x1] sm:$0x7f]
        %v1701 = vrot.slane %v1699, 7
        %1702 = vrot.lane.b32.xlu0 %v1701, 32
        %v1703 = vpop.permute.xlu0 %1702
        %1705 = vst.msk [vmem:[#allocation3 + $0x98] sm:$0xfe] %vm1506, %v1703
        %v1706 = vld [vmem:[%s969 + $0x1] sm:$0x7f]
        %1708 = vrot.lane.b32.xlu0 %v1706, 32
        %v1709 = vpop.permute.xlu0 %1708
        %1711 = vst.msk [vmem:[#allocation3 + $0xb0] sm:$0x7f] %vm1029, %v1709
        %v1712 = vld [vmem:[%s972 + $0x1] sm:$0x7f]
        %v1714 = vrot.slane %v1712, 1
        %1715 = vrot.lane.b32.xlu0 %v1714, 32
        %v1716 = vpop.permute.xlu0 %1715
        %1718 = vst.msk [vmem:[#allocation3 + $0xb0] sm:$0x80] %vm1037, %v1716
        %1719 = vst.msk [vmem:[#allocation3 + $0xc8] sm:$0x3f] %vm1039, %v1716
        %v1720 = vld [vmem:[%s974 + $0x1] sm:$0x7f]
        %v1722 = vrot.slane %v1720, 2
        %1723 = vrot.lane.b32.xlu0 %v1722, 32
        %v1724 = vpop.permute.xlu0 %1723
        %1726 = vst.msk [vmem:[#allocation3 + $0xc8] sm:$0xc0] %vm1047, %v1724
        %1727 = vst.msk [vmem:[#allocation3 + $0xe0] sm:$0x1f] %vm1049, %v1724
        %v1728 = vld [vmem:[%s976 + $0x1] sm:$0x7f]
        %v1730 = vrot.slane %v1728, 3
        %1731 = vrot.lane.b32.xlu0 %v1730, 32
        %v1732 = vpop.permute.xlu0 %1731
        %1734 = vst.msk [vmem:[#allocation3 + $0xe0] sm:$0xe0] %vm1057, %v1732
        %1735 = vst.msk [vmem:[#allocation3 + $0xf8] sm:$0xf] %vm1059, %v1732
        %v1736 = vld [vmem:[%s979 + $0x1] sm:$0x7f]
        %v1738 = vrot.slane %v1736, 4
        %1739 = vrot.lane.b32.xlu0 %v1738, 32
        %v1740 = vpop.permute.xlu0 %1739
        %1742 = vst.msk [vmem:[#allocation3 + $0xf8] sm:$0xf0] %vm1067, %v1740
        %1743 = vst.msk [vmem:[#allocation3 + $0x110] sm:$0x7] %vm1069, %v1740
        %v1744 = vld [vmem:[%s982 + $0x1] sm:$0x7f]
        %v1746 = vrot.slane %v1744, 5
        %1747 = vrot.lane.b32.xlu0 %v1746, 32
        %v1748 = vpop.permute.xlu0 %1747
        %1750 = vst.msk [vmem:[#allocation3 + $0x110] sm:$0xf8] %vm1077, %v1748
        %1751 = vst.msk [vmem:[#allocation3 + $0x128] sm:$0x3] %vm1079, %v1748
        %v1752 = vld [vmem:[%s927] sm:$0x7f]
        %v1754 = vrot.slane %v1752, 7
        %1755 = vrot.lane.b32.xlu0 %v1754, 64
        %v1756 = vpop.permute.xlu0 %1755
        %1758 = vst.msk [vmem:[#allocation3 + $0x98] sm:$0xfe] %vm1560, %v1756
        %v1759 = vld [vmem:[%s930] sm:$0x7f]
        %1761 = vrot.lane.b32.xlu0 %v1759, 64
        %v1762 = vpop.permute.xlu0 %1761
        %1764 = vst.msk [vmem:[#allocation3 + $0xb0] sm:$0x7f] %vm1096, %v1762
        %v1765 = vld [vmem:[%s932] sm:$0x7f]
        %v1767 = vrot.slane %v1765, 1
        %1768 = vrot.lane.b32.xlu0 %v1767, 64
        %v1769 = vpop.permute.xlu0 %1768
        %1771 = vst.msk [vmem:[#allocation3 + $0xb0] sm:$0x80] %vm1104, %v1769
        %1772 = vst.msk [vmem:[#allocation3 + $0xc8] sm:$0x3f] %vm1106, %v1769
        %v1773 = vld [vmem:[%s935] sm:$0x7f]
        %v1775 = vrot.slane %v1773, 2
        %1776 = vrot.lane.b32.xlu0 %v1775, 64
        %v1777 = vpop.permute.xlu0 %1776
        %1779 = vst.msk [vmem:[#allocation3 + $0xc8] sm:$0xc0] %vm1114, %v1777
        %1780 = vst.msk [vmem:[#allocation3 + $0xe0] sm:$0x1f] %vm1116, %v1777
        %v1781 = vld [vmem:[%s938] sm:$0x7f]
        %v1783 = vrot.slane %v1781, 3
        %1784 = vrot.lane.b32.xlu0 %v1783, 64
        %v1785 = vpop.permute.xlu0 %1784
        %1787 = vst.msk [vmem:[#allocation3 + $0xe0] sm:$0xe0] %vm1124, %v1785
        %1788 = vst.msk [vmem:[#allocation3 + $0xf8] sm:$0xf] %vm1126, %v1785
        %v1789 = vld [vmem:[%s941] sm:$0x7f]
        %v1791 = vrot.slane %v1789, 4
        %1792 = vrot.lane.b32.xlu0 %v1791, 64
        %v1793 = vpop.permute.xlu0 %1792
        %1795 = vst.msk [vmem:[#allocation3 + $0xf8] sm:$0xf0] %vm1134, %v1793
        %1796 = vst.msk [vmem:[#allocation3 + $0x110] sm:$0x7] %vm1136, %v1793
        %v1797 = vld [vmem:[%s944] sm:$0x7f]
        %v1799 = vrot.slane %v1797, 5
        %1800 = vrot.lane.b32.xlu0 %v1799, 64
        %v1801 = vpop.permute.xlu0 %1800
        %1803 = vst.msk [vmem:[#allocation3 + $0x110] sm:$0xf8] %vm1144, %v1801
        %1804 = vst.msk [vmem:[#allocation3 + $0x128] sm:$0x3] %vm1146, %v1801
        %v1805 = vld [vmem:[%s894 + $0x1] sm:$0x7f]
        %v1807 = vrot.slane %v1805, 7
        %1808 = vrot.lane.b32.xlu0 %v1807, 96
        %v1809 = vpop.permute.xlu0 %1808
        %1811 = vst.msk [vmem:[#allocation3 + $0x98] sm:$0xfe] %vm1614, %v1809
        %v1812 = vld [vmem:[%s897 + $0x1] sm:$0x7f]
        %1814 = vrot.lane.b32.xlu0 %v1812, 96
        %v1815 = vpop.permute.xlu0 %1814
        %1817 = vst.msk [vmem:[#allocation3 + $0xb0] sm:$0x7f] %vm1163, %v1815
        %v1818 = vld [vmem:[%s902 + $0x1] sm:$0x7f]
        %v1820 = vrot.slane %v1818, 1
        %1821 = vrot.lane.b32.xlu0 %v1820, 96
        %v1822 = vpop.permute.xlu0 %1821
        %1824 = vst.msk [vmem:[#allocation3 + $0xb0] sm:$0x80] %vm1171, %v1822
        %1825 = vst.msk [vmem:[#allocation3 + $0xc8] sm:$0x3f] %vm1173, %v1822
        %v1826 = vld [vmem:[%s907 + $0x1] sm:$0x7f]
        %v1828 = vrot.slane %v1826, 2
        %1829 = vrot.lane.b32.xlu0 %v1828, 96
        %v1830 = vpop.permute.xlu0 %1829
        %1832 = vst.msk [vmem:[#allocation3 + $0xc8] sm:$0xc0] %vm1181, %v1830
        %1833 = vst.msk [vmem:[#allocation3 + $0xe0] sm:$0x1f] %vm1183, %v1830
        %v1834 = vld [vmem:[%s912 + $0x1] sm:$0x7f]
        %v1836 = vrot.slane %v1834, 3
        %1837 = vrot.lane.b32.xlu0 %v1836, 96
        %v1838 = vpop.permute.xlu0 %1837
        %1840 = vst.msk [vmem:[#allocation3 + $0xe0] sm:$0xe0] %vm1191, %v1838
        %1841 = vst.msk [vmem:[#allocation3 + $0xf8] sm:$0xf] %vm1193, %v1838
        %v1842 = vld [vmem:[%s917 + $0x1] sm:$0x7f]
        %v1844 = vrot.slane %v1842, 4
        %1845 = vrot.lane.b32.xlu0 %v1844, 96
        %v1846 = vpop.permute.xlu0 %1845
        %1848 = vst.msk [vmem:[#allocation3 + $0xf8] sm:$0xf0] %vm1201, %v1846
        %1849 = vst.msk [vmem:[#allocation3 + $0x110] sm:$0x7] %vm1203, %v1846
        %v1850 = vld [vmem:[%s922 + $0x1] sm:$0x7f]
        %v1852 = vrot.slane %v1850, 5
        %1853 = vrot.lane.b32.xlu0 %v1852, 96
        %v1854 = vpop.permute.xlu0 %1853
        %1856 = vst.msk [vmem:[#allocation3 + $0x110] sm:$0xf8] %vm1211, %v1854
        %1857 = vst.msk [vmem:[#allocation3 + $0x128] sm:$0x3] %vm1213, %v1854
        %v1858 = vld [vmem:[%s927 + $0x1] sm:$0x7f]
        %v1860 = vrot.slane %v1858, 7
        %1862 = vst.msk [vmem:[#allocation3 + $0xa0] sm:$0xfe] %vm928, %v1860
        %v1863 = vld [vmem:[%s930 + $0x1] sm:$0x7f]
        %1864 = vst.msk [vmem:[#allocation3 + $0xb8] sm:$0x7f] %vm895, %v1863
        %v1865 = vld [vmem:[%s932 + $0x1] sm:$0x7f]
        %v1867 = vrot.slane %v1865, 1
        %1869 = vst.msk [vmem:[#allocation3 + $0xb8] sm:$0x80] %vm898, %v1867
        %1870 = vst.msk [vmem:[#allocation3 + $0xd0] sm:$0x3f] %vm900, %v1867
        %v1871 = vld [vmem:[%s935 + $0x1] sm:$0x7f]
        %v1873 = vrot.slane %v1871, 2
        %1875 = vst.msk [vmem:[#allocation3 + $0xd0] sm:$0xc0] %vm903, %v1873
        %1876 = vst.msk [vmem:[#allocation3 + $0xe8] sm:$0x1f] %vm905, %v1873
        %v1877 = vld [vmem:[%s938 + $0x1] sm:$0x7f]
        %v1879 = vrot.slane %v1877, 3
        %1881 = vst.msk [vmem:[#allocation3 + $0xe8] sm:$0xe0] %vm908, %v1879
        %1882 = vst.msk [vmem:[#allocation3 + $0x100] sm:$0xf] %vm910, %v1879
        %v1883 = vld [vmem:[%s941 + $0x1] sm:$0x7f]
        %v1885 = vrot.slane %v1883, 4
        %1887 = vst.msk [vmem:[#allocation3 + $0x100] sm:$0xf0] %vm913, %v1885
        %1888 = vst.msk [vmem:[#allocation3 + $0x118] sm:$0x7] %vm915, %v1885
        %v1889 = vld [vmem:[%s944 + $0x1] sm:$0x7f]
        %v1891 = vrot.slane %v1889, 5
        %1893 = vst.msk [vmem:[#allocation3 + $0x118] sm:$0xf8] %vm918, %v1891
        %1894 = vst.msk [vmem:[#allocation3 + $0x130] sm:$0x3] %vm920, %v1891
        %v1895 = vld [vmem:[%s947] sm:$0x7f]
        %v1897 = vrot.slane %v1895, 6
        %1899 = vst.msk [vmem:[#allocation3 + $0x120] sm:$0xfc] %vm923, %v1897
        %1900 = vst.msk [vmem:[#allocation3 + $0x138] sm:$0x1] %vm925, %v1897
        %v1901 = vld [vmem:[%s950] sm:$0x7f]
        %v1903 = vrot.slane %v1901, 7
        %1905 = vst.msk [vmem:[#allocation3 + $0x138] sm:$0xfe] %vm928, %v1903
        %v1906 = vld [vmem:[%s952] sm:$0x7f]
        %1907 = vst.msk [vmem:[#allocation3 + $0x150] sm:$0x7f] %vm895, %v1906
        %v1908 = vld [vmem:[%s954] sm:$0x7f]
        %v1910 = vrot.slane %v1908, 1
        %1912 = vst.msk [vmem:[#allocation3 + $0x150] sm:$0x80] %vm898, %v1910
        %1913 = vst.msk [vmem:[#allocation3 + $0x168] sm:$0x3f] %vm900, %v1910
        %v1914 = vld [vmem:[%s957] sm:$0x7f]
        %v1916 = vrot.slane %v1914, 2
        %1918 = vst.msk [vmem:[#allocation3 + $0x168] sm:$0xc0] %vm903, %v1916
        %1919 = vst.msk [vmem:[#allocation3 + $0x180] sm:$0x1f] %vm905, %v1916
        %v1920 = vld [vmem:[%s960] sm:$0x7f]
        %v1922 = vrot.slane %v1920, 3
        %1924 = vst.msk [vmem:[#allocation3 + $0x180] sm:$0xe0] %vm908, %v1922
        %1925 = vst.msk [vmem:[#allocation3 + $0x198] sm:$0xf] %vm910, %v1922
        %v1926 = vld [vmem:[%s963] sm:$0x7f]
        %v1928 = vrot.slane %v1926, 4
        %1930 = vst.msk [vmem:[#allocation3 + $0x198] sm:$0xf0] %vm913, %v1928
        %1931 = vst.msk [vmem:[#allocation3 + $0x1b0] sm:$0x7] %vm915, %v1928
        %v1932 = vld [vmem:[%s966] sm:$0x7f]
        %v1934 = vrot.slane %v1932, 6
        %1935 = vrot.lane.b32.xlu0 %v1934, 32
        %v1936 = vpop.permute.xlu0 %1935
        %1938 = vst.msk [vmem:[#allocation3 + $0x120] sm:$0xfc] %vm1087, %v1936
        %1939 = vst.msk [vmem:[#allocation3 + $0x138] sm:$0x1] %vm1089, %v1936
        %v1940 = vld [vmem:[%s969] sm:$0x7f]
        %v1942 = vrot.slane %v1940, 7
        %1943 = vrot.lane.b32.xlu0 %v1942, 32
        %v1944 = vpop.permute.xlu0 %1943
        %1946 = vst.msk [vmem:[#allocation3 + $0x138] sm:$0xfe] %vm1506, %v1944
        %v1947 = vld [vmem:[%s972] sm:$0x7f]
        %1949 = vrot.lane.b32.xlu0 %v1947, 32
        %v1950 = vpop.permute.xlu0 %1949
        %1952 = vst.msk [vmem:[#allocation3 + $0x150] sm:$0x7f] %vm1029, %v1950
        %v1953 = vld [vmem:[%s974] sm:$0x7f]
        %v1955 = vrot.slane %v1953, 1
        %1956 = vrot.lane.b32.xlu0 %v1955, 32
        %v1957 = vpop.permute.xlu0 %1956
        %1959 = vst.msk [vmem:[#allocation3 + $0x150] sm:$0x80] %vm1037, %v1957
        %1960 = vst.msk [vmem:[#allocation3 + $0x168] sm:$0x3f] %vm1039, %v1957
        %v1961 = vld [vmem:[%s976] sm:$0x7f]
        %v1963 = vrot.slane %v1961, 2
        %1964 = vrot.lane.b32.xlu0 %v1963, 32
        %v1965 = vpop.permute.xlu0 %1964
        %1967 = vst.msk [vmem:[#allocation3 + $0x168] sm:$0xc0] %vm1047, %v1965
        %1968 = vst.msk [vmem:[#allocation3 + $0x180] sm:$0x1f] %vm1049, %v1965
        %v1969 = vld [vmem:[%s979] sm:$0x7f]
        %v1971 = vrot.slane %v1969, 3
        %1972 = vrot.lane.b32.xlu0 %v1971, 32
        %v1973 = vpop.permute.xlu0 %1972
        %1975 = vst.msk [vmem:[#allocation3 + $0x180] sm:$0xe0] %vm1057, %v1973
        %1976 = vst.msk [vmem:[#allocation3 + $0x198] sm:$0xf] %vm1059, %v1973
        %v1977 = vld [vmem:[%s982] sm:$0x7f]
        %v1979 = vrot.slane %v1977, 4
        %1980 = vrot.lane.b32.xlu0 %v1979, 32
        %v1981 = vpop.permute.xlu0 %1980
        %1983 = vst.msk [vmem:[#allocation3 + $0x198] sm:$0xf0] %vm1067, %v1981
        %1984 = vst.msk [vmem:[#allocation3 + $0x1b0] sm:$0x7] %vm1069, %v1981
        %v1985 = vld [vmem:[%s947 + $0x1] sm:$0x7f]
        %v1987 = vrot.slane %v1985, 6
        %1988 = vrot.lane.b32.xlu0 %v1987, 64
        %v1989 = vpop.permute.xlu0 %1988
        %1991 = vst.msk [vmem:[#allocation3 + $0x120] sm:$0xfc] %vm1154, %v1989
        %1992 = vst.msk [vmem:[#allocation3 + $0x138] sm:$0x1] %vm1156, %v1989
        %v1993 = vld [vmem:[%s950 + $0x1] sm:$0x7f]
        %v1995 = vrot.slane %v1993, 7
        %1996 = vrot.lane.b32.xlu0 %v1995, 64
        %v1997 = vpop.permute.xlu0 %1996
        %1999 = vst.msk [vmem:[#allocation3 + $0x138] sm:$0xfe] %vm1560, %v1997
        %v2000 = vld [vmem:[%s952 + $0x1] sm:$0x7f]
        %2002 = vrot.lane.b32.xlu0 %v2000, 64
        %v2003 = vpop.permute.xlu0 %2002
        %2005 = vst.msk [vmem:[#allocation3 + $0x150] sm:$0x7f] %vm1096, %v2003
        %v2006 = vld [vmem:[%s954 + $0x1] sm:$0x7f]
        %v2008 = vrot.slane %v2006, 1
        %2009 = vrot.lane.b32.xlu0 %v2008, 64
        %v2010 = vpop.permute.xlu0 %2009
        %2012 = vst.msk [vmem:[#allocation3 + $0x150] sm:$0x80] %vm1104, %v2010
        %2013 = vst.msk [vmem:[#allocation3 + $0x168] sm:$0x3f] %vm1106, %v2010
        %v2014 = vld [vmem:[%s957 + $0x1] sm:$0x7f]
        %v2016 = vrot.slane %v2014, 2
        %2017 = vrot.lane.b32.xlu0 %v2016, 64
        %v2018 = vpop.permute.xlu0 %2017
        %2020 = vst.msk [vmem:[#allocation3 + $0x168] sm:$0xc0] %vm1114, %v2018
        %2021 = vst.msk [vmem:[#allocation3 + $0x180] sm:$0x1f] %vm1116, %v2018
        %v2022 = vld [vmem:[%s960 + $0x1] sm:$0x7f]
        %v2024 = vrot.slane %v2022, 3
        %2025 = vrot.lane.b32.xlu0 %v2024, 64
        %v2026 = vpop.permute.xlu0 %2025
        %2028 = vst.msk [vmem:[#allocation3 + $0x180] sm:$0xe0] %vm1124, %v2026
        %2029 = vst.msk [vmem:[#allocation3 + $0x198] sm:$0xf] %vm1126, %v2026
        %v2030 = vld [vmem:[%s963 + $0x1] sm:$0x7f]
        %v2032 = vrot.slane %v2030, 4
        %2033 = vrot.lane.b32.xlu0 %v2032, 64
        %v2034 = vpop.permute.xlu0 %2033
        %2036 = vst.msk [vmem:[#allocation3 + $0x198] sm:$0xf0] %vm1134, %v2034
        %2037 = vst.msk [vmem:[#allocation3 + $0x1b0] sm:$0x7] %vm1136, %v2034
        %v2038 = vld [vmem:[%s894] sm:$0x7f]
        %v2040 = vrot.slane %v2038, 6
        %2041 = vrot.lane.b32.xlu0 %v2040, 96
        %v2042 = vpop.permute.xlu0 %2041
        %2044 = vst.msk [vmem:[#allocation3 + $0x120] sm:$0xfc] %vm1221, %v2042
        %2045 = vst.msk [vmem:[#allocation3 + $0x138] sm:$0x1] %vm1223, %v2042
        %v2046 = vld [vmem:[%s897] sm:$0x7f]
        %v2048 = vrot.slane %v2046, 7
        %2049 = vrot.lane.b32.xlu0 %v2048, 96
        %v2050 = vpop.permute.xlu0 %2049
        %2052 = vst.msk [vmem:[#allocation3 + $0x138] sm:$0xfe] %vm1614, %v2050
        %v2053 = vld [vmem:[%s902] sm:$0x7f]
        %2055 = vrot.lane.b32.xlu0 %v2053, 96
        %v2056 = vpop.permute.xlu0 %2055
        %2058 = vst.msk [vmem:[#allocation3 + $0x150] sm:$0x7f] %vm1163, %v2056
        %v2059 = vld [vmem:[%s907] sm:$0x7f]
        %v2061 = vrot.slane %v2059, 1
        %2062 = vrot.lane.b32.xlu0 %v2061, 96
        %v2063 = vpop.permute.xlu0 %2062
        %2065 = vst.msk [vmem:[#allocation3 + $0x150] sm:$0x80] %vm1171, %v2063
        %2066 = vst.msk [vmem:[#allocation3 + $0x168] sm:$0x3f] %vm1173, %v2063
        %v2067 = vld [vmem:[%s912] sm:$0x7f]
        %v2069 = vrot.slane %v2067, 2
        %2070 = vrot.lane.b32.xlu0 %v2069, 96
        %v2071 = vpop.permute.xlu0 %2070
        %2073 = vst.msk [vmem:[#allocation3 + $0x168] sm:$0xc0] %vm1181, %v2071
        %2074 = vst.msk [vmem:[#allocation3 + $0x180] sm:$0x1f] %vm1183, %v2071
        %v2075 = vld [vmem:[%s917] sm:$0x7f]
        %v2077 = vrot.slane %v2075, 3
        %2078 = vrot.lane.b32.xlu0 %v2077, 96
        %v2079 = vpop.permute.xlu0 %2078
        %2081 = vst.msk [vmem:[#allocation3 + $0x180] sm:$0xe0] %vm1191, %v2079
        %2082 = vst.msk [vmem:[#allocation3 + $0x198] sm:$0xf] %vm1193, %v2079
        %v2083 = vld [vmem:[%s922] sm:$0x7f]
        %v2085 = vrot.slane %v2083, 4
        %2086 = vrot.lane.b32.xlu0 %v2085, 96
        %v2087 = vpop.permute.xlu0 %2086
        %2089 = vst.msk [vmem:[#allocation3 + $0x198] sm:$0xf0] %vm1201, %v2087
        %2090 = vst.msk [vmem:[#allocation3 + $0x1b0] sm:$0x7] %vm1203, %v2087
        %v2091 = vld [vmem:[%s927] sm:$0x7f]
        %v2093 = vrot.slane %v2091, 6
        %2095 = vst.msk [vmem:[#allocation3 + $0x128] sm:$0xfc] %vm923, %v2093
        %2096 = vst.msk [vmem:[#allocation3 + $0x140] sm:$0x1] %vm925, %v2093
        %v2097 = vld [vmem:[%s930] sm:$0x7f]
        %v2099 = vrot.slane %v2097, 7
        %2101 = vst.msk [vmem:[#allocation3 + $0x140] sm:$0xfe] %vm928, %v2099
        %v2102 = vld [vmem:[%s932] sm:$0x7f]
        %2103 = vst.msk [vmem:[#allocation3 + $0x158] sm:$0x7f] %vm895, %v2102
        %v2104 = vld [vmem:[%s935] sm:$0x7f]
        %v2106 = vrot.slane %v2104, 1
        %2108 = vst.msk [vmem:[#allocation3 + $0x158] sm:$0x80] %vm898, %v2106
        %2109 = vst.msk [vmem:[#allocation3 + $0x170] sm:$0x3f] %vm900, %v2106
        %v2110 = vld [vmem:[%s938] sm:$0x7f]
        %v2112 = vrot.slane %v2110, 2
        %2114 = vst.msk [vmem:[#allocation3 + $0x170] sm:$0xc0] %vm903, %v2112
        %2115 = vst.msk [vmem:[#allocation3 + $0x188] sm:$0x1f] %vm905, %v2112
        %v2116 = vld [vmem:[%s941] sm:$0x7f]
        %v2118 = vrot.slane %v2116, 3
        %2120 = vst.msk [vmem:[#allocation3 + $0x188] sm:$0xe0] %vm908, %v2118
        %2121 = vst.msk [vmem:[#allocation3 + $0x1a0] sm:$0xf] %vm910, %v2118
        %v2122 = vld [vmem:[%s944] sm:$0x7f]
        %v2124 = vrot.slane %v2122, 4
        %2126 = vst.msk [vmem:[#allocation3 + $0x1a0] sm:$0xf0] %vm913, %v2124
        %2127 = vst.msk [vmem:[#allocation3 + $0x1b8] sm:$0x7] %vm915, %v2124
        %v2128 = vld [vmem:[%s894 + $0x1] sm:$0x7f]
        %v2130 = vrot.slane %v2128, 6
        %2131 = vrot.lane.b32.xlu0 %v2130, 32
        %v2132 = vpop.permute.xlu0 %2131
        %2134 = vst.msk [vmem:[#allocation3 + $0x128] sm:$0xfc] %vm1087, %v2132
        %2135 = vst.msk [vmem:[#allocation3 + $0x140] sm:$0x1] %vm1089, %v2132
        %v2136 = vld [vmem:[%s897 + $0x1] sm:$0x7f]
        %v2138 = vrot.slane %v2136, 7
        %2139 = vrot.lane.b32.xlu0 %v2138, 32
        %v2140 = vpop.permute.xlu0 %2139
        %2142 = vst.msk [vmem:[#allocation3 + $0x140] sm:$0xfe] %vm1506, %v2140
        %v2143 = vld [vmem:[%s902 + $0x1] sm:$0x7f]
        %2145 = vrot.lane.b32.xlu0 %v2143, 32
        %v2146 = vpop.permute.xlu0 %2145
        %2148 = vst.msk [vmem:[#allocation3 + $0x158] sm:$0x7f] %vm1029, %v2146
        %v2149 = vld [vmem:[%s907 + $0x1] sm:$0x7f]
        %v2151 = vrot.slane %v2149, 1
        %2152 = vrot.lane.b32.xlu0 %v2151, 32
        %v2153 = vpop.permute.xlu0 %2152
        %2155 = vst.msk [vmem:[#allocation3 + $0x158] sm:$0x80] %vm1037, %v2153
        %2156 = vst.msk [vmem:[#allocation3 + $0x170] sm:$0x3f] %vm1039, %v2153
        %v2157 = vld [vmem:[%s912 + $0x1] sm:$0x7f]
        %v2159 = vrot.slane %v2157, 2
        %2160 = vrot.lane.b32.xlu0 %v2159, 32
        %v2161 = vpop.permute.xlu0 %2160
        %2163 = vst.msk [vmem:[#allocation3 + $0x170] sm:$0xc0] %vm1047, %v2161
        %2164 = vst.msk [vmem:[#allocation3 + $0x188] sm:$0x1f] %vm1049, %v2161
        %v2165 = vld [vmem:[%s917 + $0x1] sm:$0x7f]
        %v2167 = vrot.slane %v2165, 3
        %2168 = vrot.lane.b32.xlu0 %v2167, 32
        %v2169 = vpop.permute.xlu0 %2168
        %2171 = vst.msk [vmem:[#allocation3 + $0x188] sm:$0xe0] %vm1057, %v2169
        %2172 = vst.msk [vmem:[#allocation3 + $0x1a0] sm:$0xf] %vm1059, %v2169
        %v2173 = vld [vmem:[%s922 + $0x1] sm:$0x7f]
        %v2175 = vrot.slane %v2173, 4
        %2176 = vrot.lane.b32.xlu0 %v2175, 32
        %v2177 = vpop.permute.xlu0 %2176
        %2179 = vst.msk [vmem:[#allocation3 + $0x1a0] sm:$0xf0] %vm1067, %v2177
        %2180 = vst.msk [vmem:[#allocation3 + $0x1b8] sm:$0x7] %vm1069, %v2177
        %v2181 = vld [vmem:[%s950] sm:$0x7f]
        %v2183 = vrot.slane %v2181, 6
        %2184 = vrot.lane.b32.xlu0 %v2183, 64
        %v2185 = vpop.permute.xlu0 %2184
        %2187 = vst.msk [vmem:[#allocation3 + $0x128] sm:$0xfc] %vm1154, %v2185
        %2188 = vst.msk [vmem:[#allocation3 + $0x140] sm:$0x1] %vm1156, %v2185
        %v2189 = vld [vmem:[%s952] sm:$0x7f]
        %v2191 = vrot.slane %v2189, 7
        %2192 = vrot.lane.b32.xlu0 %v2191, 64
        %v2193 = vpop.permute.xlu0 %2192
        %2195 = vst.msk [vmem:[#allocation3 + $0x140] sm:$0xfe] %vm1560, %v2193
        %v2196 = vld [vmem:[%s954] sm:$0x7f]
        %2198 = vrot.lane.b32.xlu0 %v2196, 64
        %v2199 = vpop.permute.xlu0 %2198
        %2201 = vst.msk [vmem:[#allocation3 + $0x158] sm:$0x7f] %vm1096, %v2199
        %v2202 = vld [vmem:[%s957] sm:$0x7f]
        %v2204 = vrot.slane %v2202, 1
        %2205 = vrot.lane.b32.xlu0 %v2204, 64
        %v2206 = vpop.permute.xlu0 %2205
        %2208 = vst.msk [vmem:[#allocation3 + $0x158] sm:$0x80] %vm1104, %v2206
        %2209 = vst.msk [vmem:[#allocation3 + $0x170] sm:$0x3f] %vm1106, %v2206
        %v2210 = vld [vmem:[%s960] sm:$0x7f]
        %v2212 = vrot.slane %v2210, 2
        %2213 = vrot.lane.b32.xlu0 %v2212, 64
        %v2214 = vpop.permute.xlu0 %2213
        %2216 = vst.msk [vmem:[#allocation3 + $0x170] sm:$0xc0] %vm1114, %v2214
        %2217 = vst.msk [vmem:[#allocation3 + $0x188] sm:$0x1f] %vm1116, %v2214
        %v2218 = vld [vmem:[%s963] sm:$0x7f]
        %v2220 = vrot.slane %v2218, 3
        %2221 = vrot.lane.b32.xlu0 %v2220, 64
        %v2222 = vpop.permute.xlu0 %2221
        %2224 = vst.msk [vmem:[#allocation3 + $0x188] sm:$0xe0] %vm1124, %v2222
        %2225 = vst.msk [vmem:[#allocation3 + $0x1a0] sm:$0xf] %vm1126, %v2222
        %s2226 = scalar_lea.vmem [#allocation2], 184
        %v2227 = vld [vmem:[%s2226] sm:$0x7f]
        %v2229 = vrot.slane %v2227, 4
        %2230 = vrot.lane.b32.xlu0 %v2229, 64
        %v2231 = vpop.permute.xlu0 %2230
        %2233 = vst.msk [vmem:[#allocation3 + $0x1a0] sm:$0xf0] %vm1134, %v2231
        %2234 = vst.msk [vmem:[#allocation3 + $0x1b8] sm:$0x7] %vm1136, %v2231
        %v2235 = vld [vmem:[%s969] sm:$0x7f]
        %v2237 = vrot.slane %v2235, 6
        %2238 = vrot.lane.b32.xlu0 %v2237, 96
        %v2239 = vpop.permute.xlu0 %2238
        %2241 = vst.msk [vmem:[#allocation3 + $0x128] sm:$0xfc] %vm1221, %v2239
        %2242 = vst.msk [vmem:[#allocation3 + $0x140] sm:$0x1] %vm1223, %v2239
        %v2243 = vld [vmem:[%s972] sm:$0x7f]
        %v2245 = vrot.slane %v2243, 7
        %2246 = vrot.lane.b32.xlu0 %v2245, 96
        %v2247 = vpop.permute.xlu0 %2246
        %2249 = vst.msk [vmem:[#allocation3 + $0x140] sm:$0xfe] %vm1614, %v2247
        %v2250 = vld [vmem:[%s974] sm:$0x7f]
        %2252 = vrot.lane.b32.xlu0 %v2250, 96
        %v2253 = vpop.permute.xlu0 %2252
        %2255 = vst.msk [vmem:[#allocation3 + $0x158] sm:$0x7f] %vm1163, %v2253
        %v2256 = vld [vmem:[%s976] sm:$0x7f]
        %v2258 = vrot.slane %v2256, 1
        %2259 = vrot.lane.b32.xlu0 %v2258, 96
        %v2260 = vpop.permute.xlu0 %2259
        %2262 = vst.msk [vmem:[#allocation3 + $0x158] sm:$0x80] %vm1171, %v2260
        %2263 = vst.msk [vmem:[#allocation3 + $0x170] sm:$0x3f] %vm1173, %v2260
        %v2264 = vld [vmem:[%s979] sm:$0x7f]
        %v2266 = vrot.slane %v2264, 2
        %2267 = vrot.lane.b32.xlu0 %v2266, 96
        %v2268 = vpop.permute.xlu0 %2267
        %2270 = vst.msk [vmem:[#allocation3 + $0x170] sm:$0xc0] %vm1181, %v2268
        %2271 = vst.msk [vmem:[#allocation3 + $0x188] sm:$0x1f] %vm1183, %v2268
        %v2272 = vld [vmem:[%s982] sm:$0x7f]
        %v2274 = vrot.slane %v2272, 3
        %2275 = vrot.lane.b32.xlu0 %v2274, 96
        %v2276 = vpop.permute.xlu0 %2275
        %2278 = vst.msk [vmem:[#allocation3 + $0x188] sm:$0xe0] %vm1191, %v2276
        %2279 = vst.msk [vmem:[#allocation3 + $0x1a0] sm:$0xf] %vm1193, %v2276
        %s2280 = scalar_lea.vmem [#allocation2], 248
        %v2281 = vld [vmem:[%s2280] sm:$0x7f]
        %v2283 = vrot.slane %v2281, 4
        %2284 = vrot.lane.b32.xlu0 %v2283, 96
        %v2285 = vpop.permute.xlu0 %2284
        %2287 = vst.msk [vmem:[#allocation3 + $0x1a0] sm:$0xf0] %vm1201, %v2285
        %2288 = vst.msk [vmem:[#allocation3 + $0x1b8] sm:$0x7] %vm1203, %v2285
        %v2289 = vld [vmem:[%s950 + $0x1] sm:$0x7f]
        %v2291 = vrot.slane %v2289, 6
        %2293 = vst.msk [vmem:[#allocation3 + $0x130] sm:$0xfc] %vm923, %v2291
        %2294 = vst.msk [vmem:[#allocation3 + $0x148] sm:$0x1] %vm925, %v2291
        %v2295 = vld [vmem:[%s952 + $0x1] sm:$0x7f]
        %v2297 = vrot.slane %v2295, 7
        %2299 = vst.msk [vmem:[#allocation3 + $0x148] sm:$0xfe] %vm928, %v2297
        %v2300 = vld [vmem:[%s954 + $0x1] sm:$0x7f]
        %2301 = vst.msk [vmem:[#allocation3 + $0x160] sm:$0x7f] %vm895, %v2300
        %v2302 = vld [vmem:[%s957 + $0x1] sm:$0x7f]
        %v2304 = vrot.slane %v2302, 1
        %2306 = vst.msk [vmem:[#allocation3 + $0x160] sm:$0x80] %vm898, %v2304
        %2307 = vst.msk [vmem:[#allocation3 + $0x178] sm:$0x3f] %vm900, %v2304
        %v2308 = vld [vmem:[%s960 + $0x1] sm:$0x7f]
        %v2310 = vrot.slane %v2308, 2
        %2312 = vst.msk [vmem:[#allocation3 + $0x178] sm:$0xc0] %vm903, %v2310
        %2313 = vst.msk [vmem:[#allocation3 + $0x190] sm:$0x1f] %vm905, %v2310
        %v2314 = vld [vmem:[%s963 + $0x1] sm:$0x7f]
        %v2316 = vrot.slane %v2314, 3
        %2318 = vst.msk [vmem:[#allocation3 + $0x190] sm:$0xe0] %vm908, %v2316
        %2319 = vst.msk [vmem:[#allocation3 + $0x1a8] sm:$0xf] %vm910, %v2316
        %v2320 = vld [vmem:[%s2226 + $0x1] sm:$0x7f]
        %v2322 = vrot.slane %v2320, 4
        %2324 = vst.msk [vmem:[#allocation3 + $0x1a8] sm:$0xf0] %vm913, %v2322
        %2325 = vst.msk [vmem:[#allocation3 + $0x1c0] sm:$0x7] %vm915, %v2322
        %v2326 = vld [vmem:[%s966] sm:$0x7f]
        %v2328 = vrot.slane %v2326, 5
        %2330 = vst.msk [vmem:[#allocation3 + $0x1b0] sm:$0xf8] %vm918, %v2328
        %2331 = vst.msk [vmem:[#allocation3 + $0x1c8] sm:$0x3] %vm920, %v2328
        %v2332 = vld [vmem:[%s969] sm:$0x7f]
        %v2334 = vrot.slane %v2332, 6
        %2336 = vst.msk [vmem:[#allocation3 + $0x1c8] sm:$0xfc] %vm923, %v2334
        %2337 = vst.msk [vmem:[#allocation3 + $0x1e0] sm:$0x1] %vm925, %v2334
        %v2338 = vld [vmem:[%s972] sm:$0x7f]
        %v2340 = vrot.slane %v2338, 7
        %2342 = vst.msk [vmem:[#allocation3 + $0x1e0] sm:$0xfe] %vm928, %v2340
        %v2343 = vld [vmem:[%s974] sm:$0x7f]
        %2344 = vst.msk [vmem:[#allocation3 + $0x1f8] sm:$0x7f] %vm895, %v2343
        %v2345 = vld [vmem:[%s976] sm:$0x7f]
        %v2347 = vrot.slane %v2345, 1
        %2349 = vst.msk [vmem:[#allocation3 + $0x1f8] sm:$0x80] %vm898, %v2347
        %2350 = vst.msk [vmem:[#allocation3 + $0x210] sm:$0x3f] %vm900, %v2347
        %v2351 = vld [vmem:[%s979] sm:$0x7f]
        %v2353 = vrot.slane %v2351, 2
        %2355 = vst.msk [vmem:[#allocation3 + $0x210] sm:$0xc0] %vm903, %v2353
        %2356 = vst.msk [vmem:[#allocation3 + $0x228] sm:$0x1f] %vm905, %v2353
        %v2357 = vld [vmem:[%s982] sm:$0x7f]
        %v2359 = vrot.slane %v2357, 3
        %2361 = vst.msk [vmem:[#allocation3 + $0x228] sm:$0xe0] %vm908, %v2359
        %2362 = vst.msk [vmem:[#allocation3 + $0x240] sm:$0xf] %vm910, %v2359
        %v2363 = vld [vmem:[%s947 + $0x1] sm:$0x7f]
        %v2365 = vrot.slane %v2363, 5
        %2366 = vrot.lane.b32.xlu0 %v2365, 32
        %v2367 = vpop.permute.xlu0 %2366
        %2369 = vst.msk [vmem:[#allocation3 + $0x1b0] sm:$0xf8] %vm1077, %v2367
        %2370 = vst.msk [vmem:[#allocation3 + $0x1c8] sm:$0x3] %vm1079, %v2367
        %v2371 = vld [vmem:[%s950 + $0x1] sm:$0x7f]
        %v2373 = vrot.slane %v2371, 6
        %2374 = vrot.lane.b32.xlu0 %v2373, 32
        %v2375 = vpop.permute.xlu0 %2374
        %2377 = vst.msk [vmem:[#allocation3 + $0x1c8] sm:$0xfc] %vm1087, %v2375
        %2378 = vst.msk [vmem:[#allocation3 + $0x1e0] sm:$0x1] %vm1089, %v2375
        %v2379 = vld [vmem:[%s952 + $0x1] sm:$0x7f]
        %v2381 = vrot.slane %v2379, 7
        %2382 = vrot.lane.b32.xlu0 %v2381, 32
        %v2383 = vpop.permute.xlu0 %2382
        %2385 = vst.msk [vmem:[#allocation3 + $0x1e0] sm:$0xfe] %vm1506, %v2383
        %v2386 = vld [vmem:[%s954 + $0x1] sm:$0x7f]
        %2388 = vrot.lane.b32.xlu0 %v2386, 32
        %v2389 = vpop.permute.xlu0 %2388
        %2391 = vst.msk [vmem:[#allocation3 + $0x1f8] sm:$0x7f] %vm1029, %v2389
        %v2392 = vld [vmem:[%s957 + $0x1] sm:$0x7f]
        %v2394 = vrot.slane %v2392, 1
        %2395 = vrot.lane.b32.xlu0 %v2394, 32
        %v2396 = vpop.permute.xlu0 %2395
        %2398 = vst.msk [vmem:[#allocation3 + $0x1f8] sm:$0x80] %vm1037, %v2396
        %2399 = vst.msk [vmem:[#allocation3 + $0x210] sm:$0x3f] %vm1039, %v2396
        %v2400 = vld [vmem:[%s960 + $0x1] sm:$0x7f]
        %v2402 = vrot.slane %v2400, 2
        %2403 = vrot.lane.b32.xlu0 %v2402, 32
        %v2404 = vpop.permute.xlu0 %2403
        %2406 = vst.msk [vmem:[#allocation3 + $0x210] sm:$0xc0] %vm1047, %v2404
        %2407 = vst.msk [vmem:[#allocation3 + $0x228] sm:$0x1f] %vm1049, %v2404
        %v2408 = vld [vmem:[%s963 + $0x1] sm:$0x7f]
        %v2410 = vrot.slane %v2408, 3
        %2411 = vrot.lane.b32.xlu0 %v2410, 32
        %v2412 = vpop.permute.xlu0 %2411
        %2414 = vst.msk [vmem:[#allocation3 + $0x228] sm:$0xe0] %vm1057, %v2412
        %2415 = vst.msk [vmem:[#allocation3 + $0x240] sm:$0xf] %vm1059, %v2412
        %v2416 = vld [vmem:[%s966 + $0x1] sm:$0x7f]
        %v2418 = vrot.slane %v2416, 5
        %2419 = vrot.lane.b32.xlu0 %v2418, 64
        %v2420 = vpop.permute.xlu0 %2419
        %2422 = vst.msk [vmem:[#allocation3 + $0x1b0] sm:$0xf8] %vm1144, %v2420
        %2423 = vst.msk [vmem:[#allocation3 + $0x1c8] sm:$0x3] %vm1146, %v2420
        %v2424 = vld [vmem:[%s969 + $0x1] sm:$0x7f]
        %v2426 = vrot.slane %v2424, 6
        %2427 = vrot.lane.b32.xlu0 %v2426, 64
        %v2428 = vpop.permute.xlu0 %2427
        %2430 = vst.msk [vmem:[#allocation3 + $0x1c8] sm:$0xfc] %vm1154, %v2428
        %2431 = vst.msk [vmem:[#allocation3 + $0x1e0] sm:$0x1] %vm1156, %v2428
        %v2432 = vld [vmem:[%s972 + $0x1] sm:$0x7f]
        %v2434 = vrot.slane %v2432, 7
        %2435 = vrot.lane.b32.xlu0 %v2434, 64
        %v2436 = vpop.permute.xlu0 %2435
        %2438 = vst.msk [vmem:[#allocation3 + $0x1e0] sm:$0xfe] %vm1560, %v2436
        %v2439 = vld [vmem:[%s974 + $0x1] sm:$0x7f]
        %2441 = vrot.lane.b32.xlu0 %v2439, 64
        %v2442 = vpop.permute.xlu0 %2441
        %2444 = vst.msk [vmem:[#allocation3 + $0x1f8] sm:$0x7f] %vm1096, %v2442
        %v2445 = vld [vmem:[%s976 + $0x1] sm:$0x7f]
        %v2447 = vrot.slane %v2445, 1
        %2448 = vrot.lane.b32.xlu0 %v2447, 64
        %v2449 = vpop.permute.xlu0 %2448
        %2451 = vst.msk [vmem:[#allocation3 + $0x1f8] sm:$0x80] %vm1104, %v2449
        %2452 = vst.msk [vmem:[#allocation3 + $0x210] sm:$0x3f] %vm1106, %v2449
        %v2453 = vld [vmem:[%s979 + $0x1] sm:$0x7f]
        %v2455 = vrot.slane %v2453, 2
        %2456 = vrot.lane.b32.xlu0 %v2455, 64
        %v2457 = vpop.permute.xlu0 %2456
        %2459 = vst.msk [vmem:[#allocation3 + $0x210] sm:$0xc0] %vm1114, %v2457
        %2460 = vst.msk [vmem:[#allocation3 + $0x228] sm:$0x1f] %vm1116, %v2457
        %v2461 = vld [vmem:[%s982 + $0x1] sm:$0x7f]
        %v2463 = vrot.slane %v2461, 3
        %2464 = vrot.lane.b32.xlu0 %v2463, 64
        %v2465 = vpop.permute.xlu0 %2464
        %2467 = vst.msk [vmem:[#allocation3 + $0x228] sm:$0xe0] %vm1124, %v2465
        %2468 = vst.msk [vmem:[#allocation3 + $0x240] sm:$0xf] %vm1126, %v2465
        %v2469 = vld [vmem:[%s927] sm:$0x7f]
        %v2471 = vrot.slane %v2469, 5
        %2472 = vrot.lane.b32.xlu0 %v2471, 96
        %v2473 = vpop.permute.xlu0 %2472
        %2475 = vst.msk [vmem:[#allocation3 + $0x1b0] sm:$0xf8] %vm1211, %v2473
        %2476 = vst.msk [vmem:[#allocation3 + $0x1c8] sm:$0x3] %vm1213, %v2473
        %v2477 = vld [vmem:[%s930] sm:$0x7f]
        %v2479 = vrot.slane %v2477, 6
        %2480 = vrot.lane.b32.xlu0 %v2479, 96
        %v2481 = vpop.permute.xlu0 %2480
        %2483 = vst.msk [vmem:[#allocation3 + $0x1c8] sm:$0xfc] %vm1221, %v2481
        %2484 = vst.msk [vmem:[#allocation3 + $0x1e0] sm:$0x1] %vm1223, %v2481
        %v2485 = vld [vmem:[%s932] sm:$0x7f]
        %v2487 = vrot.slane %v2485, 7
        %2488 = vrot.lane.b32.xlu0 %v2487, 96
        %v2489 = vpop.permute.xlu0 %2488
        %2491 = vst.msk [vmem:[#allocation3 + $0x1e0] sm:$0xfe] %vm1614, %v2489
        %v2492 = vld [vmem:[%s935] sm:$0x7f]
        %2494 = vrot.lane.b32.xlu0 %v2492, 96
        %v2495 = vpop.permute.xlu0 %2494
        %2497 = vst.msk [vmem:[#allocation3 + $0x1f8] sm:$0x7f] %vm1163, %v2495
        %v2498 = vld [vmem:[%s938] sm:$0x7f]
        %v2500 = vrot.slane %v2498, 1
        %2501 = vrot.lane.b32.xlu0 %v2500, 96
        %v2502 = vpop.permute.xlu0 %2501
        %2504 = vst.msk [vmem:[#allocation3 + $0x1f8] sm:$0x80] %vm1171, %v2502
        %2505 = vst.msk [vmem:[#allocation3 + $0x210] sm:$0x3f] %vm1173, %v2502
        %v2506 = vld [vmem:[%s941] sm:$0x7f]
        %v2508 = vrot.slane %v2506, 2
        %2509 = vrot.lane.b32.xlu0 %v2508, 96
        %v2510 = vpop.permute.xlu0 %2509
        %2512 = vst.msk [vmem:[#allocation3 + $0x210] sm:$0xc0] %vm1181, %v2510
        %2513 = vst.msk [vmem:[#allocation3 + $0x228] sm:$0x1f] %vm1183, %v2510
        %v2514 = vld [vmem:[%s944] sm:$0x7f]
        %v2516 = vrot.slane %v2514, 3
        %2517 = vrot.lane.b32.xlu0 %v2516, 96
        %v2518 = vpop.permute.xlu0 %2517
        %2520 = vst.msk [vmem:[#allocation3 + $0x228] sm:$0xe0] %vm1191, %v2518
        %2521 = vst.msk [vmem:[#allocation3 + $0x240] sm:$0xf] %vm1193, %v2518
        %v2522 = vld [vmem:[%s894 + $0x1] sm:$0x7f]
        %v2524 = vrot.slane %v2522, 5
        %2526 = vst.msk [vmem:[#allocation3 + $0x1b8] sm:$0xf8] %vm918, %v2524
        %2527 = vst.msk [vmem:[#allocation3 + $0x1d0] sm:$0x3] %vm920, %v2524
        %v2528 = vld [vmem:[%s897 + $0x1] sm:$0x7f]
        %v2530 = vrot.slane %v2528, 6
        %2532 = vst.msk [vmem:[#allocation3 + $0x1d0] sm:$0xfc] %vm923, %v2530
        %2533 = vst.msk [vmem:[#allocation3 + $0x1e8] sm:$0x1] %vm925, %v2530
        %v2534 = vld [vmem:[%s902 + $0x1] sm:$0x7f]
        %v2536 = vrot.slane %v2534, 7
        %2538 = vst.msk [vmem:[#allocation3 + $0x1e8] sm:$0xfe] %vm928, %v2536
        %v2539 = vld [vmem:[%s907 + $0x1] sm:$0x7f]
        %2540 = vst.msk [vmem:[#allocation3 + $0x200] sm:$0x7f] %vm895, %v2539
        %v2541 = vld [vmem:[%s912 + $0x1] sm:$0x7f]
        %v2543 = vrot.slane %v2541, 1
        %2545 = vst.msk [vmem:[#allocation3 + $0x200] sm:$0x80] %vm898, %v2543
        %2546 = vst.msk [vmem:[#allocation3 + $0x218] sm:$0x3f] %vm900, %v2543
        %v2547 = vld [vmem:[%s917 + $0x1] sm:$0x7f]
        %v2549 = vrot.slane %v2547, 2
        %2551 = vst.msk [vmem:[#allocation3 + $0x218] sm:$0xc0] %vm903, %v2549
        %2552 = vst.msk [vmem:[#allocation3 + $0x230] sm:$0x1f] %vm905, %v2549
        %v2553 = vld [vmem:[%s922 + $0x1] sm:$0x7f]
        %v2555 = vrot.slane %v2553, 3
        %2557 = vst.msk [vmem:[#allocation3 + $0x230] sm:$0xe0] %vm908, %v2555
        %2558 = vst.msk [vmem:[#allocation3 + $0x248] sm:$0xf] %vm910, %v2555
        %v2559 = vld [vmem:[%s927 + $0x1] sm:$0x7f]
        %v2561 = vrot.slane %v2559, 5
        %2562 = vrot.lane.b32.xlu0 %v2561, 32
        %v2563 = vpop.permute.xlu0 %2562
        %2565 = vst.msk [vmem:[#allocation3 + $0x1b8] sm:$0xf8] %vm1077, %v2563
        %2566 = vst.msk [vmem:[#allocation3 + $0x1d0] sm:$0x3] %vm1079, %v2563
        %v2567 = vld [vmem:[%s930 + $0x1] sm:$0x7f]
        %v2569 = vrot.slane %v2567, 6
        %2570 = vrot.lane.b32.xlu0 %v2569, 32
        %v2571 = vpop.permute.xlu0 %2570
        %2573 = vst.msk [vmem:[#allocation3 + $0x1d0] sm:$0xfc] %vm1087, %v2571
        %2574 = vst.msk [vmem:[#allocation3 + $0x1e8] sm:$0x1] %vm1089, %v2571
        %v2575 = vld [vmem:[%s932 + $0x1] sm:$0x7f]
        %v2577 = vrot.slane %v2575, 7
        %2578 = vrot.lane.b32.xlu0 %v2577, 32
        %v2579 = vpop.permute.xlu0 %2578
        %2581 = vst.msk [vmem:[#allocation3 + $0x1e8] sm:$0xfe] %vm1506, %v2579
        %v2582 = vld [vmem:[%s935 + $0x1] sm:$0x7f]
        %2584 = vrot.lane.b32.xlu0 %v2582, 32
        %v2585 = vpop.permute.xlu0 %2584
        %2587 = vst.msk [vmem:[#allocation3 + $0x200] sm:$0x7f] %vm1029, %v2585
        %v2588 = vld [vmem:[%s938 + $0x1] sm:$0x7f]
        %v2590 = vrot.slane %v2588, 1
        %2591 = vrot.lane.b32.xlu0 %v2590, 32
        %v2592 = vpop.permute.xlu0 %2591
        %2594 = vst.msk [vmem:[#allocation3 + $0x200] sm:$0x80] %vm1037, %v2592
        %2595 = vst.msk [vmem:[#allocation3 + $0x218] sm:$0x3f] %vm1039, %v2592
        %v2596 = vld [vmem:[%s941 + $0x1] sm:$0x7f]
        %v2598 = vrot.slane %v2596, 2
        %2599 = vrot.lane.b32.xlu0 %v2598, 32
        %v2600 = vpop.permute.xlu0 %2599
        %2602 = vst.msk [vmem:[#allocation3 + $0x218] sm:$0xc0] %vm1047, %v2600
        %2603 = vst.msk [vmem:[#allocation3 + $0x230] sm:$0x1f] %vm1049, %v2600
        %v2604 = vld [vmem:[%s944 + $0x1] sm:$0x7f]
        %v2606 = vrot.slane %v2604, 3
        %2607 = vrot.lane.b32.xlu0 %v2606, 32
        %v2608 = vpop.permute.xlu0 %2607
        %2610 = vst.msk [vmem:[#allocation3 + $0x230] sm:$0xe0] %vm1057, %v2608
        %2611 = vst.msk [vmem:[#allocation3 + $0x248] sm:$0xf] %vm1059, %v2608
        %v2612 = vld [vmem:[%s969] sm:$0x7f]
        %v2614 = vrot.slane %v2612, 5
        %2615 = vrot.lane.b32.xlu0 %v2614, 64
        %v2616 = vpop.permute.xlu0 %2615
        %2618 = vst.msk [vmem:[#allocation3 + $0x1b8] sm:$0xf8] %vm1144, %v2616
        %2619 = vst.msk [vmem:[#allocation3 + $0x1d0] sm:$0x3] %vm1146, %v2616
        %v2620 = vld [vmem:[%s972] sm:$0x7f]
        %v2622 = vrot.slane %v2620, 6
        %2623 = vrot.lane.b32.xlu0 %v2622, 64
        %v2624 = vpop.permute.xlu0 %2623
        %2626 = vst.msk [vmem:[#allocation3 + $0x1d0] sm:$0xfc] %vm1154, %v2624
        %2627 = vst.msk [vmem:[#allocation3 + $0x1e8] sm:$0x1] %vm1156, %v2624
        %v2628 = vld [vmem:[%s974] sm:$0x7f]
        %v2630 = vrot.slane %v2628, 7
        %2631 = vrot.lane.b32.xlu0 %v2630, 64
        %v2632 = vpop.permute.xlu0 %2631
        %2634 = vst.msk [vmem:[#allocation3 + $0x1e8] sm:$0xfe] %vm1560, %v2632
        %v2635 = vld [vmem:[%s976] sm:$0x7f]
        %2637 = vrot.lane.b32.xlu0 %v2635, 64
        %v2638 = vpop.permute.xlu0 %2637
        %2640 = vst.msk [vmem:[#allocation3 + $0x200] sm:$0x7f] %vm1096, %v2638
        %v2641 = vld [vmem:[%s979] sm:$0x7f]
        %v2643 = vrot.slane %v2641, 1
        %2644 = vrot.lane.b32.xlu0 %v2643, 64
        %v2645 = vpop.permute.xlu0 %2644
        %2647 = vst.msk [vmem:[#allocation3 + $0x200] sm:$0x80] %vm1104, %v2645
        %2648 = vst.msk [vmem:[#allocation3 + $0x218] sm:$0x3f] %vm1106, %v2645
        %v2649 = vld [vmem:[%s982] sm:$0x7f]
        %v2651 = vrot.slane %v2649, 2
        %2652 = vrot.lane.b32.xlu0 %v2651, 64
        %v2653 = vpop.permute.xlu0 %2652
        %2655 = vst.msk [vmem:[#allocation3 + $0x218] sm:$0xc0] %vm1114, %v2653
        %2656 = vst.msk [vmem:[#allocation3 + $0x230] sm:$0x1f] %vm1116, %v2653
        %v2657 = vld [vmem:[%s2280] sm:$0x7f]
        %v2659 = vrot.slane %v2657, 3
        %2660 = vrot.lane.b32.xlu0 %v2659, 64
        %v2661 = vpop.permute.xlu0 %2660
        %2663 = vst.msk [vmem:[#allocation3 + $0x230] sm:$0xe0] %vm1124, %v2661
        %2664 = vst.msk [vmem:[#allocation3 + $0x248] sm:$0xf] %vm1126, %v2661
        %v2665 = vld [vmem:[%s950 + $0x1] sm:$0x7f]
        %v2667 = vrot.slane %v2665, 5
        %2668 = vrot.lane.b32.xlu0 %v2667, 96
        %v2669 = vpop.permute.xlu0 %2668
        %2671 = vst.msk [vmem:[#allocation3 + $0x1b8] sm:$0xf8] %vm1211, %v2669
        %2672 = vst.msk [vmem:[#allocation3 + $0x1d0] sm:$0x3] %vm1213, %v2669
        %v2673 = vld [vmem:[%s952 + $0x1] sm:$0x7f]
        %v2675 = vrot.slane %v2673, 6
        %2676 = vrot.lane.b32.xlu0 %v2675, 96
        %v2677 = vpop.permute.xlu0 %2676
        %2679 = vst.msk [vmem:[#allocation3 + $0x1d0] sm:$0xfc] %vm1221, %v2677
        %2680 = vst.msk [vmem:[#allocation3 + $0x1e8] sm:$0x1] %vm1223, %v2677
        %v2681 = vld [vmem:[%s954 + $0x1] sm:$0x7f]
        %v2683 = vrot.slane %v2681, 7
        %2684 = vrot.lane.b32.xlu0 %v2683, 96
        %v2685 = vpop.permute.xlu0 %2684
        %2687 = vst.msk [vmem:[#allocation3 + $0x1e8] sm:$0xfe] %vm1614, %v2685
        %v2688 = vld [vmem:[%s957 + $0x1] sm:$0x7f]
        %2690 = vrot.lane.b32.xlu0 %v2688, 96
        %v2691 = vpop.permute.xlu0 %2690
        %2693 = vst.msk [vmem:[#allocation3 + $0x200] sm:$0x7f] %vm1163, %v2691
        %v2694 = vld [vmem:[%s960 + $0x1] sm:$0x7f]
        %v2696 = vrot.slane %v2694, 1
        %2697 = vrot.lane.b32.xlu0 %v2696, 96
        %v2698 = vpop.permute.xlu0 %2697
        %2700 = vst.msk [vmem:[#allocation3 + $0x200] sm:$0x80] %vm1171, %v2698
        %2701 = vst.msk [vmem:[#allocation3 + $0x218] sm:$0x3f] %vm1173, %v2698
        %v2702 = vld [vmem:[%s963 + $0x1] sm:$0x7f]
        %v2704 = vrot.slane %v2702, 2
        %2705 = vrot.lane.b32.xlu0 %v2704, 96
        %v2706 = vpop.permute.xlu0 %2705
        %2708 = vst.msk [vmem:[#allocation3 + $0x218] sm:$0xc0] %vm1181, %v2706
        %2709 = vst.msk [vmem:[#allocation3 + $0x230] sm:$0x1f] %vm1183, %v2706
        %v2710 = vld [vmem:[%s2226 + $0x1] sm:$0x7f]
        %v2712 = vrot.slane %v2710, 3
        %2713 = vrot.lane.b32.xlu0 %v2712, 96
        %v2714 = vpop.permute.xlu0 %2713
        %2716 = vst.msk [vmem:[#allocation3 + $0x230] sm:$0xe0] %vm1191, %v2714
        %2717 = vst.msk [vmem:[#allocation3 + $0x248] sm:$0xf] %vm1193, %v2714
        %v2718 = vld [vmem:[%s969 + $0x1] sm:$0x7f]
        %v2720 = vrot.slane %v2718, 5
        %2722 = vst.msk [vmem:[#allocation3 + $0x1c0] sm:$0xf8] %vm918, %v2720
        %2723 = vst.msk [vmem:[#allocation3 + $0x1d8] sm:$0x3] %vm920, %v2720
        %v2724 = vld [vmem:[%s972 + $0x1] sm:$0x7f]
        %v2726 = vrot.slane %v2724, 6
        %2728 = vst.msk [vmem:[#allocation3 + $0x1d8] sm:$0xfc] %vm923, %v2726
        %2729 = vst.msk [vmem:[#allocation3 + $0x1f0] sm:$0x1] %vm925, %v2726
        %v2730 = vld [vmem:[%s974 + $0x1] sm:$0x7f]
        %v2732 = vrot.slane %v2730, 7
        %2734 = vst.msk [vmem:[#allocation3 + $0x1f0] sm:$0xfe] %vm928, %v2732
        %v2735 = vld [vmem:[%s976 + $0x1] sm:$0x7f]
        %2736 = vst.msk [vmem:[#allocation3 + $0x208] sm:$0x7f] %vm895, %v2735
        %v2737 = vld [vmem:[%s979 + $0x1] sm:$0x7f]
        %v2739 = vrot.slane %v2737, 1
        %2741 = vst.msk [vmem:[#allocation3 + $0x208] sm:$0x80] %vm898, %v2739
        %2742 = vst.msk [vmem:[#allocation3 + $0x220] sm:$0x3f] %vm900, %v2739
        %v2743 = vld [vmem:[%s982 + $0x1] sm:$0x7f]
        %v2745 = vrot.slane %v2743, 2
        %2747 = vst.msk [vmem:[#allocation3 + $0x220] sm:$0xc0] %vm903, %v2745
        %2748 = vst.msk [vmem:[#allocation3 + $0x238] sm:$0x1f] %vm905, %v2745
        %v2749 = vld [vmem:[%s2280 + $0x1] sm:$0x7f]
        %v2751 = vrot.slane %v2749, 3
        %2753 = vst.msk [vmem:[#allocation3 + $0x238] sm:$0xe0] %vm908, %v2751
        %2754 = vst.msk [vmem:[#allocation3 + $0x250] sm:$0xf] %vm910, %v2751
        %v2755 = vld [vmem:[#allocation3] sm:$0xff]
        %v2756 = vld [vmem:[#allocation3 + $0x8] sm:$0xff]
        %v2757 = vld [vmem:[#allocation3 + $0x10] sm:$0xff]
        %v2758 = vld [vmem:[#allocation3 + $0x18] sm:$0xff]
        %v2759 = vld [vmem:[#allocation3 + $0x20] sm:$0xff]
        %v2760 = vld [vmem:[#allocation3 + $0x28] sm:$0xff]
        %v2761 = vld [vmem:[#allocation3 + $0x30] sm:$0xff]
        %v2762 = vld [vmem:[#allocation3 + $0x38] sm:$0xff]
        %v2763 = vld [vmem:[#allocation3 + $0x40] sm:$0xff]
        %v2764 = vld [vmem:[#allocation3 + $0x48] sm:$0xff]
        %v2765 = vld [vmem:[#allocation3 + $0x50] sm:$0xff]
        %v2766 = vld [vmem:[#allocation3 + $0x58] sm:$0xff]
        %v2767 = vld [vmem:[#allocation3 + $0x60] sm:$0xff]
        %v2768 = vld [vmem:[#allocation3 + $0x68] sm:$0xff]
        %v2769 = vld [vmem:[#allocation3 + $0x70] sm:$0xff]
        %v2770 = vld [vmem:[#allocation3 + $0x78] sm:$0xff]
        %v2771 = vld [vmem:[#allocation3 + $0x80] sm:$0xff]
        %v2772 = vld [vmem:[#allocation3 + $0x88] sm:$0xff]
        %v2773 = vld [vmem:[#allocation3 + $0x90] sm:$0xff]
        %v2774 = vld [vmem:[#allocation3 + $0x98] sm:$0xff]
        %v2775 = vld [vmem:[#allocation3 + $0xa0] sm:$0xff]
        %v2776 = vld [vmem:[#allocation3 + $0xa8] sm:$0xff]
        %v2777 = vld [vmem:[#allocation3 + $0xb0] sm:$0xff]
        %v2778 = vld [vmem:[#allocation3 + $0xb8] sm:$0xff]
        %v2779 = vld [vmem:[#allocation3 + $0xc0] sm:$0xff]
        %v2780 = vld [vmem:[#allocation3 + $0xc8] sm:$0xff]
        %v2781 = vld [vmem:[#allocation3 + $0xd0] sm:$0xff]
        %v2782 = vld [vmem:[#allocation3 + $0xd8] sm:$0xff]
        %v2783 = vld [vmem:[#allocation3 + $0xe0] sm:$0xff]
        %v2784 = vld [vmem:[#allocation3 + $0xe8] sm:$0xff]
        %v2785 = vld [vmem:[#allocation3 + $0xf0] sm:$0xff]
        %v2786 = vld [vmem:[#allocation3 + $0xf8] sm:$0xff]
        %v2787 = vld [vmem:[#allocation3 + $0x100] sm:$0xff]
        %v2788 = vld [vmem:[#allocation3 + $0x108] sm:$0xff]
        %v2789 = vld [vmem:[#allocation3 + $0x110] sm:$0xff]
        %v2790 = vld [vmem:[#allocation3 + $0x118] sm:$0xff]
        %v2791 = vld [vmem:[#allocation3 + $0x120] sm:$0xff]
        %v2792 = vld [vmem:[#allocation3 + $0x128] sm:$0xff]
        %v2793 = vld [vmem:[#allocation3 + $0x130] sm:$0xff]
        %v2794 = vld [vmem:[#allocation3 + $0x138] sm:$0xff]
        %v2795 = vld [vmem:[#allocation3 + $0x140] sm:$0xff]
        %v2796 = vld [vmem:[#allocation3 + $0x148] sm:$0xff]
        %v2797 = vld [vmem:[#allocation3 + $0x150] sm:$0xff]
        %v2798 = vld [vmem:[#allocation3 + $0x158] sm:$0xff]
        %v2799 = vld [vmem:[#allocation3 + $0x160] sm:$0xff]
        %v2800 = vld [vmem:[#allocation3 + $0x168] sm:$0xff]
        %v2801 = vld [vmem:[#allocation3 + $0x170] sm:$0xff]
        %v2802 = vld [vmem:[#allocation3 + $0x178] sm:$0xff]
        %v2803 = vld [vmem:[#allocation3 + $0x180] sm:$0xff]
        %v2804 = vld [vmem:[#allocation3 + $0x188] sm:$0xff]
        %v2805 = vld [vmem:[#allocation3 + $0x190] sm:$0xff]
        %v2806 = vld [vmem:[#allocation3 + $0x198] sm:$0xff]
        %v2807 = vld [vmem:[#allocation3 + $0x1a0] sm:$0xff]
        %v2808 = vld [vmem:[#allocation3 + $0x1a8] sm:$0xff]
        %v2809 = vld [vmem:[#allocation3 + $0x1b0] sm:$0xff]
        %v2810 = vld [vmem:[#allocation3 + $0x1b8] sm:$0xff]
        %v2811 = vld [vmem:[#allocation3 + $0x1c0] sm:$0xff]
        %v2812 = vld [vmem:[#allocation3 + $0x1c8] sm:$0xff]
        %v2813 = vld [vmem:[#allocation3 + $0x1d0] sm:$0xff]
        %v2814 = vld [vmem:[#allocation3 + $0x1d8] sm:$0xff]
        %v2815 = vld [vmem:[#allocation3 + $0x1e0] sm:$0xff]
        %v2816 = vld [vmem:[#allocation3 + $0x1e8] sm:$0xff]
        %v2817 = vld [vmem:[#allocation3 + $0x1f0] sm:$0xff]
        %v2818 = vld [vmem:[#allocation3 + $0x1f8] sm:$0xff]
        %v2819 = vld [vmem:[#allocation3 + $0x200] sm:$0xff]
        %v2820 = vld [vmem:[#allocation3 + $0x208] sm:$0xff]
        %v2821 = vld [vmem:[#allocation3 + $0x210] sm:$0xff]
        %v2822 = vld [vmem:[#allocation3 + $0x218] sm:$0xff]
        %v2823 = vld [vmem:[#allocation3 + $0x220] sm:$0xff]
        %v2824 = vld [vmem:[#allocation3 + $0x228] sm:$0xff]
        %v2825 = vld [vmem:[#allocation3 + $0x230] sm:$0xff]
        %v2826 = vld [vmem:[#allocation3 + $0x238] sm:$0xff]
        %v2827 = vld [vmem:[#allocation3 + $0x240] sm:$0xf]
        %v2828 = vld [vmem:[#allocation3 + $0x248] sm:$0xf]
        %v2829 = vld [vmem:[#allocation3 + $0x250] sm:$0xf]
        %v2830 = vpack.c.bf16 %v2758, %v2755
        %v2831 = vpack.c.bf16 %v2759, %v2756
        %v2832 = vpack.c.bf16 %v2760, %v2757
        %v2833 = vpack.c.bf16 %v2764, %v2761
        %v2834 = vpack.c.bf16 %v2765, %v2762
        %v2835 = vpack.c.bf16 %v2766, %v2763
        %v2836 = vpack.c.bf16 %v2770, %v2767
        %v2837 = vpack.c.bf16 %v2771, %v2768
        %v2838 = vpack.c.bf16 %v2772, %v2769
        %v2839 = vpack.c.bf16 %v2776, %v2773
        %v2840 = vpack.c.bf16 %v2777, %v2774
        %v2841 = vpack.c.bf16 %v2778, %v2775
        %v2842 = vpack.c.bf16 %v2782, %v2779
        %v2843 = vpack.c.bf16 %v2783, %v2780
        %v2844 = vpack.c.bf16 %v2784, %v2781
        %v2845 = vpack.c.bf16 %v2788, %v2785
        %v2846 = vpack.c.bf16 %v2789, %v2786
        %v2847 = vpack.c.bf16 %v2790, %v2787
        %v2848 = vpack.c.bf16 %v2794, %v2791
        %v2849 = vpack.c.bf16 %v2795, %v2792
        %v2850 = vpack.c.bf16 %v2796, %v2793
        %v2851 = vpack.c.bf16 %v2800, %v2797
        %v2852 = vpack.c.bf16 %v2801, %v2798
        %v2853 = vpack.c.bf16 %v2802, %v2799
        %v2854 = vpack.c.bf16 %v2806, %v2803
        %v2855 = vpack.c.bf16 %v2807, %v2804
        %v2856 = vpack.c.bf16 %v2808, %v2805
        %v2857 = vpack.c.bf16 %v2812, %v2809
        %v2858 = vpack.c.bf16 %v2813, %v2810
        %v2859 = vpack.c.bf16 %v2814, %v2811
        %v2860 = vpack.c.bf16 %v2818, %v2815
        %v2861 = vpack.c.bf16 %v2819, %v2816
        %v2862 = vpack.c.bf16 %v2820, %v2817
        %v2863 = vpack.c.bf16 %v2824, %v2821
        %v2864 = vpack.c.bf16 %v2825, %v2822
        %v2865 = vpack.c.bf16 %v2826, %v2823
        %v2866 = vpack.c.bf16 %v2827, %v2827
        %v2867 = vpack.c.bf16 %v2828, %v2828
        %v2868 = vpack.c.bf16 %v2829, %v2829
        %v2869 = vld [vmem:[%s3] sm:$0xf]
        %v2870 = vld [vmem:[%s3 + $0x4] sm:$0xf]
        %v2871 = vld [vmem:[%s3 + $0x8] sm:$0xf]
        %v2872 = vld [vmem:[%s3 + $0xc] sm:$0xf]
        %v2873 = vld [vmem:[%s3 + $0x10] sm:$0xf]
        %v2874 = vld [vmem:[%s3 + $0x14] sm:$0xf]
        %v2875 = vld [vmem:[%s3 + $0x18] sm:$0xf]
        %v2876 = vld [vmem:[%s3 + $0x1c] sm:$0xf]
        %v2877 = vld [vmem:[%s3 + $0x20] sm:$0xf]
        %v2878 = vld [vmem:[%s3 + $0x24] sm:$0xf]
        %v2879 = vld [vmem:[%s3 + $0x28] sm:$0xf]
        %v2880 = vld [vmem:[%s3 + $0x2c] sm:$0xf]
        %v2881 = vld [vmem:[%s3 + $0x30] sm:$0xf]
        %v2882 = vld [vmem:[%s3 + $0x34] sm:$0xf]
        %v2883 = vld [vmem:[%s3 + $0x38] sm:$0xf]
        %v2884 = vld [vmem:[%s3 + $0x3c] sm:$0xf]
        %v2885 = vld [vmem:[%s3 + $0x40] sm:$0xf]
        %v2886 = vld [vmem:[%s3 + $0x44] sm:$0xf]
        %v2887 = vld [vmem:[%s3 + $0x48] sm:$0xf]
        %v2888 = vld [vmem:[%s3 + $0x4c] sm:$0xf]
        %v2889 = vld [vmem:[%s3 + $0x50] sm:$0xf]
        %v2890 = vld [vmem:[%s3 + $0x54] sm:$0xf]
        %v2891 = vld [vmem:[%s3 + $0x58] sm:$0xf]
        %v2892 = vld [vmem:[%s3 + $0x5c] sm:$0xf]
        %v2893 = vld [vmem:[%s3 + $0x60] sm:$0xf]
        %v2894 = vld [vmem:[%s3 + $0x64] sm:$0xf]
        %v2895 = vld [vmem:[%s3 + $0x68] sm:$0xf]
        %v2896 = vld [vmem:[%s3 + $0x6c] sm:$0xf]
        %v2897 = vld [vmem:[%s3 + $0x70] sm:$0xf]
        %v2898 = vld [vmem:[%s3 + $0x74] sm:$0xf]
        %v2899 = vld [vmem:[%s3 + $0x78] sm:$0xf]
        %v2900 = vld [vmem:[%s3 + $0x7c] sm:$0xf]
        %v2901 = vld [vmem:[%s3 + $0x80] sm:$0xf]
        %v2902 = vld [vmem:[%s3 + $0x84] sm:$0xf]
        %v2903 = vld [vmem:[%s3 + $0x88] sm:$0xf]
        %v2904 = vld [vmem:[%s3 + $0x8c] sm:$0xf]
        %v2941 = vunpack.c.l.b16 %v2869
        %v2942 = vunpack.c.l.b16 %v2870
        %v2943 = vunpack.c.l.b16 %v2871
        %v2944 = vunpack.c.l.b16 %v2872
        %v2945 = vunpack.c.l.b16 %v2873
        %v2946 = vunpack.c.l.b16 %v2874
        %v2947 = vunpack.c.l.b16 %v2875
        %v2948 = vunpack.c.l.b16 %v2876
        %v2949 = vunpack.c.l.b16 %v2877
        %v2950 = vunpack.c.l.b16 %v2878
        %v2951 = vunpack.c.l.b16 %v2879
        %v2952 = vunpack.c.l.b16 %v2880
        %v2953 = vunpack.c.l.b16 %v2881
        %v2954 = vunpack.c.l.b16 %v2882
        %v2955 = vunpack.c.l.b16 %v2883
        %v2956 = vunpack.c.l.b16 %v2884
        %v2957 = vunpack.c.l.b16 %v2885
        %v2958 = vunpack.c.l.b16 %v2886
        %v2959 = vunpack.c.l.b16 %v2887
        %v2960 = vunpack.c.l.b16 %v2888
        %v2961 = vunpack.c.l.b16 %v2889
        %v2962 = vunpack.c.l.b16 %v2890
        %v2963 = vunpack.c.l.b16 %v2891
        %v2964 = vunpack.c.l.b16 %v2892
        %v2965 = vunpack.c.l.b16 %v2893
        %v2966 = vunpack.c.l.b16 %v2894
        %v2967 = vunpack.c.l.b16 %v2895
        %v2968 = vunpack.c.l.b16 %v2896
        %v2969 = vunpack.c.l.b16 %v2897
        %v2970 = vunpack.c.l.b16 %v2898
        %v2971 = vunpack.c.l.b16 %v2899
        %v2972 = vunpack.c.l.b16 %v2900
        %v2973 = vunpack.c.l.b16 %v2901
        %v2974 = vunpack.c.l.b16 %v2902
        %v2975 = vunpack.c.l.b16 %v2903
        %v2976 = vunpack.c.l.b16 %v2904
        %v2977 = vpack.c.b16 %v2942, %v2941
        %v2978 = vpack.c.b16 %v2944, %v2943
        %v2979 = vpack.c.b16 %v2946, %v2945
        %v2980 = vpack.c.b16 %v2948, %v2947
        %v2981 = vpack.c.b16 %v2950, %v2949
        %v2982 = vpack.c.b16 %v2952, %v2951
        %v2983 = vpack.c.b16 %v2954, %v2953
        %v2984 = vpack.c.b16 %v2956, %v2955
        %v2985 = vpack.c.b16 %v2958, %v2957
        %v2986 = vpack.c.b16 %v2960, %v2959
        %v2987 = vpack.c.b16 %v2962, %v2961
        %v2988 = vpack.c.b16 %v2964, %v2963
        %v2989 = vpack.c.b16 %v2966, %v2965
        %v2990 = vpack.c.b16 %v2968, %v2967
        %v2991 = vpack.c.b16 %v2970, %v2969
        %v2992 = vpack.c.b16 %v2972, %v2971
        %v2993 = vpack.c.b16 %v2974, %v2973
        %v2994 = vpack.c.b16 %v2976, %v2975
        %v3014 = vsel %vm861, %v2832, 0
        %v3017 = vsel %vm861, %v2835, 0
        %v3020 = vsel %vm861, %v2838, 0
        %v3023 = vsel %vm861, %v2841, 0
        %v3026 = vsel %vm861, %v2844, 0
        %v3029 = vsel %vm861, %v2847, 0
        %v3032 = vsel %vm861, %v2850, 0
        %v3035 = vsel %vm861, %v2853, 0
        %v3038 = vsel %vm861, %v2856, 0
        %v3041 = vsel %vm861, %v2859, 0
        %v3044 = vsel %vm861, %v2862, 0
        %v3047 = vsel %vm861, %v2865, 0
        %v3050 = vsel %vm861, %v2868, 0
        %3052 = vmatprep.subr.bf16.mxu0 0
        %3053 = vmatpush1.bf16.msra.mxu0 %v2984
        %3054 = vmatprep.subr.bf16.mxu0 0
        %3055 = vmatpush1.bf16.msra.mxu0 %v2983
        %3056 = vmatprep.subr.bf16.mxu0 0
        %3057 = vmatpush1.bf16.msra.mxu0 %v2982
        %3058 = vmatprep.subr.bf16.mxu0 0
        %3059 = vmatpush1.bf16.msra.mxu0 %v2981
        %3060 = vmatprep.subr.bf16.mxu0 0
        %3061 = vmatpush1.bf16.msra.mxu0 %v2980
        %3062 = vmatprep.subr.bf16.mxu0 0
        %3063 = vmatpush1.bf16.msra.mxu0 %v2979
        %3064 = vmatprep.subr.bf16.mxu0 0
        %3065 = vmatpush1.bf16.msra.mxu0 %v2978
        %3066 = vmatprep.subr.bf16.mxu0 0
        %3067 = vmatpush1.bf16.msra.mxu0 %v2977
        %3068 = vmatprep.subr.bf16.mxu0 0
        %3069 = vmatpush2.bf16.msra.mxu0 %v2992
        %3070 = vmatprep.subr.bf16.mxu0 0
        %3071 = vmatpush2.bf16.msra.mxu0 %v2991
        %3072 = vmatprep.subr.bf16.mxu0 0
        %3073 = vmatpush2.bf16.msra.mxu0 %v2990
        %3074 = vmatprep.subr.bf16.mxu0 0
        %3075 = vmatpush2.bf16.msra.mxu0 %v2989
        %3076 = vmatprep.subr.bf16.mxu0 0
        %3077 = vmatpush2.bf16.msra.mxu0 %v2988
        %3078 = vmatprep.subr.bf16.mxu0 0
        %3079 = vmatpush2.bf16.msra.mxu0 %v2987
        %3080 = vmatprep.subr.bf16.mxu0 0
        %3081 = vmatpush2.bf16.msra.mxu0 %v2986
        %3082 = vmatprep.subr.bf16.mxu0 0
        %3083 = vmatpush2.bf16.msra.mxu0 %v2985
        %3084 = vmatprep.mubr.bf16.mxu0 %v2831
        %3085 = vmatmul.mubr.bf16.gmra.mxu0 %v2830
        %v3086 = vpop.f32.mrf.mxu0
        %v3087 = vadd.f32 0.0, %v3086
        %v3088 = vpop.f32.mrf.mxu0
        %v3089 = vpop.f32.mrf.mxu0
        %v3090 = vadd.f32 0.0, %v3089
        %v3091 = vpop.f32.mrf.mxu0
        %3092 = vmatprep.mubr.bf16.mxu0 %v2834
        %3093 = vmatmul.mubr.bf16.gmra.mxu0 %v2833
        %v3094 = vpop.f32.mrf.mxu0
        %v3095 = vadd.f32 0.0, %v3094
        %v3096 = vpop.f32.mrf.mxu0
        %v3097 = vpop.f32.mrf.mxu0
        %v3098 = vadd.f32 0.0, %v3097
        %v3099 = vpop.f32.mrf.mxu0
        %3100 = vmatprep.mubr.bf16.mxu0 %v2837
        %3101 = vmatmul.mubr.bf16.gmra.mxu0 %v2836
        %v3102 = vpop.f32.mrf.mxu0
        %v3103 = vadd.f32 0.0, %v3102
        %v3104 = vpop.f32.mrf.mxu0
        %v3105 = vpop.f32.mrf.mxu0
        %v3106 = vadd.f32 0.0, %v3105
        %v3107 = vpop.f32.mrf.mxu0
        %3108 = vmatprep.mubr.bf16.mxu0 %v2840
        %3109 = vmatmul.mubr.bf16.gmra.mxu0 %v2839
        %v3110 = vpop.f32.mrf.mxu0
        %v3111 = vadd.f32 0.0, %v3110
        %v3112 = vpop.f32.mrf.mxu0
        %v3113 = vpop.f32.mrf.mxu0
        %v3114 = vadd.f32 0.0, %v3113
        %v3115 = vpop.f32.mrf.mxu0
        %3116 = vmatprep.mubr.bf16.mxu0 %v2843
        %3117 = vmatmul.mubr.bf16.gmra.mxu0 %v2842
        %v3118 = vpop.f32.mrf.mxu0
        %v3119 = vadd.f32 0.0, %v3118
        %v3120 = vpop.f32.mrf.mxu0
        %v3121 = vpop.f32.mrf.mxu0
        %v3122 = vadd.f32 0.0, %v3121
        %v3123 = vpop.f32.mrf.mxu0
        %3124 = vmatprep.mubr.bf16.mxu0 %v2846
        %3125 = vmatmul.mubr.bf16.gmra.mxu0 %v2845
        %v3126 = vpop.f32.mrf.mxu0
        %v3127 = vadd.f32 0.0, %v3126
        %v3128 = vpop.f32.mrf.mxu0
        %v3129 = vpop.f32.mrf.mxu0
        %v3130 = vadd.f32 0.0, %v3129
        %v3131 = vpop.f32.mrf.mxu0
        %3132 = vmatprep.mubr.bf16.mxu0 %v2849
        %3133 = vmatmul.mubr.bf16.gmra.mxu0 %v2848
        %v3134 = vpop.f32.mrf.mxu0
        %v3135 = vadd.f32 0.0, %v3134
        %v3136 = vpop.f32.mrf.mxu0
        %v3137 = vpop.f32.mrf.mxu0
        %v3138 = vadd.f32 0.0, %v3137
        %v3139 = vpop.f32.mrf.mxu0
        %3140 = vmatprep.mubr.bf16.mxu0 %v2852
        %3141 = vmatmul.mubr.bf16.gmra.mxu0 %v2851
        %v3142 = vpop.f32.mrf.mxu0
        %v3143 = vadd.f32 0.0, %v3142
        %v3144 = vpop.f32.mrf.mxu0
        %v3145 = vpop.f32.mrf.mxu0
        %v3146 = vadd.f32 0.0, %v3145
        %v3147 = vpop.f32.mrf.mxu0
        %3148 = vmatprep.mubr.bf16.mxu0 %v2855
        %3149 = vmatmul.mubr.bf16.gmra.mxu0 %v2854
        %v3150 = vpop.f32.mrf.mxu0
        %v3151 = vadd.f32 0.0, %v3150
        %v3152 = vpop.f32.mrf.mxu0
        %v3153 = vpop.f32.mrf.mxu0
        %v3154 = vadd.f32 0.0, %v3153
        %v3155 = vpop.f32.mrf.mxu0
        %3156 = vmatprep.mubr.bf16.mxu0 %v2858
        %3157 = vmatmul.mubr.bf16.gmra.mxu0 %v2857
        %v3158 = vpop.f32.mrf.mxu0
        %v3159 = vadd.f32 0.0, %v3158
        %v3160 = vpop.f32.mrf.mxu0
        %v3161 = vpop.f32.mrf.mxu0
        %v3162 = vadd.f32 0.0, %v3161
        %v3163 = vpop.f32.mrf.mxu0
        %3164 = vmatprep.mubr.bf16.mxu0 %v2861
        %3165 = vmatmul.mubr.bf16.gmra.mxu0 %v2860
        %v3166 = vpop.f32.mrf.mxu0
        %v3167 = vadd.f32 0.0, %v3166
        %v3168 = vpop.f32.mrf.mxu0
        %v3169 = vpop.f32.mrf.mxu0
        %v3170 = vadd.f32 0.0, %v3169
        %v3171 = vpop.f32.mrf.mxu0
        %3172 = vmatprep.mubr.bf16.mxu0 %v2864
        %3173 = vmatmul.mubr.bf16.gmra.mxu0 %v2863
        %v3174 = vpop.f32.mrf.mxu0
        %v3175 = vadd.f32 0.0, %v3174
        %v3176 = vpop.f32.mrf.mxu0
        %v3177 = vpop.f32.mrf.mxu0
        %v3178 = vadd.f32 0.0, %v3177
        %v3179 = vpop.f32.mrf.mxu0
        %3180 = vmatprep.mubr.bf16.mxu0 %v2867
        %3181 = vmatmul.mubr.bf16.gmra.mxu0 %v2866
        %v3182 = vpop.f32.mrf.mxu0
        %v3183 = vadd.f32 0.0, %v3182
        %v3184 = vpop.f32.mrf.mxu0
        %v3185 = vpop.f32.mrf.mxu0
        %v3186 = vpop.f32.mrf.mxu0
        %3187 = vdwg.mxu0
        %3188 = vmatprep.subr.bf16.mxu0 0
        %3189 = vmatpush1.bf16.msra.mxu0 0
        %3190 = vmatprep.subr.bf16.mxu0 0
        %3191 = vmatpush1.bf16.msra.mxu0 0
        %3192 = vmatprep.subr.bf16.mxu0 0
        %3193 = vmatpush1.bf16.msra.mxu0 0
        %3194 = vmatprep.subr.bf16.mxu0 0
        %3195 = vmatpush1.bf16.msra.mxu0 0
        %3196 = vmatprep.subr.bf16.mxu0 0
        %3197 = vmatpush1.bf16.msra.mxu0 0
        %3198 = vmatprep.subr.bf16.mxu0 0
        %3199 = vmatpush1.bf16.msra.mxu0 0
        %3200 = vmatprep.subr.bf16.mxu0 0
        %3201 = vmatpush1.bf16.msra.mxu0 %v2994
        %3202 = vmatprep.subr.bf16.mxu0 0
        %3203 = vmatpush1.bf16.msra.mxu0 %v2993
        %3204 = vmatprep.subr.bf16.mxu0 0
        %3205 = vmatpush2.bf16.msra.mxu0 0
        %3206 = vmatprep.subr.bf16.mxu0 0
        %3207 = vmatpush2.bf16.msra.mxu0 0
        %3208 = vmatprep.subr.bf16.mxu0 0
        %3209 = vmatpush2.bf16.msra.mxu0 0
        %3210 = vmatprep.subr.bf16.mxu0 0
        %3211 = vmatpush2.bf16.msra.mxu0 0
        %3212 = vmatprep.subr.bf16.mxu0 0
        %3213 = vmatpush2.bf16.msra.mxu0 0
        %3214 = vmatprep.subr.bf16.mxu0 0
        %3215 = vmatpush2.bf16.msra.mxu0 0
        %3216 = vmatprep.subr.bf16.mxu0 0
        %3217 = vmatpush2.bf16.msra.mxu0 0
        %3218 = vmatprep.subr.bf16.mxu0 0
        %3219 = vmatpush2.bf16.msra.mxu0 0
        %3220 = vmatprep.mubr.bf16.mxu0 0
        %3221 = vmatmul.mubr.bf16.gmra.mxu0 %v3014
        %v3222 = vpop.f32.mrf.mxu0
        %v3223 = vadd.f32 %v3087, %v3222
        %v3224 = vpop.f32.mrf.mxu0
        %v3225 = vpop.f32.mrf.mxu0
        %v3226 = vadd.f32 %v3090, %v3225
        %v3227 = vpop.f32.mrf.mxu0
        %3228 = vmatprep.mubr.bf16.mxu0 0
        %3229 = vmatmul.mubr.bf16.gmra.mxu0 %v3017
        %v3230 = vpop.f32.mrf.mxu0
        %v3231 = vadd.f32 %v3095, %v3230
        %v3232 = vpop.f32.mrf.mxu0
        %v3233 = vpop.f32.mrf.mxu0
        %v3234 = vadd.f32 %v3098, %v3233
        %v3235 = vpop.f32.mrf.mxu0
        %3236 = vmatprep.mubr.bf16.mxu0 0
        %3237 = vmatmul.mubr.bf16.gmra.mxu0 %v3020
        %v3238 = vpop.f32.mrf.mxu0
        %v3239 = vadd.f32 %v3103, %v3238
        %v3240 = vpop.f32.mrf.mxu0
        %v3241 = vpop.f32.mrf.mxu0
        %v3242 = vadd.f32 %v3106, %v3241
        %v3243 = vpop.f32.mrf.mxu0
        %3244 = vmatprep.mubr.bf16.mxu0 0
        %3245 = vmatmul.mubr.bf16.gmra.mxu0 %v3023
        %v3246 = vpop.f32.mrf.mxu0
        %v3247 = vadd.f32 %v3111, %v3246
        %v3248 = vpop.f32.mrf.mxu0
        %v3249 = vpop.f32.mrf.mxu0
        %v3250 = vadd.f32 %v3114, %v3249
        %v3251 = vpop.f32.mrf.mxu0
        %3252 = vmatprep.mubr.bf16.mxu0 0
        %3253 = vmatmul.mubr.bf16.gmra.mxu0 %v3026
        %v3254 = vpop.f32.mrf.mxu0
        %v3255 = vadd.f32 %v3119, %v3254
        %v3256 = vpop.f32.mrf.mxu0
        %v3257 = vpop.f32.mrf.mxu0
        %v3258 = vadd.f32 %v3122, %v3257
        %v3259 = vpop.f32.mrf.mxu0
        %3260 = vmatprep.mubr.bf16.mxu0 0
        %3261 = vmatmul.mubr.bf16.gmra.mxu0 %v3029
        %v3262 = vpop.f32.mrf.mxu0
        %v3263 = vadd.f32 %v3127, %v3262
        %v3264 = vpop.f32.mrf.mxu0
        %v3265 = vpop.f32.mrf.mxu0
        %v3266 = vadd.f32 %v3130, %v3265
        %v3267 = vpop.f32.mrf.mxu0
        %3268 = vmatprep.mubr.bf16.mxu0 0
        %3269 = vmatmul.mubr.bf16.gmra.mxu0 %v3032
        %v3270 = vpop.f32.mrf.mxu0
        %v3271 = vadd.f32 %v3135, %v3270
        %v3272 = vpop.f32.mrf.mxu0
        %v3273 = vpop.f32.mrf.mxu0
        %v3274 = vadd.f32 %v3138, %v3273
        %v3275 = vpop.f32.mrf.mxu0
        %3276 = vmatprep.mubr.bf16.mxu0 0
        %3277 = vmatmul.mubr.bf16.gmra.mxu0 %v3035
        %v3278 = vpop.f32.mrf.mxu0
        %v3279 = vadd.f32 %v3143, %v3278
        %v3280 = vpop.f32.mrf.mxu0
        %v3281 = vpop.f32.mrf.mxu0
        %v3282 = vadd.f32 %v3146, %v3281
        %v3283 = vpop.f32.mrf.mxu0
        %3284 = vmatprep.mubr.bf16.mxu0 0
        %3285 = vmatmul.mubr.bf16.gmra.mxu0 %v3038
        %v3286 = vpop.f32.mrf.mxu0
        %v3287 = vadd.f32 %v3151, %v3286
        %v3288 = vpop.f32.mrf.mxu0
        %v3289 = vpop.f32.mrf.mxu0
        %v3290 = vadd.f32 %v3154, %v3289
        %v3291 = vpop.f32.mrf.mxu0
        %3292 = vmatprep.mubr.bf16.mxu0 0
        %3293 = vmatmul.mubr.bf16.gmra.mxu0 %v3041
        %v3294 = vpop.f32.mrf.mxu0
        %v3295 = vadd.f32 %v3159, %v3294
        %v3296 = vpop.f32.mrf.mxu0
        %v3297 = vpop.f32.mrf.mxu0
        %v3298 = vadd.f32 %v3162, %v3297
        %v3299 = vpop.f32.mrf.mxu0
        %3300 = vmatprep.mubr.bf16.mxu0 0
        %3301 = vmatmul.mubr.bf16.gmra.mxu0 %v3044
        %v3302 = vpop.f32.mrf.mxu0
        %v3303 = vadd.f32 %v3167, %v3302
        %v3304 = vpop.f32.mrf.mxu0
        %v3305 = vpop.f32.mrf.mxu0
        %v3306 = vadd.f32 %v3170, %v3305
        %v3307 = vpop.f32.mrf.mxu0
        %3308 = vmatprep.mubr.bf16.mxu0 0
        %3309 = vmatmul.mubr.bf16.gmra.mxu0 %v3047
        %v3310 = vpop.f32.mrf.mxu0
        %v3311 = vadd.f32 %v3175, %v3310
        %v3312 = vpop.f32.mrf.mxu0
        %v3313 = vpop.f32.mrf.mxu0
        %v3314 = vadd.f32 %v3178, %v3313
        %v3315 = vpop.f32.mrf.mxu0
        %3316 = vmatprep.mubr.bf16.mxu0 0
        %3317 = vmatmul.mubr.bf16.gmra.mxu0 %v3050
        %v3318 = vpop.f32.mrf.mxu0
        %v3319 = vadd.f32 %v3183, %v3318
        %v3320 = vpop.f32.mrf.mxu0
        %v3321 = vpop.f32.mrf.mxu0
        %v3322 = vpop.f32.mrf.mxu0
        %3323 = vdwg.mxu0
        %vm3331 = vcmask 1046528
        %v3332 = vrot.slane %v3247, 1
        %v3333 = vrot.slane %v3250, 1
        %v3334 = vsel %vm3331, %v3332, %v3333
        %v3335 = vrot.slane %v3255, 1
        %v3336 = vsel %vm3331, %v3333, %v3335
        %v3337 = vrot.slane %v3258, 1
        %v3338 = vsel %vm3331, %v3335, %v3337
        %v3339 = vrot.slane %v3263, 1
        %v3340 = vsel %vm3331, %v3337, %v3339
        %v3341 = vrot.slane %v3266, 1
        %v3342 = vsel %vm3331, %v3339, %v3341
        %v3343 = vrot.slane %v3271, 1
        %v3344 = vsel %vm3331, %v3341, %v3343
        %v3352 = vmax.f32 %v3223, %v3334
        %v3353 = vmax.f32 %v3226, %v3336
        %v3354 = vmax.f32 %v3231, %v3338
        %v3355 = vmax.f32 %v3234, %v3340
        %v3356 = vmax.f32 %v3239, %v3342
        %v3357 = vmax.f32 %v3242, %v3344
        %v3358 = vmax.f32 %v3247, %v3343
        %v3366 = vrot.slane %v3295, 1
        %v3367 = vrot.slane %v3298, 1
        %v3368 = vsel %vm3331, %v3366, %v3367
        %v3369 = vrot.slane %v3303, 1
        %v3370 = vsel %vm3331, %v3367, %v3369
        %v3371 = vrot.slane %v3306, 1
        %v3372 = vsel %vm3331, %v3369, %v3371
        %v3373 = vrot.slane %v3311, 1
        %v3374 = vsel %vm3331, %v3371, %v3373
        %v3375 = vrot.slane %v3314, 1
        %v3376 = vsel %vm3331, %v3373, %v3375
        %v3377 = vrot.slane %v3319, 1
        %v3378 = vsel %vm3331, %v3375, %v3377
        %v3386 = vmax.f32 %v3271, %v3368
        %v3387 = vmax.f32 %v3274, %v3370
        %v3388 = vmax.f32 %v3279, %v3372
        %v3389 = vmax.f32 %v3282, %v3374
        %v3390 = vmax.f32 %v3287, %v3376
        %v3391 = vmax.f32 %v3290, %v3378
        %v3392 = vmax.f32 %v3295, %v3377
        %vm3400 = vcmask 1045504
        %v3401 = vrot.slane %v3386, 2
        %v3402 = vrot.slane %v3387, 2
        %v3403 = vsel %vm3400, %v3401, %v3402
        %v3404 = vrot.slane %v3388, 2
        %v3405 = vsel %vm3400, %v3402, %v3404
        %v3406 = vrot.slane %v3389, 2
        %v3407 = vsel %vm3400, %v3404, %v3406
        %v3408 = vrot.slane %v3390, 2
        %v3409 = vsel %vm3400, %v3406, %v3408
        %v3410 = vrot.slane %v3391, 2
        %v3411 = vsel %vm3400, %v3408, %v3410
        %v3412 = vrot.slane %v3392, 2
        %v3413 = vsel %vm3400, %v3410, %v3412
        %v3421 = vmax.f32 %v3352, %v3403
        %v3422 = vmax.f32 %v3353, %v3405
        %v3423 = vmax.f32 %v3354, %v3407
        %v3424 = vmax.f32 %v3355, %v3409
        %v3425 = vmax.f32 %v3356, %v3411
        %v3426 = vmax.f32 %v3357, %v3413
        %v3427 = vmax.f32 %v3358, %v3412
        %v3428 = vld [vmem:[#allocation8] sm:$0x1]
        %v3430 = vlaneseq
        %v3431 = vshrl.u32 %v3430, 7
        %v3432 = vsub.s32 0, %v3431
        %v3433 = vrot.slane %v3428, %v3432
        %v3435 = vadd.f32 %v3421, %v3433
        %v3436 = vadd.f32 %v3422, %v3433
        %v3437 = vadd.f32 %v3423, %v3433
        %v3438 = vadd.f32 %v3424, %v3433
        %v3439 = vadd.f32 %v3425, %v3433
        %v3440 = vadd.f32 %v3426, %v3433
        %v3441 = vadd.f32 %v3427, %v3433
        %v3442 = vmax.f32 %v3435, 0.0
        %v3443 = vmax.f32 %v3436, 0.0
        %v3444 = vmax.f32 %v3437, 0.0
        %v3445 = vmax.f32 %v3438, 0.0
        %v3446 = vmax.f32 %v3439, 0.0
        %v3447 = vmax.f32 %v3440, 0.0
        %v3448 = vmax.f32 %v3441, 0.0
        %v3449 = vpack.c.bf16 %v3443, %v3442
        %v3450 = vpack.c.bf16 %v3445, %v3444
        %v3451 = vpack.c.bf16 %v3447, %v3446
        %v3452 = vpack.c.bf16 %v3448, %v3448
        %v3457 = vunpack.c.l.b16 %v3449
        %v3458 = vunpack.c.h.b16 %v3449
        %v3459 = vunpack.c.l.b16 %v3450
        %v3460 = vunpack.c.h.b16 %v3450
        %v3461 = vunpack.c.l.b16 %v3451
        %v3462 = vunpack.c.h.b16 %v3451
        %v3463 = vunpack.c.l.b16 %v3452
        %v3464 = vpack.c.b16 %v3457, %v3457
        %v3465 = vpack.c.b16 %v3458, %v3458
        %v3466 = vpack.c.b16 %v3459, %v3459
        %v3467 = vpack.c.b16 %v3460, %v3460
        %v3468 = vpack.c.b16 %v3461, %v3461
        %v3469 = vpack.c.b16 %v3462, %v3462
        %v3470 = vpack.c.b16 %v3463, %v3463
        %vm3478 = vcmask 519168
        %3479 = vst.msk [vmem:[%s264] sm:$0xf] %vm3478, %v3464
        %3480 = vst.msk [vmem:[%s264 + $0x4] sm:$0xf] %vm3478, %v3465
        %3481 = vst.msk [vmem:[%s264 + $0x8] sm:$0xf] %vm3478, %v3466
        %3482 = vst.msk [vmem:[%s264 + $0xc] sm:$0xf] %vm3478, %v3467
        %3483 = vst.msk [vmem:[%s264 + $0x10] sm:$0xf] %vm3478, %v3468
        %3484 = vst.msk [vmem:[%s264 + $0x14] sm:$0xf] %vm3478, %v3469
        %vm3485 = vcmask 516096
        %vm3486 = vsmask.f32 256
        %vm3487 = vmand %vm3485, %vm3486
        %v3488 = vld [vmem:[%s264 + $0x18] sm:$0x1]
        %v3489 = vsel %vm3487, %v3470, %v3488
        %3490 = vst [vmem:[%s264 + $0x18] sm:$0x1] %v3489
        %p3491 = scmp.lt.s32.totalorder %s18, 1
        %s3492 = scalar_select %p3491, %s18, 1
        %s3493 = smul.addr %s3492, 7
        %s3494 = smul.addr %s3493, 4
        %s3495 = scalar_lea.vmem %s5, %s3494
        // Predicated region
        $region53: #{cnn_forward.2} parent=39 // pred_check
          %p3496 = pneg %p146
        $region54: #{cnn_forward.2} parent=39 // pred_check_branch
          %3498 = sbr.rel (%p3496) target = $region56
        $region55: #{cnn_forward.2} parent=39 // pred_region
          _
        $region56: #{cnn_forward.2} parent=39 // pred_fallthru
          _
      $region40: #{cnn_forward.2} parent=5 // pred_fallthru
        _
      %p3499 = scmp.le.s32.totalorder 2, %s13
      // Predicated region
      $region57: #{cnn_forward.2} parent=5 // pred_check
        %p3500 = pneg %p3499
      $region58: #{cnn_forward.2} parent=5 // pred_check_branch
        %3502 = sbr.rel (%p3500) target = $region60
      $region59: #{cnn_forward.2} parent=5 // pred_region
        %s3503 = ssub.s32 %s13, 2
        // Predicated region
        $region61: #{cnn_forward.2} parent=59 // pred_check
          %p3504 = pneg %p152
        $region62: #{cnn_forward.2} parent=59 // pred_check_branch
          %3506 = sbr.rel (%p3504) target = $region64
        $region63: #{cnn_forward.2} parent=59 // pred_region
          %p3507 = scmp.lt.s32.totalorder %s19, 1
          %s3508 = scalar_select %p3507, %s19, 1
          %s3509 = smul.addr %s3508, 7
          %s3510 = smul.addr %s3509, 4
          %s3511 = scalar_lea.vmem %s5, %s3510
        $region64: #{cnn_forward.2} parent=59 // pred_fallthru
          _
      $region60: #{cnn_forward.2} parent=5 // pred_fallthru
        _
    $region6: #{cnn_forward.2} parent=1 // loop_footer
      %s17 = sadd.s32 1, %s13
    $region7: #{cnn_forward.2} parent=1 // loop_footer_branch
      %12 = sbr.rel target = $region3
    $region8: #{cnn_forward.2} parent=1 // loop_exit
      _
    %3512 = vsyncpa [#allocation5], 1
    %s3513 = scalar_lea.sflag [#allocation5], 1
    %3514 = vsyncpa %s3513, 1
    %3515 = vsyncpa [#allocation7], 1

</llo_original>
